<compile_context>
chip_gen: v7x
topology: tpu7x:2x2x1
jax: 0.10.0
libtpu: 0.0.40
codegen_flags: <defaults>
</compile_context>

<pallas_src>
import jax
import jax.numpy as jnp
from jax.experimental import pallas as pl
from jax.experimental.pallas import tpu as pltpu


NUM_ACTIONS = 4
FC_HIDDEN = 512
FC_IN = 64 * 7 * 7
FC_TILE = 128  # fc1 output tile width (lane-dense)


# ---------------------------------------------------------------------------
# Pallas kernels
# ---------------------------------------------------------------------------

def _conv_mm_kernel(w_ref, p_ref, b_ref, o_ref):
    """(OC, K) @ (K, M) + bias, ReLU. Output is lane-dense along M."""
    acc = jnp.dot(w_ref[...], p_ref[...], preferred_element_type=jnp.float32)
    acc = jnp.maximum(acc + b_ref[...], 0.0)   # b_ref: (OC, 1) broadcasts over M
    o_ref[...] = acc.astype(o_ref.dtype)


def _fc_fused_kernel(x_ref, w1_ref, b1_ref, w2_ref, b2_ref, o_ref, acc_ref):
    """Fused fc1 + ReLU + fc2.

    Grid axis j tiles fc1's 512-wide output into 128-lane chunks. Each step
    computes h_j = relu(x @ W1[:, j*128:(j+1)*128] + b1_j) and immediately
    accumulates its fc2 partial product h_j @ W2[j*128:(j+1)*128, :] into a
    small f32 VMEM accumulator, so the (N, 512) intermediate never leaves
    VMEM/vregs and the bf16 fc1 weight DMA is pipelined across grid steps.
    """
    j = pl.program_id(0)

    @pl.when(j == 0)
    def _():
        acc_ref[...] = jnp.zeros_like(acc_ref)

    h = jnp.dot(x_ref[...], w1_ref[...], preferred_element_type=jnp.float32)
    h = jnp.maximum(h + b1_ref[...], 0.0).astype(jnp.bfloat16)
    acc_ref[...] += jnp.dot(h, w2_ref[...], preferred_element_type=jnp.float32)

    @pl.when(j == pl.num_programs(0) - 1)
    def _():
        o_ref[...] = acc_ref[...] + b2_ref[...]


# ---------------------------------------------------------------------------
# Kernel wrappers
# ---------------------------------------------------------------------------

def conv_matmul_relu(w2d, patches, b_col):
    """w2d: (OC, K) bf16, patches: (K, M) bf16, b_col: (OC, 1) f32
    -> (OC, M) bf16 = relu(w2d @ patches + b)."""
    oc, k = w2d.shape
    k2, m = patches.shape
    assert k == k2
    return pl.pallas_call(
        _conv_mm_kernel,
        out_shape=jax.ShapeDtypeStruct((oc, m), jnp.bfloat16),
        grid=(1,),
        in_specs=[
            pl.BlockSpec((oc, k), lambda i: (0, 0)),
            pl.BlockSpec((k, m), lambda i: (0, 0)),
            pl.BlockSpec((oc, 1), lambda i: (0, 0)),
        ],
        out_specs=pl.BlockSpec((oc, m), lambda i: (0, 0)),
        compiler_params=pltpu.CompilerParams(
            dimension_semantics=("arbitrary",)),
    )(w2d, patches, b_col)


def fc_fused(x, w1t, b1, w2t, b2):
    """x: (N, 3136) bf16; w1t: (3136, 512) bf16; b1: (1, 512) f32;
    w2t: (512, 4) bf16; b2: (1, 4) f32 -> (N, 4) f32."""
    n, k = x.shape
    assert w1t.shape == (k, FC_HIDDEN) and w2t.shape == (FC_HIDDEN, NUM_ACTIONS)
    n_tiles = FC_HIDDEN // FC_TILE
    return pl.pallas_call(
        _fc_fused_kernel,
        out_shape=jax.ShapeDtypeStruct((n, NUM_ACTIONS), jnp.float32),
        grid=(n_tiles,),
        in_specs=[
            pl.BlockSpec((n, k), lambda j: (0, 0)),                   # x (resident)
            pl.BlockSpec((k, FC_TILE), lambda j: (0, j)),             # W1 column tile
            pl.BlockSpec((1, FC_TILE), lambda j: (0, j)),             # b1 tile
            pl.BlockSpec((FC_TILE, NUM_ACTIONS), lambda j: (j, 0)),   # W2 row tile
            pl.BlockSpec((1, NUM_ACTIONS), lambda j: (0, 0)),         # b2
        ],
        out_specs=pl.BlockSpec((n, NUM_ACTIONS), lambda j: (0, 0)),
        scratch_shapes=[pltpu.VMEM((n, NUM_ACTIONS), jnp.float32)],
        compiler_params=pltpu.CompilerParams(
            dimension_semantics=("arbitrary",)),
    )(x, w1t, b1, w2t, b2)


# ---------------------------------------------------------------------------
# Conv-as-matmul glue (im2col in channel-major layout: pure slicing / reshape)
# ---------------------------------------------------------------------------

def im2col_cnhw(x, kh, kw, stride):
    """x: (C, N, H, W) -> (C*KH*KW, N*OH*OW).

    K ordering is (c, kh, kw), matching PyTorch's (OC, C, KH, KW) weight
    flattening; M ordering is (n, oh, ow). Built with one stack along a
    middle axis — no large transposes of the expanded patch tensor."""
    c, n, h, w = x.shape
    oh = (h - kh) // stride + 1
    ow = (w - kw) // stride + 1
    cols = [
        x[:, :, i:i + stride * oh:stride, j:j + stride * ow:stride]
        for i in range(kh) for j in range(kw)
    ]
    p = jnp.stack(cols, axis=1)                 # (C, KH*KW, N, OH, OW)
    return p.reshape(c * kh * kw, n * oh * ow), oh, ow


def conv2d_relu(x_cnhw, w2d, b_col, kh, kw, stride):
    """x_cnhw: (C, N, H, W) bf16; w2d: (OC, C*KH*KW) bf16; b_col: (OC, 1) f32.
    Returns (OC, N, OH, OW) bf16 — channel-major, ready for the next im2col."""
    _, n, _, _ = x_cnhw.shape
    oc = w2d.shape[0]
    patches, oh, ow = im2col_cnhw(x_cnhw, kh, kw, stride)
    out = conv_matmul_relu(w2d, patches, b_col)           # (OC, N*OH*OW)
    return out.reshape(oc, n, oh, ow)


# ---------------------------------------------------------------------------
# Parameters
# ---------------------------------------------------------------------------

def init_params(key):
    """Synthetic parameters in PyTorch layout (deterministic)."""
    def dense_like(key, shape, fan_in):
        return jax.random.normal(key, shape, jnp.float32) / jnp.sqrt(fan_in)

    ks = jax.random.split(key, 10)
    return {
        "conv1_w": dense_like(ks[0], (32, 4, 8, 8), 4 * 8 * 8),
        "conv1_b": dense_like(ks[1], (32,), 4 * 8 * 8),
        "conv2_w": dense_like(ks[2], (64, 32, 4, 4), 32 * 4 * 4),
        "conv2_b": dense_like(ks[3], (64,), 32 * 4 * 4),
        "conv3_w": dense_like(ks[4], (64, 64, 3, 3), 64 * 3 * 3),
        "conv3_b": dense_like(ks[5], (64,), 64 * 3 * 3),
        "fc1_w": dense_like(ks[6], (FC_HIDDEN, FC_IN), FC_IN),        # (out, in)
        "fc1_b": dense_like(ks[7], (FC_HIDDEN,), FC_IN),
        "fc2_w": dense_like(ks[8], (NUM_ACTIONS, FC_HIDDEN), FC_HIDDEN),
        "fc2_b": dense_like(ks[9], (NUM_ACTIONS,), FC_HIDDEN),
    }


def prepare_params(params):
    """One-time conversion of PyTorch-layout f32 params to kernel layout:
    2-D bf16 conv weights (1/255 folded into conv1), (OC, 1) f32 conv biases,
    pre-transposed bf16 fc weights, (1, out) f32 fc biases."""
    def conv_w(w, scale=1.0):
        oc = w.shape[0]
        return (w * scale).reshape(oc, -1).astype(jnp.bfloat16)

    return {
        "conv1_w2d": conv_w(params["conv1_w"], 1.0 / 255.0),
        "conv1_b": params["conv1_b"].reshape(-1, 1).astype(jnp.float32),
        "conv2_w2d": conv_w(params["conv2_w"]),
        "conv2_b": params["conv2_b"].reshape(-1, 1).astype(jnp.float32),
        "conv3_w2d": conv_w(params["conv3_w"]),
        "conv3_b": params["conv3_b"].reshape(-1, 1).astype(jnp.float32),
        "fc1_wT": params["fc1_w"].T.astype(jnp.bfloat16),     # (3136, 512)
        "fc1_b": params["fc1_b"].reshape(1, -1).astype(jnp.float32),
        "fc2_wT": params["fc2_w"].T.astype(jnp.bfloat16),     # (512, 4)
        "fc2_b": params["fc2_b"].reshape(1, -1).astype(jnp.float32),
    }


# ---------------------------------------------------------------------------
# Forward pass
# ---------------------------------------------------------------------------

def dqn_forward(prep, x):
    """x: (N, 4, 84, 84) float, raw pixel values 0..255. Returns (N, 4) f32."""
    n = x.shape[0]
    # /255 is folded into conv1's weights. Work channel-major (C, N, H, W) in
    # bf16 so each conv's (OC, M) output feeds the next im2col directly.
    x = jnp.transpose(x.astype(jnp.bfloat16), (1, 0, 2, 3))            # (4, N, 84, 84)
    x = conv2d_relu(x, prep["conv1_w2d"], prep["conv1_b"], 8, 8, 4)    # (32, N, 20, 20)
    x = conv2d_relu(x, prep["conv2_w2d"], prep["conv2_b"], 4, 4, 2)    # (64, N, 9, 9)
    x = conv2d_relu(x, prep["conv3_w2d"], prep["conv3_b"], 3, 3, 1)    # (64, N, 7, 7)
    flat = jnp.transpose(x, (1, 0, 2, 3)).reshape(n, FC_IN)            # NCHW flatten
    return fc_fused(flat, prep["fc1_wT"], prep["fc1_b"],
                    prep["fc2_wT"], prep["fc2_b"])                     # (N, 4)


def dqn_forward_ref(params, x):
    """Pure-JAX f32 reference with PyTorch semantics (independent of the
    kernel's im2col glue) for a correctness check."""
    x = x.astype(jnp.float32) / 255.0

    def conv(xx, w, b, stride):
        out = jax.lax.conv_general_dilated(
            xx, w, window_strides=(stride, stride), padding="VALID",
            dimension_numbers=("NCHW", "OIHW", "NCHW"))
        return jax.nn.relu(out + b.reshape(1, -1, 1, 1))

    x = conv(x, params["conv1_w"], params["conv1_b"], 4)
    x = conv(x, params["conv2_w"], params["conv2_b"], 2)
    x = conv(x, params["conv3_w"], params["conv3_b"], 1)
    x = x.reshape(x.shape[0], -1)
    x = jax.nn.relu(x @ params["fc1_w"].T + params["fc1_b"])
    return x @ params["fc2_w"].T + params["fc2_b"]


if __name__ == "__main__":
    key = jax.random.PRNGKey(0)
    pkey, xkey = jax.random.split(key)

    params = init_params(pkey)
    prep = prepare_params(params)   # one-time weight prep (fold /255, bf16, .T)

    # Simulated stacked Atari frames: batch=2, 4 channels, 84x84, values 0..255.
    x = jax.random.uniform(xkey, (2, 4, 84, 84), jnp.float32, 0.0, 255.0)

    out = jax.block_until_ready(jax.jit(dqn_forward)(prep, x))
    assert out.shape == (2, NUM_ACTIONS) and out.dtype == jnp.float32

    ref = jax.block_until_ready(jax.jit(dqn_forward_ref)(params, x))
    max_err = float(jnp.max(jnp.abs(out - ref)))
    assert jnp.allclose(out, ref, rtol=5e-2, atol=5e-2), (
        f"mismatch: max abs diff {max_err}")

    print("KERNEL_OK")
</pallas_src>

<mosaic_0001>
module attributes {stable_mosaic.version = 11 : i64} {
  func.func @_conv_mm_kernel(%arg0: i32, %arg1: memref<32x256xbf16, #tpu.memory_space<vmem>>, %arg2: memref<256x800xbf16, #tpu.memory_space<vmem>>, %arg3: memref<32x1xf32, #tpu.memory_space<vmem>>, %arg4: memref<32x800xbf16, #tpu.memory_space<vmem>>) attributes {dimension_semantics = [#tpu.dimension_semantics<arbitrary>], iteration_bounds = array<i64: 1>, scalar_prefetch = 0 : i64, scratch_operands = 0 : i64, tpu.core_type = #tpu.core_type<tc>, window_params = [{pipeline_mode = #tpu.pipeline_mode<synchronous>, transform_indices = @transform_0, window_bounds = array<i64: 32, 256>}, {pipeline_mode = #tpu.pipeline_mode<synchronous>, transform_indices = @transform_1, window_bounds = array<i64: 256, 800>}, {pipeline_mode = #tpu.pipeline_mode<synchronous>, transform_indices = @transform_2, window_bounds = array<i64: 32, 1>}, {pipeline_mode = #tpu.pipeline_mode<synchronous>, transform_indices = @transform_3, window_bounds = array<i64: 32, 800>}]} {
    %c0 = arith.constant 0 : index
    %c0_0 = arith.constant 0 : index
    %0 = vector.load %arg1[%c0, %c0_0] : memref<32x256xbf16, #tpu.memory_space<vmem>>, vector<32x256xbf16>
    %c0_1 = arith.constant 0 : index
    %c0_2 = arith.constant 0 : index
    %1 = vector.load %arg2[%c0_1, %c0_2] : memref<256x800xbf16, #tpu.memory_space<vmem>>, vector<256x800xbf16>
    %cst = arith.constant dense<0.000000e+00> : vector<32x800xf32>
    %2 = tpu.matmul %0, %1, %cst {dimension_numbers = #tpu.dot_dimension_numbers<[1], [0], [0], [1], [0, 0, 1, 1], [], []>} : vector<32x256xbf16>, vector<256x800xbf16>, vector<32x800xf32> -> vector<32x800xf32>
    %c0_3 = arith.constant 0 : index
    %c0_4 = arith.constant 0 : index
    %3 = vector.load %arg3[%c0_3, %c0_4] : memref<32x1xf32, #tpu.memory_space<vmem>>, vector<32x1xf32>
    %4 = vector.broadcast %3 : vector<32x1xf32> to vector<32x800xf32>
    %5 = arith.addf %2, %4 : vector<32x800xf32>
    %cst_5 = arith.constant 0.000000e+00 : f32
    %6 = vector.broadcast %cst_5 : f32 to vector<32x800xf32>
    %7 = arith.maximumf %5, %6 : vector<32x800xf32>
    %8 = arith.truncf %7 : vector<32x800xf32> to vector<32x800xbf16>
    %c0_6 = arith.constant 0 : index
    %c0_7 = arith.constant 0 : index
    %9 = vector.load %arg4[%c0_6, %c0_7] : memref<32x800xbf16, #tpu.memory_space<vmem>>, vector<32x800xbf16>
    tpu.vector_store %arg4[%c0_6, %c0_7], %8 {strides = array<i32>} : memref<32x800xbf16, #tpu.memory_space<vmem>>, vector<32x800xbf16>,
    return
  }
  func.func @transform_0(%arg0: i32) -> (i32, i32) {
    %c0_i32 = arith.constant 0 : i32
    %c0_i32_0 = arith.constant 0 : i32
    %c0_i32_1 = arith.constant 0 : i32
    return %c0_i32, %c0_i32_0 : i32, i32
  }
  func.func @transform_1(%arg0: i32) -> (i32, i32) {
    %c0_i32 = arith.constant 0 : i32
    %c0_i32_0 = arith.constant 0 : i32
    %c0_i32_1 = arith.constant 0 : i32
    return %c0_i32, %c0_i32_0 : i32, i32
  }
  func.func @transform_2(%arg0: i32) -> (i32, i32) {
    %c0_i32 = arith.constant 0 : i32
    %c0_i32_0 = arith.constant 0 : i32
    %c0_i32_1 = arith.constant 0 : i32
    return %c0_i32, %c0_i32_0 : i32, i32
  }
  func.func @transform_3(%arg0: i32) -> (i32, i32) {
    %c0_i32 = arith.constant 0 : i32
    %c0_i32_0 = arith.constant 0 : i32
    %c0_i32_1 = arith.constant 0 : i32
    return %c0_i32, %c0_i32_0 : i32, i32
  }
}

module attributes {stable_mosaic.version = 11 : i64} {
  func.func @_conv_mm_kernel(%arg0: i32, %arg1: memref<64x512xbf16, #tpu.memory_space<vmem>>, %arg2: memref<512x162xbf16, #tpu.memory_space<vmem>>, %arg3: memref<64x1xf32, #tpu.memory_space<vmem>>, %arg4: memref<64x162xbf16, #tpu.memory_space<vmem>>) attributes {dimension_semantics = [#tpu.dimension_semantics<arbitrary>], iteration_bounds = array<i64: 1>, scalar_prefetch = 0 : i64, scratch_operands = 0 : i64, tpu.core_type = #tpu.core_type<tc>, window_params = [{pipeline_mode = #tpu.pipeline_mode<synchronous>, transform_indices = @transform_0, window_bounds = array<i64: 64, 512>}, {pipeline_mode = #tpu.pipeline_mode<synchronous>, transform_indices = @transform_1, window_bounds = array<i64: 512, 162>}, {pipeline_mode = #tpu.pipeline_mode<synchronous>, transform_indices = @transform_2, window_bounds = array<i64: 64, 1>}, {pipeline_mode = #tpu.pipeline_mode<synchronous>, transform_indices = @transform_3, window_bounds = array<i64: 64, 162>}]} {
    %c0 = arith.constant 0 : index
    %c0_0 = arith.constant 0 : index
    %0 = vector.load %arg1[%c0, %c0_0] : memref<64x512xbf16, #tpu.memory_space<vmem>>, vector<64x512xbf16>
    %c0_1 = arith.constant 0 : index
    %c0_2 = arith.constant 0 : index
    %1 = vector.load %arg2[%c0_1, %c0_2] : memref<512x162xbf16, #tpu.memory_space<vmem>>, vector<512x162xbf16>
    %cst = arith.constant dense<0.000000e+00> : vector<64x162xf32>
    %2 = tpu.matmul %0, %1, %cst {dimension_numbers = #tpu.dot_dimension_numbers<[1], [0], [0], [1], [0, 0, 1, 1], [], []>} : vector<64x512xbf16>, vector<512x162xbf16>, vector<64x162xf32> -> vector<64x162xf32>
    %c0_3 = arith.constant 0 : index
    %c0_4 = arith.constant 0 : index
    %3 = vector.load %arg3[%c0_3, %c0_4] : memref<64x1xf32, #tpu.memory_space<vmem>>, vector<64x1xf32>
    %4 = vector.broadcast %3 : vector<64x1xf32> to vector<64x162xf32>
    %5 = arith.addf %2, %4 : vector<64x162xf32>
    %cst_5 = arith.constant 0.000000e+00 : f32
    %6 = vector.broadcast %cst_5 : f32 to vector<64x162xf32>
    %7 = arith.maximumf %5, %6 : vector<64x162xf32>
    %8 = arith.truncf %7 : vector<64x162xf32> to vector<64x162xbf16>
    %c0_6 = arith.constant 0 : index
    %c0_7 = arith.constant 0 : index
    %9 = vector.load %arg4[%c0_6, %c0_7] : memref<64x162xbf16, #tpu.memory_space<vmem>>, vector<64x162xbf16>
    tpu.vector_store %arg4[%c0_6, %c0_7], %8 {strides = array<i32>} : memref<64x162xbf16, #tpu.memory_space<vmem>>, vector<64x162xbf16>,
    return
  }
  func.func @transform_0(%arg0: i32) -> (i32, i32) {
    %c0_i32 = arith.constant 0 : i32
    %c0_i32_0 = arith.constant 0 : i32
    %c0_i32_1 = arith.constant 0 : i32
    return %c0_i32, %c0_i32_0 : i32, i32
  }
  func.func @transform_1(%arg0: i32) -> (i32, i32) {
    %c0_i32 = arith.constant 0 : i32
    %c0_i32_0 = arith.constant 0 : i32
    %c0_i32_1 = arith.constant 0 : i32
    return %c0_i32, %c0_i32_0 : i32, i32
  }
  func.func @transform_2(%arg0: i32) -> (i32, i32) {
    %c0_i32 = arith.constant 0 : i32
    %c0_i32_0 = arith.constant 0 : i32
    %c0_i32_1 = arith.constant 0 : i32
    return %c0_i32, %c0_i32_0 : i32, i32
  }
  func.func @transform_3(%arg0: i32) -> (i32, i32) {
    %c0_i32 = arith.constant 0 : i32
    %c0_i32_0 = arith.constant 0 : i32
    %c0_i32_1 = arith.constant 0 : i32
    return %c0_i32, %c0_i32_0 : i32, i32
  }
}

module attributes {stable_mosaic.version = 11 : i64} {
  func.func @_conv_mm_kernel(%arg0: i32, %arg1: memref<64x576xbf16, #tpu.memory_space<vmem>>, %arg2: memref<576x98xbf16, #tpu.memory_space<vmem>>, %arg3: memref<64x1xf32, #tpu.memory_space<vmem>>, %arg4: memref<64x98xbf16, #tpu.memory_space<vmem>>) attributes {dimension_semantics = [#tpu.dimension_semantics<arbitrary>], iteration_bounds = array<i64: 1>, scalar_prefetch = 0 : i64, scratch_operands = 0 : i64, tpu.core_type = #tpu.core_type<tc>, window_params = [{pipeline_mode = #tpu.pipeline_mode<synchronous>, transform_indices = @transform_0, window_bounds = array<i64: 64, 576>}, {pipeline_mode = #tpu.pipeline_mode<synchronous>, transform_indices = @transform_1, window_bounds = array<i64: 576, 98>}, {pipeline_mode = #tpu.pipeline_mode<synchronous>, transform_indices = @transform_2, window_bounds = array<i64: 64, 1>}, {pipeline_mode = #tpu.pipeline_mode<synchronous>, transform_indices = @transform_3, window_bounds = array<i64: 64, 98>}]} {
    %c0 = arith.constant 0 : index
    %c0_0 = arith.constant 0 : index
    %0 = vector.load %arg1[%c0, %c0_0] : memref<64x576xbf16, #tpu.memory_space<vmem>>, vector<64x576xbf16>
    %c0_1 = arith.constant 0 : index
    %c0_2 = arith.constant 0 : index
    %1 = vector.load %arg2[%c0_1, %c0_2] : memref<576x98xbf16, #tpu.memory_space<vmem>>, vector<576x98xbf16>
    %cst = arith.constant dense<0.000000e+00> : vector<64x98xf32>
    %2 = tpu.matmul %0, %1, %cst {dimension_numbers = #tpu.dot_dimension_numbers<[1], [0], [0], [1], [0, 0, 1, 1], [], []>} : vector<64x576xbf16>, vector<576x98xbf16>, vector<64x98xf32> -> vector<64x98xf32>
    %c0_3 = arith.constant 0 : index
    %c0_4 = arith.constant 0 : index
    %3 = vector.load %arg3[%c0_3, %c0_4] : memref<64x1xf32, #tpu.memory_space<vmem>>, vector<64x1xf32>
    %4 = vector.broadcast %3 : vector<64x1xf32> to vector<64x98xf32>
    %5 = arith.addf %2, %4 : vector<64x98xf32>
    %cst_5 = arith.constant 0.000000e+00 : f32
    %6 = vector.broadcast %cst_5 : f32 to vector<64x98xf32>
    %7 = arith.maximumf %5, %6 : vector<64x98xf32>
    %8 = arith.truncf %7 : vector<64x98xf32> to vector<64x98xbf16>
    %c0_6 = arith.constant 0 : index
    %c0_7 = arith.constant 0 : index
    %9 = vector.load %arg4[%c0_6, %c0_7] : memref<64x98xbf16, #tpu.memory_space<vmem>>, vector<64x98xbf16>
    tpu.vector_store %arg4[%c0_6, %c0_7], %8 {strides = array<i32>} : memref<64x98xbf16, #tpu.memory_space<vmem>>, vector<64x98xbf16>,
    return
  }
  func.func @transform_0(%arg0: i32) -> (i32, i32) {
    %c0_i32 = arith.constant 0 : i32
    %c0_i32_0 = arith.constant 0 : i32
    %c0_i32_1 = arith.constant 0 : i32
    return %c0_i32, %c0_i32_0 : i32, i32
  }
  func.func @transform_1(%arg0: i32) -> (i32, i32) {
    %c0_i32 = arith.constant 0 : i32
    %c0_i32_0 = arith.constant 0 : i32
    %c0_i32_1 = arith.constant 0 : i32
    return %c0_i32, %c0_i32_0 : i32, i32
  }
  func.func @transform_2(%arg0: i32) -> (i32, i32) {
    %c0_i32 = arith.constant 0 : i32
    %c0_i32_0 = arith.constant 0 : i32
    %c0_i32_1 = arith.constant 0 : i32
    return %c0_i32, %c0_i32_0 : i32, i32
  }
  func.func @transform_3(%arg0: i32) -> (i32, i32) {
    %c0_i32 = arith.constant 0 : i32
    %c0_i32_0 = arith.constant 0 : i32
    %c0_i32_1 = arith.constant 0 : i32
    return %c0_i32, %c0_i32_0 : i32, i32
  }
}

module attributes {stable_mosaic.version = 11 : i64} {
  func.func @_fc_fused_kernel(%arg0: i32, %arg1: memref<2x3136xbf16, #tpu.memory_space<vmem>>, %arg2: memref<3136x128xbf16, #tpu.memory_space<vmem>>, %arg3: memref<1x128xf32, #tpu.memory_space<vmem>>, %arg4: memref<128x4xbf16, #tpu.memory_space<vmem>>, %arg5: memref<1x4xf32, #tpu.memory_space<vmem>>, %arg6: memref<2x4xf32, #tpu.memory_space<vmem>>, %arg7: memref<2x4xf32, #tpu.memory_space<vmem>>) attributes {dimension_semantics = [#tpu.dimension_semantics<arbitrary>], iteration_bounds = array<i64: 4>, scalar_prefetch = 0 : i64, scratch_operands = 1 : i64, tpu.core_type = #tpu.core_type<tc>, window_params = [{pipeline_mode = #tpu.pipeline_mode<synchronous>, transform_indices = @transform_0, window_bounds = array<i64: 2, 3136>}, {transform_indices = @transform_1, window_bounds = array<i64: 3136, 128>}, {transform_indices = @transform_2, window_bounds = array<i64: 1, 128>}, {transform_indices = @transform_3, window_bounds = array<i64: 128, 4>}, {pipeline_mode = #tpu.pipeline_mode<synchronous>, transform_indices = @transform_4, window_bounds = array<i64: 1, 4>}, {pipeline_mode = #tpu.pipeline_mode<synchronous>, transform_indices = @transform_5, window_bounds = array<i64: 2, 4>}]} {
    %c0_i32 = arith.constant 0 : i32
    %0 = arith.cmpi eq, %arg0, %c0_i32 : i32
    %1 = arith.extui %0 : i1 to i32
    %c0_i32_0 = arith.constant 0 : i32
    %2 = arith.cmpi ne, %1, %c0_i32_0 : i32
    scf.if %2 {
      %cst_15 = arith.constant 0.000000e+00 : f32
      %20 = vector.broadcast %cst_15 : f32 to vector<2x4xf32>
      %c0_16 = arith.constant 0 : index
      %c0_17 = arith.constant 0 : index
      %21 = vector.load %arg7[%c0_16, %c0_17] : memref<2x4xf32, #tpu.memory_space<vmem>>, vector<2x4xf32>
      tpu.vector_store %arg7[%c0_16, %c0_17], %20 {strides = array<i32>} : memref<2x4xf32, #tpu.memory_space<vmem>>, vector<2x4xf32>,
    } else {
    }
    %c0 = arith.constant 0 : index
    %c0_1 = arith.constant 0 : index
    %3 = vector.load %arg1[%c0, %c0_1] : memref<2x3136xbf16, #tpu.memory_space<vmem>>, vector<2x3136xbf16>
    %c0_2 = arith.constant 0 : index
    %c0_3 = arith.constant 0 : index
    %4 = vector.load %arg2[%c0_2, %c0_3] : memref<3136x128xbf16, #tpu.memory_space<vmem>>, vector<3136x128xbf16>
    %cst = arith.constant dense<0.000000e+00> : vector<2x128xf32>
    %5 = tpu.matmul %3, %4, %cst {dimension_numbers = #tpu.dot_dimension_numbers<[1], [0], [0], [1], [0, 0, 1, 1], [], []>} : vector<2x3136xbf16>, vector<3136x128xbf16>, vector<2x128xf32> -> vector<2x128xf32>
    %c0_4 = arith.constant 0 : index
    %c0_5 = arith.constant 0 : index
    %6 = vector.load %arg3[%c0_4, %c0_5] : memref<1x128xf32, #tpu.memory_space<vmem>>, vector<1x128xf32>
    %7 = vector.broadcast %6 : vector<1x128xf32> to vector<2x128xf32>
    %8 = arith.addf %5, %7 : vector<2x128xf32>
    %cst_6 = arith.constant 0.000000e+00 : f32
    %9 = vector.broadcast %cst_6 : f32 to vector<2x128xf32>
    %10 = arith.maximumf %8, %9 : vector<2x128xf32>
    %11 = arith.truncf %10 : vector<2x128xf32> to vector<2x128xbf16>
    %c0_7 = arith.constant 0 : index
    %c0_8 = arith.constant 0 : index
    %12 = vector.load %arg7[%c0_7, %c0_8] : memref<2x4xf32, #tpu.memory_space<vmem>>, vector<2x4xf32>
    %c0_9 = arith.constant 0 : index
    %c0_10 = arith.constant 0 : index
    %13 = vector.load %arg4[%c0_9, %c0_10] : memref<128x4xbf16, #tpu.memory_space<vmem>>, vector<128x4xbf16>
    %cst_11 = arith.constant dense<0.000000e+00> : vector<2x4xf32>
    %14 = tpu.matmul %11, %13, %cst_11 {dimension_numbers = #tpu.dot_dimension_numbers<[1], [0], [0], [1], [0, 0, 1, 1], [], []>} : vector<2x128xbf16>, vector<128x4xbf16>, vector<2x4xf32> -> vector<2x4xf32>
    %15 = arith.addf %12, %14 : vector<2x4xf32>
    %c0_12 = arith.constant 0 : index
    %c0_13 = arith.constant 0 : index
    %16 = vector.load %arg7[%c0_12, %c0_13] : memref<2x4xf32, #tpu.memory_space<vmem>>, vector<2x4xf32>
    tpu.vector_store %arg7[%c0_12, %c0_13], %15 {strides = array<i32>} : memref<2x4xf32, #tpu.memory_space<vmem>>, vector<2x4xf32>,
    %c3_i32 = arith.constant 3 : i32
    %17 = arith.cmpi eq, %arg0, %c3_i32 : i32
    %18 = arith.extui %17 : i1 to i32
    %c0_i32_14 = arith.constant 0 : i32
    %19 = arith.cmpi ne, %18, %c0_i32_14 : i32
    scf.if %19 {
      %c0_15 = arith.constant 0 : index
      %c0_16 = arith.constant 0 : index
      %20 = vector.load %arg7[%c0_15, %c0_16] : memref<2x4xf32, #tpu.memory_space<vmem>>, vector<2x4xf32>
      %c0_17 = arith.constant 0 : index
      %c0_18 = arith.constant 0 : index
      %21 = vector.load %arg5[%c0_17, %c0_18] : memref<1x4xf32, #tpu.memory_space<vmem>>, vector<1x4xf32>
      %22 = vector.broadcast %21 : vector<1x4xf32> to vector<2x4xf32>
      %23 = arith.addf %20, %22 : vector<2x4xf32>
      %c0_19 = arith.constant 0 : index
      %c0_20 = arith.constant 0 : index
      %24 = vector.load %arg6[%c0_19, %c0_20] : memref<2x4xf32, #tpu.memory_space<vmem>>, vector<2x4xf32>
      tpu.vector_store %arg6[%c0_19, %c0_20], %23 {strides = array<i32>} : memref<2x4xf32, #tpu.memory_space<vmem>>, vector<2x4xf32>,
    } else {
    }
    return
  }
  func.func @transform_0(%arg0: i32) -> (i32, i32) {
    %c0_i32 = arith.constant 0 : i32
    %c0_i32_0 = arith.constant 0 : i32
    %c0_i32_1 = arith.constant 0 : i32
    return %c0_i32, %c0_i32_0 : i32, i32
  }
  func.func @transform_1(%arg0: i32) -> (i32, i32) {
    %c0_i32 = arith.constant 0 : i32
    %c0_i32_0 = arith.constant 0 : i32
    return %c0_i32, %arg0 : i32, i32
  }
  func.func @transform_2(%arg0: i32) -> (i32, i32) {
    %c0_i32 = arith.constant 0 : i32
    %c0_i32_0 = arith.constant 0 : i32
    return %c0_i32, %arg0 : i32, i32
  }
  func.func @transform_3(%arg0: i32) -> (i32, i32) {
    %c0_i32 = arith.constant 0 : i32
    %c0_i32_0 = arith.constant 0 : i32
    return %arg0, %c0_i32 : i32, i32
  }
  func.func @transform_4(%arg0: i32) -> (i32, i32) {
    %c0_i32 = arith.constant 0 : i32
    %c0_i32_0 = arith.constant 0 : i32
    %c0_i32_1 = arith.constant 0 : i32
    return %c0_i32, %c0_i32_0 : i32, i32
  }
  func.func @transform_5(%arg0: i32) -> (i32, i32) {
    %c0_i32 = arith.constant 0 : i32
    %c0_i32_0 = arith.constant 0 : i32
    %c0_i32_1 = arith.constant 0 : i32
    return %c0_i32, %c0_i32_0 : i32, i32
  }
}

</mosaic_0001>

<llo_original>
// kernel: dqn_forward.4
$region0: #{dqn_forward.4}
  #allocation0 [shape = 'u32[]', space=smem, size = 0x4, offset = 0x4, fixed_abs, tag = 'smem constant byte address 0x4 - core index']
  #allocation1 [shape = 'u32[144,128]{1,0:T(1,128)}', space=vmem, size = 0x12000, scoped, tag = 'internal scratch']
  %s0 = inlined_call_operand.vmem [shape: bf16[32,256], index: 0, kind: input, shape index: {}]
  %s1 = inlined_call_operand.vmem [shape: bf16[256,800], index: 1, kind: input, shape index: {}]
  %s2 = inlined_call_operand.vmem [shape: f32[32,1], index: 2, kind: input, shape index: {}]
  %s3 = inlined_call_operand.vmem [shape: bf16[32,800], index: 3, kind: output, shape index: {}]
  %s4 = sld [smem:[#allocation0]]
  $region22: #{dqn_forward.4} parent=0
    _
  %s6 = ssub.s32 1, %s4
  %s7 = scalar_select 0, %s6, %s4
  // Predicated region
  $region2: #{dqn_forward.4} parent=0 // pred_check
    _
  $region3: #{dqn_forward.4} parent=0 // pred_check_branch
    %9 = sbr.rel (0) target = $region5
  $region4: #{dqn_forward.4} parent=0 // pred_region
    _
  $region5: #{dqn_forward.4} parent=0 // pred_fallthru
    _
  // Predicated region
  $region6: #{dqn_forward.4} parent=0 // pred_check
    _
  $region7: #{dqn_forward.4} parent=0 // pred_check_branch
    %11 = sbr.rel (0) target = $region9
  $region8: #{dqn_forward.4} parent=0 // pred_region
    _
  $region9: #{dqn_forward.4} parent=0 // pred_fallthru
    _
  // Predicated region
  $region10: #{dqn_forward.4} parent=0 // pred_check
    _
  $region11: #{dqn_forward.4} parent=0 // pred_check_branch
    %13 = sbr.rel (0) target = $region13
  $region12: #{dqn_forward.4} parent=0 // pred_region
    _
  $region13: #{dqn_forward.4} parent=0 // pred_fallthru
    _
  %v15 = vld [vmem:[%s0] sm:$0xff]
  %v16 = vld [vmem:[%s0 + $0x8] sm:$0xff]
  %v17 = vld [vmem:[%s0 + $0x10] sm:$0xff]
  %v18 = vld [vmem:[%s0 + $0x18] sm:$0xff]
  %v19 = vld [vmem:[%s1] sm:$0xff]
  %v20 = vld [vmem:[%s1 + $0x8] sm:$0xff]
  %v21 = vld [vmem:[%s1 + $0x10] sm:$0xff]
  %v22 = vld [vmem:[%s1 + $0x18] sm:$0xf]
  %v23 = vld [vmem:[%s1 + $0x1c] sm:$0xff]
  %v24 = vld [vmem:[%s1 + $0x24] sm:$0xff]
  %v25 = vld [vmem:[%s1 + $0x2c] sm:$0xff]
  %v26 = vld [vmem:[%s1 + $0x34] sm:$0xf]
  %v27 = vld [vmem:[%s1 + $0x38] sm:$0xff]
  %v28 = vld [vmem:[%s1 + $0x40] sm:$0xff]
  %v29 = vld [vmem:[%s1 + $0x48] sm:$0xff]
  %v30 = vld [vmem:[%s1 + $0x50] sm:$0xf]
  %v31 = vld [vmem:[%s1 + $0x54] sm:$0xff]
  %v32 = vld [vmem:[%s1 + $0x5c] sm:$0xff]
  %v33 = vld [vmem:[%s1 + $0x64] sm:$0xff]
  %v34 = vld [vmem:[%s1 + $0x6c] sm:$0xf]
  %v35 = vld [vmem:[%s1 + $0x70] sm:$0xff]
  %v36 = vld [vmem:[%s1 + $0x78] sm:$0xff]
  %v37 = vld [vmem:[%s1 + $0x80] sm:$0xff]
  %v38 = vld [vmem:[%s1 + $0x88] sm:$0xf]
  %v39 = vld [vmem:[%s1 + $0x8c] sm:$0xff]
  %v40 = vld [vmem:[%s1 + $0x94] sm:$0xff]
  %v41 = vld [vmem:[%s1 + $0x9c] sm:$0xff]
  %v42 = vld [vmem:[%s1 + $0xa4] sm:$0xf]
  %v43 = vld [vmem:[%s1 + $0xa8] sm:$0xff]
  %v44 = vld [vmem:[%s1 + $0xb0] sm:$0xff]
  %v45 = vld [vmem:[%s1 + $0xb8] sm:$0xff]
  %v46 = vld [vmem:[%s1 + $0xc0] sm:$0xf]
  %v47 = vld [vmem:[%s1 + $0xc4] sm:$0xff]
  %v48 = vld [vmem:[%s1 + $0xcc] sm:$0xff]
  %v49 = vld [vmem:[%s1 + $0xd4] sm:$0xff]
  %v50 = vld [vmem:[%s1 + $0xdc] sm:$0xf]
  %v51 = vld [vmem:[%s1 + $0xe0] sm:$0xff]
  %v52 = vld [vmem:[%s1 + $0xe8] sm:$0xff]
  %v53 = vld [vmem:[%s1 + $0xf0] sm:$0xff]
  %v54 = vld [vmem:[%s1 + $0xf8] sm:$0xf]
  %v55 = vld [vmem:[%s1 + $0xfc] sm:$0xff]
  %v56 = vld [vmem:[%s1 + $0x104] sm:$0xff]
  %v57 = vld [vmem:[%s1 + $0x10c] sm:$0xff]
  %v58 = vld [vmem:[%s1 + $0x114] sm:$0xf]
  %v59 = vld [vmem:[%s1 + $0x118] sm:$0xff]
  %v60 = vld [vmem:[%s1 + $0x120] sm:$0xff]
  %v61 = vld [vmem:[%s1 + $0x128] sm:$0xff]
  %v62 = vld [vmem:[%s1 + $0x130] sm:$0xf]
  %v63 = vld [vmem:[%s1 + $0x134] sm:$0xff]
  %v64 = vld [vmem:[%s1 + $0x13c] sm:$0xff]
  %v65 = vld [vmem:[%s1 + $0x144] sm:$0xff]
  %v66 = vld [vmem:[%s1 + $0x14c] sm:$0xf]
  %v67 = vld [vmem:[%s1 + $0x150] sm:$0xff]
  %v68 = vld [vmem:[%s1 + $0x158] sm:$0xff]
  %v69 = vld [vmem:[%s1 + $0x160] sm:$0xff]
  %v70 = vld [vmem:[%s1 + $0x168] sm:$0xf]
  %v71 = vld [vmem:[%s1 + $0x16c] sm:$0xff]
  %v72 = vld [vmem:[%s1 + $0x174] sm:$0xff]
  %v73 = vld [vmem:[%s1 + $0x17c] sm:$0xff]
  %v74 = vld [vmem:[%s1 + $0x184] sm:$0xf]
  %v75 = vld [vmem:[%s1 + $0x188] sm:$0xff]
  %v76 = vld [vmem:[%s1 + $0x190] sm:$0xff]
  %v77 = vld [vmem:[%s1 + $0x198] sm:$0xff]
  %v78 = vld [vmem:[%s1 + $0x1a0] sm:$0xf]
  %v79 = vld [vmem:[%s1 + $0x1a4] sm:$0xff]
  %v80 = vld [vmem:[%s1 + $0x1ac] sm:$0xff]
  %v81 = vld [vmem:[%s1 + $0x1b4] sm:$0xff]
  %v82 = vld [vmem:[%s1 + $0x1bc] sm:$0xf]
  %v83 = vld [vmem:[%s1 + $0x1c0] sm:$0xff]
  %v84 = vld [vmem:[%s1 + $0x1c8] sm:$0xff]
  %v85 = vld [vmem:[%s1 + $0x1d0] sm:$0xff]
  %v86 = vld [vmem:[%s1 + $0x1d8] sm:$0xf]
  %v87 = vld [vmem:[%s1 + $0x1dc] sm:$0xff]
  %v88 = vld [vmem:[%s1 + $0x1e4] sm:$0xff]
  %v89 = vld [vmem:[%s1 + $0x1ec] sm:$0xff]
  %v90 = vld [vmem:[%s1 + $0x1f4] sm:$0xf]
  %v91 = vld [vmem:[%s1 + $0x1f8] sm:$0xff]
  %v92 = vld [vmem:[%s1 + $0x200] sm:$0xff]
  %v93 = vld [vmem:[%s1 + $0x208] sm:$0xff]
  %v94 = vld [vmem:[%s1 + $0x210] sm:$0xf]
  %v95 = vld [vmem:[%s1 + $0x214] sm:$0xff]
  %v96 = vld [vmem:[%s1 + $0x21c] sm:$0xff]
  %v97 = vld [vmem:[%s1 + $0x224] sm:$0xff]
  %v98 = vld [vmem:[%s1 + $0x22c] sm:$0xf]
  %v99 = vld [vmem:[%s1 + $0x230] sm:$0xff]
  %v100 = vld [vmem:[%s1 + $0x238] sm:$0xff]
  %v101 = vld [vmem:[%s1 + $0x240] sm:$0xff]
  %v102 = vld [vmem:[%s1 + $0x248] sm:$0xf]
  %v103 = vld [vmem:[%s1 + $0x24c] sm:$0xff]
  %v104 = vld [vmem:[%s1 + $0x254] sm:$0xff]
  %v105 = vld [vmem:[%s1 + $0x25c] sm:$0xff]
  %v106 = vld [vmem:[%s1 + $0x264] sm:$0xf]
  %v107 = vld [vmem:[%s1 + $0x268] sm:$0xff]
  %v108 = vld [vmem:[%s1 + $0x270] sm:$0xff]
  %v109 = vld [vmem:[%s1 + $0x278] sm:$0xff]
  %v110 = vld [vmem:[%s1 + $0x280] sm:$0xf]
  %v111 = vld [vmem:[%s1 + $0x284] sm:$0xff]
  %v112 = vld [vmem:[%s1 + $0x28c] sm:$0xff]
  %v113 = vld [vmem:[%s1 + $0x294] sm:$0xff]
  %v114 = vld [vmem:[%s1 + $0x29c] sm:$0xf]
  %v115 = vld [vmem:[%s1 + $0x2a0] sm:$0xff]
  %v116 = vld [vmem:[%s1 + $0x2a8] sm:$0xff]
  %v117 = vld [vmem:[%s1 + $0x2b0] sm:$0xff]
  %v118 = vld [vmem:[%s1 + $0x2b8] sm:$0xf]
  %v119 = vld [vmem:[%s1 + $0x2bc] sm:$0xff]
  %v120 = vld [vmem:[%s1 + $0x2c4] sm:$0xff]
  %v121 = vld [vmem:[%s1 + $0x2cc] sm:$0xff]
  %v122 = vld [vmem:[%s1 + $0x2d4] sm:$0xf]
  %v123 = vld [vmem:[%s1 + $0x2d8] sm:$0xff]
  %v124 = vld [vmem:[%s1 + $0x2e0] sm:$0xff]
  %v125 = vld [vmem:[%s1 + $0x2e8] sm:$0xff]
  %v126 = vld [vmem:[%s1 + $0x2f0] sm:$0xf]
  %v127 = vld [vmem:[%s1 + $0x2f4] sm:$0xff]
  %v128 = vld [vmem:[%s1 + $0x2fc] sm:$0xff]
  %v129 = vld [vmem:[%s1 + $0x304] sm:$0xff]
  %v130 = vld [vmem:[%s1 + $0x30c] sm:$0xf]
  %v131 = vld [vmem:[%s1 + $0x310] sm:$0xff]
  %v132 = vld [vmem:[%s1 + $0x318] sm:$0xff]
  %v133 = vld [vmem:[%s1 + $0x320] sm:$0xff]
  %v134 = vld [vmem:[%s1 + $0x328] sm:$0xf]
  %v135 = vld [vmem:[%s1 + $0x32c] sm:$0xff]
  %v136 = vld [vmem:[%s1 + $0x334] sm:$0xff]
  %v137 = vld [vmem:[%s1 + $0x33c] sm:$0xff]
  %v138 = vld [vmem:[%s1 + $0x344] sm:$0xf]
  %v139 = vld [vmem:[%s1 + $0x348] sm:$0xff]
  %v140 = vld [vmem:[%s1 + $0x350] sm:$0xff]
  %v141 = vld [vmem:[%s1 + $0x358] sm:$0xff]
  %v142 = vld [vmem:[%s1 + $0x360] sm:$0xf]
  %v143 = vld [vmem:[%s1 + $0x364] sm:$0xff]
  %v144 = vld [vmem:[%s1 + $0x36c] sm:$0xff]
  %v145 = vld [vmem:[%s1 + $0x374] sm:$0xff]
  %v146 = vld [vmem:[%s1 + $0x37c] sm:$0xf]
  %v147 = vld [vmem:[%s2] sm:$0xff]
  %v148 = vld [vmem:[%s2 + $0x8] sm:$0xff]
  %v149 = vld [vmem:[%s2 + $0x10] sm:$0xff]
  %v150 = vld [vmem:[%s2 + $0x18] sm:$0xff]
  %152 = vset.pattern.permute.xlu0 0
  %153 = vperm.xlu0 %152, %v147
  %v154 = vpop.permute.xlu0 %153
  %157 = vset.pattern.permute.xlu0 0
  %158 = vperm.xlu0 %157, %v148
  %v159 = vpop.permute.xlu0 %158
  %162 = vset.pattern.permute.xlu0 0
  %163 = vperm.xlu0 %162, %v149
  %v164 = vpop.permute.xlu0 %163
  %167 = vset.pattern.permute.xlu0 0
  %168 = vperm.xlu0 %167, %v150
  %v169 = vpop.permute.xlu0 %168
  %v175 = vunpack.c.l.b16 %v15
  %v176 = vunpack.c.h.b16 %v15
  %v177 = vunpack.c.l.b16 %v16
  %v178 = vunpack.c.h.b16 %v16
  %v179 = vunpack.c.l.b16 %v17
  %v180 = vunpack.c.h.b16 %v17
  %v181 = vunpack.c.l.b16 %v18
  %v182 = vunpack.c.h.b16 %v18
  %v183 = vpack.c.b16 %v177, %v175
  %v184 = vpack.c.b16 %v178, %v176
  %v185 = vpack.c.b16 %v181, %v179
  %v186 = vpack.c.b16 %v182, %v180
  %v319 = vunpack.c.l.b16 %v19
  %v320 = vunpack.c.h.b16 %v19
  %v321 = vunpack.c.l.b16 %v20
  %v322 = vunpack.c.h.b16 %v20
  %v323 = vunpack.c.l.b16 %v21
  %v324 = vunpack.c.h.b16 %v21
  %v325 = vunpack.c.l.b16 %v22
  %v326 = vunpack.c.l.b16 %v23
  %v327 = vunpack.c.h.b16 %v23
  %v328 = vunpack.c.l.b16 %v24
  %v329 = vunpack.c.h.b16 %v24
  %v330 = vunpack.c.l.b16 %v25
  %v331 = vunpack.c.h.b16 %v25
  %v332 = vunpack.c.l.b16 %v26
  %v333 = vunpack.c.l.b16 %v27
  %v334 = vunpack.c.h.b16 %v27
  %v335 = vunpack.c.l.b16 %v28
  %v336 = vunpack.c.h.b16 %v28
  %v337 = vunpack.c.l.b16 %v29
  %v338 = vunpack.c.h.b16 %v29
  %v339 = vunpack.c.l.b16 %v30
  %v340 = vunpack.c.l.b16 %v31
  %v341 = vunpack.c.h.b16 %v31
  %v342 = vunpack.c.l.b16 %v32
  %v343 = vunpack.c.h.b16 %v32
  %v344 = vunpack.c.l.b16 %v33
  %v345 = vunpack.c.h.b16 %v33
  %v346 = vunpack.c.l.b16 %v34
  %v347 = vunpack.c.l.b16 %v35
  %v348 = vunpack.c.h.b16 %v35
  %v349 = vunpack.c.l.b16 %v36
  %v350 = vunpack.c.h.b16 %v36
  %v351 = vunpack.c.l.b16 %v37
  %v352 = vunpack.c.h.b16 %v37
  %v353 = vunpack.c.l.b16 %v38
  %v354 = vunpack.c.l.b16 %v39
  %v355 = vunpack.c.h.b16 %v39
  %v356 = vunpack.c.l.b16 %v40
  %v357 = vunpack.c.h.b16 %v40
  %v358 = vunpack.c.l.b16 %v41
  %v359 = vunpack.c.h.b16 %v41
  %v360 = vunpack.c.l.b16 %v42
  %v361 = vunpack.c.l.b16 %v43
  %v362 = vunpack.c.h.b16 %v43
  %v363 = vunpack.c.l.b16 %v44
  %v364 = vunpack.c.h.b16 %v44
  %v365 = vunpack.c.l.b16 %v45
  %v366 = vunpack.c.h.b16 %v45
  %v367 = vunpack.c.l.b16 %v46
  %v368 = vunpack.c.l.b16 %v47
  %v369 = vunpack.c.h.b16 %v47
  %v370 = vunpack.c.l.b16 %v48
  %v371 = vunpack.c.h.b16 %v48
  %v372 = vunpack.c.l.b16 %v49
  %v373 = vunpack.c.h.b16 %v49
  %v374 = vunpack.c.l.b16 %v50
  %v375 = vunpack.c.l.b16 %v51
  %v376 = vunpack.c.h.b16 %v51
  %v377 = vunpack.c.l.b16 %v52
  %v378 = vunpack.c.h.b16 %v52
  %v379 = vunpack.c.l.b16 %v53
  %v380 = vunpack.c.h.b16 %v53
  %v381 = vunpack.c.l.b16 %v54
  %v382 = vunpack.c.l.b16 %v55
  %v383 = vunpack.c.h.b16 %v55
  %v384 = vunpack.c.l.b16 %v56
  %v385 = vunpack.c.h.b16 %v56
  %v386 = vunpack.c.l.b16 %v57
  %v387 = vunpack.c.h.b16 %v57
  %v388 = vunpack.c.l.b16 %v58
  %v389 = vunpack.c.l.b16 %v59
  %v390 = vunpack.c.h.b16 %v59
  %v391 = vunpack.c.l.b16 %v60
  %v392 = vunpack.c.h.b16 %v60
  %v393 = vunpack.c.l.b16 %v61
  %v394 = vunpack.c.h.b16 %v61
  %v395 = vunpack.c.l.b16 %v62
  %v396 = vunpack.c.l.b16 %v63
  %v397 = vunpack.c.h.b16 %v63
  %v398 = vunpack.c.l.b16 %v64
  %v399 = vunpack.c.h.b16 %v64
  %v400 = vunpack.c.l.b16 %v65
  %v401 = vunpack.c.h.b16 %v65
  %v402 = vunpack.c.l.b16 %v66
  %v403 = vunpack.c.l.b16 %v67
  %v404 = vunpack.c.h.b16 %v67
  %v405 = vunpack.c.l.b16 %v68
  %v406 = vunpack.c.h.b16 %v68
  %v407 = vunpack.c.l.b16 %v69
  %v408 = vunpack.c.h.b16 %v69
  %v409 = vunpack.c.l.b16 %v70
  %v410 = vunpack.c.l.b16 %v71
  %v411 = vunpack.c.h.b16 %v71
  %v412 = vunpack.c.l.b16 %v72
  %v413 = vunpack.c.h.b16 %v72
  %v414 = vunpack.c.l.b16 %v73
  %v415 = vunpack.c.h.b16 %v73
  %v416 = vunpack.c.l.b16 %v74
  %v417 = vunpack.c.l.b16 %v75
  %v418 = vunpack.c.h.b16 %v75
  %v419 = vunpack.c.l.b16 %v76
  %v420 = vunpack.c.h.b16 %v76
  %v421 = vunpack.c.l.b16 %v77
  %v422 = vunpack.c.h.b16 %v77
  %v423 = vunpack.c.l.b16 %v78
  %v424 = vunpack.c.l.b16 %v79
  %v425 = vunpack.c.h.b16 %v79
  %v426 = vunpack.c.l.b16 %v80
  %v427 = vunpack.c.h.b16 %v80
  %v428 = vunpack.c.l.b16 %v81
  %v429 = vunpack.c.h.b16 %v81
  %v430 = vunpack.c.l.b16 %v82
  %v431 = vunpack.c.l.b16 %v83
  %v432 = vunpack.c.h.b16 %v83
  %v433 = vunpack.c.l.b16 %v84
  %v434 = vunpack.c.h.b16 %v84
  %v435 = vunpack.c.l.b16 %v85
  %v436 = vunpack.c.h.b16 %v85
  %v437 = vunpack.c.l.b16 %v86
  %v438 = vunpack.c.l.b16 %v87
  %v439 = vunpack.c.h.b16 %v87
  %v440 = vunpack.c.l.b16 %v88
  %v441 = vunpack.c.h.b16 %v88
  %v442 = vunpack.c.l.b16 %v89
  %v443 = vunpack.c.h.b16 %v89
  %v444 = vunpack.c.l.b16 %v90
  %v445 = vunpack.c.l.b16 %v91
  %v446 = vunpack.c.h.b16 %v91
  %v447 = vunpack.c.l.b16 %v92
  %v448 = vunpack.c.h.b16 %v92
  %v449 = vunpack.c.l.b16 %v93
  %v450 = vunpack.c.h.b16 %v93
  %v451 = vunpack.c.l.b16 %v94
  %v452 = vunpack.c.l.b16 %v95
  %v453 = vunpack.c.h.b16 %v95
  %v454 = vunpack.c.l.b16 %v96
  %v455 = vunpack.c.h.b16 %v96
  %v456 = vunpack.c.l.b16 %v97
  %v457 = vunpack.c.h.b16 %v97
  %v458 = vunpack.c.l.b16 %v98
  %v459 = vunpack.c.l.b16 %v99
  %v460 = vunpack.c.h.b16 %v99
  %v461 = vunpack.c.l.b16 %v100
  %v462 = vunpack.c.h.b16 %v100
  %v463 = vunpack.c.l.b16 %v101
  %v464 = vunpack.c.h.b16 %v101
  %v465 = vunpack.c.l.b16 %v102
  %v466 = vunpack.c.l.b16 %v103
  %v467 = vunpack.c.h.b16 %v103
  %v468 = vunpack.c.l.b16 %v104
  %v469 = vunpack.c.h.b16 %v104
  %v470 = vunpack.c.l.b16 %v105
  %v471 = vunpack.c.h.b16 %v105
  %v472 = vunpack.c.l.b16 %v106
  %v473 = vunpack.c.l.b16 %v107
  %v474 = vunpack.c.h.b16 %v107
  %v475 = vunpack.c.l.b16 %v108
  %v476 = vunpack.c.h.b16 %v108
  %v477 = vunpack.c.l.b16 %v109
  %v478 = vunpack.c.h.b16 %v109
  %v479 = vunpack.c.l.b16 %v110
  %v480 = vunpack.c.l.b16 %v111
  %v481 = vunpack.c.h.b16 %v111
  %v482 = vunpack.c.l.b16 %v112
  %v483 = vunpack.c.h.b16 %v112
  %v484 = vunpack.c.l.b16 %v113
  %v485 = vunpack.c.h.b16 %v113
  %v486 = vunpack.c.l.b16 %v114
  %v487 = vunpack.c.l.b16 %v115
  %v488 = vunpack.c.h.b16 %v115
  %v489 = vunpack.c.l.b16 %v116
  %v490 = vunpack.c.h.b16 %v116
  %v491 = vunpack.c.l.b16 %v117
  %v492 = vunpack.c.h.b16 %v117
  %v493 = vunpack.c.l.b16 %v118
  %v494 = vunpack.c.l.b16 %v119
  %v495 = vunpack.c.h.b16 %v119
  %v496 = vunpack.c.l.b16 %v120
  %v497 = vunpack.c.h.b16 %v120
  %v498 = vunpack.c.l.b16 %v121
  %v499 = vunpack.c.h.b16 %v121
  %v500 = vunpack.c.l.b16 %v122
  %v501 = vunpack.c.l.b16 %v123
  %v502 = vunpack.c.h.b16 %v123
  %v503 = vunpack.c.l.b16 %v124
  %v504 = vunpack.c.h.b16 %v124
  %v505 = vunpack.c.l.b16 %v125
  %v506 = vunpack.c.h.b16 %v125
  %v507 = vunpack.c.l.b16 %v126
  %v508 = vunpack.c.l.b16 %v127
  %v509 = vunpack.c.h.b16 %v127
  %v510 = vunpack.c.l.b16 %v128
  %v511 = vunpack.c.h.b16 %v128
  %v512 = vunpack.c.l.b16 %v129
  %v513 = vunpack.c.h.b16 %v129
  %v514 = vunpack.c.l.b16 %v130
  %v515 = vunpack.c.l.b16 %v131
  %v516 = vunpack.c.h.b16 %v131
  %v517 = vunpack.c.l.b16 %v132
  %v518 = vunpack.c.h.b16 %v132
  %v519 = vunpack.c.l.b16 %v133
  %v520 = vunpack.c.h.b16 %v133
  %v521 = vunpack.c.l.b16 %v134
  %v522 = vunpack.c.l.b16 %v135
  %v523 = vunpack.c.h.b16 %v135
  %v524 = vunpack.c.l.b16 %v136
  %v525 = vunpack.c.h.b16 %v136
  %v526 = vunpack.c.l.b16 %v137
  %v527 = vunpack.c.h.b16 %v137
  %v528 = vunpack.c.l.b16 %v138
  %v529 = vunpack.c.l.b16 %v139
  %v530 = vunpack.c.h.b16 %v139
  %v531 = vunpack.c.l.b16 %v140
  %v532 = vunpack.c.h.b16 %v140
  %v533 = vunpack.c.l.b16 %v141
  %v534 = vunpack.c.h.b16 %v141
  %v535 = vunpack.c.l.b16 %v142
  %v536 = vunpack.c.l.b16 %v143
  %v537 = vunpack.c.h.b16 %v143
  %v538 = vunpack.c.l.b16 %v144
  %v539 = vunpack.c.h.b16 %v144
  %v540 = vunpack.c.l.b16 %v145
  %v541 = vunpack.c.h.b16 %v145
  %v542 = vunpack.c.l.b16 %v146
  %v543 = vpack.c.b16 %v326, %v319
  %v544 = vpack.c.b16 %v327, %v320
  %v545 = vpack.c.b16 %v328, %v321
  %v546 = vpack.c.b16 %v329, %v322
  %v547 = vpack.c.b16 %v330, %v323
  %v548 = vpack.c.b16 %v331, %v324
  %v549 = vpack.c.b16 %v332, %v325
  %v550 = vpack.c.b16 %v340, %v333
  %v551 = vpack.c.b16 %v341, %v334
  %v552 = vpack.c.b16 %v342, %v335
  %v553 = vpack.c.b16 %v343, %v336
  %v554 = vpack.c.b16 %v344, %v337
  %v555 = vpack.c.b16 %v345, %v338
  %v556 = vpack.c.b16 %v346, %v339
  %v557 = vpack.c.b16 %v354, %v347
  %v558 = vpack.c.b16 %v355, %v348
  %v559 = vpack.c.b16 %v356, %v349
  %v560 = vpack.c.b16 %v357, %v350
  %v561 = vpack.c.b16 %v358, %v351
  %v562 = vpack.c.b16 %v359, %v352
  %v563 = vpack.c.b16 %v360, %v353
  %v564 = vpack.c.b16 %v368, %v361
  %v565 = vpack.c.b16 %v369, %v362
  %v566 = vpack.c.b16 %v370, %v363
  %v567 = vpack.c.b16 %v371, %v364
  %v568 = vpack.c.b16 %v372, %v365
  %v569 = vpack.c.b16 %v373, %v366
  %v570 = vpack.c.b16 %v374, %v367
  %v571 = vpack.c.b16 %v382, %v375
  %v572 = vpack.c.b16 %v383, %v376
  %v573 = vpack.c.b16 %v384, %v377
  %v574 = vpack.c.b16 %v385, %v378
  %v575 = vpack.c.b16 %v386, %v379
  %v576 = vpack.c.b16 %v387, %v380
  %v577 = vpack.c.b16 %v388, %v381
  %v578 = vpack.c.b16 %v396, %v389
  %v579 = vpack.c.b16 %v397, %v390
  %v580 = vpack.c.b16 %v398, %v391
  %v581 = vpack.c.b16 %v399, %v392
  %v582 = vpack.c.b16 %v400, %v393
  %v583 = vpack.c.b16 %v401, %v394
  %v584 = vpack.c.b16 %v402, %v395
  %v585 = vpack.c.b16 %v410, %v403
  %v586 = vpack.c.b16 %v411, %v404
  %v587 = vpack.c.b16 %v412, %v405
  %v588 = vpack.c.b16 %v413, %v406
  %v589 = vpack.c.b16 %v414, %v407
  %v590 = vpack.c.b16 %v415, %v408
  %v591 = vpack.c.b16 %v416, %v409
  %v592 = vpack.c.b16 %v424, %v417
  %v593 = vpack.c.b16 %v425, %v418
  %v594 = vpack.c.b16 %v426, %v419
  %v595 = vpack.c.b16 %v427, %v420
  %v596 = vpack.c.b16 %v428, %v421
  %v597 = vpack.c.b16 %v429, %v422
  %v598 = vpack.c.b16 %v430, %v423
  %v599 = vpack.c.b16 %v438, %v431
  %v600 = vpack.c.b16 %v439, %v432
  %v601 = vpack.c.b16 %v440, %v433
  %v602 = vpack.c.b16 %v441, %v434
  %v603 = vpack.c.b16 %v442, %v435
  %v604 = vpack.c.b16 %v443, %v436
  %v605 = vpack.c.b16 %v444, %v437
  %v606 = vpack.c.b16 %v452, %v445
  %v607 = vpack.c.b16 %v453, %v446
  %v608 = vpack.c.b16 %v454, %v447
  %v609 = vpack.c.b16 %v455, %v448
  %v610 = vpack.c.b16 %v456, %v449
  %v611 = vpack.c.b16 %v457, %v450
  %v612 = vpack.c.b16 %v458, %v451
  %v613 = vpack.c.b16 %v466, %v459
  %v614 = vpack.c.b16 %v467, %v460
  %v615 = vpack.c.b16 %v468, %v461
  %v616 = vpack.c.b16 %v469, %v462
  %v617 = vpack.c.b16 %v470, %v463
  %v618 = vpack.c.b16 %v471, %v464
  %v619 = vpack.c.b16 %v472, %v465
  %v620 = vpack.c.b16 %v480, %v473
  %v621 = vpack.c.b16 %v481, %v474
  %v622 = vpack.c.b16 %v482, %v475
  %v623 = vpack.c.b16 %v483, %v476
  %v624 = vpack.c.b16 %v484, %v477
  %v625 = vpack.c.b16 %v485, %v478
  %v626 = vpack.c.b16 %v486, %v479
  %v627 = vpack.c.b16 %v494, %v487
  %v628 = vpack.c.b16 %v495, %v488
  %v629 = vpack.c.b16 %v496, %v489
  %v630 = vpack.c.b16 %v497, %v490
  %v631 = vpack.c.b16 %v498, %v491
  %v632 = vpack.c.b16 %v499, %v492
  %v633 = vpack.c.b16 %v500, %v493
  %v634 = vpack.c.b16 %v508, %v501
  %v635 = vpack.c.b16 %v509, %v502
  %v636 = vpack.c.b16 %v510, %v503
  %v637 = vpack.c.b16 %v511, %v504
  %v638 = vpack.c.b16 %v512, %v505
  %v639 = vpack.c.b16 %v513, %v506
  %v640 = vpack.c.b16 %v514, %v507
  %v641 = vpack.c.b16 %v522, %v515
  %v642 = vpack.c.b16 %v523, %v516
  %v643 = vpack.c.b16 %v524, %v517
  %v644 = vpack.c.b16 %v525, %v518
  %v645 = vpack.c.b16 %v526, %v519
  %v646 = vpack.c.b16 %v527, %v520
  %v647 = vpack.c.b16 %v528, %v521
  %v648 = vpack.c.b16 %v536, %v529
  %v649 = vpack.c.b16 %v537, %v530
  %v650 = vpack.c.b16 %v538, %v531
  %v651 = vpack.c.b16 %v539, %v532
  %v652 = vpack.c.b16 %v540, %v533
  %v653 = vpack.c.b16 %v541, %v534
  %v654 = vpack.c.b16 %v542, %v535
  %767 = vmatprep.subr.bf16.mxu0 %v544
  %768 = vmatpush1.bf16.msra.mxu0 %v543
  %769 = vmatprep.subr.bf16.mxu0 %v551
  %770 = vmatpush1.bf16.msra.mxu0 %v550
  %771 = vmatprep.subr.bf16.mxu0 %v558
  %772 = vmatpush1.bf16.msra.mxu0 %v557
  %773 = vmatprep.subr.bf16.mxu0 %v565
  %774 = vmatpush1.bf16.msra.mxu0 %v564
  %775 = vmatprep.subr.bf16.mxu0 %v572
  %776 = vmatpush1.bf16.msra.mxu0 %v571
  %777 = vmatprep.subr.bf16.mxu0 %v579
  %778 = vmatpush1.bf16.msra.mxu0 %v578
  %779 = vmatprep.subr.bf16.mxu0 %v586
  %780 = vmatpush1.bf16.msra.mxu0 %v585
  %781 = vmatprep.subr.bf16.mxu0 %v593
  %782 = vmatpush1.bf16.msra.mxu0 %v592
  %783 = vmatprep.subr.bf16.mxu0 %v600
  %784 = vmatpush1.bf16.msra.mxu0 %v599
  %785 = vmatprep.subr.bf16.mxu0 %v607
  %786 = vmatpush1.bf16.msra.mxu0 %v606
  %787 = vmatprep.subr.bf16.mxu0 %v614
  %788 = vmatpush1.bf16.msra.mxu0 %v613
  %789 = vmatprep.subr.bf16.mxu0 %v621
  %790 = vmatpush1.bf16.msra.mxu0 %v620
  %791 = vmatprep.subr.bf16.mxu0 %v628
  %792 = vmatpush1.bf16.msra.mxu0 %v627
  %793 = vmatprep.subr.bf16.mxu0 %v635
  %794 = vmatpush1.bf16.msra.mxu0 %v634
  %795 = vmatprep.subr.bf16.mxu0 %v642
  %796 = vmatpush1.bf16.msra.mxu0 %v641
  %797 = vmatprep.subr.bf16.mxu0 %v649
  %798 = vmatpush1.bf16.msra.mxu0 %v648
  %799 = vmatprep.mubr.bf16.mxu0 %v184
  %800 = vmatmul.mubr.bf16.gmra.mrb[0].mxu0 %v183
  %v801 = vpop.f32.mrb[0].mxu0
  %v802 = vadd.f32 %v154, %v801
  %v803 = vpop.f32.mrb[0].mxu0
  %v804 = vadd.f32 %v154, %v803
  %v805 = vpop.f32.mrb[0].mxu0
  %v806 = vadd.f32 %v159, %v805
  %v807 = vpop.f32.mrb[0].mxu0
  %v808 = vadd.f32 %v159, %v807
  %809 = vmatprep.mubr.bf16.mxu0 %v186
  %810 = vmatmul.mubr.bf16.gmra.mrb[0].mxu0 %v185
  %v811 = vpop.f32.mrb[0].mxu0
  %v812 = vadd.f32 %v164, %v811
  %v813 = vpop.f32.mrb[0].mxu0
  %v814 = vadd.f32 %v164, %v813
  %v815 = vpop.f32.mrb[0].mxu0
  %v816 = vadd.f32 %v169, %v815
  %v817 = vpop.f32.mrb[0].mxu0
  %v818 = vadd.f32 %v169, %v817
  %819 = vdwg.mxu0
  %820 = vmatprep.subr.bf16.mxu0 %v546
  %821 = vmatpush1.bf16.msra.mxu0 %v545
  %822 = vmatprep.subr.bf16.mxu0 %v553
  %823 = vmatpush1.bf16.msra.mxu0 %v552
  %824 = vmatprep.subr.bf16.mxu0 %v560
  %825 = vmatpush1.bf16.msra.mxu0 %v559
  %826 = vmatprep.subr.bf16.mxu0 %v567
  %827 = vmatpush1.bf16.msra.mxu0 %v566
  %828 = vmatprep.subr.bf16.mxu0 %v574
  %829 = vmatpush1.bf16.msra.mxu0 %v573
  %830 = vmatprep.subr.bf16.mxu0 %v581
  %831 = vmatpush1.bf16.msra.mxu0 %v580
  %832 = vmatprep.subr.bf16.mxu0 %v588
  %833 = vmatpush1.bf16.msra.mxu0 %v587
  %834 = vmatprep.subr.bf16.mxu0 %v595
  %835 = vmatpush1.bf16.msra.mxu0 %v594
  %836 = vmatprep.subr.bf16.mxu0 %v602
  %837 = vmatpush1.bf16.msra.mxu0 %v601
  %838 = vmatprep.subr.bf16.mxu0 %v609
  %839 = vmatpush1.bf16.msra.mxu0 %v608
  %840 = vmatprep.subr.bf16.mxu0 %v616
  %841 = vmatpush1.bf16.msra.mxu0 %v615
  %842 = vmatprep.subr.bf16.mxu0 %v623
  %843 = vmatpush1.bf16.msra.mxu0 %v622
  %844 = vmatprep.subr.bf16.mxu0 %v630
  %845 = vmatpush1.bf16.msra.mxu0 %v629
  %846 = vmatprep.subr.bf16.mxu0 %v637
  %847 = vmatpush1.bf16.msra.mxu0 %v636
  %848 = vmatprep.subr.bf16.mxu0 %v644
  %849 = vmatpush1.bf16.msra.mxu0 %v643
  %850 = vmatprep.subr.bf16.mxu0 %v651
  %851 = vmatpush1.bf16.msra.mxu0 %v650
  %852 = vmatprep.mubr.bf16.mxu0 %v184
  %853 = vmatmul.mubr.bf16.gmra.mrb[0].mxu0 %v183
  %v854 = vpop.f32.mrb[0].mxu0
  %v855 = vadd.f32 %v154, %v854
  %v856 = vpop.f32.mrb[0].mxu0
  %v857 = vadd.f32 %v154, %v856
  %v858 = vpop.f32.mrb[0].mxu0
  %v859 = vadd.f32 %v159, %v858
  %v860 = vpop.f32.mrb[0].mxu0
  %v861 = vadd.f32 %v159, %v860
  %862 = vmatprep.mubr.bf16.mxu0 %v186
  %863 = vmatmul.mubr.bf16.gmra.mrb[0].mxu0 %v185
  %v864 = vpop.f32.mrb[0].mxu0
  %v865 = vadd.f32 %v164, %v864
  %v866 = vpop.f32.mrb[0].mxu0
  %v867 = vadd.f32 %v164, %v866
  %v868 = vpop.f32.mrb[0].mxu0
  %v869 = vadd.f32 %v169, %v868
  %v870 = vpop.f32.mrb[0].mxu0
  %v871 = vadd.f32 %v169, %v870
  %872 = vdwg.mxu0
  %873 = vmatprep.subr.bf16.mxu0 %v548
  %874 = vmatpush1.bf16.msra.mxu0 %v547
  %875 = vmatprep.subr.bf16.mxu0 %v555
  %876 = vmatpush1.bf16.msra.mxu0 %v554
  %877 = vmatprep.subr.bf16.mxu0 %v562
  %878 = vmatpush1.bf16.msra.mxu0 %v561
  %879 = vmatprep.subr.bf16.mxu0 %v569
  %880 = vmatpush1.bf16.msra.mxu0 %v568
  %881 = vmatprep.subr.bf16.mxu0 %v576
  %882 = vmatpush1.bf16.msra.mxu0 %v575
  %883 = vmatprep.subr.bf16.mxu0 %v583
  %884 = vmatpush1.bf16.msra.mxu0 %v582
  %885 = vmatprep.subr.bf16.mxu0 %v590
  %886 = vmatpush1.bf16.msra.mxu0 %v589
  %887 = vmatprep.subr.bf16.mxu0 %v597
  %888 = vmatpush1.bf16.msra.mxu0 %v596
  %889 = vmatprep.subr.bf16.mxu0 %v604
  %890 = vmatpush1.bf16.msra.mxu0 %v603
  %891 = vmatprep.subr.bf16.mxu0 %v611
  %892 = vmatpush1.bf16.msra.mxu0 %v610
  %893 = vmatprep.subr.bf16.mxu0 %v618
  %894 = vmatpush1.bf16.msra.mxu0 %v617
  %895 = vmatprep.subr.bf16.mxu0 %v625
  %896 = vmatpush1.bf16.msra.mxu0 %v624
  %897 = vmatprep.subr.bf16.mxu0 %v632
  %898 = vmatpush1.bf16.msra.mxu0 %v631
  %899 = vmatprep.subr.bf16.mxu0 %v639
  %900 = vmatpush1.bf16.msra.mxu0 %v638
  %901 = vmatprep.subr.bf16.mxu0 %v646
  %902 = vmatpush1.bf16.msra.mxu0 %v645
  %903 = vmatprep.subr.bf16.mxu0 %v653
  %904 = vmatpush1.bf16.msra.mxu0 %v652
  %905 = vmatprep.mubr.bf16.mxu0 %v184
  %906 = vmatmul.mubr.bf16.gmra.mrb[0].mxu0 %v183
  %v907 = vpop.f32.mrb[0].mxu0
  %v908 = vadd.f32 %v154, %v907
  %v909 = vpop.f32.mrb[0].mxu0
  %v910 = vadd.f32 %v154, %v909
  %v911 = vpop.f32.mrb[0].mxu0
  %v912 = vadd.f32 %v159, %v911
  %v913 = vpop.f32.mrb[0].mxu0
  %v914 = vadd.f32 %v159, %v913
  %915 = vmatprep.mubr.bf16.mxu0 %v186
  %916 = vmatmul.mubr.bf16.gmra.mrb[0].mxu0 %v185
  %v917 = vpop.f32.mrb[0].mxu0
  %v918 = vadd.f32 %v164, %v917
  %v919 = vpop.f32.mrb[0].mxu0
  %v920 = vadd.f32 %v164, %v919
  %v921 = vpop.f32.mrb[0].mxu0
  %v922 = vadd.f32 %v169, %v921
  %v923 = vpop.f32.mrb[0].mxu0
  %v924 = vadd.f32 %v169, %v923
  %925 = vdwg.mxu0
  %926 = vmatprep.subr.bf16.mxu0 0
  %927 = vmatpush1.bf16.msra.mxu0 %v549
  %928 = vmatprep.subr.bf16.mxu0 0
  %929 = vmatpush1.bf16.msra.mxu0 %v556
  %930 = vmatprep.subr.bf16.mxu0 0
  %931 = vmatpush1.bf16.msra.mxu0 %v563
  %932 = vmatprep.subr.bf16.mxu0 0
  %933 = vmatpush1.bf16.msra.mxu0 %v570
  %934 = vmatprep.subr.bf16.mxu0 0
  %935 = vmatpush1.bf16.msra.mxu0 %v577
  %936 = vmatprep.subr.bf16.mxu0 0
  %937 = vmatpush1.bf16.msra.mxu0 %v584
  %938 = vmatprep.subr.bf16.mxu0 0
  %939 = vmatpush1.bf16.msra.mxu0 %v591
  %940 = vmatprep.subr.bf16.mxu0 0
  %941 = vmatpush1.bf16.msra.mxu0 %v598
  %942 = vmatprep.subr.bf16.mxu0 0
  %943 = vmatpush1.bf16.msra.mxu0 %v605
  %944 = vmatprep.subr.bf16.mxu0 0
  %945 = vmatpush1.bf16.msra.mxu0 %v612
  %946 = vmatprep.subr.bf16.mxu0 0
  %947 = vmatpush1.bf16.msra.mxu0 %v619
  %948 = vmatprep.subr.bf16.mxu0 0
  %949 = vmatpush1.bf16.msra.mxu0 %v626
  %950 = vmatprep.subr.bf16.mxu0 0
  %951 = vmatpush1.bf16.msra.mxu0 %v633
  %952 = vmatprep.subr.bf16.mxu0 0
  %953 = vmatpush1.bf16.msra.mxu0 %v640
  %954 = vmatprep.subr.bf16.mxu0 0
  %955 = vmatpush1.bf16.msra.mxu0 %v647
  %956 = vmatprep.subr.bf16.mxu0 0
  %957 = vmatpush1.bf16.msra.mxu0 %v654
  %958 = vmatprep.mubr.bf16.mxu0 %v184
  %959 = vmatmul.mubr.bf16.gmra.mrb[0].mxu0 %v183
  %v960 = vpop.f32.mrb[0].mxu0
  %v961 = vadd.f32 %v154, %v960
  %v962 = vpop.f32.mrb[0].mxu0
  %v963 = vpop.f32.mrb[0].mxu0
  %v964 = vadd.f32 %v159, %v963
  %v965 = vpop.f32.mrb[0].mxu0
  %966 = vmatprep.mubr.bf16.mxu0 %v186
  %967 = vmatmul.mubr.bf16.gmra.mrb[0].mxu0 %v185
  %v968 = vpop.f32.mrb[0].mxu0
  %v969 = vadd.f32 %v164, %v968
  %v970 = vpop.f32.mrb[0].mxu0
  %v971 = vpop.f32.mrb[0].mxu0
  %v972 = vadd.f32 %v169, %v971
  %v973 = vpop.f32.mrb[0].mxu0
  %974 = vdwg.mxu0
  %v975 = vmax.f32 %v802, 0.0
  %v976 = vmax.f32 %v804, 0.0
  %v977 = vmax.f32 %v855, 0.0
  %v978 = vmax.f32 %v857, 0.0
  %v979 = vmax.f32 %v908, 0.0
  %v980 = vmax.f32 %v910, 0.0
  %v981 = vmax.f32 %v961, 0.0
  %v982 = vmax.f32 %v806, 0.0
  %v983 = vmax.f32 %v808, 0.0
  %v984 = vmax.f32 %v859, 0.0
  %v985 = vmax.f32 %v861, 0.0
  %v986 = vmax.f32 %v912, 0.0
  %v987 = vmax.f32 %v914, 0.0
  %v988 = vmax.f32 %v964, 0.0
  %v989 = vmax.f32 %v812, 0.0
  %v990 = vmax.f32 %v814, 0.0
  %v991 = vmax.f32 %v865, 0.0
  %v992 = vmax.f32 %v867, 0.0
  %v993 = vmax.f32 %v918, 0.0
  %v994 = vmax.f32 %v920, 0.0
  %v995 = vmax.f32 %v969, 0.0
  %v996 = vmax.f32 %v816, 0.0
  %v997 = vmax.f32 %v818, 0.0
  %v998 = vmax.f32 %v869, 0.0
  %v999 = vmax.f32 %v871, 0.0
  %v1000 = vmax.f32 %v922, 0.0
  %v1001 = vmax.f32 %v924, 0.0
  %v1002 = vmax.f32 %v972, 0.0
  %v1003 = vpack.c.bf16 %v982, %v975
  %v1004 = vpack.c.bf16 %v983, %v976
  %v1005 = vpack.c.bf16 %v984, %v977
  %v1006 = vpack.c.bf16 %v985, %v978
  %v1007 = vpack.c.bf16 %v986, %v979
  %v1008 = vpack.c.bf16 %v987, %v980
  %v1009 = vpack.c.bf16 %v988, %v981
  %v1010 = vpack.c.bf16 %v996, %v989
  %v1011 = vpack.c.bf16 %v997, %v990
  %v1012 = vpack.c.bf16 %v998, %v991
  %v1013 = vpack.c.bf16 %v999, %v992
  %v1014 = vpack.c.bf16 %v1000, %v993
  %v1015 = vpack.c.bf16 %v1001, %v994
  %v1016 = vpack.c.bf16 %v1002, %v995
  %v1031 = vunpack.c.l.b16 %v1003
  %v1032 = vunpack.c.l.b16 %v1004
  %v1033 = vunpack.c.l.b16 %v1005
  %v1034 = vunpack.c.l.b16 %v1006
  %v1035 = vunpack.c.l.b16 %v1007
  %v1036 = vunpack.c.l.b16 %v1008
  %v1037 = vunpack.c.l.b16 %v1009
  %v1038 = vunpack.c.h.b16 %v1003
  %v1039 = vunpack.c.h.b16 %v1004
  %v1040 = vunpack.c.h.b16 %v1005
  %v1041 = vunpack.c.h.b16 %v1006
  %v1042 = vunpack.c.h.b16 %v1007
  %v1043 = vunpack.c.h.b16 %v1008
  %v1044 = vunpack.c.h.b16 %v1009
  %v1045 = vunpack.c.l.b16 %v1010
  %v1046 = vunpack.c.l.b16 %v1011
  %v1047 = vunpack.c.l.b16 %v1012
  %v1048 = vunpack.c.l.b16 %v1013
  %v1049 = vunpack.c.l.b16 %v1014
  %v1050 = vunpack.c.l.b16 %v1015
  %v1051 = vunpack.c.l.b16 %v1016
  %v1052 = vunpack.c.h.b16 %v1010
  %v1053 = vunpack.c.h.b16 %v1011
  %v1054 = vunpack.c.h.b16 %v1012
  %v1055 = vunpack.c.h.b16 %v1013
  %v1056 = vunpack.c.h.b16 %v1014
  %v1057 = vunpack.c.h.b16 %v1015
  %v1058 = vunpack.c.h.b16 %v1016
  %v1059 = vpack.c.b16 %v1032, %v1031
  %v1060 = vpack.c.b16 %v1034, %v1033
  %v1061 = vpack.c.b16 %v1036, %v1035
  %v1062 = vpack.c.b16 %v1037, %v1037
  %v1063 = vpack.c.b16 %v1039, %v1038
  %v1064 = vpack.c.b16 %v1041, %v1040
  %v1065 = vpack.c.b16 %v1043, %v1042
  %v1066 = vpack.c.b16 %v1044, %v1044
  %v1067 = vpack.c.b16 %v1046, %v1045
  %v1068 = vpack.c.b16 %v1048, %v1047
  %v1069 = vpack.c.b16 %v1050, %v1049
  %v1070 = vpack.c.b16 %v1051, %v1051
  %v1071 = vpack.c.b16 %v1053, %v1052
  %v1072 = vpack.c.b16 %v1055, %v1054
  %v1073 = vpack.c.b16 %v1057, %v1056
  %v1074 = vpack.c.b16 %v1058, %v1058
  %1091 = vst [vmem:[%s3] sm:$0xff] %v1059
  %1092 = vst [vmem:[%s3 + $0x8] sm:$0xff] %v1060
  %1093 = vst [vmem:[%s3 + $0x10] sm:$0xff] %v1061
  %vm1094 = vcmask 257024
  %1095 = vst.msk [vmem:[%s3 + $0x18] sm:$0xf] %vm1094, %v1062
  %1096 = vst [vmem:[%s3 + $0x1c] sm:$0xff] %v1063
  %1097 = vst [vmem:[%s3 + $0x24] sm:$0xff] %v1064
  %1098 = vst [vmem:[%s3 + $0x2c] sm:$0xff] %v1065
  %1099 = vst.msk [vmem:[%s3 + $0x34] sm:$0xf] %vm1094, %v1066
  %1100 = vst [vmem:[%s3 + $0x38] sm:$0xff] %v1067
  %1101 = vst [vmem:[%s3 + $0x40] sm:$0xff] %v1068
  %1102 = vst [vmem:[%s3 + $0x48] sm:$0xff] %v1069
  %1103 = vst.msk [vmem:[%s3 + $0x50] sm:$0xf] %vm1094, %v1070
  %1104 = vst [vmem:[%s3 + $0x54] sm:$0xff] %v1071
  %1105 = vst [vmem:[%s3 + $0x5c] sm:$0xff] %v1072
  %1106 = vst [vmem:[%s3 + $0x64] sm:$0xff] %v1073
  %1107 = vst.msk [vmem:[%s3 + $0x6c] sm:$0xf] %vm1094, %v1074
  // Predicated region
  $region14: #{dqn_forward.4} parent=0 // pred_check
    _
  $region15: #{dqn_forward.4} parent=0 // pred_check_branch
    %1109 = sbr.rel (0) target = $region17
  $region16: #{dqn_forward.4} parent=0 // pred_region
    _
  $region17: #{dqn_forward.4} parent=0 // pred_fallthru
    _
  // Predicated region
  $region18: #{dqn_forward.4} parent=0 // pred_check
    _
  $region19: #{dqn_forward.4} parent=0 // pred_check_branch
    %1111 = sbr.rel (0) target = $region21
  $region20: #{dqn_forward.4} parent=0 // pred_region
    _
  $region21: #{dqn_forward.4} parent=0 // pred_fallthru
    _

// kernel: dqn_forward.5
$region0: #{dqn_forward.5}
  #allocation0 [shape = 'u32[]', space=smem, size = 0x4, offset = 0x4, fixed_abs, tag = 'smem constant byte address 0x4 - core index']
  #allocation1 [shape = 'u32[144,128]{1,0:T(1,128)}', space=vmem, size = 0x12000, scoped, tag = 'internal scratch']
  %s0 = inlined_call_operand.vmem [shape: bf16[64,512], index: 0, kind: input, shape index: {}]
  %s1 = inlined_call_operand.vmem [shape: bf16[512,162], index: 1, kind: input, shape index: {}]
  %s2 = inlined_call_operand.vmem [shape: f32[64,1], index: 2, kind: input, shape index: {}]
  %s3 = inlined_call_operand.vmem [shape: bf16[64,162], index: 3, kind: output, shape index: {}]
  %s4 = sld [smem:[#allocation0]]
  $region22: #{dqn_forward.5} parent=0
    _
  %s6 = ssub.s32 1, %s4
  %s7 = scalar_select 0, %s6, %s4
  // Predicated region
  $region2: #{dqn_forward.5} parent=0 // pred_check
    _
  $region3: #{dqn_forward.5} parent=0 // pred_check_branch
    %9 = sbr.rel (0) target = $region5
  $region4: #{dqn_forward.5} parent=0 // pred_region
    _
  $region5: #{dqn_forward.5} parent=0 // pred_fallthru
    _
  // Predicated region
  $region6: #{dqn_forward.5} parent=0 // pred_check
    _
  $region7: #{dqn_forward.5} parent=0 // pred_check_branch
    %11 = sbr.rel (0) target = $region9
  $region8: #{dqn_forward.5} parent=0 // pred_region
    _
  $region9: #{dqn_forward.5} parent=0 // pred_fallthru
    _
  // Predicated region
  $region10: #{dqn_forward.5} parent=0 // pred_check
    _
  $region11: #{dqn_forward.5} parent=0 // pred_check_branch
    %13 = sbr.rel (0) target = $region13
  $region12: #{dqn_forward.5} parent=0 // pred_region
    _
  $region13: #{dqn_forward.5} parent=0 // pred_fallthru
    _
  %v14 = vld [vmem:[%s0] sm:$0xff]
  %v15 = vld [vmem:[%s0 + $0x8] sm:$0xff]
  %v16 = vld [vmem:[%s0 + $0x10] sm:$0xff]
  %v17 = vld [vmem:[%s0 + $0x18] sm:$0xff]
  %v18 = vld [vmem:[%s0 + $0x20] sm:$0xff]
  %v19 = vld [vmem:[%s0 + $0x28] sm:$0xff]
  %v20 = vld [vmem:[%s0 + $0x30] sm:$0xff]
  %v21 = vld [vmem:[%s0 + $0x38] sm:$0xff]
  %v22 = vld [vmem:[%s0 + $0x40] sm:$0xff]
  %v23 = vld [vmem:[%s0 + $0x48] sm:$0xff]
  %v24 = vld [vmem:[%s0 + $0x50] sm:$0xff]
  %v25 = vld [vmem:[%s0 + $0x58] sm:$0xff]
  %v26 = vld [vmem:[%s0 + $0x60] sm:$0xff]
  %v27 = vld [vmem:[%s0 + $0x68] sm:$0xff]
  %v28 = vld [vmem:[%s0 + $0x70] sm:$0xff]
  %v29 = vld [vmem:[%s0 + $0x78] sm:$0xff]
  %v30 = vld [vmem:[%s1] sm:$0xff]
  %v31 = vld [vmem:[%s1 + $0x8] sm:$0xff]
  %v32 = vld [vmem:[%s1 + $0x10] sm:$0xff]
  %v33 = vld [vmem:[%s1 + $0x18] sm:$0xff]
  %v34 = vld [vmem:[%s1 + $0x20] sm:$0xff]
  %v35 = vld [vmem:[%s1 + $0x28] sm:$0xff]
  %v36 = vld [vmem:[%s1 + $0x30] sm:$0xff]
  %v37 = vld [vmem:[%s1 + $0x38] sm:$0xff]
  %v38 = vld [vmem:[%s1 + $0x40] sm:$0xff]
  %v39 = vld [vmem:[%s1 + $0x48] sm:$0xff]
  %v40 = vld [vmem:[%s1 + $0x50] sm:$0xff]
  %v41 = vld [vmem:[%s1 + $0x58] sm:$0xff]
  %v42 = vld [vmem:[%s1 + $0x60] sm:$0xff]
  %v43 = vld [vmem:[%s1 + $0x68] sm:$0xff]
  %v44 = vld [vmem:[%s1 + $0x70] sm:$0xff]
  %v45 = vld [vmem:[%s1 + $0x78] sm:$0xff]
  %v46 = vld [vmem:[%s1 + $0x80] sm:$0xff]
  %v47 = vld [vmem:[%s1 + $0x88] sm:$0xff]
  %v48 = vld [vmem:[%s1 + $0x90] sm:$0xff]
  %v49 = vld [vmem:[%s1 + $0x98] sm:$0xff]
  %v50 = vld [vmem:[%s1 + $0xa0] sm:$0xff]
  %v51 = vld [vmem:[%s1 + $0xa8] sm:$0xff]
  %v52 = vld [vmem:[%s1 + $0xb0] sm:$0xff]
  %v53 = vld [vmem:[%s1 + $0xb8] sm:$0xff]
  %v54 = vld [vmem:[%s1 + $0xc0] sm:$0xff]
  %v55 = vld [vmem:[%s1 + $0xc8] sm:$0xff]
  %v56 = vld [vmem:[%s1 + $0xd0] sm:$0xff]
  %v57 = vld [vmem:[%s1 + $0xd8] sm:$0xff]
  %v58 = vld [vmem:[%s1 + $0xe0] sm:$0xff]
  %v59 = vld [vmem:[%s1 + $0xe8] sm:$0xff]
  %v60 = vld [vmem:[%s1 + $0xf0] sm:$0xff]
  %v61 = vld [vmem:[%s1 + $0xf8] sm:$0xff]
  %v62 = vld [vmem:[%s1 + $0x100] sm:$0xff]
  %v63 = vld [vmem:[%s1 + $0x108] sm:$0xff]
  %v64 = vld [vmem:[%s1 + $0x110] sm:$0xff]
  %v65 = vld [vmem:[%s1 + $0x118] sm:$0xff]
  %v66 = vld [vmem:[%s1 + $0x120] sm:$0xff]
  %v67 = vld [vmem:[%s1 + $0x128] sm:$0xff]
  %v68 = vld [vmem:[%s1 + $0x130] sm:$0xff]
  %v69 = vld [vmem:[%s1 + $0x138] sm:$0xff]
  %v70 = vld [vmem:[%s1 + $0x140] sm:$0xff]
  %v71 = vld [vmem:[%s1 + $0x148] sm:$0xff]
  %v72 = vld [vmem:[%s1 + $0x150] sm:$0xff]
  %v73 = vld [vmem:[%s1 + $0x158] sm:$0xff]
  %v74 = vld [vmem:[%s1 + $0x160] sm:$0xff]
  %v75 = vld [vmem:[%s1 + $0x168] sm:$0xff]
  %v76 = vld [vmem:[%s1 + $0x170] sm:$0xff]
  %v77 = vld [vmem:[%s1 + $0x178] sm:$0xff]
  %v78 = vld [vmem:[%s1 + $0x180] sm:$0xff]
  %v79 = vld [vmem:[%s1 + $0x188] sm:$0xff]
  %v80 = vld [vmem:[%s1 + $0x190] sm:$0xff]
  %v81 = vld [vmem:[%s1 + $0x198] sm:$0xff]
  %v82 = vld [vmem:[%s1 + $0x1a0] sm:$0xff]
  %v83 = vld [vmem:[%s1 + $0x1a8] sm:$0xff]
  %v84 = vld [vmem:[%s1 + $0x1b0] sm:$0xff]
  %v85 = vld [vmem:[%s1 + $0x1b8] sm:$0xff]
  %v86 = vld [vmem:[%s1 + $0x1c0] sm:$0xff]
  %v87 = vld [vmem:[%s1 + $0x1c8] sm:$0xff]
  %v88 = vld [vmem:[%s1 + $0x1d0] sm:$0xff]
  %v89 = vld [vmem:[%s1 + $0x1d8] sm:$0xff]
  %v90 = vld [vmem:[%s1 + $0x1e0] sm:$0xff]
  %v91 = vld [vmem:[%s1 + $0x1e8] sm:$0xff]
  %v92 = vld [vmem:[%s1 + $0x1f0] sm:$0xff]
  %v93 = vld [vmem:[%s1 + $0x1f8] sm:$0xff]
  %v94 = vld [vmem:[%s2] sm:$0xff]
  %v95 = vld [vmem:[%s2 + $0x8] sm:$0xff]
  %v96 = vld [vmem:[%s2 + $0x10] sm:$0xff]
  %v97 = vld [vmem:[%s2 + $0x18] sm:$0xff]
  %v98 = vld [vmem:[%s2 + $0x20] sm:$0xff]
  %v99 = vld [vmem:[%s2 + $0x28] sm:$0xff]
  %v100 = vld [vmem:[%s2 + $0x30] sm:$0xff]
  %v101 = vld [vmem:[%s2 + $0x38] sm:$0xff]
  %103 = vset.pattern.permute.xlu0 0
  %104 = vperm.xlu0 %103, %v94
  %v105 = vpop.permute.xlu0 %104
  %108 = vset.pattern.permute.xlu0 0
  %109 = vperm.xlu0 %108, %v95
  %v110 = vpop.permute.xlu0 %109
  %113 = vset.pattern.permute.xlu0 0
  %114 = vperm.xlu0 %113, %v96
  %v115 = vpop.permute.xlu0 %114
  %118 = vset.pattern.permute.xlu0 0
  %119 = vperm.xlu0 %118, %v97
  %v120 = vpop.permute.xlu0 %119
  %123 = vset.pattern.permute.xlu0 0
  %124 = vperm.xlu0 %123, %v98
  %v125 = vpop.permute.xlu0 %124
  %128 = vset.pattern.permute.xlu0 0
  %129 = vperm.xlu0 %128, %v99
  %v130 = vpop.permute.xlu0 %129
  %133 = vset.pattern.permute.xlu0 0
  %134 = vperm.xlu0 %133, %v100
  %v135 = vpop.permute.xlu0 %134
  %138 = vset.pattern.permute.xlu0 0
  %139 = vperm.xlu0 %138, %v101
  %v140 = vpop.permute.xlu0 %139
  %v158 = vunpack.c.l.b16 %v14
  %v159 = vunpack.c.h.b16 %v14
  %v160 = vunpack.c.l.b16 %v15
  %v161 = vunpack.c.h.b16 %v15
  %v162 = vunpack.c.l.b16 %v16
  %v163 = vunpack.c.h.b16 %v16
  %v164 = vunpack.c.l.b16 %v17
  %v165 = vunpack.c.h.b16 %v17
  %v166 = vunpack.c.l.b16 %v18
  %v167 = vunpack.c.h.b16 %v18
  %v168 = vunpack.c.l.b16 %v19
  %v169 = vunpack.c.h.b16 %v19
  %v170 = vunpack.c.l.b16 %v20
  %v171 = vunpack.c.h.b16 %v20
  %v172 = vunpack.c.l.b16 %v21
  %v173 = vunpack.c.h.b16 %v21
  %v174 = vunpack.c.l.b16 %v22
  %v175 = vunpack.c.h.b16 %v22
  %v176 = vunpack.c.l.b16 %v23
  %v177 = vunpack.c.h.b16 %v23
  %v178 = vunpack.c.l.b16 %v24
  %v179 = vunpack.c.h.b16 %v24
  %v180 = vunpack.c.l.b16 %v25
  %v181 = vunpack.c.h.b16 %v25
  %v182 = vunpack.c.l.b16 %v26
  %v183 = vunpack.c.h.b16 %v26
  %v184 = vunpack.c.l.b16 %v27
  %v185 = vunpack.c.h.b16 %v27
  %v186 = vunpack.c.l.b16 %v28
  %v187 = vunpack.c.h.b16 %v28
  %v188 = vunpack.c.l.b16 %v29
  %v189 = vunpack.c.h.b16 %v29
  %v190 = vpack.c.b16 %v162, %v158
  %v191 = vpack.c.b16 %v163, %v159
  %v192 = vpack.c.b16 %v164, %v160
  %v193 = vpack.c.b16 %v165, %v161
  %v194 = vpack.c.b16 %v170, %v166
  %v195 = vpack.c.b16 %v171, %v167
  %v196 = vpack.c.b16 %v172, %v168
  %v197 = vpack.c.b16 %v173, %v169
  %v198 = vpack.c.b16 %v178, %v174
  %v199 = vpack.c.b16 %v179, %v175
  %v200 = vpack.c.b16 %v180, %v176
  %v201 = vpack.c.b16 %v181, %v177
  %v202 = vpack.c.b16 %v186, %v182
  %v203 = vpack.c.b16 %v187, %v183
  %v204 = vpack.c.b16 %v188, %v184
  %v205 = vpack.c.b16 %v189, %v185
  %v286 = vunpack.c.l.b16 %v30
  %v287 = vunpack.c.h.b16 %v30
  %v288 = vunpack.c.l.b16 %v31
  %v289 = vunpack.c.h.b16 %v31
  %v290 = vunpack.c.l.b16 %v32
  %v291 = vunpack.c.h.b16 %v32
  %v292 = vunpack.c.l.b16 %v33
  %v293 = vunpack.c.h.b16 %v33
  %v294 = vunpack.c.l.b16 %v34
  %v295 = vunpack.c.h.b16 %v34
  %v296 = vunpack.c.l.b16 %v35
  %v297 = vunpack.c.h.b16 %v35
  %v298 = vunpack.c.l.b16 %v36
  %v299 = vunpack.c.h.b16 %v36
  %v300 = vunpack.c.l.b16 %v37
  %v301 = vunpack.c.h.b16 %v37
  %v302 = vunpack.c.l.b16 %v38
  %v303 = vunpack.c.h.b16 %v38
  %v304 = vunpack.c.l.b16 %v39
  %v305 = vunpack.c.h.b16 %v39
  %v306 = vunpack.c.l.b16 %v40
  %v307 = vunpack.c.h.b16 %v40
  %v308 = vunpack.c.l.b16 %v41
  %v309 = vunpack.c.h.b16 %v41
  %v310 = vunpack.c.l.b16 %v42
  %v311 = vunpack.c.h.b16 %v42
  %v312 = vunpack.c.l.b16 %v43
  %v313 = vunpack.c.h.b16 %v43
  %v314 = vunpack.c.l.b16 %v44
  %v315 = vunpack.c.h.b16 %v44
  %v316 = vunpack.c.l.b16 %v45
  %v317 = vunpack.c.h.b16 %v45
  %v318 = vunpack.c.l.b16 %v46
  %v319 = vunpack.c.h.b16 %v46
  %v320 = vunpack.c.l.b16 %v47
  %v321 = vunpack.c.h.b16 %v47
  %v322 = vunpack.c.l.b16 %v48
  %v323 = vunpack.c.h.b16 %v48
  %v324 = vunpack.c.l.b16 %v49
  %v325 = vunpack.c.h.b16 %v49
  %v326 = vunpack.c.l.b16 %v50
  %v327 = vunpack.c.h.b16 %v50
  %v328 = vunpack.c.l.b16 %v51
  %v329 = vunpack.c.h.b16 %v51
  %v330 = vunpack.c.l.b16 %v52
  %v331 = vunpack.c.h.b16 %v52
  %v332 = vunpack.c.l.b16 %v53
  %v333 = vunpack.c.h.b16 %v53
  %v334 = vunpack.c.l.b16 %v54
  %v335 = vunpack.c.h.b16 %v54
  %v336 = vunpack.c.l.b16 %v55
  %v337 = vunpack.c.h.b16 %v55
  %v338 = vunpack.c.l.b16 %v56
  %v339 = vunpack.c.h.b16 %v56
  %v340 = vunpack.c.l.b16 %v57
  %v341 = vunpack.c.h.b16 %v57
  %v342 = vunpack.c.l.b16 %v58
  %v343 = vunpack.c.h.b16 %v58
  %v344 = vunpack.c.l.b16 %v59
  %v345 = vunpack.c.h.b16 %v59
  %v346 = vunpack.c.l.b16 %v60
  %v347 = vunpack.c.h.b16 %v60
  %v348 = vunpack.c.l.b16 %v61
  %v349 = vunpack.c.h.b16 %v61
  %v350 = vunpack.c.l.b16 %v62
  %v351 = vunpack.c.h.b16 %v62
  %v352 = vunpack.c.l.b16 %v63
  %v353 = vunpack.c.h.b16 %v63
  %v354 = vunpack.c.l.b16 %v64
  %v355 = vunpack.c.h.b16 %v64
  %v356 = vunpack.c.l.b16 %v65
  %v357 = vunpack.c.h.b16 %v65
  %v358 = vunpack.c.l.b16 %v66
  %v359 = vunpack.c.h.b16 %v66
  %v360 = vunpack.c.l.b16 %v67
  %v361 = vunpack.c.h.b16 %v67
  %v362 = vunpack.c.l.b16 %v68
  %v363 = vunpack.c.h.b16 %v68
  %v364 = vunpack.c.l.b16 %v69
  %v365 = vunpack.c.h.b16 %v69
  %v366 = vunpack.c.l.b16 %v70
  %v367 = vunpack.c.h.b16 %v70
  %v368 = vunpack.c.l.b16 %v71
  %v369 = vunpack.c.h.b16 %v71
  %v370 = vunpack.c.l.b16 %v72
  %v371 = vunpack.c.h.b16 %v72
  %v372 = vunpack.c.l.b16 %v73
  %v373 = vunpack.c.h.b16 %v73
  %v374 = vunpack.c.l.b16 %v74
  %v375 = vunpack.c.h.b16 %v74
  %v376 = vunpack.c.l.b16 %v75
  %v377 = vunpack.c.h.b16 %v75
  %v378 = vunpack.c.l.b16 %v76
  %v379 = vunpack.c.h.b16 %v76
  %v380 = vunpack.c.l.b16 %v77
  %v381 = vunpack.c.h.b16 %v77
  %v382 = vunpack.c.l.b16 %v78
  %v383 = vunpack.c.h.b16 %v78
  %v384 = vunpack.c.l.b16 %v79
  %v385 = vunpack.c.h.b16 %v79
  %v386 = vunpack.c.l.b16 %v80
  %v387 = vunpack.c.h.b16 %v80
  %v388 = vunpack.c.l.b16 %v81
  %v389 = vunpack.c.h.b16 %v81
  %v390 = vunpack.c.l.b16 %v82
  %v391 = vunpack.c.h.b16 %v82
  %v392 = vunpack.c.l.b16 %v83
  %v393 = vunpack.c.h.b16 %v83
  %v394 = vunpack.c.l.b16 %v84
  %v395 = vunpack.c.h.b16 %v84
  %v396 = vunpack.c.l.b16 %v85
  %v397 = vunpack.c.h.b16 %v85
  %v398 = vunpack.c.l.b16 %v86
  %v399 = vunpack.c.h.b16 %v86
  %v400 = vunpack.c.l.b16 %v87
  %v401 = vunpack.c.h.b16 %v87
  %v402 = vunpack.c.l.b16 %v88
  %v403 = vunpack.c.h.b16 %v88
  %v404 = vunpack.c.l.b16 %v89
  %v405 = vunpack.c.h.b16 %v89
  %v406 = vunpack.c.l.b16 %v90
  %v407 = vunpack.c.h.b16 %v90
  %v408 = vunpack.c.l.b16 %v91
  %v409 = vunpack.c.h.b16 %v91
  %v410 = vunpack.c.l.b16 %v92
  %v411 = vunpack.c.h.b16 %v92
  %v412 = vunpack.c.l.b16 %v93
  %v413 = vunpack.c.h.b16 %v93
  %v414 = vpack.c.b16 %v288, %v286
  %v415 = vpack.c.b16 %v289, %v287
  %v416 = vpack.c.b16 %v292, %v290
  %v417 = vpack.c.b16 %v293, %v291
  %v418 = vpack.c.b16 %v296, %v294
  %v419 = vpack.c.b16 %v297, %v295
  %v420 = vpack.c.b16 %v300, %v298
  %v421 = vpack.c.b16 %v301, %v299
  %v422 = vpack.c.b16 %v304, %v302
  %v423 = vpack.c.b16 %v305, %v303
  %v424 = vpack.c.b16 %v308, %v306
  %v425 = vpack.c.b16 %v309, %v307
  %v426 = vpack.c.b16 %v312, %v310
  %v427 = vpack.c.b16 %v313, %v311
  %v428 = vpack.c.b16 %v316, %v314
  %v429 = vpack.c.b16 %v317, %v315
  %v430 = vpack.c.b16 %v320, %v318
  %v431 = vpack.c.b16 %v321, %v319
  %v432 = vpack.c.b16 %v324, %v322
  %v433 = vpack.c.b16 %v325, %v323
  %v434 = vpack.c.b16 %v328, %v326
  %v435 = vpack.c.b16 %v329, %v327
  %v436 = vpack.c.b16 %v332, %v330
  %v437 = vpack.c.b16 %v333, %v331
  %v438 = vpack.c.b16 %v336, %v334
  %v439 = vpack.c.b16 %v337, %v335
  %v440 = vpack.c.b16 %v340, %v338
  %v441 = vpack.c.b16 %v341, %v339
  %v442 = vpack.c.b16 %v344, %v342
  %v443 = vpack.c.b16 %v345, %v343
  %v444 = vpack.c.b16 %v348, %v346
  %v445 = vpack.c.b16 %v349, %v347
  %v446 = vpack.c.b16 %v352, %v350
  %v447 = vpack.c.b16 %v353, %v351
  %v448 = vpack.c.b16 %v356, %v354
  %v449 = vpack.c.b16 %v357, %v355
  %v450 = vpack.c.b16 %v360, %v358
  %v451 = vpack.c.b16 %v361, %v359
  %v452 = vpack.c.b16 %v364, %v362
  %v453 = vpack.c.b16 %v365, %v363
  %v454 = vpack.c.b16 %v368, %v366
  %v455 = vpack.c.b16 %v369, %v367
  %v456 = vpack.c.b16 %v372, %v370
  %v457 = vpack.c.b16 %v373, %v371
  %v458 = vpack.c.b16 %v376, %v374
  %v459 = vpack.c.b16 %v377, %v375
  %v460 = vpack.c.b16 %v380, %v378
  %v461 = vpack.c.b16 %v381, %v379
  %v462 = vpack.c.b16 %v384, %v382
  %v463 = vpack.c.b16 %v385, %v383
  %v464 = vpack.c.b16 %v388, %v386
  %v465 = vpack.c.b16 %v389, %v387
  %v466 = vpack.c.b16 %v392, %v390
  %v467 = vpack.c.b16 %v393, %v391
  %v468 = vpack.c.b16 %v396, %v394
  %v469 = vpack.c.b16 %v397, %v395
  %v470 = vpack.c.b16 %v400, %v398
  %v471 = vpack.c.b16 %v401, %v399
  %v472 = vpack.c.b16 %v404, %v402
  %v473 = vpack.c.b16 %v405, %v403
  %v474 = vpack.c.b16 %v408, %v406
  %v475 = vpack.c.b16 %v409, %v407
  %v476 = vpack.c.b16 %v412, %v410
  %v477 = vpack.c.b16 %v413, %v411
  %542 = vmatprep.subr.bf16.mxu0 %v415
  %543 = vmatpush1.bf16.msra.mxu0 %v414
  %544 = vmatprep.subr.bf16.mxu0 %v417
  %545 = vmatpush1.bf16.msra.mxu0 %v416
  %546 = vmatprep.subr.bf16.mxu0 %v419
  %547 = vmatpush1.bf16.msra.mxu0 %v418
  %548 = vmatprep.subr.bf16.mxu0 %v421
  %549 = vmatpush1.bf16.msra.mxu0 %v420
  %550 = vmatprep.subr.bf16.mxu0 %v423
  %551 = vmatpush1.bf16.msra.mxu0 %v422
  %552 = vmatprep.subr.bf16.mxu0 %v425
  %553 = vmatpush1.bf16.msra.mxu0 %v424
  %554 = vmatprep.subr.bf16.mxu0 %v427
  %555 = vmatpush1.bf16.msra.mxu0 %v426
  %556 = vmatprep.subr.bf16.mxu0 %v429
  %557 = vmatpush1.bf16.msra.mxu0 %v428
  %558 = vmatprep.subr.bf16.mxu0 %v431
  %559 = vmatpush1.bf16.msra.mxu0 %v430
  %560 = vmatprep.subr.bf16.mxu0 %v433
  %561 = vmatpush1.bf16.msra.mxu0 %v432
  %562 = vmatprep.subr.bf16.mxu0 %v435
  %563 = vmatpush1.bf16.msra.mxu0 %v434
  %564 = vmatprep.subr.bf16.mxu0 %v437
  %565 = vmatpush1.bf16.msra.mxu0 %v436
  %566 = vmatprep.subr.bf16.mxu0 %v439
  %567 = vmatpush1.bf16.msra.mxu0 %v438
  %568 = vmatprep.subr.bf16.mxu0 %v441
  %569 = vmatpush1.bf16.msra.mxu0 %v440
  %570 = vmatprep.subr.bf16.mxu0 %v443
  %571 = vmatpush1.bf16.msra.mxu0 %v442
  %572 = vmatprep.subr.bf16.mxu0 %v445
  %573 = vmatpush1.bf16.msra.mxu0 %v444
  %574 = vmatprep.mubr.bf16.mxu0 %v191
  %575 = vmatmul.mubr.bf16.gmra.mrb[0].mxu0 %v190
  %v576 = vpop.f32.mrb[0].mxu0
  %v577 = vadd.f32 %v105, %v576
  %v578 = vpop.f32.mrb[0].mxu0
  %v579 = vadd.f32 %v105, %v578
  %v580 = vpop.f32.mrb[0].mxu0
  %v581 = vadd.f32 %v110, %v580
  %v582 = vpop.f32.mrb[0].mxu0
  %v583 = vadd.f32 %v110, %v582
  %584 = vmatprep.mubr.bf16.mxu0 %v195
  %585 = vmatmul.mubr.bf16.gmra.mrb[0].mxu0 %v194
  %v586 = vpop.f32.mrb[0].mxu0
  %v587 = vadd.f32 %v115, %v586
  %v588 = vpop.f32.mrb[0].mxu0
  %v589 = vadd.f32 %v115, %v588
  %v590 = vpop.f32.mrb[0].mxu0
  %v591 = vadd.f32 %v120, %v590
  %v592 = vpop.f32.mrb[0].mxu0
  %v593 = vadd.f32 %v120, %v592
  %594 = vmatprep.mubr.bf16.mxu0 %v199
  %595 = vmatmul.mubr.bf16.gmra.mrb[0].mxu0 %v198
  %v596 = vpop.f32.mrb[0].mxu0
  %v597 = vadd.f32 %v125, %v596
  %v598 = vpop.f32.mrb[0].mxu0
  %v599 = vadd.f32 %v125, %v598
  %v600 = vpop.f32.mrb[0].mxu0
  %v601 = vadd.f32 %v130, %v600
  %v602 = vpop.f32.mrb[0].mxu0
  %v603 = vadd.f32 %v130, %v602
  %604 = vmatprep.mubr.bf16.mxu0 %v203
  %605 = vmatmul.mubr.bf16.gmra.mrb[0].mxu0 %v202
  %v606 = vpop.f32.mrb[0].mxu0
  %v607 = vadd.f32 %v135, %v606
  %v608 = vpop.f32.mrb[0].mxu0
  %v609 = vadd.f32 %v135, %v608
  %v610 = vpop.f32.mrb[0].mxu0
  %v611 = vadd.f32 %v140, %v610
  %v612 = vpop.f32.mrb[0].mxu0
  %v613 = vadd.f32 %v140, %v612
  %614 = vdwg.mxu0
  %615 = vmatprep.subr.bf16.mxu0 %v447
  %616 = vmatpush1.bf16.msra.mxu0 %v446
  %617 = vmatprep.subr.bf16.mxu0 %v449
  %618 = vmatpush1.bf16.msra.mxu0 %v448
  %619 = vmatprep.subr.bf16.mxu0 %v451
  %620 = vmatpush1.bf16.msra.mxu0 %v450
  %621 = vmatprep.subr.bf16.mxu0 %v453
  %622 = vmatpush1.bf16.msra.mxu0 %v452
  %623 = vmatprep.subr.bf16.mxu0 %v455
  %624 = vmatpush1.bf16.msra.mxu0 %v454
  %625 = vmatprep.subr.bf16.mxu0 %v457
  %626 = vmatpush1.bf16.msra.mxu0 %v456
  %627 = vmatprep.subr.bf16.mxu0 %v459
  %628 = vmatpush1.bf16.msra.mxu0 %v458
  %629 = vmatprep.subr.bf16.mxu0 %v461
  %630 = vmatpush1.bf16.msra.mxu0 %v460
  %631 = vmatprep.subr.bf16.mxu0 %v463
  %632 = vmatpush1.bf16.msra.mxu0 %v462
  %633 = vmatprep.subr.bf16.mxu0 %v465
  %634 = vmatpush1.bf16.msra.mxu0 %v464
  %635 = vmatprep.subr.bf16.mxu0 %v467
  %636 = vmatpush1.bf16.msra.mxu0 %v466
  %637 = vmatprep.subr.bf16.mxu0 %v469
  %638 = vmatpush1.bf16.msra.mxu0 %v468
  %639 = vmatprep.subr.bf16.mxu0 %v471
  %640 = vmatpush1.bf16.msra.mxu0 %v470
  %641 = vmatprep.subr.bf16.mxu0 %v473
  %642 = vmatpush1.bf16.msra.mxu0 %v472
  %643 = vmatprep.subr.bf16.mxu0 %v475
  %644 = vmatpush1.bf16.msra.mxu0 %v474
  %645 = vmatprep.subr.bf16.mxu0 %v477
  %646 = vmatpush1.bf16.msra.mxu0 %v476
  %647 = vmatprep.mubr.bf16.mxu0 %v193
  %648 = vmatmul.mubr.bf16.gmra.mrb[0].mxu0 %v192
  %v649 = vpop.f32.mrb[0].mxu0
  %v650 = vadd.f32 %v577, %v649
  %v651 = vpop.f32.mrb[0].mxu0
  %v652 = vadd.f32 %v579, %v651
  %v653 = vpop.f32.mrb[0].mxu0
  %v654 = vadd.f32 %v581, %v653
  %v655 = vpop.f32.mrb[0].mxu0
  %v656 = vadd.f32 %v583, %v655
  %657 = vmatprep.mubr.bf16.mxu0 %v197
  %658 = vmatmul.mubr.bf16.gmra.mrb[0].mxu0 %v196
  %v659 = vpop.f32.mrb[0].mxu0
  %v660 = vadd.f32 %v587, %v659
  %v661 = vpop.f32.mrb[0].mxu0
  %v662 = vadd.f32 %v589, %v661
  %v663 = vpop.f32.mrb[0].mxu0
  %v664 = vadd.f32 %v591, %v663
  %v665 = vpop.f32.mrb[0].mxu0
  %v666 = vadd.f32 %v593, %v665
  %667 = vmatprep.mubr.bf16.mxu0 %v201
  %668 = vmatmul.mubr.bf16.gmra.mrb[0].mxu0 %v200
  %v669 = vpop.f32.mrb[0].mxu0
  %v670 = vadd.f32 %v597, %v669
  %v671 = vpop.f32.mrb[0].mxu0
  %v672 = vadd.f32 %v599, %v671
  %v673 = vpop.f32.mrb[0].mxu0
  %v674 = vadd.f32 %v601, %v673
  %v675 = vpop.f32.mrb[0].mxu0
  %v676 = vadd.f32 %v603, %v675
  %677 = vmatprep.mubr.bf16.mxu0 %v205
  %678 = vmatmul.mubr.bf16.gmra.mrb[0].mxu0 %v204
  %v679 = vpop.f32.mrb[0].mxu0
  %v680 = vadd.f32 %v607, %v679
  %v681 = vpop.f32.mrb[0].mxu0
  %v682 = vadd.f32 %v609, %v681
  %v683 = vpop.f32.mrb[0].mxu0
  %v684 = vadd.f32 %v611, %v683
  %v685 = vpop.f32.mrb[0].mxu0
  %v686 = vadd.f32 %v613, %v685
  %687 = vdwg.mxu0
  %v688 = vmax.f32 %v650, 0.0
  %v689 = vmax.f32 %v652, 0.0
  %v690 = vmax.f32 %v654, 0.0
  %v691 = vmax.f32 %v656, 0.0
  %v692 = vmax.f32 %v660, 0.0
  %v693 = vmax.f32 %v662, 0.0
  %v694 = vmax.f32 %v664, 0.0
  %v695 = vmax.f32 %v666, 0.0
  %v696 = vmax.f32 %v670, 0.0
  %v697 = vmax.f32 %v672, 0.0
  %v698 = vmax.f32 %v674, 0.0
  %v699 = vmax.f32 %v676, 0.0
  %v700 = vmax.f32 %v680, 0.0
  %v701 = vmax.f32 %v682, 0.0
  %v702 = vmax.f32 %v684, 0.0
  %v703 = vmax.f32 %v686, 0.0
  %v704 = vpack.c.bf16 %v690, %v688
  %v705 = vpack.c.bf16 %v691, %v689
  %v706 = vpack.c.bf16 %v694, %v692
  %v707 = vpack.c.bf16 %v695, %v693
  %v708 = vpack.c.bf16 %v698, %v696
  %v709 = vpack.c.bf16 %v699, %v697
  %v710 = vpack.c.bf16 %v702, %v700
  %v711 = vpack.c.bf16 %v703, %v701
  %v720 = vunpack.c.l.b16 %v704
  %v721 = vunpack.c.l.b16 %v705
  %v722 = vunpack.c.h.b16 %v704
  %v723 = vunpack.c.h.b16 %v705
  %v724 = vunpack.c.l.b16 %v706
  %v725 = vunpack.c.l.b16 %v707
  %v726 = vunpack.c.h.b16 %v706
  %v727 = vunpack.c.h.b16 %v707
  %v728 = vunpack.c.l.b16 %v708
  %v729 = vunpack.c.l.b16 %v709
  %v730 = vunpack.c.h.b16 %v708
  %v731 = vunpack.c.h.b16 %v709
  %v732 = vunpack.c.l.b16 %v710
  %v733 = vunpack.c.l.b16 %v711
  %v734 = vunpack.c.h.b16 %v710
  %v735 = vunpack.c.h.b16 %v711
  %v736 = vpack.c.b16 %v721, %v720
  %v737 = vpack.c.b16 %v723, %v722
  %v738 = vpack.c.b16 %v725, %v724
  %v739 = vpack.c.b16 %v727, %v726
  %v740 = vpack.c.b16 %v729, %v728
  %v741 = vpack.c.b16 %v731, %v730
  %v742 = vpack.c.b16 %v733, %v732
  %v743 = vpack.c.b16 %v735, %v734
  %vm752 = vcmask 1043456
  %vm753 = vcmask 277508
  %vm754 = vmor %vm753, %vm752
  %755 = vst.msk [vmem:[%s3] sm:$0xff] %vm754, %v736
  %756 = vst.msk [vmem:[%s3 + $0x8] sm:$0xff] %vm754, %v737
  %757 = vst.msk [vmem:[%s3 + $0x10] sm:$0xff] %vm754, %v738
  %758 = vst.msk [vmem:[%s3 + $0x18] sm:$0xff] %vm754, %v739
  %759 = vst.msk [vmem:[%s3 + $0x20] sm:$0xff] %vm754, %v740
  %760 = vst.msk [vmem:[%s3 + $0x28] sm:$0xff] %vm754, %v741
  %761 = vst.msk [vmem:[%s3 + $0x30] sm:$0xff] %vm754, %v742
  %762 = vst.msk [vmem:[%s3 + $0x38] sm:$0xff] %vm754, %v743
  // Predicated region
  $region14: #{dqn_forward.5} parent=0 // pred_check
    _
  $region15: #{dqn_forward.5} parent=0 // pred_check_branch
    %764 = sbr.rel (0) target = $region17
  $region16: #{dqn_forward.5} parent=0 // pred_region
    _
  $region17: #{dqn_forward.5} parent=0 // pred_fallthru
    _
  // Predicated region
  $region18: #{dqn_forward.5} parent=0 // pred_check
    _
  $region19: #{dqn_forward.5} parent=0 // pred_check_branch
    %766 = sbr.rel (0) target = $region21
  $region20: #{dqn_forward.5} parent=0 // pred_region
    _
  $region21: #{dqn_forward.5} parent=0 // pred_fallthru
    _

// kernel: dqn_forward.6
$region0: #{dqn_forward.6}
  #allocation0 [shape = 'u32[]', space=smem, size = 0x4, offset = 0x4, fixed_abs, tag = 'smem constant byte address 0x4 - core index']
  #allocation1 [shape = 'u32[144,128]{1,0:T(1,128)}', space=vmem, size = 0x12000, scoped, tag = 'internal scratch']
  %s0 = inlined_call_operand.vmem [shape: bf16[64,576], index: 0, kind: input, shape index: {}]
  %s1 = inlined_call_operand.vmem [shape: bf16[576,98], index: 1, kind: input, shape index: {}]
  %s2 = inlined_call_operand.vmem [shape: f32[64,1], index: 2, kind: input, shape index: {}]
  %s3 = inlined_call_operand.vmem [shape: bf16[64,98], index: 3, kind: output, shape index: {}]
  %s4 = sld [smem:[#allocation0]]
  $region22: #{dqn_forward.6} parent=0
    _
  %s6 = ssub.s32 1, %s4
  %s7 = scalar_select 0, %s6, %s4
  // Predicated region
  $region2: #{dqn_forward.6} parent=0 // pred_check
    _
  $region3: #{dqn_forward.6} parent=0 // pred_check_branch
    %9 = sbr.rel (0) target = $region5
  $region4: #{dqn_forward.6} parent=0 // pred_region
    _
  $region5: #{dqn_forward.6} parent=0 // pred_fallthru
    _
  // Predicated region
  $region6: #{dqn_forward.6} parent=0 // pred_check
    _
  $region7: #{dqn_forward.6} parent=0 // pred_check_branch
    %11 = sbr.rel (0) target = $region9
  $region8: #{dqn_forward.6} parent=0 // pred_region
    _
  $region9: #{dqn_forward.6} parent=0 // pred_fallthru
    _
  // Predicated region
  $region10: #{dqn_forward.6} parent=0 // pred_check
    _
  $region11: #{dqn_forward.6} parent=0 // pred_check_branch
    %13 = sbr.rel (0) target = $region13
  $region12: #{dqn_forward.6} parent=0 // pred_region
    _
  $region13: #{dqn_forward.6} parent=0 // pred_fallthru
    _
  %v15 = vld [vmem:[%s0] sm:$0xff]
  %v16 = vld [vmem:[%s0 + $0x8] sm:$0xff]
  %v17 = vld [vmem:[%s0 + $0x10] sm:$0xf]
  %v18 = vld [vmem:[%s0 + $0x14] sm:$0xff]
  %v19 = vld [vmem:[%s0 + $0x1c] sm:$0xff]
  %v20 = vld [vmem:[%s0 + $0x24] sm:$0xf]
  %v21 = vld [vmem:[%s0 + $0x28] sm:$0xff]
  %v22 = vld [vmem:[%s0 + $0x30] sm:$0xff]
  %v23 = vld [vmem:[%s0 + $0x38] sm:$0xf]
  %v24 = vld [vmem:[%s0 + $0x3c] sm:$0xff]
  %v25 = vld [vmem:[%s0 + $0x44] sm:$0xff]
  %v26 = vld [vmem:[%s0 + $0x4c] sm:$0xf]
  %v27 = vld [vmem:[%s0 + $0x50] sm:$0xff]
  %v28 = vld [vmem:[%s0 + $0x58] sm:$0xff]
  %v29 = vld [vmem:[%s0 + $0x60] sm:$0xf]
  %v30 = vld [vmem:[%s0 + $0x64] sm:$0xff]
  %v31 = vld [vmem:[%s0 + $0x6c] sm:$0xff]
  %v32 = vld [vmem:[%s0 + $0x74] sm:$0xf]
  %v33 = vld [vmem:[%s0 + $0x78] sm:$0xff]
  %v34 = vld [vmem:[%s0 + $0x80] sm:$0xff]
  %v35 = vld [vmem:[%s0 + $0x88] sm:$0xf]
  %v36 = vld [vmem:[%s0 + $0x8c] sm:$0xff]
  %v37 = vld [vmem:[%s0 + $0x94] sm:$0xff]
  %v38 = vld [vmem:[%s0 + $0x9c] sm:$0xf]
  %v39 = vld [vmem:[%s1] sm:$0xf]
  %v40 = vld [vmem:[%s1 + $0x4] sm:$0xf]
  %v41 = vld [vmem:[%s1 + $0x8] sm:$0xf]
  %v42 = vld [vmem:[%s1 + $0xc] sm:$0xf]
  %v43 = vld [vmem:[%s1 + $0x10] sm:$0xf]
  %v44 = vld [vmem:[%s1 + $0x14] sm:$0xf]
  %v45 = vld [vmem:[%s1 + $0x18] sm:$0xf]
  %v46 = vld [vmem:[%s1 + $0x1c] sm:$0xf]
  %v47 = vld [vmem:[%s1 + $0x20] sm:$0xf]
  %v48 = vld [vmem:[%s1 + $0x24] sm:$0xf]
  %v49 = vld [vmem:[%s1 + $0x28] sm:$0xf]
  %v50 = vld [vmem:[%s1 + $0x2c] sm:$0xf]
  %v51 = vld [vmem:[%s1 + $0x30] sm:$0xf]
  %v52 = vld [vmem:[%s1 + $0x34] sm:$0xf]
  %v53 = vld [vmem:[%s1 + $0x38] sm:$0xf]
  %v54 = vld [vmem:[%s1 + $0x3c] sm:$0xf]
  %v55 = vld [vmem:[%s1 + $0x40] sm:$0xf]
  %v56 = vld [vmem:[%s1 + $0x44] sm:$0xf]
  %v57 = vld [vmem:[%s1 + $0x48] sm:$0xf]
  %v58 = vld [vmem:[%s1 + $0x4c] sm:$0xf]
  %v59 = vld [vmem:[%s1 + $0x50] sm:$0xf]
  %v60 = vld [vmem:[%s1 + $0x54] sm:$0xf]
  %v61 = vld [vmem:[%s1 + $0x58] sm:$0xf]
  %v62 = vld [vmem:[%s1 + $0x5c] sm:$0xf]
  %v63 = vld [vmem:[%s1 + $0x60] sm:$0xf]
  %v64 = vld [vmem:[%s1 + $0x64] sm:$0xf]
  %v65 = vld [vmem:[%s1 + $0x68] sm:$0xf]
  %v66 = vld [vmem:[%s1 + $0x6c] sm:$0xf]
  %v67 = vld [vmem:[%s1 + $0x70] sm:$0xf]
  %v68 = vld [vmem:[%s1 + $0x74] sm:$0xf]
  %v69 = vld [vmem:[%s1 + $0x78] sm:$0xf]
  %v70 = vld [vmem:[%s1 + $0x7c] sm:$0xf]
  %v71 = vld [vmem:[%s1 + $0x80] sm:$0xf]
  %v72 = vld [vmem:[%s1 + $0x84] sm:$0xf]
  %v73 = vld [vmem:[%s1 + $0x88] sm:$0xf]
  %v74 = vld [vmem:[%s1 + $0x8c] sm:$0xf]
  %v75 = vld [vmem:[%s1 + $0x90] sm:$0xf]
  %v76 = vld [vmem:[%s1 + $0x94] sm:$0xf]
  %v77 = vld [vmem:[%s1 + $0x98] sm:$0xf]
  %v78 = vld [vmem:[%s1 + $0x9c] sm:$0xf]
  %v79 = vld [vmem:[%s1 + $0xa0] sm:$0xf]
  %v80 = vld [vmem:[%s1 + $0xa4] sm:$0xf]
  %v81 = vld [vmem:[%s1 + $0xa8] sm:$0xf]
  %v82 = vld [vmem:[%s1 + $0xac] sm:$0xf]
  %v83 = vld [vmem:[%s1 + $0xb0] sm:$0xf]
  %v84 = vld [vmem:[%s1 + $0xb4] sm:$0xf]
  %v85 = vld [vmem:[%s1 + $0xb8] sm:$0xf]
  %v86 = vld [vmem:[%s1 + $0xbc] sm:$0xf]
  %v87 = vld [vmem:[%s1 + $0xc0] sm:$0xf]
  %v88 = vld [vmem:[%s1 + $0xc4] sm:$0xf]
  %v89 = vld [vmem:[%s1 + $0xc8] sm:$0xf]
  %v90 = vld [vmem:[%s1 + $0xcc] sm:$0xf]
  %v91 = vld [vmem:[%s1 + $0xd0] sm:$0xf]
  %v92 = vld [vmem:[%s1 + $0xd4] sm:$0xf]
  %v93 = vld [vmem:[%s1 + $0xd8] sm:$0xf]
  %v94 = vld [vmem:[%s1 + $0xdc] sm:$0xf]
  %v95 = vld [vmem:[%s1 + $0xe0] sm:$0xf]
  %v96 = vld [vmem:[%s1 + $0xe4] sm:$0xf]
  %v97 = vld [vmem:[%s1 + $0xe8] sm:$0xf]
  %v98 = vld [vmem:[%s1 + $0xec] sm:$0xf]
  %v99 = vld [vmem:[%s1 + $0xf0] sm:$0xf]
  %v100 = vld [vmem:[%s1 + $0xf4] sm:$0xf]
  %v101 = vld [vmem:[%s1 + $0xf8] sm:$0xf]
  %v102 = vld [vmem:[%s1 + $0xfc] sm:$0xf]
  %v103 = vld [vmem:[%s1 + $0x100] sm:$0xf]
  %v104 = vld [vmem:[%s1 + $0x104] sm:$0xf]
  %v105 = vld [vmem:[%s1 + $0x108] sm:$0xf]
  %v106 = vld [vmem:[%s1 + $0x10c] sm:$0xf]
  %v107 = vld [vmem:[%s1 + $0x110] sm:$0xf]
  %v108 = vld [vmem:[%s1 + $0x114] sm:$0xf]
  %v109 = vld [vmem:[%s1 + $0x118] sm:$0xf]
  %v110 = vld [vmem:[%s1 + $0x11c] sm:$0xf]
  %v111 = vld [vmem:[%s2] sm:$0xff]
  %v112 = vld [vmem:[%s2 + $0x8] sm:$0xff]
  %v113 = vld [vmem:[%s2 + $0x10] sm:$0xff]
  %v114 = vld [vmem:[%s2 + $0x18] sm:$0xff]
  %v115 = vld [vmem:[%s2 + $0x20] sm:$0xff]
  %v116 = vld [vmem:[%s2 + $0x28] sm:$0xff]
  %v117 = vld [vmem:[%s2 + $0x30] sm:$0xff]
  %v118 = vld [vmem:[%s2 + $0x38] sm:$0xff]
  %120 = vset.pattern.permute.xlu0 0
  %121 = vperm.xlu0 %120, %v111
  %v122 = vpop.permute.xlu0 %121
  %125 = vset.pattern.permute.xlu0 0
  %126 = vperm.xlu0 %125, %v112
  %v127 = vpop.permute.xlu0 %126
  %130 = vset.pattern.permute.xlu0 0
  %131 = vperm.xlu0 %130, %v113
  %v132 = vpop.permute.xlu0 %131
  %135 = vset.pattern.permute.xlu0 0
  %136 = vperm.xlu0 %135, %v114
  %v137 = vpop.permute.xlu0 %136
  %140 = vset.pattern.permute.xlu0 0
  %141 = vperm.xlu0 %140, %v115
  %v142 = vpop.permute.xlu0 %141
  %145 = vset.pattern.permute.xlu0 0
  %146 = vperm.xlu0 %145, %v116
  %v147 = vpop.permute.xlu0 %146
  %150 = vset.pattern.permute.xlu0 0
  %151 = vperm.xlu0 %150, %v117
  %v152 = vpop.permute.xlu0 %151
  %155 = vset.pattern.permute.xlu0 0
  %156 = vperm.xlu0 %155, %v118
  %v157 = vpop.permute.xlu0 %156
  %v183 = vunpack.c.l.b16 %v15
  %v184 = vunpack.c.h.b16 %v15
  %v185 = vunpack.c.l.b16 %v16
  %v186 = vunpack.c.h.b16 %v16
  %v187 = vunpack.c.l.b16 %v17
  %v188 = vunpack.c.l.b16 %v18
  %v189 = vunpack.c.h.b16 %v18
  %v190 = vunpack.c.l.b16 %v19
  %v191 = vunpack.c.h.b16 %v19
  %v192 = vunpack.c.l.b16 %v20
  %v193 = vunpack.c.l.b16 %v21
  %v194 = vunpack.c.h.b16 %v21
  %v195 = vunpack.c.l.b16 %v22
  %v196 = vunpack.c.h.b16 %v22
  %v197 = vunpack.c.l.b16 %v23
  %v198 = vunpack.c.l.b16 %v24
  %v199 = vunpack.c.h.b16 %v24
  %v200 = vunpack.c.l.b16 %v25
  %v201 = vunpack.c.h.b16 %v25
  %v202 = vunpack.c.l.b16 %v26
  %v203 = vunpack.c.l.b16 %v27
  %v204 = vunpack.c.h.b16 %v27
  %v205 = vunpack.c.l.b16 %v28
  %v206 = vunpack.c.h.b16 %v28
  %v207 = vunpack.c.l.b16 %v29
  %v208 = vunpack.c.l.b16 %v30
  %v209 = vunpack.c.h.b16 %v30
  %v210 = vunpack.c.l.b16 %v31
  %v211 = vunpack.c.h.b16 %v31
  %v212 = vunpack.c.l.b16 %v32
  %v213 = vunpack.c.l.b16 %v33
  %v214 = vunpack.c.h.b16 %v33
  %v215 = vunpack.c.l.b16 %v34
  %v216 = vunpack.c.h.b16 %v34
  %v217 = vunpack.c.l.b16 %v35
  %v218 = vunpack.c.l.b16 %v36
  %v219 = vunpack.c.h.b16 %v36
  %v220 = vunpack.c.l.b16 %v37
  %v221 = vunpack.c.h.b16 %v37
  %v222 = vunpack.c.l.b16 %v38
  %v223 = vpack.c.b16 %v188, %v183
  %v224 = vpack.c.b16 %v189, %v184
  %v225 = vpack.c.b16 %v190, %v185
  %v226 = vpack.c.b16 %v191, %v186
  %v227 = vpack.c.b16 %v192, %v187
  %v228 = vpack.c.b16 %v198, %v193
  %v229 = vpack.c.b16 %v199, %v194
  %v230 = vpack.c.b16 %v200, %v195
  %v231 = vpack.c.b16 %v201, %v196
  %v232 = vpack.c.b16 %v202, %v197
  %v233 = vpack.c.b16 %v208, %v203
  %v234 = vpack.c.b16 %v209, %v204
  %v235 = vpack.c.b16 %v210, %v205
  %v236 = vpack.c.b16 %v211, %v206
  %v237 = vpack.c.b16 %v212, %v207
  %v238 = vpack.c.b16 %v218, %v213
  %v239 = vpack.c.b16 %v219, %v214
  %v240 = vpack.c.b16 %v220, %v215
  %v241 = vpack.c.b16 %v221, %v216
  %v242 = vpack.c.b16 %v222, %v217
  %v331 = vunpack.c.l.b16 %v39
  %v332 = vunpack.c.l.b16 %v40
  %v333 = vunpack.c.l.b16 %v41
  %v334 = vunpack.c.l.b16 %v42
  %v335 = vunpack.c.l.b16 %v43
  %v336 = vunpack.c.l.b16 %v44
  %v337 = vunpack.c.l.b16 %v45
  %v338 = vunpack.c.l.b16 %v46
  %v339 = vunpack.c.l.b16 %v47
  %v340 = vunpack.c.l.b16 %v48
  %v341 = vunpack.c.l.b16 %v49
  %v342 = vunpack.c.l.b16 %v50
  %v343 = vunpack.c.l.b16 %v51
  %v344 = vunpack.c.l.b16 %v52
  %v345 = vunpack.c.l.b16 %v53
  %v346 = vunpack.c.l.b16 %v54
  %v347 = vunpack.c.l.b16 %v55
  %v348 = vunpack.c.l.b16 %v56
  %v349 = vunpack.c.l.b16 %v57
  %v350 = vunpack.c.l.b16 %v58
  %v351 = vunpack.c.l.b16 %v59
  %v352 = vunpack.c.l.b16 %v60
  %v353 = vunpack.c.l.b16 %v61
  %v354 = vunpack.c.l.b16 %v62
  %v355 = vunpack.c.l.b16 %v63
  %v356 = vunpack.c.l.b16 %v64
  %v357 = vunpack.c.l.b16 %v65
  %v358 = vunpack.c.l.b16 %v66
  %v359 = vunpack.c.l.b16 %v67
  %v360 = vunpack.c.l.b16 %v68
  %v361 = vunpack.c.l.b16 %v69
  %v362 = vunpack.c.l.b16 %v70
  %v363 = vunpack.c.l.b16 %v71
  %v364 = vunpack.c.l.b16 %v72
  %v365 = vunpack.c.l.b16 %v73
  %v366 = vunpack.c.l.b16 %v74
  %v367 = vunpack.c.l.b16 %v75
  %v368 = vunpack.c.l.b16 %v76
  %v369 = vunpack.c.l.b16 %v77
  %v370 = vunpack.c.l.b16 %v78
  %v371 = vunpack.c.l.b16 %v79
  %v372 = vunpack.c.l.b16 %v80
  %v373 = vunpack.c.l.b16 %v81
  %v374 = vunpack.c.l.b16 %v82
  %v375 = vunpack.c.l.b16 %v83
  %v376 = vunpack.c.l.b16 %v84
  %v377 = vunpack.c.l.b16 %v85
  %v378 = vunpack.c.l.b16 %v86
  %v379 = vunpack.c.l.b16 %v87
  %v380 = vunpack.c.l.b16 %v88
  %v381 = vunpack.c.l.b16 %v89
  %v382 = vunpack.c.l.b16 %v90
  %v383 = vunpack.c.l.b16 %v91
  %v384 = vunpack.c.l.b16 %v92
  %v385 = vunpack.c.l.b16 %v93
  %v386 = vunpack.c.l.b16 %v94
  %v387 = vunpack.c.l.b16 %v95
  %v388 = vunpack.c.l.b16 %v96
  %v389 = vunpack.c.l.b16 %v97
  %v390 = vunpack.c.l.b16 %v98
  %v391 = vunpack.c.l.b16 %v99
  %v392 = vunpack.c.l.b16 %v100
  %v393 = vunpack.c.l.b16 %v101
  %v394 = vunpack.c.l.b16 %v102
  %v395 = vunpack.c.l.b16 %v103
  %v396 = vunpack.c.l.b16 %v104
  %v397 = vunpack.c.l.b16 %v105
  %v398 = vunpack.c.l.b16 %v106
  %v399 = vunpack.c.l.b16 %v107
  %v400 = vunpack.c.l.b16 %v108
  %v401 = vunpack.c.l.b16 %v109
  %v402 = vunpack.c.l.b16 %v110
  %v403 = vpack.c.b16 %v332, %v331
  %v404 = vpack.c.b16 %v334, %v333
  %v405 = vpack.c.b16 %v336, %v335
  %v406 = vpack.c.b16 %v338, %v337
  %v407 = vpack.c.b16 %v340, %v339
  %v408 = vpack.c.b16 %v342, %v341
  %v409 = vpack.c.b16 %v344, %v343
  %v410 = vpack.c.b16 %v346, %v345
  %v411 = vpack.c.b16 %v348, %v347
  %v412 = vpack.c.b16 %v350, %v349
  %v413 = vpack.c.b16 %v352, %v351
  %v414 = vpack.c.b16 %v354, %v353
  %v415 = vpack.c.b16 %v356, %v355
  %v416 = vpack.c.b16 %v358, %v357
  %v417 = vpack.c.b16 %v360, %v359
  %v418 = vpack.c.b16 %v362, %v361
  %v419 = vpack.c.b16 %v364, %v363
  %v420 = vpack.c.b16 %v366, %v365
  %v421 = vpack.c.b16 %v368, %v367
  %v422 = vpack.c.b16 %v370, %v369
  %v423 = vpack.c.b16 %v372, %v371
  %v424 = vpack.c.b16 %v374, %v373
  %v425 = vpack.c.b16 %v376, %v375
  %v426 = vpack.c.b16 %v378, %v377
  %v427 = vpack.c.b16 %v380, %v379
  %v428 = vpack.c.b16 %v382, %v381
  %v429 = vpack.c.b16 %v384, %v383
  %v430 = vpack.c.b16 %v386, %v385
  %v431 = vpack.c.b16 %v388, %v387
  %v432 = vpack.c.b16 %v390, %v389
  %v433 = vpack.c.b16 %v392, %v391
  %v434 = vpack.c.b16 %v394, %v393
  %v435 = vpack.c.b16 %v396, %v395
  %v436 = vpack.c.b16 %v398, %v397
  %v437 = vpack.c.b16 %v400, %v399
  %v438 = vpack.c.b16 %v402, %v401
  %vm475 = vcmask 523264
  %v477 = vsel %vm475, %v227, 0
  %v480 = vsel %vm475, %v232, 0
  %v483 = vsel %vm475, %v237, 0
  %v486 = vsel %vm475, %v242, 0
  %488 = vmatprep.subr.bf16.mxu0 0
  %489 = vmatpush1.bf16.msra.mxu0 %v403
  %490 = vmatprep.subr.bf16.mxu0 0
  %491 = vmatpush1.bf16.msra.mxu0 %v404
  %492 = vmatprep.subr.bf16.mxu0 0
  %493 = vmatpush1.bf16.msra.mxu0 %v405
  %494 = vmatprep.subr.bf16.mxu0 0
  %495 = vmatpush1.bf16.msra.mxu0 %v406
  %496 = vmatprep.subr.bf16.mxu0 0
  %497 = vmatpush1.bf16.msra.mxu0 %v407
  %498 = vmatprep.subr.bf16.mxu0 0
  %499 = vmatpush1.bf16.msra.mxu0 %v408
  %500 = vmatprep.subr.bf16.mxu0 0
  %501 = vmatpush1.bf16.msra.mxu0 %v409
  %502 = vmatprep.subr.bf16.mxu0 0
  %503 = vmatpush1.bf16.msra.mxu0 %v410
  %504 = vmatprep.subr.bf16.mxu0 0
  %505 = vmatpush1.bf16.msra.mxu0 %v411
  %506 = vmatprep.subr.bf16.mxu0 0
  %507 = vmatpush1.bf16.msra.mxu0 %v412
  %508 = vmatprep.subr.bf16.mxu0 0
  %509 = vmatpush1.bf16.msra.mxu0 %v413
  %510 = vmatprep.subr.bf16.mxu0 0
  %511 = vmatpush1.bf16.msra.mxu0 %v414
  %512 = vmatprep.subr.bf16.mxu0 0
  %513 = vmatpush1.bf16.msra.mxu0 %v415
  %514 = vmatprep.subr.bf16.mxu0 0
  %515 = vmatpush1.bf16.msra.mxu0 %v416
  %516 = vmatprep.subr.bf16.mxu0 0
  %517 = vmatpush1.bf16.msra.mxu0 %v417
  %518 = vmatprep.subr.bf16.mxu0 0
  %519 = vmatpush1.bf16.msra.mxu0 %v418
  %520 = vmatprep.mubr.bf16.mxu0 %v224
  %521 = vmatmul.mubr.bf16.gmra.mrb[0].mxu0 %v223
  %v522 = vpop.f32.mrb[0].mxu0
  %v523 = vadd.f32 %v122, %v522
  %v524 = vpop.f32.mrb[0].mxu0
  %v525 = vpop.f32.mrb[0].mxu0
  %v526 = vadd.f32 %v127, %v525
  %v527 = vpop.f32.mrb[0].mxu0
  %528 = vmatprep.mubr.bf16.mxu0 %v229
  %529 = vmatmul.mubr.bf16.gmra.mrb[0].mxu0 %v228
  %v530 = vpop.f32.mrb[0].mxu0
  %v531 = vadd.f32 %v132, %v530
  %v532 = vpop.f32.mrb[0].mxu0
  %v533 = vpop.f32.mrb[0].mxu0
  %v534 = vadd.f32 %v137, %v533
  %v535 = vpop.f32.mrb[0].mxu0
  %536 = vmatprep.mubr.bf16.mxu0 %v234
  %537 = vmatmul.mubr.bf16.gmra.mrb[0].mxu0 %v233
  %v538 = vpop.f32.mrb[0].mxu0
  %v539 = vadd.f32 %v142, %v538
  %v540 = vpop.f32.mrb[0].mxu0
  %v541 = vpop.f32.mrb[0].mxu0
  %v542 = vadd.f32 %v147, %v541
  %v543 = vpop.f32.mrb[0].mxu0
  %544 = vmatprep.mubr.bf16.mxu0 %v239
  %545 = vmatmul.mubr.bf16.gmra.mrb[0].mxu0 %v238
  %v546 = vpop.f32.mrb[0].mxu0
  %v547 = vadd.f32 %v152, %v546
  %v548 = vpop.f32.mrb[0].mxu0
  %v549 = vpop.f32.mrb[0].mxu0
  %v550 = vadd.f32 %v157, %v549
  %v551 = vpop.f32.mrb[0].mxu0
  %552 = vdwg.mxu0
  %553 = vmatprep.subr.bf16.mxu0 0
  %554 = vmatpush1.bf16.msra.mxu0 %v419
  %555 = vmatprep.subr.bf16.mxu0 0
  %556 = vmatpush1.bf16.msra.mxu0 %v420
  %557 = vmatprep.subr.bf16.mxu0 0
  %558 = vmatpush1.bf16.msra.mxu0 %v421
  %559 = vmatprep.subr.bf16.mxu0 0
  %560 = vmatpush1.bf16.msra.mxu0 %v422
  %561 = vmatprep.subr.bf16.mxu0 0
  %562 = vmatpush1.bf16.msra.mxu0 %v423
  %563 = vmatprep.subr.bf16.mxu0 0
  %564 = vmatpush1.bf16.msra.mxu0 %v424
  %565 = vmatprep.subr.bf16.mxu0 0
  %566 = vmatpush1.bf16.msra.mxu0 %v425
  %567 = vmatprep.subr.bf16.mxu0 0
  %568 = vmatpush1.bf16.msra.mxu0 %v426
  %569 = vmatprep.subr.bf16.mxu0 0
  %570 = vmatpush1.bf16.msra.mxu0 %v427
  %571 = vmatprep.subr.bf16.mxu0 0
  %572 = vmatpush1.bf16.msra.mxu0 %v428
  %573 = vmatprep.subr.bf16.mxu0 0
  %574 = vmatpush1.bf16.msra.mxu0 %v429
  %575 = vmatprep.subr.bf16.mxu0 0
  %576 = vmatpush1.bf16.msra.mxu0 %v430
  %577 = vmatprep.subr.bf16.mxu0 0
  %578 = vmatpush1.bf16.msra.mxu0 %v431
  %579 = vmatprep.subr.bf16.mxu0 0
  %580 = vmatpush1.bf16.msra.mxu0 %v432
  %581 = vmatprep.subr.bf16.mxu0 0
  %582 = vmatpush1.bf16.msra.mxu0 %v433
  %583 = vmatprep.subr.bf16.mxu0 0
  %584 = vmatpush1.bf16.msra.mxu0 %v434
  %585 = vmatprep.mubr.bf16.mxu0 %v226
  %586 = vmatmul.mubr.bf16.gmra.mrb[0].mxu0 %v225
  %v587 = vpop.f32.mrb[0].mxu0
  %v588 = vadd.f32 %v523, %v587
  %v589 = vpop.f32.mrb[0].mxu0
  %v590 = vpop.f32.mrb[0].mxu0
  %v591 = vadd.f32 %v526, %v590
  %v592 = vpop.f32.mrb[0].mxu0
  %593 = vmatprep.mubr.bf16.mxu0 %v231
  %594 = vmatmul.mubr.bf16.gmra.mrb[0].mxu0 %v230
  %v595 = vpop.f32.mrb[0].mxu0
  %v596 = vadd.f32 %v531, %v595
  %v597 = vpop.f32.mrb[0].mxu0
  %v598 = vpop.f32.mrb[0].mxu0
  %v599 = vadd.f32 %v534, %v598
  %v600 = vpop.f32.mrb[0].mxu0
  %601 = vmatprep.mubr.bf16.mxu0 %v236
  %602 = vmatmul.mubr.bf16.gmra.mrb[0].mxu0 %v235
  %v603 = vpop.f32.mrb[0].mxu0
  %v604 = vadd.f32 %v539, %v603
  %v605 = vpop.f32.mrb[0].mxu0
  %v606 = vpop.f32.mrb[0].mxu0
  %v607 = vadd.f32 %v542, %v606
  %v608 = vpop.f32.mrb[0].mxu0
  %609 = vmatprep.mubr.bf16.mxu0 %v241
  %610 = vmatmul.mubr.bf16.gmra.mrb[0].mxu0 %v240
  %v611 = vpop.f32.mrb[0].mxu0
  %v612 = vadd.f32 %v547, %v611
  %v613 = vpop.f32.mrb[0].mxu0
  %v614 = vpop.f32.mrb[0].mxu0
  %v615 = vadd.f32 %v550, %v614
  %v616 = vpop.f32.mrb[0].mxu0
  %617 = vdwg.mxu0
  %618 = vmatprep.subr.bf16.mxu0 0
  %619 = vmatpush1.bf16.msra.mxu0 %v435
  %620 = vmatprep.subr.bf16.mxu0 0
  %621 = vmatpush1.bf16.msra.mxu0 %v436
  %622 = vmatprep.subr.bf16.mxu0 0
  %623 = vmatpush1.bf16.msra.mxu0 %v437
  %624 = vmatprep.subr.bf16.mxu0 0
  %625 = vmatpush1.bf16.msra.mxu0 %v438
  %626 = vmatprep.subr.bf16.mxu0 0
  %627 = vmatpush1.bf16.msra.mxu0 0
  %628 = vmatprep.subr.bf16.mxu0 0
  %629 = vmatpush1.bf16.msra.mxu0 0
  %630 = vmatprep.subr.bf16.mxu0 0
  %631 = vmatpush1.bf16.msra.mxu0 0
  %632 = vmatprep.subr.bf16.mxu0 0
  %633 = vmatpush1.bf16.msra.mxu0 0
  %634 = vmatprep.subr.bf16.mxu0 0
  %635 = vmatpush1.bf16.msra.mxu0 0
  %636 = vmatprep.subr.bf16.mxu0 0
  %637 = vmatpush1.bf16.msra.mxu0 0
  %638 = vmatprep.subr.bf16.mxu0 0
  %639 = vmatpush1.bf16.msra.mxu0 0
  %640 = vmatprep.subr.bf16.mxu0 0
  %641 = vmatpush1.bf16.msra.mxu0 0
  %642 = vmatprep.subr.bf16.mxu0 0
  %643 = vmatpush1.bf16.msra.mxu0 0
  %644 = vmatprep.subr.bf16.mxu0 0
  %645 = vmatpush1.bf16.msra.mxu0 0
  %646 = vmatprep.subr.bf16.mxu0 0
  %647 = vmatpush1.bf16.msra.mxu0 0
  %648 = vmatprep.subr.bf16.mxu0 0
  %649 = vmatpush1.bf16.msra.mxu0 0
  %650 = vmatprep.mubr.bf16.mxu0 0
  %651 = vmatmul.mubr.bf16.gmra.mrb[0].mxu0 %v477
  %v652 = vpop.f32.mrb[0].mxu0
  %v653 = vadd.f32 %v588, %v652
  %v654 = vpop.f32.mrb[0].mxu0
  %v655 = vpop.f32.mrb[0].mxu0
  %v656 = vadd.f32 %v591, %v655
  %v657 = vpop.f32.mrb[0].mxu0
  %658 = vmatprep.mubr.bf16.mxu0 0
  %659 = vmatmul.mubr.bf16.gmra.mrb[0].mxu0 %v480
  %v660 = vpop.f32.mrb[0].mxu0
  %v661 = vadd.f32 %v596, %v660
  %v662 = vpop.f32.mrb[0].mxu0
  %v663 = vpop.f32.mrb[0].mxu0
  %v664 = vadd.f32 %v599, %v663
  %v665 = vpop.f32.mrb[0].mxu0
  %666 = vmatprep.mubr.bf16.mxu0 0
  %667 = vmatmul.mubr.bf16.gmra.mrb[0].mxu0 %v483
  %v668 = vpop.f32.mrb[0].mxu0
  %v669 = vadd.f32 %v604, %v668
  %v670 = vpop.f32.mrb[0].mxu0
  %v671 = vpop.f32.mrb[0].mxu0
  %v672 = vadd.f32 %v607, %v671
  %v673 = vpop.f32.mrb[0].mxu0
  %674 = vmatprep.mubr.bf16.mxu0 0
  %675 = vmatmul.mubr.bf16.gmra.mrb[0].mxu0 %v486
  %v676 = vpop.f32.mrb[0].mxu0
  %v677 = vadd.f32 %v612, %v676
  %v678 = vpop.f32.mrb[0].mxu0
  %v679 = vpop.f32.mrb[0].mxu0
  %v680 = vadd.f32 %v615, %v679
  %v681 = vpop.f32.mrb[0].mxu0
  %682 = vdwg.mxu0
  %v683 = vmax.f32 %v653, 0.0
  %v684 = vmax.f32 %v656, 0.0
  %v685 = vmax.f32 %v661, 0.0
  %v686 = vmax.f32 %v664, 0.0
  %v687 = vmax.f32 %v669, 0.0
  %v688 = vmax.f32 %v672, 0.0
  %v689 = vmax.f32 %v677, 0.0
  %v690 = vmax.f32 %v680, 0.0
  %v691 = vpack.c.bf16 %v684, %v683
  %v692 = vpack.c.bf16 %v686, %v685
  %v693 = vpack.c.bf16 %v688, %v687
  %v694 = vpack.c.bf16 %v690, %v689
  %v699 = vunpack.c.l.b16 %v691
  %v700 = vunpack.c.h.b16 %v691
  %v701 = vunpack.c.l.b16 %v692
  %v702 = vunpack.c.h.b16 %v692
  %v703 = vunpack.c.l.b16 %v693
  %v704 = vunpack.c.h.b16 %v693
  %v705 = vunpack.c.l.b16 %v694
  %v706 = vunpack.c.h.b16 %v694
  %v707 = vpack.c.b16 %v699, %v699
  %v708 = vpack.c.b16 %v700, %v700
  %v709 = vpack.c.b16 %v701, %v701
  %v710 = vpack.c.b16 %v702, %v702
  %v711 = vpack.c.b16 %v703, %v703
  %v712 = vpack.c.b16 %v704, %v704
  %v713 = vpack.c.b16 %v705, %v705
  %v714 = vpack.c.b16 %v706, %v706
  %vm723 = vcmask 797696
  %724 = vst.msk [vmem:[%s3] sm:$0xf] %vm723, %v707
  %725 = vst.msk [vmem:[%s3 + $0x4] sm:$0xf] %vm723, %v708
  %726 = vst.msk [vmem:[%s3 + $0x8] sm:$0xf] %vm723, %v709
  %727 = vst.msk [vmem:[%s3 + $0xc] sm:$0xf] %vm723, %v710
  %728 = vst.msk [vmem:[%s3 + $0x10] sm:$0xf] %vm723, %v711
  %729 = vst.msk [vmem:[%s3 + $0x14] sm:$0xf] %vm723, %v712
  %730 = vst.msk [vmem:[%s3 + $0x18] sm:$0xf] %vm723, %v713
  %731 = vst.msk [vmem:[%s3 + $0x1c] sm:$0xf] %vm723, %v714
  // Predicated region
  $region14: #{dqn_forward.6} parent=0 // pred_check
    _
  $region15: #{dqn_forward.6} parent=0 // pred_check_branch
    %733 = sbr.rel (0) target = $region17
  $region16: #{dqn_forward.6} parent=0 // pred_region
    _
  $region17: #{dqn_forward.6} parent=0 // pred_fallthru
    _
  // Predicated region
  $region18: #{dqn_forward.6} parent=0 // pred_check
    _
  $region19: #{dqn_forward.6} parent=0 // pred_check_branch
    %735 = sbr.rel (0) target = $region21
  $region20: #{dqn_forward.6} parent=0 // pred_region
    _
  $region21: #{dqn_forward.6} parent=0 // pred_fallthru
    _

// kernel: dqn_forward.7
$region0: #{dqn_forward.7}
  #allocation0 [shape = 'u32[]', space=smem, size = 0x4, offset = 0x4, fixed_abs, tag = 'smem constant byte address 0x4 - core index']
  #allocation1 [shape = 'u32[144,128]{1,0:T(1,128)}', space=vmem, size = 0x12000, scoped, tag = 'internal scratch']
  #allocation2 [shape = 'f32[2,4]{1,0:T(2,128)}', space=vmem, size = 0x400, scoped, tag = 'scratch operand']
  %s0 = inlined_call_operand.vmem [shape: bf16[2,3136], index: 0, kind: input, shape index: {}]
  %s1 = inlined_call_operand.vmem [shape: bf16[3136,512], index: 1, kind: input, shape index: {}]
  %s2 = inlined_call_operand.vmem [shape: f32[1,512], index: 2, kind: input, shape index: {}]
  %s3 = inlined_call_operand.vmem [shape: bf16[512,4], index: 3, kind: input, shape index: {}]
  %s4 = inlined_call_operand.vmem [shape: f32[1,4], index: 4, kind: input, shape index: {}]
  %s5 = inlined_call_operand.hbm [shape: f32[2,4], index: 5, kind: output, shape index: {}]
  %s6 = sld [smem:[#allocation0]]
  $region102: #{dqn_forward.7} parent=0
    _
  %s8 = ssub.s32 1, %s6
  %s9 = scalar_select 0, %s8, %s6
  $region1: #{dqn_forward.7} parent=0
    #allocation3 [shape = 'u8[1605632]{0}', space=vmem, size = 0x188000, scoped, tag = 'input window, operand 1']
    #allocation4 [shape = 'u8[1024]{0}', space=vmem, size = 0x400, scoped, tag = 'output window, operand 0, single buffered']
    #allocation5 [shape = 's32[2]{0}', space=sflag, size = 0x8, scoped, tag = 'scoped memory for dqn_forward.7']
    %10 = vsyncpa [#allocation5], 0
    loop: start=0, step=1, limit=6
    $region2: #{dqn_forward.7} parent=1 // loop_pre_header
      _
    $region3: #{dqn_forward.7} parent=1 // loop_header
      %s12 = sphi 0, %s16
      %p13 = scmp.ge.s32.totalorder %s12, 6
      %s20 = sphi 0, %s20
      %s22 = sphi 0, %s20
      %s23 = sphi 0, %s22
      %s37 = sphi 0, %s23
      %s43 = sphi 0, %s45
      %s46 = sphi 0, %s43
      %s47 = sphi 0, %s46
      %s63 = sphi 0, %s47
      %s69 = sphi 0, %s71
      %s72 = sphi 0, %s69
      %s73 = sphi 0, %s72
      %s89 = sphi 0, %s73
      %s95 = sphi 0, %s97
      %s98 = sphi 0, %s95
      %s99 = sphi 0, %s98
      %s115 = sphi 0, %s99
      %s119 = sphi 0, %s119
      %s121 = sphi 0, %s119
      %s122 = sphi 0, %s121
      %s136 = sphi 0, %s122
      %s140 = sphi 0, %s140
      %s142 = sphi 0, %s140
      %s143 = sphi 0, %s142
      %s157 = sphi 0, %s143
    $region4: #{dqn_forward.7} parent=1 // loop_header_branch
      %15 = sbr.rel (%p13) target = $region8
    $region5: #{dqn_forward.7} parent=1 // loop_body
      %s17 = ssub.s32 %s12, 1
      %s18 = ssub.s32 %s12, 2
      %s19 = sadd.s32 %s12, 1
      %s21 = sadd.s32 %s20, 1
      %p24 = scmp.eq.s32.totalorder %s12, 3
      %p25 = scmp.ne.s32.totalorder %s20, %s22
      %p26 = scmp.eq.s32.totalorder %s12, 0
      %p27 = por %p25, %p26
      %p28 = scmp.ne.s32.totalorder %s20, %s22
      %p29 = scmp.eq.s32.totalorder %s17, 3
      %p30 = por %p28, %p29
      %p31 = scmp.ne.s32.totalorder %s22, %s23
      %p32 = scmp.eq.s32.totalorder %s17, 0
      %p33 = por %p31, %p32
      %p34 = scmp.ne.s32.totalorder %s22, %s23
      %p35 = scmp.eq.s32.totalorder %s18, 3
      %p36 = por %p34, %p35
      %p38 = scmp.ne.s32.totalorder %s23, %s37
      %p39 = scmp.eq.s32.totalorder %s18, 0
      %p40 = por %p38, %p39
      %s41 = ssub.s32 %s12, %s19
      %p42 = scmp.eq.s32.totalorder %s41, 0
      %s44 = sadd.s32 %s43, 1
      %s45 = scalar_select %p42, %s43, %s44
      %p48 = pneg %p42
      %p49 = scmp.eq.s32.totalorder %s12, 3
      %p50 = por %p48, %p49
      %p51 = scmp.ne.s32.totalorder %s43, %s46
      %p52 = scmp.eq.s32.totalorder %s12, 0
      %p53 = por %p51, %p52
      %p54 = scmp.ne.s32.totalorder %s43, %s46
      %p55 = scmp.eq.s32.totalorder %s17, 3
      %p56 = por %p54, %p55
      %p57 = scmp.ne.s32.totalorder %s46, %s47
      %p58 = scmp.eq.s32.totalorder %s17, 0
      %p59 = por %p57, %p58
      %p60 = scmp.ne.s32.totalorder %s46, %s47
      %p61 = scmp.eq.s32.totalorder %s18, 3
      %p62 = por %p60, %p61
      %p64 = scmp.ne.s32.totalorder %s47, %s63
      %p65 = scmp.eq.s32.totalorder %s18, 0
      %p66 = por %p64, %p65
      %s67 = ssub.s32 %s12, %s19
      %p68 = scmp.eq.s32.totalorder %s67, 0
      %s70 = sadd.s32 %s69, 1
      %s71 = scalar_select %p68, %s69, %s70
      %p74 = pneg %p68
      %p75 = scmp.eq.s32.totalorder %s12, 3
      %p76 = por %p74, %p75
      %p77 = scmp.ne.s32.totalorder %s69, %s72
      %p78 = scmp.eq.s32.totalorder %s12, 0
      %p79 = por %p77, %p78
      %p80 = scmp.ne.s32.totalorder %s69, %s72
      %p81 = scmp.eq.s32.totalorder %s17, 3
      %p82 = por %p80, %p81
      %p83 = scmp.ne.s32.totalorder %s72, %s73
      %p84 = scmp.eq.s32.totalorder %s17, 0
      %p85 = por %p83, %p84
      %p86 = scmp.ne.s32.totalorder %s72, %s73
      %p87 = scmp.eq.s32.totalorder %s18, 3
      %p88 = por %p86, %p87
      %p90 = scmp.ne.s32.totalorder %s73, %s89
      %p91 = scmp.eq.s32.totalorder %s18, 0
      %p92 = por %p90, %p91
      %s93 = ssub.s32 %s12, %s19
      %p94 = scmp.eq.s32.totalorder %s93, 0
      %s96 = sadd.s32 %s95, 1
      %s97 = scalar_select %p94, %s95, %s96
      %p100 = pneg %p94
      %p101 = scmp.eq.s32.totalorder %s12, 3
      %p102 = por %p100, %p101
      %p103 = scmp.ne.s32.totalorder %s95, %s98
      %p104 = scmp.eq.s32.totalorder %s12, 0
      %p105 = por %p103, %p104
      %p106 = scmp.ne.s32.totalorder %s95, %s98
      %p107 = scmp.eq.s32.totalorder %s17, 3
      %p108 = por %p106, %p107
      %p109 = scmp.ne.s32.totalorder %s98, %s99
      %p110 = scmp.eq.s32.totalorder %s17, 0
      %p111 = por %p109, %p110
      %p112 = scmp.ne.s32.totalorder %s98, %s99
      %p113 = scmp.eq.s32.totalorder %s18, 3
      %p114 = por %p112, %p113
      %p116 = scmp.ne.s32.totalorder %s99, %s115
      %p117 = scmp.eq.s32.totalorder %s18, 0
      %p118 = por %p116, %p117
      %s120 = sadd.s32 %s119, 1
      %p123 = scmp.eq.s32.totalorder %s12, 3
      %p124 = scmp.ne.s32.totalorder %s119, %s121
      %p125 = scmp.eq.s32.totalorder %s12, 0
      %p126 = por %p124, %p125
      %p127 = scmp.ne.s32.totalorder %s119, %s121
      %p128 = scmp.eq.s32.totalorder %s17, 3
      %p129 = por %p127, %p128
      %p130 = scmp.ne.s32.totalorder %s121, %s122
      %p131 = scmp.eq.s32.totalorder %s17, 0
      %p132 = por %p130, %p131
      %p133 = scmp.ne.s32.totalorder %s121, %s122
      %p134 = scmp.eq.s32.totalorder %s18, 3
      %p135 = por %p133, %p134
      %p137 = scmp.ne.s32.totalorder %s122, %s136
      %p138 = scmp.eq.s32.totalorder %s18, 0
      %p139 = por %p137, %p138
      %s141 = sadd.s32 %s140, 1
      %p144 = scmp.eq.s32.totalorder %s12, 3
      %p145 = scmp.ne.s32.totalorder %s140, %s142
      %p146 = scmp.eq.s32.totalorder %s12, 0
      %p147 = por %p145, %p146
      %p148 = scmp.ne.s32.totalorder %s140, %s142
      %p149 = scmp.eq.s32.totalorder %s17, 3
      %p150 = por %p148, %p149
      %p151 = scmp.ne.s32.totalorder %s142, %s143
      %p152 = scmp.eq.s32.totalorder %s17, 0
      %p153 = por %p151, %p152
      %p154 = scmp.ne.s32.totalorder %s142, %s143
      %p155 = scmp.eq.s32.totalorder %s18, 3
      %p156 = por %p154, %p155
      %p158 = scmp.ne.s32.totalorder %s143, %s157
      %p159 = scmp.eq.s32.totalorder %s18, 0
      %p160 = por %p158, %p159
      %p161 = scmp.le.s32.totalorder 1, %s12
      %p162 = scmp.lt.s32.totalorder %s12, 5
      %p163 = pnand %p161, %p162
      %p164 = pneg %p163
      // Predicated region
      $region9: #{dqn_forward.7} parent=5 // pred_check
        _
      $region10: #{dqn_forward.7} parent=5 // pred_check_branch
        %166 = sbr.rel (%p163) target = $region12
      $region11: #{dqn_forward.7} parent=5 // pred_region
        %s167 = ssub.s32 %s12, 1
        // Predicated region
        $region13: #{dqn_forward.7} parent=11 // pred_check
          %p168 = pneg %p33
        $region14: #{dqn_forward.7} parent=11 // pred_check_branch
          %170 = sbr.rel (%p168) target = $region16
        $region15: #{dqn_forward.7} parent=11 // pred_region
          _
        $region16: #{dqn_forward.7} parent=11 // pred_fallthru
          _
        // Predicated region
        $region17: #{dqn_forward.7} parent=11 // pred_check
          %p171 = pneg %p132
        $region18: #{dqn_forward.7} parent=11 // pred_check_branch
          %173 = sbr.rel (%p171) target = $region20
        $region19: #{dqn_forward.7} parent=11 // pred_region
          _
        $region20: #{dqn_forward.7} parent=11 // pred_fallthru
          _
      $region12: #{dqn_forward.7} parent=5 // pred_fallthru
        _
      %p174 = scmp.lt.s32.totalorder %s12, 4
      // Predicated region
      $region21: #{dqn_forward.7} parent=5 // pred_check
        %p175 = pneg %p174
      $region22: #{dqn_forward.7} parent=5 // pred_check_branch
        %177 = sbr.rel (%p175) target = $region24
      $region23: #{dqn_forward.7} parent=5 // pred_region
        // Predicated region
        $region25: #{dqn_forward.7} parent=23 // pred_check
          %p178 = pneg %p53
        $region26: #{dqn_forward.7} parent=23 // pred_check_branch
          %180 = sbr.rel (%p178) target = $region28
        $region27: #{dqn_forward.7} parent=23 // pred_region
          %s181 = sand.u32 %s43, 1
          %s182 = sand.u32 %s43, 1
          %s183 = smul.addr %s182, 1568
          %s184 = scalar_lea.vmem [#allocation3], %s183
          %s185 = smul.addr %s12, 4
          %s186 = scalar_lea.vmem %s1, %s185
          // Predicated region
          $region29: #{dqn_forward.7} parent=27 // pred_check
            _
          $region30: #{dqn_forward.7} parent=27 // pred_check_branch
            %188 = sbr.rel (0) target = $region32
          $region31: #{dqn_forward.7} parent=27 // pred_region
            // Predicated region
            $region33: #{dqn_forward.7} parent=31 // pred_check
              _
            $region34: #{dqn_forward.7} parent=31 // pred_check_branch
              %190 = sbr.rel target = $region36
            $region35: #{dqn_forward.7} parent=31 // pred_region
              // Predicated region
              $region48: #{dqn_forward.7} parent=35 // pred_check
                _
              $region49: #{dqn_forward.7} parent=35 // pred_check_branch
                %987 = sbr.rel (0) target = $region51
              $region50: #{dqn_forward.7} parent=35 // pred_region
                loop: start=0, step=1, limit=1
                $region52: #{dqn_forward.7} parent=50 // loop_pre_header
                  _
                $region53: #{dqn_forward.7} parent=50 // loop_header
                  %s989 = sphi 0, %s993
                  %p990 = scmp.ge.s32.totalorder %s989, 1
                  %s994 = sphi %s186, %s186
                  %s995 = sphi %s184, %s184
                $region54: #{dqn_forward.7} parent=50 // loop_header_branch
                  %992 = sbr.rel (%p990) target = $region58
                $region55: #{dqn_forward.7} parent=50 // loop_body
                  _
                $region56: #{dqn_forward.7} parent=50 // loop_footer
                  %s993 = sadd.s32 1, %s989
                $region57: #{dqn_forward.7} parent=50 // loop_footer_branch
                  %988 = sbr.rel target = $region53
                $region58: #{dqn_forward.7} parent=50 // loop_exit
                  _
                loop: start=0, step=1, limit=1
                $region59: #{dqn_forward.7} parent=50 // loop_pre_header
                  _
                $region60: #{dqn_forward.7} parent=50 // loop_header
                  %s998 = sphi 0, %s1002
                  %p999 = scmp.ge.s32.totalorder %s998, 1
                  %s1003 = sphi %s186, %s186
                  %s1004 = sphi %s184, %s184
                $region61: #{dqn_forward.7} parent=50 // loop_header_branch
                  %1001 = sbr.rel (%p999) target = $region65
                $region62: #{dqn_forward.7} parent=50 // loop_body
                  %v1005 = vld [vmem:[%s1003] sm:$0xf]
                  %1006 = vst [vmem:[%s1004] sm:$0xf] %v1005
                  %v1007 = vld [vmem:[%s1003 + $0x10] sm:$0xf]
                  %1008 = vst [vmem:[%s1004 + $0x4] sm:$0xf] %v1007
                  %v1009 = vld [vmem:[%s1003 + $0x20] sm:$0xf]
                  %1010 = vst [vmem:[%s1004 + $0x8] sm:$0xf] %v1009
                  %v1011 = vld [vmem:[%s1003 + $0x30] sm:$0xf]
                  %1012 = vst [vmem:[%s1004 + $0xc] sm:$0xf] %v1011
                  %v1013 = vld [vmem:[%s1003 + $0x40] sm:$0xf]
                  %1014 = vst [vmem:[%s1004 + $0x10] sm:$0xf] %v1013
                  %v1015 = vld [vmem:[%s1003 + $0x50] sm:$0xf]
                  %1016 = vst [vmem:[%s1004 + $0x14] sm:$0xf] %v1015
                  %v1017 = vld [vmem:[%s1003 + $0x60] sm:$0xf]
                  %1018 = vst [vmem:[%s1004 + $0x18] sm:$0xf] %v1017
                  %v1019 = vld [vmem:[%s1003 + $0x70] sm:$0xf]
                  %1020 = vst [vmem:[%s1004 + $0x1c] sm:$0xf] %v1019
                  %v1021 = vld [vmem:[%s1003 + $0x80] sm:$0xf]
                  %1022 = vst [vmem:[%s1004 + $0x20] sm:$0xf] %v1021
                  %v1023 = vld [vmem:[%s1003 + $0x90] sm:$0xf]
                  %1024 = vst [vmem:[%s1004 + $0x24] sm:$0xf] %v1023
                  %v1025 = vld [vmem:[%s1003 + $0xa0] sm:$0xf]
                  %1026 = vst [vmem:[%s1004 + $0x28] sm:$0xf] %v1025
                  %v1027 = vld [vmem:[%s1003 + $0xb0] sm:$0xf]
                  %1028 = vst [vmem:[%s1004 + $0x2c] sm:$0xf] %v1027
                  %v1029 = vld [vmem:[%s1003 + $0xc0] sm:$0xf]
                  %1030 = vst [vmem:[%s1004 + $0x30] sm:$0xf] %v1029
                  %v1031 = vld [vmem:[%s1003 + $0xd0] sm:$0xf]
                  %1032 = vst [vmem:[%s1004 + $0x34] sm:$0xf] %v1031
                  %v1033 = vld [vmem:[%s1003 + $0xe0] sm:$0xf]
                  %1034 = vst [vmem:[%s1004 + $0x38] sm:$0xf] %v1033
                  %v1035 = vld [vmem:[%s1003 + $0xf0] sm:$0xf]
                  %1036 = vst [vmem:[%s1004 + $0x3c] sm:$0xf] %v1035
                  %v1037 = vld [vmem:[%s1003 + $0x100] sm:$0xf]
                  %1038 = vst [vmem:[%s1004 + $0x40] sm:$0xf] %v1037
                  %v1039 = vld [vmem:[%s1003 + $0x110] sm:$0xf]
                  %1040 = vst [vmem:[%s1004 + $0x44] sm:$0xf] %v1039
                  %v1041 = vld [vmem:[%s1003 + $0x120] sm:$0xf]
                  %1042 = vst [vmem:[%s1004 + $0x48] sm:$0xf] %v1041
                  %v1043 = vld [vmem:[%s1003 + $0x130] sm:$0xf]
                  %1044 = vst [vmem:[%s1004 + $0x4c] sm:$0xf] %v1043
                  %v1045 = vld [vmem:[%s1003 + $0x140] sm:$0xf]
                  %1046 = vst [vmem:[%s1004 + $0x50] sm:$0xf] %v1045
                  %v1047 = vld [vmem:[%s1003 + $0x150] sm:$0xf]
                  %1048 = vst [vmem:[%s1004 + $0x54] sm:$0xf] %v1047
                  %v1049 = vld [vmem:[%s1003 + $0x160] sm:$0xf]
                  %1050 = vst [vmem:[%s1004 + $0x58] sm:$0xf] %v1049
                  %v1051 = vld [vmem:[%s1003 + $0x170] sm:$0xf]
                  %1052 = vst [vmem:[%s1004 + $0x5c] sm:$0xf] %v1051
                  %v1053 = vld [vmem:[%s1003 + $0x180] sm:$0xf]
                  %1054 = vst [vmem:[%s1004 + $0x60] sm:$0xf] %v1053
                  %v1055 = vld [vmem:[%s1003 + $0x190] sm:$0xf]
                  %1056 = vst [vmem:[%s1004 + $0x64] sm:$0xf] %v1055
                  %v1057 = vld [vmem:[%s1003 + $0x1a0] sm:$0xf]
                  %1058 = vst [vmem:[%s1004 + $0x68] sm:$0xf] %v1057
                  %v1059 = vld [vmem:[%s1003 + $0x1b0] sm:$0xf]
                  %1060 = vst [vmem:[%s1004 + $0x6c] sm:$0xf] %v1059
                  %v1061 = vld [vmem:[%s1003 + $0x1c0] sm:$0xf]
                  %1062 = vst [vmem:[%s1004 + $0x70] sm:$0xf] %v1061
                  %v1063 = vld [vmem:[%s1003 + $0x1d0] sm:$0xf]
                  %1064 = vst [vmem:[%s1004 + $0x74] sm:$0xf] %v1063
                  %v1065 = vld [vmem:[%s1003 + $0x1e0] sm:$0xf]
                  %1066 = vst [vmem:[%s1004 + $0x78] sm:$0xf] %v1065
                  %v1067 = vld [vmem:[%s1003 + $0x1f0] sm:$0xf]
                  %1068 = vst [vmem:[%s1004 + $0x7c] sm:$0xf] %v1067
                  %v1069 = vld [vmem:[%s1003 + $0x200] sm:$0xf]
                  %1070 = vst [vmem:[%s1004 + $0x80] sm:$0xf] %v1069
                  %v1071 = vld [vmem:[%s1003 + $0x210] sm:$0xf]
                  %1072 = vst [vmem:[%s1004 + $0x84] sm:$0xf] %v1071
                  %v1073 = vld [vmem:[%s1003 + $0x220] sm:$0xf]
                  %1074 = vst [vmem:[%s1004 + $0x88] sm:$0xf] %v1073
                  %v1075 = vld [vmem:[%s1003 + $0x230] sm:$0xf]
                  %1076 = vst [vmem:[%s1004 + $0x8c] sm:$0xf] %v1075
                  %v1077 = vld [vmem:[%s1003 + $0x240] sm:$0xf]
                  %1078 = vst [vmem:[%s1004 + $0x90] sm:$0xf] %v1077
                  %v1079 = vld [vmem:[%s1003 + $0x250] sm:$0xf]
                  %1080 = vst [vmem:[%s1004 + $0x94] sm:$0xf] %v1079
                  %v1081 = vld [vmem:[%s1003 + $0x260] sm:$0xf]
                  %1082 = vst [vmem:[%s1004 + $0x98] sm:$0xf] %v1081
                  %v1083 = vld [vmem:[%s1003 + $0x270] sm:$0xf]
                  %1084 = vst [vmem:[%s1004 + $0x9c] sm:$0xf] %v1083
                  %v1085 = vld [vmem:[%s1003 + $0x280] sm:$0xf]
                  %1086 = vst [vmem:[%s1004 + $0xa0] sm:$0xf] %v1085
                  %v1087 = vld [vmem:[%s1003 + $0x290] sm:$0xf]
                  %1088 = vst [vmem:[%s1004 + $0xa4] sm:$0xf] %v1087
                  %v1089 = vld [vmem:[%s1003 + $0x2a0] sm:$0xf]
                  %1090 = vst [vmem:[%s1004 + $0xa8] sm:$0xf] %v1089
                  %v1091 = vld [vmem:[%s1003 + $0x2b0] sm:$0xf]
                  %1092 = vst [vmem:[%s1004 + $0xac] sm:$0xf] %v1091
                  %v1093 = vld [vmem:[%s1003 + $0x2c0] sm:$0xf]
                  %1094 = vst [vmem:[%s1004 + $0xb0] sm:$0xf] %v1093
                  %v1095 = vld [vmem:[%s1003 + $0x2d0] sm:$0xf]
                  %1096 = vst [vmem:[%s1004 + $0xb4] sm:$0xf] %v1095
                  %v1097 = vld [vmem:[%s1003 + $0x2e0] sm:$0xf]
                  %1098 = vst [vmem:[%s1004 + $0xb8] sm:$0xf] %v1097
                  %v1099 = vld [vmem:[%s1003 + $0x2f0] sm:$0xf]
                  %1100 = vst [vmem:[%s1004 + $0xbc] sm:$0xf] %v1099
                  %v1101 = vld [vmem:[%s1003 + $0x300] sm:$0xf]
                  %1102 = vst [vmem:[%s1004 + $0xc0] sm:$0xf] %v1101
                  %v1103 = vld [vmem:[%s1003 + $0x310] sm:$0xf]
                  %1104 = vst [vmem:[%s1004 + $0xc4] sm:$0xf] %v1103
                  %v1105 = vld [vmem:[%s1003 + $0x320] sm:$0xf]
                  %1106 = vst [vmem:[%s1004 + $0xc8] sm:$0xf] %v1105
                  %v1107 = vld [vmem:[%s1003 + $0x330] sm:$0xf]
                  %1108 = vst [vmem:[%s1004 + $0xcc] sm:$0xf] %v1107
                  %v1109 = vld [vmem:[%s1003 + $0x340] sm:$0xf]
                  %1110 = vst [vmem:[%s1004 + $0xd0] sm:$0xf] %v1109
                  %v1111 = vld [vmem:[%s1003 + $0x350] sm:$0xf]
                  %1112 = vst [vmem:[%s1004 + $0xd4] sm:$0xf] %v1111
                  %v1113 = vld [vmem:[%s1003 + $0x360] sm:$0xf]
                  %1114 = vst [vmem:[%s1004 + $0xd8] sm:$0xf] %v1113
                  %v1115 = vld [vmem:[%s1003 + $0x370] sm:$0xf]
                  %1116 = vst [vmem:[%s1004 + $0xdc] sm:$0xf] %v1115
                  %v1117 = vld [vmem:[%s1003 + $0x380] sm:$0xf]
                  %1118 = vst [vmem:[%s1004 + $0xe0] sm:$0xf] %v1117
                  %v1119 = vld [vmem:[%s1003 + $0x390] sm:$0xf]
                  %1120 = vst [vmem:[%s1004 + $0xe4] sm:$0xf] %v1119
                  %v1121 = vld [vmem:[%s1003 + $0x3a0] sm:$0xf]
                  %1122 = vst [vmem:[%s1004 + $0xe8] sm:$0xf] %v1121
                  %v1123 = vld [vmem:[%s1003 + $0x3b0] sm:$0xf]
                  %1124 = vst [vmem:[%s1004 + $0xec] sm:$0xf] %v1123
                  %v1125 = vld [vmem:[%s1003 + $0x3c0] sm:$0xf]
                  %1126 = vst [vmem:[%s1004 + $0xf0] sm:$0xf] %v1125
                  %v1127 = vld [vmem:[%s1003 + $0x3d0] sm:$0xf]
                  %1128 = vst [vmem:[%s1004 + $0xf4] sm:$0xf] %v1127
                  %v1129 = vld [vmem:[%s1003 + $0x3e0] sm:$0xf]
                  %1130 = vst [vmem:[%s1004 + $0xf8] sm:$0xf] %v1129
                  %v1131 = vld [vmem:[%s1003 + $0x3f0] sm:$0xf]
                  %1132 = vst [vmem:[%s1004 + $0xfc] sm:$0xf] %v1131
                  %v1133 = vld [vmem:[%s1003 + $0x400] sm:$0xf]
                  %1134 = vst [vmem:[%s1004 + $0x100] sm:$0xf] %v1133
                  %v1135 = vld [vmem:[%s1003 + $0x410] sm:$0xf]
                  %1136 = vst [vmem:[%s1004 + $0x104] sm:$0xf] %v1135
                  %v1137 = vld [vmem:[%s1003 + $0x420] sm:$0xf]
                  %1138 = vst [vmem:[%s1004 + $0x108] sm:$0xf] %v1137
                  %v1139 = vld [vmem:[%s1003 + $0x430] sm:$0xf]
                  %1140 = vst [vmem:[%s1004 + $0x10c] sm:$0xf] %v1139
                  %v1141 = vld [vmem:[%s1003 + $0x440] sm:$0xf]
                  %1142 = vst [vmem:[%s1004 + $0x110] sm:$0xf] %v1141
                  %v1143 = vld [vmem:[%s1003 + $0x450] sm:$0xf]
                  %1144 = vst [vmem:[%s1004 + $0x114] sm:$0xf] %v1143
                  %v1145 = vld [vmem:[%s1003 + $0x460] sm:$0xf]
                  %1146 = vst [vmem:[%s1004 + $0x118] sm:$0xf] %v1145
                  %v1147 = vld [vmem:[%s1003 + $0x470] sm:$0xf]
                  %1148 = vst [vmem:[%s1004 + $0x11c] sm:$0xf] %v1147
                  %v1149 = vld [vmem:[%s1003 + $0x480] sm:$0xf]
                  %1150 = vst [vmem:[%s1004 + $0x120] sm:$0xf] %v1149
                  %v1151 = vld [vmem:[%s1003 + $0x490] sm:$0xf]
                  %1152 = vst [vmem:[%s1004 + $0x124] sm:$0xf] %v1151
                  %v1153 = vld [vmem:[%s1003 + $0x4a0] sm:$0xf]
                  %1154 = vst [vmem:[%s1004 + $0x128] sm:$0xf] %v1153
                  %v1155 = vld [vmem:[%s1003 + $0x4b0] sm:$0xf]
                  %1156 = vst [vmem:[%s1004 + $0x12c] sm:$0xf] %v1155
                  %v1157 = vld [vmem:[%s1003 + $0x4c0] sm:$0xf]
                  %1158 = vst [vmem:[%s1004 + $0x130] sm:$0xf] %v1157
                  %v1159 = vld [vmem:[%s1003 + $0x4d0] sm:$0xf]
                  %1160 = vst [vmem:[%s1004 + $0x134] sm:$0xf] %v1159
                  %v1161 = vld [vmem:[%s1003 + $0x4e0] sm:$0xf]
                  %1162 = vst [vmem:[%s1004 + $0x138] sm:$0xf] %v1161
                  %v1163 = vld [vmem:[%s1003 + $0x4f0] sm:$0xf]
                  %1164 = vst [vmem:[%s1004 + $0x13c] sm:$0xf] %v1163
                  %v1165 = vld [vmem:[%s1003 + $0x500] sm:$0xf]
                  %1166 = vst [vmem:[%s1004 + $0x140] sm:$0xf] %v1165
                  %v1167 = vld [vmem:[%s1003 + $0x510] sm:$0xf]
                  %1168 = vst [vmem:[%s1004 + $0x144] sm:$0xf] %v1167
                  %v1169 = vld [vmem:[%s1003 + $0x520] sm:$0xf]
                  %1170 = vst [vmem:[%s1004 + $0x148] sm:$0xf] %v1169
                  %v1171 = vld [vmem:[%s1003 + $0x530] sm:$0xf]
                  %1172 = vst [vmem:[%s1004 + $0x14c] sm:$0xf] %v1171
                  %v1173 = vld [vmem:[%s1003 + $0x540] sm:$0xf]
                  %1174 = vst [vmem:[%s1004 + $0x150] sm:$0xf] %v1173
                  %v1175 = vld [vmem:[%s1003 + $0x550] sm:$0xf]
                  %1176 = vst [vmem:[%s1004 + $0x154] sm:$0xf] %v1175
                  %v1177 = vld [vmem:[%s1003 + $0x560] sm:$0xf]
                  %1178 = vst [vmem:[%s1004 + $0x158] sm:$0xf] %v1177
                  %v1179 = vld [vmem:[%s1003 + $0x570] sm:$0xf]
                  %1180 = vst [vmem:[%s1004 + $0x15c] sm:$0xf] %v1179
                  %v1181 = vld [vmem:[%s1003 + $0x580] sm:$0xf]
                  %1182 = vst [vmem:[%s1004 + $0x160] sm:$0xf] %v1181
                  %v1183 = vld [vmem:[%s1003 + $0x590] sm:$0xf]
                  %1184 = vst [vmem:[%s1004 + $0x164] sm:$0xf] %v1183
                  %v1185 = vld [vmem:[%s1003 + $0x5a0] sm:$0xf]
                  %1186 = vst [vmem:[%s1004 + $0x168] sm:$0xf] %v1185
                  %v1187 = vld [vmem:[%s1003 + $0x5b0] sm:$0xf]
                  %1188 = vst [vmem:[%s1004 + $0x16c] sm:$0xf] %v1187
                  %v1189 = vld [vmem:[%s1003 + $0x5c0] sm:$0xf]
                  %1190 = vst [vmem:[%s1004 + $0x170] sm:$0xf] %v1189
                  %v1191 = vld [vmem:[%s1003 + $0x5d0] sm:$0xf]
                  %1192 = vst [vmem:[%s1004 + $0x174] sm:$0xf] %v1191
                  %v1193 = vld [vmem:[%s1003 + $0x5e0] sm:$0xf]
                  %1194 = vst [vmem:[%s1004 + $0x178] sm:$0xf] %v1193
                  %v1195 = vld [vmem:[%s1003 + $0x5f0] sm:$0xf]
                  %1196 = vst [vmem:[%s1004 + $0x17c] sm:$0xf] %v1195
                  %v1197 = vld [vmem:[%s1003 + $0x600] sm:$0xf]
                  %1198 = vst [vmem:[%s1004 + $0x180] sm:$0xf] %v1197
                  %v1199 = vld [vmem:[%s1003 + $0x610] sm:$0xf]
                  %1200 = vst [vmem:[%s1004 + $0x184] sm:$0xf] %v1199
                  %v1201 = vld [vmem:[%s1003 + $0x620] sm:$0xf]
                  %1202 = vst [vmem:[%s1004 + $0x188] sm:$0xf] %v1201
                  %v1203 = vld [vmem:[%s1003 + $0x630] sm:$0xf]
                  %1204 = vst [vmem:[%s1004 + $0x18c] sm:$0xf] %v1203
                  %v1205 = vld [vmem:[%s1003 + $0x640] sm:$0xf]
                  %1206 = vst [vmem:[%s1004 + $0x190] sm:$0xf] %v1205
                  %v1207 = vld [vmem:[%s1003 + $0x650] sm:$0xf]
                  %1208 = vst [vmem:[%s1004 + $0x194] sm:$0xf] %v1207
                  %v1209 = vld [vmem:[%s1003 + $0x660] sm:$0xf]
                  %1210 = vst [vmem:[%s1004 + $0x198] sm:$0xf] %v1209
                  %v1211 = vld [vmem:[%s1003 + $0x670] sm:$0xf]
                  %1212 = vst [vmem:[%s1004 + $0x19c] sm:$0xf] %v1211
                  %v1213 = vld [vmem:[%s1003 + $0x680] sm:$0xf]
                  %1214 = vst [vmem:[%s1004 + $0x1a0] sm:$0xf] %v1213
                  %v1215 = vld [vmem:[%s1003 + $0x690] sm:$0xf]
                  %1216 = vst [vmem:[%s1004 + $0x1a4] sm:$0xf] %v1215
                  %v1217 = vld [vmem:[%s1003 + $0x6a0] sm:$0xf]
                  %1218 = vst [vmem:[%s1004 + $0x1a8] sm:$0xf] %v1217
                  %v1219 = vld [vmem:[%s1003 + $0x6b0] sm:$0xf]
                  %1220 = vst [vmem:[%s1004 + $0x1ac] sm:$0xf] %v1219
                  %v1221 = vld [vmem:[%s1003 + $0x6c0] sm:$0xf]
                  %1222 = vst [vmem:[%s1004 + $0x1b0] sm:$0xf] %v1221
                  %v1223 = vld [vmem:[%s1003 + $0x6d0] sm:$0xf]
                  %1224 = vst [vmem:[%s1004 + $0x1b4] sm:$0xf] %v1223
                  %v1225 = vld [vmem:[%s1003 + $0x6e0] sm:$0xf]
                  %1226 = vst [vmem:[%s1004 + $0x1b8] sm:$0xf] %v1225
                  %v1227 = vld [vmem:[%s1003 + $0x6f0] sm:$0xf]
                  %1228 = vst [vmem:[%s1004 + $0x1bc] sm:$0xf] %v1227
                  %v1229 = vld [vmem:[%s1003 + $0x700] sm:$0xf]
                  %1230 = vst [vmem:[%s1004 + $0x1c0] sm:$0xf] %v1229
                  %v1231 = vld [vmem:[%s1003 + $0x710] sm:$0xf]
                  %1232 = vst [vmem:[%s1004 + $0x1c4] sm:$0xf] %v1231
                  %v1233 = vld [vmem:[%s1003 + $0x720] sm:$0xf]
                  %1234 = vst [vmem:[%s1004 + $0x1c8] sm:$0xf] %v1233
                  %v1235 = vld [vmem:[%s1003 + $0x730] sm:$0xf]
                  %1236 = vst [vmem:[%s1004 + $0x1cc] sm:$0xf] %v1235
                  %v1237 = vld [vmem:[%s1003 + $0x740] sm:$0xf]
                  %1238 = vst [vmem:[%s1004 + $0x1d0] sm:$0xf] %v1237
                  %v1239 = vld [vmem:[%s1003 + $0x750] sm:$0xf]
                  %1240 = vst [vmem:[%s1004 + $0x1d4] sm:$0xf] %v1239
                  %v1241 = vld [vmem:[%s1003 + $0x760] sm:$0xf]
                  %1242 = vst [vmem:[%s1004 + $0x1d8] sm:$0xf] %v1241
                  %v1243 = vld [vmem:[%s1003 + $0x770] sm:$0xf]
                  %1244 = vst [vmem:[%s1004 + $0x1dc] sm:$0xf] %v1243
                  %v1245 = vld [vmem:[%s1003 + $0x780] sm:$0xf]
                  %1246 = vst [vmem:[%s1004 + $0x1e0] sm:$0xf] %v1245
                  %v1247 = vld [vmem:[%s1003 + $0x790] sm:$0xf]
                  %1248 = vst [vmem:[%s1004 + $0x1e4] sm:$0xf] %v1247
                  %v1249 = vld [vmem:[%s1003 + $0x7a0] sm:$0xf]
                  %1250 = vst [vmem:[%s1004 + $0x1e8] sm:$0xf] %v1249
                  %v1251 = vld [vmem:[%s1003 + $0x7b0] sm:$0xf]
                  %1252 = vst [vmem:[%s1004 + $0x1ec] sm:$0xf] %v1251
                  %v1253 = vld [vmem:[%s1003 + $0x7c0] sm:$0xf]
                  %1254 = vst [vmem:[%s1004 + $0x1f0] sm:$0xf] %v1253
                  %v1255 = vld [vmem:[%s1003 + $0x7d0] sm:$0xf]
                  %1256 = vst [vmem:[%s1004 + $0x1f4] sm:$0xf] %v1255
                  %v1257 = vld [vmem:[%s1003 + $0x7e0] sm:$0xf]
                  %1258 = vst [vmem:[%s1004 + $0x1f8] sm:$0xf] %v1257
                  %v1259 = vld [vmem:[%s1003 + $0x7f0] sm:$0xf]
                  %1260 = vst [vmem:[%s1004 + $0x1fc] sm:$0xf] %v1259
                  %v1261 = vld [vmem:[%s1003 + $0x800] sm:$0xf]
                  %1262 = vst [vmem:[%s1004 + $0x200] sm:$0xf] %v1261
                  %v1263 = vld [vmem:[%s1003 + $0x810] sm:$0xf]
                  %1264 = vst [vmem:[%s1004 + $0x204] sm:$0xf] %v1263
                  %v1265 = vld [vmem:[%s1003 + $0x820] sm:$0xf]
                  %1266 = vst [vmem:[%s1004 + $0x208] sm:$0xf] %v1265
                  %v1267 = vld [vmem:[%s1003 + $0x830] sm:$0xf]
                  %1268 = vst [vmem:[%s1004 + $0x20c] sm:$0xf] %v1267
                  %v1269 = vld [vmem:[%s1003 + $0x840] sm:$0xf]
                  %1270 = vst [vmem:[%s1004 + $0x210] sm:$0xf] %v1269
                  %v1271 = vld [vmem:[%s1003 + $0x850] sm:$0xf]
                  %1272 = vst [vmem:[%s1004 + $0x214] sm:$0xf] %v1271
                  %v1273 = vld [vmem:[%s1003 + $0x860] sm:$0xf]
                  %1274 = vst [vmem:[%s1004 + $0x218] sm:$0xf] %v1273
                  %v1275 = vld [vmem:[%s1003 + $0x870] sm:$0xf]
                  %1276 = vst [vmem:[%s1004 + $0x21c] sm:$0xf] %v1275
                  %v1277 = vld [vmem:[%s1003 + $0x880] sm:$0xf]
                  %1278 = vst [vmem:[%s1004 + $0x220] sm:$0xf] %v1277
                  %v1279 = vld [vmem:[%s1003 + $0x890] sm:$0xf]
                  %1280 = vst [vmem:[%s1004 + $0x224] sm:$0xf] %v1279
                  %v1281 = vld [vmem:[%s1003 + $0x8a0] sm:$0xf]
                  %1282 = vst [vmem:[%s1004 + $0x228] sm:$0xf] %v1281
                  %v1283 = vld [vmem:[%s1003 + $0x8b0] sm:$0xf]
                  %1284 = vst [vmem:[%s1004 + $0x22c] sm:$0xf] %v1283
                  %v1285 = vld [vmem:[%s1003 + $0x8c0] sm:$0xf]
                  %1286 = vst [vmem:[%s1004 + $0x230] sm:$0xf] %v1285
                  %v1287 = vld [vmem:[%s1003 + $0x8d0] sm:$0xf]
                  %1288 = vst [vmem:[%s1004 + $0x234] sm:$0xf] %v1287
                  %v1289 = vld [vmem:[%s1003 + $0x8e0] sm:$0xf]
                  %1290 = vst [vmem:[%s1004 + $0x238] sm:$0xf] %v1289
                  %v1291 = vld [vmem:[%s1003 + $0x8f0] sm:$0xf]
                  %1292 = vst [vmem:[%s1004 + $0x23c] sm:$0xf] %v1291
                  %v1293 = vld [vmem:[%s1003 + $0x900] sm:$0xf]
                  %1294 = vst [vmem:[%s1004 + $0x240] sm:$0xf] %v1293
                  %v1295 = vld [vmem:[%s1003 + $0x910] sm:$0xf]
                  %1296 = vst [vmem:[%s1004 + $0x244] sm:$0xf] %v1295
                  %v1297 = vld [vmem:[%s1003 + $0x920] sm:$0xf]
                  %1298 = vst [vmem:[%s1004 + $0x248] sm:$0xf] %v1297
                  %v1299 = vld [vmem:[%s1003 + $0x930] sm:$0xf]
                  %1300 = vst [vmem:[%s1004 + $0x24c] sm:$0xf] %v1299
                  %v1301 = vld [vmem:[%s1003 + $0x940] sm:$0xf]
                  %1302 = vst [vmem:[%s1004 + $0x250] sm:$0xf] %v1301
                  %v1303 = vld [vmem:[%s1003 + $0x950] sm:$0xf]
                  %1304 = vst [vmem:[%s1004 + $0x254] sm:$0xf] %v1303
                  %v1305 = vld [vmem:[%s1003 + $0x960] sm:$0xf]
                  %1306 = vst [vmem:[%s1004 + $0x258] sm:$0xf] %v1305
                  %v1307 = vld [vmem:[%s1003 + $0x970] sm:$0xf]
                  %1308 = vst [vmem:[%s1004 + $0x25c] sm:$0xf] %v1307
                  %v1309 = vld [vmem:[%s1003 + $0x980] sm:$0xf]
                  %1310 = vst [vmem:[%s1004 + $0x260] sm:$0xf] %v1309
                  %v1311 = vld [vmem:[%s1003 + $0x990] sm:$0xf]
                  %1312 = vst [vmem:[%s1004 + $0x264] sm:$0xf] %v1311
                  %v1313 = vld [vmem:[%s1003 + $0x9a0] sm:$0xf]
                  %1314 = vst [vmem:[%s1004 + $0x268] sm:$0xf] %v1313
                  %v1315 = vld [vmem:[%s1003 + $0x9b0] sm:$0xf]
                  %1316 = vst [vmem:[%s1004 + $0x26c] sm:$0xf] %v1315
                  %v1317 = vld [vmem:[%s1003 + $0x9c0] sm:$0xf]
                  %1318 = vst [vmem:[%s1004 + $0x270] sm:$0xf] %v1317
                  %v1319 = vld [vmem:[%s1003 + $0x9d0] sm:$0xf]
                  %1320 = vst [vmem:[%s1004 + $0x274] sm:$0xf] %v1319
                  %v1321 = vld [vmem:[%s1003 + $0x9e0] sm:$0xf]
                  %1322 = vst [vmem:[%s1004 + $0x278] sm:$0xf] %v1321
                  %v1323 = vld [vmem:[%s1003 + $0x9f0] sm:$0xf]
                  %1324 = vst [vmem:[%s1004 + $0x27c] sm:$0xf] %v1323
                  %v1325 = vld [vmem:[%s1003 + $0xa00] sm:$0xf]
                  %1326 = vst [vmem:[%s1004 + $0x280] sm:$0xf] %v1325
                  %v1327 = vld [vmem:[%s1003 + $0xa10] sm:$0xf]
                  %1328 = vst [vmem:[%s1004 + $0x284] sm:$0xf] %v1327
                  %v1329 = vld [vmem:[%s1003 + $0xa20] sm:$0xf]
                  %1330 = vst [vmem:[%s1004 + $0x288] sm:$0xf] %v1329
                  %v1331 = vld [vmem:[%s1003 + $0xa30] sm:$0xf]
                  %1332 = vst [vmem:[%s1004 + $0x28c] sm:$0xf] %v1331
                  %v1333 = vld [vmem:[%s1003 + $0xa40] sm:$0xf]
                  %1334 = vst [vmem:[%s1004 + $0x290] sm:$0xf] %v1333
                  %v1335 = vld [vmem:[%s1003 + $0xa50] sm:$0xf]
                  %1336 = vst [vmem:[%s1004 + $0x294] sm:$0xf] %v1335
                  %v1337 = vld [vmem:[%s1003 + $0xa60] sm:$0xf]
                  %1338 = vst [vmem:[%s1004 + $0x298] sm:$0xf] %v1337
                  %v1339 = vld [vmem:[%s1003 + $0xa70] sm:$0xf]
                  %1340 = vst [vmem:[%s1004 + $0x29c] sm:$0xf] %v1339
                  %v1341 = vld [vmem:[%s1003 + $0xa80] sm:$0xf]
                  %1342 = vst [vmem:[%s1004 + $0x2a0] sm:$0xf] %v1341
                  %v1343 = vld [vmem:[%s1003 + $0xa90] sm:$0xf]
                  %1344 = vst [vmem:[%s1004 + $0x2a4] sm:$0xf] %v1343
                  %v1345 = vld [vmem:[%s1003 + $0xaa0] sm:$0xf]
                  %1346 = vst [vmem:[%s1004 + $0x2a8] sm:$0xf] %v1345
                  %v1347 = vld [vmem:[%s1003 + $0xab0] sm:$0xf]
                  %1348 = vst [vmem:[%s1004 + $0x2ac] sm:$0xf] %v1347
                  %v1349 = vld [vmem:[%s1003 + $0xac0] sm:$0xf]
                  %1350 = vst [vmem:[%s1004 + $0x2b0] sm:$0xf] %v1349
                  %v1351 = vld [vmem:[%s1003 + $0xad0] sm:$0xf]
                  %1352 = vst [vmem:[%s1004 + $0x2b4] sm:$0xf] %v1351
                  %v1353 = vld [vmem:[%s1003 + $0xae0] sm:$0xf]
                  %1354 = vst [vmem:[%s1004 + $0x2b8] sm:$0xf] %v1353
                  %v1355 = vld [vmem:[%s1003 + $0xaf0] sm:$0xf]
                  %1356 = vst [vmem:[%s1004 + $0x2bc] sm:$0xf] %v1355
                  %v1357 = vld [vmem:[%s1003 + $0xb00] sm:$0xf]
                  %1358 = vst [vmem:[%s1004 + $0x2c0] sm:$0xf] %v1357
                  %v1359 = vld [vmem:[%s1003 + $0xb10] sm:$0xf]
                  %1360 = vst [vmem:[%s1004 + $0x2c4] sm:$0xf] %v1359
                  %v1361 = vld [vmem:[%s1003 + $0xb20] sm:$0xf]
                  %1362 = vst [vmem:[%s1004 + $0x2c8] sm:$0xf] %v1361
                  %v1363 = vld [vmem:[%s1003 + $0xb30] sm:$0xf]
                  %1364 = vst [vmem:[%s1004 + $0x2cc] sm:$0xf] %v1363
                  %v1365 = vld [vmem:[%s1003 + $0xb40] sm:$0xf]
                  %1366 = vst [vmem:[%s1004 + $0x2d0] sm:$0xf] %v1365
                  %v1367 = vld [vmem:[%s1003 + $0xb50] sm:$0xf]
                  %1368 = vst [vmem:[%s1004 + $0x2d4] sm:$0xf] %v1367
                  %v1369 = vld [vmem:[%s1003 + $0xb60] sm:$0xf]
                  %1370 = vst [vmem:[%s1004 + $0x2d8] sm:$0xf] %v1369
                  %v1371 = vld [vmem:[%s1003 + $0xb70] sm:$0xf]
                  %1372 = vst [vmem:[%s1004 + $0x2dc] sm:$0xf] %v1371
                  %v1373 = vld [vmem:[%s1003 + $0xb80] sm:$0xf]
                  %1374 = vst [vmem:[%s1004 + $0x2e0] sm:$0xf] %v1373
                  %v1375 = vld [vmem:[%s1003 + $0xb90] sm:$0xf]
                  %1376 = vst [vmem:[%s1004 + $0x2e4] sm:$0xf] %v1375
                  %v1377 = vld [vmem:[%s1003 + $0xba0] sm:$0xf]
                  %1378 = vst [vmem:[%s1004 + $0x2e8] sm:$0xf] %v1377
                  %v1379 = vld [vmem:[%s1003 + $0xbb0] sm:$0xf]
                  %1380 = vst [vmem:[%s1004 + $0x2ec] sm:$0xf] %v1379
                  %v1381 = vld [vmem:[%s1003 + $0xbc0] sm:$0xf]
                  %1382 = vst [vmem:[%s1004 + $0x2f0] sm:$0xf] %v1381
                  %v1383 = vld [vmem:[%s1003 + $0xbd0] sm:$0xf]
                  %1384 = vst [vmem:[%s1004 + $0x2f4] sm:$0xf] %v1383
                  %v1385 = vld [vmem:[%s1003 + $0xbe0] sm:$0xf]
                  %1386 = vst [vmem:[%s1004 + $0x2f8] sm:$0xf] %v1385
                  %v1387 = vld [vmem:[%s1003 + $0xbf0] sm:$0xf]
                  %1388 = vst [vmem:[%s1004 + $0x2fc] sm:$0xf] %v1387
                  %v1389 = vld [vmem:[%s1003 + $0xc00] sm:$0xf]
                  %1390 = vst [vmem:[%s1004 + $0x300] sm:$0xf] %v1389
                  %v1391 = vld [vmem:[%s1003 + $0xc10] sm:$0xf]
                  %1392 = vst [vmem:[%s1004 + $0x304] sm:$0xf] %v1391
                  %v1393 = vld [vmem:[%s1003 + $0xc20] sm:$0xf]
                  %1394 = vst [vmem:[%s1004 + $0x308] sm:$0xf] %v1393
                  %v1395 = vld [vmem:[%s1003 + $0xc30] sm:$0xf]
                  %1396 = vst [vmem:[%s1004 + $0x30c] sm:$0xf] %v1395
                  %v1397 = vld [vmem:[%s1003 + $0xc40] sm:$0xf]
                  %1398 = vst [vmem:[%s1004 + $0x310] sm:$0xf] %v1397
                  %v1399 = vld [vmem:[%s1003 + $0xc50] sm:$0xf]
                  %1400 = vst [vmem:[%s1004 + $0x314] sm:$0xf] %v1399
                  %v1401 = vld [vmem:[%s1003 + $0xc60] sm:$0xf]
                  %1402 = vst [vmem:[%s1004 + $0x318] sm:$0xf] %v1401
                  %v1403 = vld [vmem:[%s1003 + $0xc70] sm:$0xf]
                  %1404 = vst [vmem:[%s1004 + $0x31c] sm:$0xf] %v1403
                  %v1405 = vld [vmem:[%s1003 + $0xc80] sm:$0xf]
                  %1406 = vst [vmem:[%s1004 + $0x320] sm:$0xf] %v1405
                  %v1407 = vld [vmem:[%s1003 + $0xc90] sm:$0xf]
                  %1408 = vst [vmem:[%s1004 + $0x324] sm:$0xf] %v1407
                  %v1409 = vld [vmem:[%s1003 + $0xca0] sm:$0xf]
                  %1410 = vst [vmem:[%s1004 + $0x328] sm:$0xf] %v1409
                  %v1411 = vld [vmem:[%s1003 + $0xcb0] sm:$0xf]
                  %1412 = vst [vmem:[%s1004 + $0x32c] sm:$0xf] %v1411
                  %v1413 = vld [vmem:[%s1003 + $0xcc0] sm:$0xf]
                  %1414 = vst [vmem:[%s1004 + $0x330] sm:$0xf] %v1413
                  %v1415 = vld [vmem:[%s1003 + $0xcd0] sm:$0xf]
                  %1416 = vst [vmem:[%s1004 + $0x334] sm:$0xf] %v1415
                  %v1417 = vld [vmem:[%s1003 + $0xce0] sm:$0xf]
                  %1418 = vst [vmem:[%s1004 + $0x338] sm:$0xf] %v1417
                  %v1419 = vld [vmem:[%s1003 + $0xcf0] sm:$0xf]
                  %1420 = vst [vmem:[%s1004 + $0x33c] sm:$0xf] %v1419
                  %v1421 = vld [vmem:[%s1003 + $0xd00] sm:$0xf]
                  %1422 = vst [vmem:[%s1004 + $0x340] sm:$0xf] %v1421
                  %v1423 = vld [vmem:[%s1003 + $0xd10] sm:$0xf]
                  %1424 = vst [vmem:[%s1004 + $0x344] sm:$0xf] %v1423
                  %v1425 = vld [vmem:[%s1003 + $0xd20] sm:$0xf]
                  %1426 = vst [vmem:[%s1004 + $0x348] sm:$0xf] %v1425
                  %v1427 = vld [vmem:[%s1003 + $0xd30] sm:$0xf]
                  %1428 = vst [vmem:[%s1004 + $0x34c] sm:$0xf] %v1427
                  %v1429 = vld [vmem:[%s1003 + $0xd40] sm:$0xf]
                  %1430 = vst [vmem:[%s1004 + $0x350] sm:$0xf] %v1429
                  %v1431 = vld [vmem:[%s1003 + $0xd50] sm:$0xf]
                  %1432 = vst [vmem:[%s1004 + $0x354] sm:$0xf] %v1431
                  %v1433 = vld [vmem:[%s1003 + $0xd60] sm:$0xf]
                  %1434 = vst [vmem:[%s1004 + $0x358] sm:$0xf] %v1433
                  %v1435 = vld [vmem:[%s1003 + $0xd70] sm:$0xf]
                  %1436 = vst [vmem:[%s1004 + $0x35c] sm:$0xf] %v1435
                  %v1437 = vld [vmem:[%s1003 + $0xd80] sm:$0xf]
                  %1438 = vst [vmem:[%s1004 + $0x360] sm:$0xf] %v1437
                  %v1439 = vld [vmem:[%s1003 + $0xd90] sm:$0xf]
                  %1440 = vst [vmem:[%s1004 + $0x364] sm:$0xf] %v1439
                  %v1441 = vld [vmem:[%s1003 + $0xda0] sm:$0xf]
                  %1442 = vst [vmem:[%s1004 + $0x368] sm:$0xf] %v1441
                  %v1443 = vld [vmem:[%s1003 + $0xdb0] sm:$0xf]
                  %1444 = vst [vmem:[%s1004 + $0x36c] sm:$0xf] %v1443
                  %v1445 = vld [vmem:[%s1003 + $0xdc0] sm:$0xf]
                  %1446 = vst [vmem:[%s1004 + $0x370] sm:$0xf] %v1445
                  %v1447 = vld [vmem:[%s1003 + $0xdd0] sm:$0xf]
                  %1448 = vst [vmem:[%s1004 + $0x374] sm:$0xf] %v1447
                  %v1449 = vld [vmem:[%s1003 + $0xde0] sm:$0xf]
                  %1450 = vst [vmem:[%s1004 + $0x378] sm:$0xf] %v1449
                  %v1451 = vld [vmem:[%s1003 + $0xdf0] sm:$0xf]
                  %1452 = vst [vmem:[%s1004 + $0x37c] sm:$0xf] %v1451
                  %v1453 = vld [vmem:[%s1003 + $0xe00] sm:$0xf]
                  %1454 = vst [vmem:[%s1004 + $0x380] sm:$0xf] %v1453
                  %v1455 = vld [vmem:[%s1003 + $0xe10] sm:$0xf]
                  %1456 = vst [vmem:[%s1004 + $0x384] sm:$0xf] %v1455
                  %v1457 = vld [vmem:[%s1003 + $0xe20] sm:$0xf]
                  %1458 = vst [vmem:[%s1004 + $0x388] sm:$0xf] %v1457
                  %v1459 = vld [vmem:[%s1003 + $0xe30] sm:$0xf]
                  %1460 = vst [vmem:[%s1004 + $0x38c] sm:$0xf] %v1459
                  %v1461 = vld [vmem:[%s1003 + $0xe40] sm:$0xf]
                  %1462 = vst [vmem:[%s1004 + $0x390] sm:$0xf] %v1461
                  %v1463 = vld [vmem:[%s1003 + $0xe50] sm:$0xf]
                  %1464 = vst [vmem:[%s1004 + $0x394] sm:$0xf] %v1463
                  %v1465 = vld [vmem:[%s1003 + $0xe60] sm:$0xf]
                  %1466 = vst [vmem:[%s1004 + $0x398] sm:$0xf] %v1465
                  %v1467 = vld [vmem:[%s1003 + $0xe70] sm:$0xf]
                  %1468 = vst [vmem:[%s1004 + $0x39c] sm:$0xf] %v1467
                  %v1469 = vld [vmem:[%s1003 + $0xe80] sm:$0xf]
                  %1470 = vst [vmem:[%s1004 + $0x3a0] sm:$0xf] %v1469
                  %v1471 = vld [vmem:[%s1003 + $0xe90] sm:$0xf]
                  %1472 = vst [vmem:[%s1004 + $0x3a4] sm:$0xf] %v1471
                  %v1473 = vld [vmem:[%s1003 + $0xea0] sm:$0xf]
                  %1474 = vst [vmem:[%s1004 + $0x3a8] sm:$0xf] %v1473
                  %v1475 = vld [vmem:[%s1003 + $0xeb0] sm:$0xf]
                  %1476 = vst [vmem:[%s1004 + $0x3ac] sm:$0xf] %v1475
                  %v1477 = vld [vmem:[%s1003 + $0xec0] sm:$0xf]
                  %1478 = vst [vmem:[%s1004 + $0x3b0] sm:$0xf] %v1477
                  %v1479 = vld [vmem:[%s1003 + $0xed0] sm:$0xf]
                  %1480 = vst [vmem:[%s1004 + $0x3b4] sm:$0xf] %v1479
                  %v1481 = vld [vmem:[%s1003 + $0xee0] sm:$0xf]
                  %1482 = vst [vmem:[%s1004 + $0x3b8] sm:$0xf] %v1481
                  %v1483 = vld [vmem:[%s1003 + $0xef0] sm:$0xf]
                  %1484 = vst [vmem:[%s1004 + $0x3bc] sm:$0xf] %v1483
                  %v1485 = vld [vmem:[%s1003 + $0xf00] sm:$0xf]
                  %1486 = vst [vmem:[%s1004 + $0x3c0] sm:$0xf] %v1485
                  %v1487 = vld [vmem:[%s1003 + $0xf10] sm:$0xf]
                  %1488 = vst [vmem:[%s1004 + $0x3c4] sm:$0xf] %v1487
                  %v1489 = vld [vmem:[%s1003 + $0xf20] sm:$0xf]
                  %1490 = vst [vmem:[%s1004 + $0x3c8] sm:$0xf] %v1489
                  %v1491 = vld [vmem:[%s1003 + $0xf30] sm:$0xf]
                  %1492 = vst [vmem:[%s1004 + $0x3cc] sm:$0xf] %v1491
                  %v1493 = vld [vmem:[%s1003 + $0xf40] sm:$0xf]
                  %1494 = vst [vmem:[%s1004 + $0x3d0] sm:$0xf] %v1493
                  %v1495 = vld [vmem:[%s1003 + $0xf50] sm:$0xf]
                  %1496 = vst [vmem:[%s1004 + $0x3d4] sm:$0xf] %v1495
                  %v1497 = vld [vmem:[%s1003 + $0xf60] sm:$0xf]
                  %1498 = vst [vmem:[%s1004 + $0x3d8] sm:$0xf] %v1497
                  %v1499 = vld [vmem:[%s1003 + $0xf70] sm:$0xf]
                  %1500 = vst [vmem:[%s1004 + $0x3dc] sm:$0xf] %v1499
                  %v1501 = vld [vmem:[%s1003 + $0xf80] sm:$0xf]
                  %1502 = vst [vmem:[%s1004 + $0x3e0] sm:$0xf] %v1501
                  %v1503 = vld [vmem:[%s1003 + $0xf90] sm:$0xf]
                  %1504 = vst [vmem:[%s1004 + $0x3e4] sm:$0xf] %v1503
                  %v1505 = vld [vmem:[%s1003 + $0xfa0] sm:$0xf]
                  %1506 = vst [vmem:[%s1004 + $0x3e8] sm:$0xf] %v1505
                  %v1507 = vld [vmem:[%s1003 + $0xfb0] sm:$0xf]
                  %1508 = vst [vmem:[%s1004 + $0x3ec] sm:$0xf] %v1507
                  %v1509 = vld [vmem:[%s1003 + $0xfc0] sm:$0xf]
                  %1510 = vst [vmem:[%s1004 + $0x3f0] sm:$0xf] %v1509
                  %v1511 = vld [vmem:[%s1003 + $0xfd0] sm:$0xf]
                  %1512 = vst [vmem:[%s1004 + $0x3f4] sm:$0xf] %v1511
                  %v1513 = vld [vmem:[%s1003 + $0xfe0] sm:$0xf]
                  %1514 = vst [vmem:[%s1004 + $0x3f8] sm:$0xf] %v1513
                  %v1515 = vld [vmem:[%s1003 + $0xff0] sm:$0xf]
                  %1516 = vst [vmem:[%s1004 + $0x3fc] sm:$0xf] %v1515
                  %v1517 = vld [vmem:[%s1003 + $0x1000] sm:$0xf]
                  %1518 = vst [vmem:[%s1004 + $0x400] sm:$0xf] %v1517
                  %v1519 = vld [vmem:[%s1003 + $0x1010] sm:$0xf]
                  %1520 = vst [vmem:[%s1004 + $0x404] sm:$0xf] %v1519
                  %v1521 = vld [vmem:[%s1003 + $0x1020] sm:$0xf]
                  %1522 = vst [vmem:[%s1004 + $0x408] sm:$0xf] %v1521
                  %v1523 = vld [vmem:[%s1003 + $0x1030] sm:$0xf]
                  %1524 = vst [vmem:[%s1004 + $0x40c] sm:$0xf] %v1523
                  %v1525 = vld [vmem:[%s1003 + $0x1040] sm:$0xf]
                  %1526 = vst [vmem:[%s1004 + $0x410] sm:$0xf] %v1525
                  %v1527 = vld [vmem:[%s1003 + $0x1050] sm:$0xf]
                  %1528 = vst [vmem:[%s1004 + $0x414] sm:$0xf] %v1527
                  %v1529 = vld [vmem:[%s1003 + $0x1060] sm:$0xf]
                  %1530 = vst [vmem:[%s1004 + $0x418] sm:$0xf] %v1529
                  %v1531 = vld [vmem:[%s1003 + $0x1070] sm:$0xf]
                  %1532 = vst [vmem:[%s1004 + $0x41c] sm:$0xf] %v1531
                  %v1533 = vld [vmem:[%s1003 + $0x1080] sm:$0xf]
                  %1534 = vst [vmem:[%s1004 + $0x420] sm:$0xf] %v1533
                  %v1535 = vld [vmem:[%s1003 + $0x1090] sm:$0xf]
                  %1536 = vst [vmem:[%s1004 + $0x424] sm:$0xf] %v1535
                  %v1537 = vld [vmem:[%s1003 + $0x10a0] sm:$0xf]
                  %1538 = vst [vmem:[%s1004 + $0x428] sm:$0xf] %v1537
                  %v1539 = vld [vmem:[%s1003 + $0x10b0] sm:$0xf]
                  %1540 = vst [vmem:[%s1004 + $0x42c] sm:$0xf] %v1539
                  %v1541 = vld [vmem:[%s1003 + $0x10c0] sm:$0xf]
                  %1542 = vst [vmem:[%s1004 + $0x430] sm:$0xf] %v1541
                  %v1543 = vld [vmem:[%s1003 + $0x10d0] sm:$0xf]
                  %1544 = vst [vmem:[%s1004 + $0x434] sm:$0xf] %v1543
                  %v1545 = vld [vmem:[%s1003 + $0x10e0] sm:$0xf]
                  %1546 = vst [vmem:[%s1004 + $0x438] sm:$0xf] %v1545
                  %v1547 = vld [vmem:[%s1003 + $0x10f0] sm:$0xf]
                  %1548 = vst [vmem:[%s1004 + $0x43c] sm:$0xf] %v1547
                  %v1549 = vld [vmem:[%s1003 + $0x1100] sm:$0xf]
                  %1550 = vst [vmem:[%s1004 + $0x440] sm:$0xf] %v1549
                  %v1551 = vld [vmem:[%s1003 + $0x1110] sm:$0xf]
                  %1552 = vst [vmem:[%s1004 + $0x444] sm:$0xf] %v1551
                  %v1553 = vld [vmem:[%s1003 + $0x1120] sm:$0xf]
                  %1554 = vst [vmem:[%s1004 + $0x448] sm:$0xf] %v1553
                  %v1555 = vld [vmem:[%s1003 + $0x1130] sm:$0xf]
                  %1556 = vst [vmem:[%s1004 + $0x44c] sm:$0xf] %v1555
                  %v1557 = vld [vmem:[%s1003 + $0x1140] sm:$0xf]
                  %1558 = vst [vmem:[%s1004 + $0x450] sm:$0xf] %v1557
                  %v1559 = vld [vmem:[%s1003 + $0x1150] sm:$0xf]
                  %1560 = vst [vmem:[%s1004 + $0x454] sm:$0xf] %v1559
                  %v1561 = vld [vmem:[%s1003 + $0x1160] sm:$0xf]
                  %1562 = vst [vmem:[%s1004 + $0x458] sm:$0xf] %v1561
                  %v1563 = vld [vmem:[%s1003 + $0x1170] sm:$0xf]
                  %1564 = vst [vmem:[%s1004 + $0x45c] sm:$0xf] %v1563
                  %v1565 = vld [vmem:[%s1003 + $0x1180] sm:$0xf]
                  %1566 = vst [vmem:[%s1004 + $0x460] sm:$0xf] %v1565
                  %v1567 = vld [vmem:[%s1003 + $0x1190] sm:$0xf]
                  %1568 = vst [vmem:[%s1004 + $0x464] sm:$0xf] %v1567
                  %v1569 = vld [vmem:[%s1003 + $0x11a0] sm:$0xf]
                  %1570 = vst [vmem:[%s1004 + $0x468] sm:$0xf] %v1569
                  %v1571 = vld [vmem:[%s1003 + $0x11b0] sm:$0xf]
                  %1572 = vst [vmem:[%s1004 + $0x46c] sm:$0xf] %v1571
                  %v1573 = vld [vmem:[%s1003 + $0x11c0] sm:$0xf]
                  %1574 = vst [vmem:[%s1004 + $0x470] sm:$0xf] %v1573
                  %v1575 = vld [vmem:[%s1003 + $0x11d0] sm:$0xf]
                  %1576 = vst [vmem:[%s1004 + $0x474] sm:$0xf] %v1575
                  %v1577 = vld [vmem:[%s1003 + $0x11e0] sm:$0xf]
                  %1578 = vst [vmem:[%s1004 + $0x478] sm:$0xf] %v1577
                  %v1579 = vld [vmem:[%s1003 + $0x11f0] sm:$0xf]
                  %1580 = vst [vmem:[%s1004 + $0x47c] sm:$0xf] %v1579
                  %v1581 = vld [vmem:[%s1003 + $0x1200] sm:$0xf]
                  %1582 = vst [vmem:[%s1004 + $0x480] sm:$0xf] %v1581
                  %v1583 = vld [vmem:[%s1003 + $0x1210] sm:$0xf]
                  %1584 = vst [vmem:[%s1004 + $0x484] sm:$0xf] %v1583
                  %v1585 = vld [vmem:[%s1003 + $0x1220] sm:$0xf]
                  %1586 = vst [vmem:[%s1004 + $0x488] sm:$0xf] %v1585
                  %v1587 = vld [vmem:[%s1003 + $0x1230] sm:$0xf]
                  %1588 = vst [vmem:[%s1004 + $0x48c] sm:$0xf] %v1587
                  %v1589 = vld [vmem:[%s1003 + $0x1240] sm:$0xf]
                  %1590 = vst [vmem:[%s1004 + $0x490] sm:$0xf] %v1589
                  %v1591 = vld [vmem:[%s1003 + $0x1250] sm:$0xf]
                  %1592 = vst [vmem:[%s1004 + $0x494] sm:$0xf] %v1591
                  %v1593 = vld [vmem:[%s1003 + $0x1260] sm:$0xf]
                  %1594 = vst [vmem:[%s1004 + $0x498] sm:$0xf] %v1593
                  %v1595 = vld [vmem:[%s1003 + $0x1270] sm:$0xf]
                  %1596 = vst [vmem:[%s1004 + $0x49c] sm:$0xf] %v1595
                  %v1597 = vld [vmem:[%s1003 + $0x1280] sm:$0xf]
                  %1598 = vst [vmem:[%s1004 + $0x4a0] sm:$0xf] %v1597
                  %v1599 = vld [vmem:[%s1003 + $0x1290] sm:$0xf]
                  %1600 = vst [vmem:[%s1004 + $0x4a4] sm:$0xf] %v1599
                  %v1601 = vld [vmem:[%s1003 + $0x12a0] sm:$0xf]
                  %1602 = vst [vmem:[%s1004 + $0x4a8] sm:$0xf] %v1601
                  %v1603 = vld [vmem:[%s1003 + $0x12b0] sm:$0xf]
                  %1604 = vst [vmem:[%s1004 + $0x4ac] sm:$0xf] %v1603
                  %v1605 = vld [vmem:[%s1003 + $0x12c0] sm:$0xf]
                  %1606 = vst [vmem:[%s1004 + $0x4b0] sm:$0xf] %v1605
                  %v1607 = vld [vmem:[%s1003 + $0x12d0] sm:$0xf]
                  %1608 = vst [vmem:[%s1004 + $0x4b4] sm:$0xf] %v1607
                  %v1609 = vld [vmem:[%s1003 + $0x12e0] sm:$0xf]
                  %1610 = vst [vmem:[%s1004 + $0x4b8] sm:$0xf] %v1609
                  %v1611 = vld [vmem:[%s1003 + $0x12f0] sm:$0xf]
                  %1612 = vst [vmem:[%s1004 + $0x4bc] sm:$0xf] %v1611
                  %v1613 = vld [vmem:[%s1003 + $0x1300] sm:$0xf]
                  %1614 = vst [vmem:[%s1004 + $0x4c0] sm:$0xf] %v1613
                  %v1615 = vld [vmem:[%s1003 + $0x1310] sm:$0xf]
                  %1616 = vst [vmem:[%s1004 + $0x4c4] sm:$0xf] %v1615
                  %v1617 = vld [vmem:[%s1003 + $0x1320] sm:$0xf]
                  %1618 = vst [vmem:[%s1004 + $0x4c8] sm:$0xf] %v1617
                  %v1619 = vld [vmem:[%s1003 + $0x1330] sm:$0xf]
                  %1620 = vst [vmem:[%s1004 + $0x4cc] sm:$0xf] %v1619
                  %v1621 = vld [vmem:[%s1003 + $0x1340] sm:$0xf]
                  %1622 = vst [vmem:[%s1004 + $0x4d0] sm:$0xf] %v1621
                  %v1623 = vld [vmem:[%s1003 + $0x1350] sm:$0xf]
                  %1624 = vst [vmem:[%s1004 + $0x4d4] sm:$0xf] %v1623
                  %v1625 = vld [vmem:[%s1003 + $0x1360] sm:$0xf]
                  %1626 = vst [vmem:[%s1004 + $0x4d8] sm:$0xf] %v1625
                  %v1627 = vld [vmem:[%s1003 + $0x1370] sm:$0xf]
                  %1628 = vst [vmem:[%s1004 + $0x4dc] sm:$0xf] %v1627
                  %v1629 = vld [vmem:[%s1003 + $0x1380] sm:$0xf]
                  %1630 = vst [vmem:[%s1004 + $0x4e0] sm:$0xf] %v1629
                  %v1631 = vld [vmem:[%s1003 + $0x1390] sm:$0xf]
                  %1632 = vst [vmem:[%s1004 + $0x4e4] sm:$0xf] %v1631
                  %v1633 = vld [vmem:[%s1003 + $0x13a0] sm:$0xf]
                  %1634 = vst [vmem:[%s1004 + $0x4e8] sm:$0xf] %v1633
                  %v1635 = vld [vmem:[%s1003 + $0x13b0] sm:$0xf]
                  %1636 = vst [vmem:[%s1004 + $0x4ec] sm:$0xf] %v1635
                  %v1637 = vld [vmem:[%s1003 + $0x13c0] sm:$0xf]
                  %1638 = vst [vmem:[%s1004 + $0x4f0] sm:$0xf] %v1637
                  %v1639 = vld [vmem:[%s1003 + $0x13d0] sm:$0xf]
                  %1640 = vst [vmem:[%s1004 + $0x4f4] sm:$0xf] %v1639
                  %v1641 = vld [vmem:[%s1003 + $0x13e0] sm:$0xf]
                  %1642 = vst [vmem:[%s1004 + $0x4f8] sm:$0xf] %v1641
                  %v1643 = vld [vmem:[%s1003 + $0x13f0] sm:$0xf]
                  %1644 = vst [vmem:[%s1004 + $0x4fc] sm:$0xf] %v1643
                  %v1645 = vld [vmem:[%s1003 + $0x1400] sm:$0xf]
                  %1646 = vst [vmem:[%s1004 + $0x500] sm:$0xf] %v1645
                  %v1647 = vld [vmem:[%s1003 + $0x1410] sm:$0xf]
                  %1648 = vst [vmem:[%s1004 + $0x504] sm:$0xf] %v1647
                  %v1649 = vld [vmem:[%s1003 + $0x1420] sm:$0xf]
                  %1650 = vst [vmem:[%s1004 + $0x508] sm:$0xf] %v1649
                  %v1651 = vld [vmem:[%s1003 + $0x1430] sm:$0xf]
                  %1652 = vst [vmem:[%s1004 + $0x50c] sm:$0xf] %v1651
                  %v1653 = vld [vmem:[%s1003 + $0x1440] sm:$0xf]
                  %1654 = vst [vmem:[%s1004 + $0x510] sm:$0xf] %v1653
                  %v1655 = vld [vmem:[%s1003 + $0x1450] sm:$0xf]
                  %1656 = vst [vmem:[%s1004 + $0x514] sm:$0xf] %v1655
                  %v1657 = vld [vmem:[%s1003 + $0x1460] sm:$0xf]
                  %1658 = vst [vmem:[%s1004 + $0x518] sm:$0xf] %v1657
                  %v1659 = vld [vmem:[%s1003 + $0x1470] sm:$0xf]
                  %1660 = vst [vmem:[%s1004 + $0x51c] sm:$0xf] %v1659
                  %v1661 = vld [vmem:[%s1003 + $0x1480] sm:$0xf]
                  %1662 = vst [vmem:[%s1004 + $0x520] sm:$0xf] %v1661
                  %v1663 = vld [vmem:[%s1003 + $0x1490] sm:$0xf]
                  %1664 = vst [vmem:[%s1004 + $0x524] sm:$0xf] %v1663
                  %v1665 = vld [vmem:[%s1003 + $0x14a0] sm:$0xf]
                  %1666 = vst [vmem:[%s1004 + $0x528] sm:$0xf] %v1665
                  %v1667 = vld [vmem:[%s1003 + $0x14b0] sm:$0xf]
                  %1668 = vst [vmem:[%s1004 + $0x52c] sm:$0xf] %v1667
                  %v1669 = vld [vmem:[%s1003 + $0x14c0] sm:$0xf]
                  %1670 = vst [vmem:[%s1004 + $0x530] sm:$0xf] %v1669
                  %v1671 = vld [vmem:[%s1003 + $0x14d0] sm:$0xf]
                  %1672 = vst [vmem:[%s1004 + $0x534] sm:$0xf] %v1671
                  %v1673 = vld [vmem:[%s1003 + $0x14e0] sm:$0xf]
                  %1674 = vst [vmem:[%s1004 + $0x538] sm:$0xf] %v1673
                  %v1675 = vld [vmem:[%s1003 + $0x14f0] sm:$0xf]
                  %1676 = vst [vmem:[%s1004 + $0x53c] sm:$0xf] %v1675
                  %v1677 = vld [vmem:[%s1003 + $0x1500] sm:$0xf]
                  %1678 = vst [vmem:[%s1004 + $0x540] sm:$0xf] %v1677
                  %v1679 = vld [vmem:[%s1003 + $0x1510] sm:$0xf]
                  %1680 = vst [vmem:[%s1004 + $0x544] sm:$0xf] %v1679
                  %v1681 = vld [vmem:[%s1003 + $0x1520] sm:$0xf]
                  %1682 = vst [vmem:[%s1004 + $0x548] sm:$0xf] %v1681
                  %v1683 = vld [vmem:[%s1003 + $0x1530] sm:$0xf]
                  %1684 = vst [vmem:[%s1004 + $0x54c] sm:$0xf] %v1683
                  %v1685 = vld [vmem:[%s1003 + $0x1540] sm:$0xf]
                  %1686 = vst [vmem:[%s1004 + $0x550] sm:$0xf] %v1685
                  %v1687 = vld [vmem:[%s1003 + $0x1550] sm:$0xf]
                  %1688 = vst [vmem:[%s1004 + $0x554] sm:$0xf] %v1687
                  %v1689 = vld [vmem:[%s1003 + $0x1560] sm:$0xf]
                  %1690 = vst [vmem:[%s1004 + $0x558] sm:$0xf] %v1689
                  %v1691 = vld [vmem:[%s1003 + $0x1570] sm:$0xf]
                  %1692 = vst [vmem:[%s1004 + $0x55c] sm:$0xf] %v1691
                  %v1693 = vld [vmem:[%s1003 + $0x1580] sm:$0xf]
                  %1694 = vst [vmem:[%s1004 + $0x560] sm:$0xf] %v1693
                  %v1695 = vld [vmem:[%s1003 + $0x1590] sm:$0xf]
                  %1696 = vst [vmem:[%s1004 + $0x564] sm:$0xf] %v1695
                  %v1697 = vld [vmem:[%s1003 + $0x15a0] sm:$0xf]
                  %1698 = vst [vmem:[%s1004 + $0x568] sm:$0xf] %v1697
                  %v1699 = vld [vmem:[%s1003 + $0x15b0] sm:$0xf]
                  %1700 = vst [vmem:[%s1004 + $0x56c] sm:$0xf] %v1699
                  %v1701 = vld [vmem:[%s1003 + $0x15c0] sm:$0xf]
                  %1702 = vst [vmem:[%s1004 + $0x570] sm:$0xf] %v1701
                  %v1703 = vld [vmem:[%s1003 + $0x15d0] sm:$0xf]
                  %1704 = vst [vmem:[%s1004 + $0x574] sm:$0xf] %v1703
                  %v1705 = vld [vmem:[%s1003 + $0x15e0] sm:$0xf]
                  %1706 = vst [vmem:[%s1004 + $0x578] sm:$0xf] %v1705
                  %v1707 = vld [vmem:[%s1003 + $0x15f0] sm:$0xf]
                  %1708 = vst [vmem:[%s1004 + $0x57c] sm:$0xf] %v1707
                  %v1709 = vld [vmem:[%s1003 + $0x1600] sm:$0xf]
                  %1710 = vst [vmem:[%s1004 + $0x580] sm:$0xf] %v1709
                  %v1711 = vld [vmem:[%s1003 + $0x1610] sm:$0xf]
                  %1712 = vst [vmem:[%s1004 + $0x584] sm:$0xf] %v1711
                  %v1713 = vld [vmem:[%s1003 + $0x1620] sm:$0xf]
                  %1714 = vst [vmem:[%s1004 + $0x588] sm:$0xf] %v1713
                  %v1715 = vld [vmem:[%s1003 + $0x1630] sm:$0xf]
                  %1716 = vst [vmem:[%s1004 + $0x58c] sm:$0xf] %v1715
                  %v1717 = vld [vmem:[%s1003 + $0x1640] sm:$0xf]
                  %1718 = vst [vmem:[%s1004 + $0x590] sm:$0xf] %v1717
                  %v1719 = vld [vmem:[%s1003 + $0x1650] sm:$0xf]
                  %1720 = vst [vmem:[%s1004 + $0x594] sm:$0xf] %v1719
                  %v1721 = vld [vmem:[%s1003 + $0x1660] sm:$0xf]
                  %1722 = vst [vmem:[%s1004 + $0x598] sm:$0xf] %v1721
                  %v1723 = vld [vmem:[%s1003 + $0x1670] sm:$0xf]
                  %1724 = vst [vmem:[%s1004 + $0x59c] sm:$0xf] %v1723
                  %v1725 = vld [vmem:[%s1003 + $0x1680] sm:$0xf]
                  %1726 = vst [vmem:[%s1004 + $0x5a0] sm:$0xf] %v1725
                  %v1727 = vld [vmem:[%s1003 + $0x1690] sm:$0xf]
                  %1728 = vst [vmem:[%s1004 + $0x5a4] sm:$0xf] %v1727
                  %v1729 = vld [vmem:[%s1003 + $0x16a0] sm:$0xf]
                  %1730 = vst [vmem:[%s1004 + $0x5a8] sm:$0xf] %v1729
                  %v1731 = vld [vmem:[%s1003 + $0x16b0] sm:$0xf]
                  %1732 = vst [vmem:[%s1004 + $0x5ac] sm:$0xf] %v1731
                  %v1733 = vld [vmem:[%s1003 + $0x16c0] sm:$0xf]
                  %1734 = vst [vmem:[%s1004 + $0x5b0] sm:$0xf] %v1733
                  %v1735 = vld [vmem:[%s1003 + $0x16d0] sm:$0xf]
                  %1736 = vst [vmem:[%s1004 + $0x5b4] sm:$0xf] %v1735
                  %v1737 = vld [vmem:[%s1003 + $0x16e0] sm:$0xf]
                  %1738 = vst [vmem:[%s1004 + $0x5b8] sm:$0xf] %v1737
                  %v1739 = vld [vmem:[%s1003 + $0x16f0] sm:$0xf]
                  %1740 = vst [vmem:[%s1004 + $0x5bc] sm:$0xf] %v1739
                  %v1741 = vld [vmem:[%s1003 + $0x1700] sm:$0xf]
                  %1742 = vst [vmem:[%s1004 + $0x5c0] sm:$0xf] %v1741
                  %v1743 = vld [vmem:[%s1003 + $0x1710] sm:$0xf]
                  %1744 = vst [vmem:[%s1004 + $0x5c4] sm:$0xf] %v1743
                  %v1745 = vld [vmem:[%s1003 + $0x1720] sm:$0xf]
                  %1746 = vst [vmem:[%s1004 + $0x5c8] sm:$0xf] %v1745
                  %v1747 = vld [vmem:[%s1003 + $0x1730] sm:$0xf]
                  %1748 = vst [vmem:[%s1004 + $0x5cc] sm:$0xf] %v1747
                  %v1749 = vld [vmem:[%s1003 + $0x1740] sm:$0xf]
                  %1750 = vst [vmem:[%s1004 + $0x5d0] sm:$0xf] %v1749
                  %v1751 = vld [vmem:[%s1003 + $0x1750] sm:$0xf]
                  %1752 = vst [vmem:[%s1004 + $0x5d4] sm:$0xf] %v1751
                  %v1753 = vld [vmem:[%s1003 + $0x1760] sm:$0xf]
                  %1754 = vst [vmem:[%s1004 + $0x5d8] sm:$0xf] %v1753
                  %v1755 = vld [vmem:[%s1003 + $0x1770] sm:$0xf]
                  %1756 = vst [vmem:[%s1004 + $0x5dc] sm:$0xf] %v1755
                  %v1757 = vld [vmem:[%s1003 + $0x1780] sm:$0xf]
                  %1758 = vst [vmem:[%s1004 + $0x5e0] sm:$0xf] %v1757
                  %v1759 = vld [vmem:[%s1003 + $0x1790] sm:$0xf]
                  %1760 = vst [vmem:[%s1004 + $0x5e4] sm:$0xf] %v1759
                  %v1761 = vld [vmem:[%s1003 + $0x17a0] sm:$0xf]
                  %1762 = vst [vmem:[%s1004 + $0x5e8] sm:$0xf] %v1761
                  %v1763 = vld [vmem:[%s1003 + $0x17b0] sm:$0xf]
                  %1764 = vst [vmem:[%s1004 + $0x5ec] sm:$0xf] %v1763
                  %v1765 = vld [vmem:[%s1003 + $0x17c0] sm:$0xf]
                  %1766 = vst [vmem:[%s1004 + $0x5f0] sm:$0xf] %v1765
                  %v1767 = vld [vmem:[%s1003 + $0x17d0] sm:$0xf]
                  %1768 = vst [vmem:[%s1004 + $0x5f4] sm:$0xf] %v1767
                  %v1769 = vld [vmem:[%s1003 + $0x17e0] sm:$0xf]
                  %1770 = vst [vmem:[%s1004 + $0x5f8] sm:$0xf] %v1769
                  %v1771 = vld [vmem:[%s1003 + $0x17f0] sm:$0xf]
                  %1772 = vst [vmem:[%s1004 + $0x5fc] sm:$0xf] %v1771
                  %v1773 = vld [vmem:[%s1003 + $0x1800] sm:$0xf]
                  %1774 = vst [vmem:[%s1004 + $0x600] sm:$0xf] %v1773
                  %v1775 = vld [vmem:[%s1003 + $0x1810] sm:$0xf]
                  %1776 = vst [vmem:[%s1004 + $0x604] sm:$0xf] %v1775
                  %v1777 = vld [vmem:[%s1003 + $0x1820] sm:$0xf]
                  %1778 = vst [vmem:[%s1004 + $0x608] sm:$0xf] %v1777
                  %v1779 = vld [vmem:[%s1003 + $0x1830] sm:$0xf]
                  %1780 = vst [vmem:[%s1004 + $0x60c] sm:$0xf] %v1779
                  %v1781 = vld [vmem:[%s1003 + $0x1840] sm:$0xf]
                  %1782 = vst [vmem:[%s1004 + $0x610] sm:$0xf] %v1781
                  %v1783 = vld [vmem:[%s1003 + $0x1850] sm:$0xf]
                  %1784 = vst [vmem:[%s1004 + $0x614] sm:$0xf] %v1783
                  %v1785 = vld [vmem:[%s1003 + $0x1860] sm:$0xf]
                  %1786 = vst [vmem:[%s1004 + $0x618] sm:$0xf] %v1785
                  %v1787 = vld [vmem:[%s1003 + $0x1870] sm:$0xf]
                  %1788 = vst [vmem:[%s1004 + $0x61c] sm:$0xf] %v1787
                $region63: #{dqn_forward.7} parent=50 // loop_footer
                  %s1002 = sadd.s32 1, %s998
                $region64: #{dqn_forward.7} parent=50 // loop_footer_branch
                  %997 = sbr.rel target = $region60
                $region65: #{dqn_forward.7} parent=50 // loop_exit
                  _
              $region51: #{dqn_forward.7} parent=35 // pred_fallthru
                _
            $region36: #{dqn_forward.7} parent=31 // pred_fallthru
              _
            // Predicated region
            $region37: #{dqn_forward.7} parent=31 // pred_check
              _
            $region38: #{dqn_forward.7} parent=31 // pred_check_branch
              %192 = sbr.rel (0) target = $region40
            $region39: #{dqn_forward.7} parent=31 // pred_region
              loop: start=0, step=1, limit=1
              $region41: #{dqn_forward.7} parent=39 // loop_pre_header
                _
              $region42: #{dqn_forward.7} parent=39 // loop_header
                %s195 = sphi 0, %s199
                %p196 = scmp.ge.s32.totalorder %s195, 1
                %s200 = sphi %s186, %s186
                %s201 = sphi %s184, %s184
              $region43: #{dqn_forward.7} parent=39 // loop_header_branch
                %198 = sbr.rel (%p196) target = $region47
              $region44: #{dqn_forward.7} parent=39 // loop_body
                %v202 = vld [vmem:[%s200] sm:$0xf]
                %203 = vst [vmem:[%s201] sm:$0xf] %v202
                %v204 = vld [vmem:[%s200 + $0x10] sm:$0xf]
                %205 = vst [vmem:[%s201 + $0x4] sm:$0xf] %v204
                %v206 = vld [vmem:[%s200 + $0x20] sm:$0xf]
                %207 = vst [vmem:[%s201 + $0x8] sm:$0xf] %v206
                %v208 = vld [vmem:[%s200 + $0x30] sm:$0xf]
                %209 = vst [vmem:[%s201 + $0xc] sm:$0xf] %v208
                %v210 = vld [vmem:[%s200 + $0x40] sm:$0xf]
                %211 = vst [vmem:[%s201 + $0x10] sm:$0xf] %v210
                %v212 = vld [vmem:[%s200 + $0x50] sm:$0xf]
                %213 = vst [vmem:[%s201 + $0x14] sm:$0xf] %v212
                %v214 = vld [vmem:[%s200 + $0x60] sm:$0xf]
                %215 = vst [vmem:[%s201 + $0x18] sm:$0xf] %v214
                %v216 = vld [vmem:[%s200 + $0x70] sm:$0xf]
                %217 = vst [vmem:[%s201 + $0x1c] sm:$0xf] %v216
                %v218 = vld [vmem:[%s200 + $0x80] sm:$0xf]
                %219 = vst [vmem:[%s201 + $0x20] sm:$0xf] %v218
                %v220 = vld [vmem:[%s200 + $0x90] sm:$0xf]
                %221 = vst [vmem:[%s201 + $0x24] sm:$0xf] %v220
                %v222 = vld [vmem:[%s200 + $0xa0] sm:$0xf]
                %223 = vst [vmem:[%s201 + $0x28] sm:$0xf] %v222
                %v224 = vld [vmem:[%s200 + $0xb0] sm:$0xf]
                %225 = vst [vmem:[%s201 + $0x2c] sm:$0xf] %v224
                %v226 = vld [vmem:[%s200 + $0xc0] sm:$0xf]
                %227 = vst [vmem:[%s201 + $0x30] sm:$0xf] %v226
                %v228 = vld [vmem:[%s200 + $0xd0] sm:$0xf]
                %229 = vst [vmem:[%s201 + $0x34] sm:$0xf] %v228
                %v230 = vld [vmem:[%s200 + $0xe0] sm:$0xf]
                %231 = vst [vmem:[%s201 + $0x38] sm:$0xf] %v230
                %v232 = vld [vmem:[%s200 + $0xf0] sm:$0xf]
                %233 = vst [vmem:[%s201 + $0x3c] sm:$0xf] %v232
                %v234 = vld [vmem:[%s200 + $0x100] sm:$0xf]
                %235 = vst [vmem:[%s201 + $0x40] sm:$0xf] %v234
                %v236 = vld [vmem:[%s200 + $0x110] sm:$0xf]
                %237 = vst [vmem:[%s201 + $0x44] sm:$0xf] %v236
                %v238 = vld [vmem:[%s200 + $0x120] sm:$0xf]
                %239 = vst [vmem:[%s201 + $0x48] sm:$0xf] %v238
                %v240 = vld [vmem:[%s200 + $0x130] sm:$0xf]
                %241 = vst [vmem:[%s201 + $0x4c] sm:$0xf] %v240
                %v242 = vld [vmem:[%s200 + $0x140] sm:$0xf]
                %243 = vst [vmem:[%s201 + $0x50] sm:$0xf] %v242
                %v244 = vld [vmem:[%s200 + $0x150] sm:$0xf]
                %245 = vst [vmem:[%s201 + $0x54] sm:$0xf] %v244
                %v246 = vld [vmem:[%s200 + $0x160] sm:$0xf]
                %247 = vst [vmem:[%s201 + $0x58] sm:$0xf] %v246
                %v248 = vld [vmem:[%s200 + $0x170] sm:$0xf]
                %249 = vst [vmem:[%s201 + $0x5c] sm:$0xf] %v248
                %v250 = vld [vmem:[%s200 + $0x180] sm:$0xf]
                %251 = vst [vmem:[%s201 + $0x60] sm:$0xf] %v250
                %v252 = vld [vmem:[%s200 + $0x190] sm:$0xf]
                %253 = vst [vmem:[%s201 + $0x64] sm:$0xf] %v252
                %v254 = vld [vmem:[%s200 + $0x1a0] sm:$0xf]
                %255 = vst [vmem:[%s201 + $0x68] sm:$0xf] %v254
                %v256 = vld [vmem:[%s200 + $0x1b0] sm:$0xf]
                %257 = vst [vmem:[%s201 + $0x6c] sm:$0xf] %v256
                %v258 = vld [vmem:[%s200 + $0x1c0] sm:$0xf]
                %259 = vst [vmem:[%s201 + $0x70] sm:$0xf] %v258
                %v260 = vld [vmem:[%s200 + $0x1d0] sm:$0xf]
                %261 = vst [vmem:[%s201 + $0x74] sm:$0xf] %v260
                %v262 = vld [vmem:[%s200 + $0x1e0] sm:$0xf]
                %263 = vst [vmem:[%s201 + $0x78] sm:$0xf] %v262
                %v264 = vld [vmem:[%s200 + $0x1f0] sm:$0xf]
                %265 = vst [vmem:[%s201 + $0x7c] sm:$0xf] %v264
                %v266 = vld [vmem:[%s200 + $0x200] sm:$0xf]
                %267 = vst [vmem:[%s201 + $0x80] sm:$0xf] %v266
                %v268 = vld [vmem:[%s200 + $0x210] sm:$0xf]
                %269 = vst [vmem:[%s201 + $0x84] sm:$0xf] %v268
                %v270 = vld [vmem:[%s200 + $0x220] sm:$0xf]
                %271 = vst [vmem:[%s201 + $0x88] sm:$0xf] %v270
                %v272 = vld [vmem:[%s200 + $0x230] sm:$0xf]
                %273 = vst [vmem:[%s201 + $0x8c] sm:$0xf] %v272
                %v274 = vld [vmem:[%s200 + $0x240] sm:$0xf]
                %275 = vst [vmem:[%s201 + $0x90] sm:$0xf] %v274
                %v276 = vld [vmem:[%s200 + $0x250] sm:$0xf]
                %277 = vst [vmem:[%s201 + $0x94] sm:$0xf] %v276
                %v278 = vld [vmem:[%s200 + $0x260] sm:$0xf]
                %279 = vst [vmem:[%s201 + $0x98] sm:$0xf] %v278
                %v280 = vld [vmem:[%s200 + $0x270] sm:$0xf]
                %281 = vst [vmem:[%s201 + $0x9c] sm:$0xf] %v280
                %v282 = vld [vmem:[%s200 + $0x280] sm:$0xf]
                %283 = vst [vmem:[%s201 + $0xa0] sm:$0xf] %v282
                %v284 = vld [vmem:[%s200 + $0x290] sm:$0xf]
                %285 = vst [vmem:[%s201 + $0xa4] sm:$0xf] %v284
                %v286 = vld [vmem:[%s200 + $0x2a0] sm:$0xf]
                %287 = vst [vmem:[%s201 + $0xa8] sm:$0xf] %v286
                %v288 = vld [vmem:[%s200 + $0x2b0] sm:$0xf]
                %289 = vst [vmem:[%s201 + $0xac] sm:$0xf] %v288
                %v290 = vld [vmem:[%s200 + $0x2c0] sm:$0xf]
                %291 = vst [vmem:[%s201 + $0xb0] sm:$0xf] %v290
                %v292 = vld [vmem:[%s200 + $0x2d0] sm:$0xf]
                %293 = vst [vmem:[%s201 + $0xb4] sm:$0xf] %v292
                %v294 = vld [vmem:[%s200 + $0x2e0] sm:$0xf]
                %295 = vst [vmem:[%s201 + $0xb8] sm:$0xf] %v294
                %v296 = vld [vmem:[%s200 + $0x2f0] sm:$0xf]
                %297 = vst [vmem:[%s201 + $0xbc] sm:$0xf] %v296
                %v298 = vld [vmem:[%s200 + $0x300] sm:$0xf]
                %299 = vst [vmem:[%s201 + $0xc0] sm:$0xf] %v298
                %v300 = vld [vmem:[%s200 + $0x310] sm:$0xf]
                %301 = vst [vmem:[%s201 + $0xc4] sm:$0xf] %v300
                %v302 = vld [vmem:[%s200 + $0x320] sm:$0xf]
                %303 = vst [vmem:[%s201 + $0xc8] sm:$0xf] %v302
                %v304 = vld [vmem:[%s200 + $0x330] sm:$0xf]
                %305 = vst [vmem:[%s201 + $0xcc] sm:$0xf] %v304
                %v306 = vld [vmem:[%s200 + $0x340] sm:$0xf]
                %307 = vst [vmem:[%s201 + $0xd0] sm:$0xf] %v306
                %v308 = vld [vmem:[%s200 + $0x350] sm:$0xf]
                %309 = vst [vmem:[%s201 + $0xd4] sm:$0xf] %v308
                %v310 = vld [vmem:[%s200 + $0x360] sm:$0xf]
                %311 = vst [vmem:[%s201 + $0xd8] sm:$0xf] %v310
                %v312 = vld [vmem:[%s200 + $0x370] sm:$0xf]
                %313 = vst [vmem:[%s201 + $0xdc] sm:$0xf] %v312
                %v314 = vld [vmem:[%s200 + $0x380] sm:$0xf]
                %315 = vst [vmem:[%s201 + $0xe0] sm:$0xf] %v314
                %v316 = vld [vmem:[%s200 + $0x390] sm:$0xf]
                %317 = vst [vmem:[%s201 + $0xe4] sm:$0xf] %v316
                %v318 = vld [vmem:[%s200 + $0x3a0] sm:$0xf]
                %319 = vst [vmem:[%s201 + $0xe8] sm:$0xf] %v318
                %v320 = vld [vmem:[%s200 + $0x3b0] sm:$0xf]
                %321 = vst [vmem:[%s201 + $0xec] sm:$0xf] %v320
                %v322 = vld [vmem:[%s200 + $0x3c0] sm:$0xf]
                %323 = vst [vmem:[%s201 + $0xf0] sm:$0xf] %v322
                %v324 = vld [vmem:[%s200 + $0x3d0] sm:$0xf]
                %325 = vst [vmem:[%s201 + $0xf4] sm:$0xf] %v324
                %v326 = vld [vmem:[%s200 + $0x3e0] sm:$0xf]
                %327 = vst [vmem:[%s201 + $0xf8] sm:$0xf] %v326
                %v328 = vld [vmem:[%s200 + $0x3f0] sm:$0xf]
                %329 = vst [vmem:[%s201 + $0xfc] sm:$0xf] %v328
                %v330 = vld [vmem:[%s200 + $0x400] sm:$0xf]
                %331 = vst [vmem:[%s201 + $0x100] sm:$0xf] %v330
                %v332 = vld [vmem:[%s200 + $0x410] sm:$0xf]
                %333 = vst [vmem:[%s201 + $0x104] sm:$0xf] %v332
                %v334 = vld [vmem:[%s200 + $0x420] sm:$0xf]
                %335 = vst [vmem:[%s201 + $0x108] sm:$0xf] %v334
                %v336 = vld [vmem:[%s200 + $0x430] sm:$0xf]
                %337 = vst [vmem:[%s201 + $0x10c] sm:$0xf] %v336
                %v338 = vld [vmem:[%s200 + $0x440] sm:$0xf]
                %339 = vst [vmem:[%s201 + $0x110] sm:$0xf] %v338
                %v340 = vld [vmem:[%s200 + $0x450] sm:$0xf]
                %341 = vst [vmem:[%s201 + $0x114] sm:$0xf] %v340
                %v342 = vld [vmem:[%s200 + $0x460] sm:$0xf]
                %343 = vst [vmem:[%s201 + $0x118] sm:$0xf] %v342
                %v344 = vld [vmem:[%s200 + $0x470] sm:$0xf]
                %345 = vst [vmem:[%s201 + $0x11c] sm:$0xf] %v344
                %v346 = vld [vmem:[%s200 + $0x480] sm:$0xf]
                %347 = vst [vmem:[%s201 + $0x120] sm:$0xf] %v346
                %v348 = vld [vmem:[%s200 + $0x490] sm:$0xf]
                %349 = vst [vmem:[%s201 + $0x124] sm:$0xf] %v348
                %v350 = vld [vmem:[%s200 + $0x4a0] sm:$0xf]
                %351 = vst [vmem:[%s201 + $0x128] sm:$0xf] %v350
                %v352 = vld [vmem:[%s200 + $0x4b0] sm:$0xf]
                %353 = vst [vmem:[%s201 + $0x12c] sm:$0xf] %v352
                %v354 = vld [vmem:[%s200 + $0x4c0] sm:$0xf]
                %355 = vst [vmem:[%s201 + $0x130] sm:$0xf] %v354
                %v356 = vld [vmem:[%s200 + $0x4d0] sm:$0xf]
                %357 = vst [vmem:[%s201 + $0x134] sm:$0xf] %v356
                %v358 = vld [vmem:[%s200 + $0x4e0] sm:$0xf]
                %359 = vst [vmem:[%s201 + $0x138] sm:$0xf] %v358
                %v360 = vld [vmem:[%s200 + $0x4f0] sm:$0xf]
                %361 = vst [vmem:[%s201 + $0x13c] sm:$0xf] %v360
                %v362 = vld [vmem:[%s200 + $0x500] sm:$0xf]
                %363 = vst [vmem:[%s201 + $0x140] sm:$0xf] %v362
                %v364 = vld [vmem:[%s200 + $0x510] sm:$0xf]
                %365 = vst [vmem:[%s201 + $0x144] sm:$0xf] %v364
                %v366 = vld [vmem:[%s200 + $0x520] sm:$0xf]
                %367 = vst [vmem:[%s201 + $0x148] sm:$0xf] %v366
                %v368 = vld [vmem:[%s200 + $0x530] sm:$0xf]
                %369 = vst [vmem:[%s201 + $0x14c] sm:$0xf] %v368
                %v370 = vld [vmem:[%s200 + $0x540] sm:$0xf]
                %371 = vst [vmem:[%s201 + $0x150] sm:$0xf] %v370
                %v372 = vld [vmem:[%s200 + $0x550] sm:$0xf]
                %373 = vst [vmem:[%s201 + $0x154] sm:$0xf] %v372
                %v374 = vld [vmem:[%s200 + $0x560] sm:$0xf]
                %375 = vst [vmem:[%s201 + $0x158] sm:$0xf] %v374
                %v376 = vld [vmem:[%s200 + $0x570] sm:$0xf]
                %377 = vst [vmem:[%s201 + $0x15c] sm:$0xf] %v376
                %v378 = vld [vmem:[%s200 + $0x580] sm:$0xf]
                %379 = vst [vmem:[%s201 + $0x160] sm:$0xf] %v378
                %v380 = vld [vmem:[%s200 + $0x590] sm:$0xf]
                %381 = vst [vmem:[%s201 + $0x164] sm:$0xf] %v380
                %v382 = vld [vmem:[%s200 + $0x5a0] sm:$0xf]
                %383 = vst [vmem:[%s201 + $0x168] sm:$0xf] %v382
                %v384 = vld [vmem:[%s200 + $0x5b0] sm:$0xf]
                %385 = vst [vmem:[%s201 + $0x16c] sm:$0xf] %v384
                %v386 = vld [vmem:[%s200 + $0x5c0] sm:$0xf]
                %387 = vst [vmem:[%s201 + $0x170] sm:$0xf] %v386
                %v388 = vld [vmem:[%s200 + $0x5d0] sm:$0xf]
                %389 = vst [vmem:[%s201 + $0x174] sm:$0xf] %v388
                %v390 = vld [vmem:[%s200 + $0x5e0] sm:$0xf]
                %391 = vst [vmem:[%s201 + $0x178] sm:$0xf] %v390
                %v392 = vld [vmem:[%s200 + $0x5f0] sm:$0xf]
                %393 = vst [vmem:[%s201 + $0x17c] sm:$0xf] %v392
                %v394 = vld [vmem:[%s200 + $0x600] sm:$0xf]
                %395 = vst [vmem:[%s201 + $0x180] sm:$0xf] %v394
                %v396 = vld [vmem:[%s200 + $0x610] sm:$0xf]
                %397 = vst [vmem:[%s201 + $0x184] sm:$0xf] %v396
                %v398 = vld [vmem:[%s200 + $0x620] sm:$0xf]
                %399 = vst [vmem:[%s201 + $0x188] sm:$0xf] %v398
                %v400 = vld [vmem:[%s200 + $0x630] sm:$0xf]
                %401 = vst [vmem:[%s201 + $0x18c] sm:$0xf] %v400
                %v402 = vld [vmem:[%s200 + $0x640] sm:$0xf]
                %403 = vst [vmem:[%s201 + $0x190] sm:$0xf] %v402
                %v404 = vld [vmem:[%s200 + $0x650] sm:$0xf]
                %405 = vst [vmem:[%s201 + $0x194] sm:$0xf] %v404
                %v406 = vld [vmem:[%s200 + $0x660] sm:$0xf]
                %407 = vst [vmem:[%s201 + $0x198] sm:$0xf] %v406
                %v408 = vld [vmem:[%s200 + $0x670] sm:$0xf]
                %409 = vst [vmem:[%s201 + $0x19c] sm:$0xf] %v408
                %v410 = vld [vmem:[%s200 + $0x680] sm:$0xf]
                %411 = vst [vmem:[%s201 + $0x1a0] sm:$0xf] %v410
                %v412 = vld [vmem:[%s200 + $0x690] sm:$0xf]
                %413 = vst [vmem:[%s201 + $0x1a4] sm:$0xf] %v412
                %v414 = vld [vmem:[%s200 + $0x6a0] sm:$0xf]
                %415 = vst [vmem:[%s201 + $0x1a8] sm:$0xf] %v414
                %v416 = vld [vmem:[%s200 + $0x6b0] sm:$0xf]
                %417 = vst [vmem:[%s201 + $0x1ac] sm:$0xf] %v416
                %v418 = vld [vmem:[%s200 + $0x6c0] sm:$0xf]
                %419 = vst [vmem:[%s201 + $0x1b0] sm:$0xf] %v418
                %v420 = vld [vmem:[%s200 + $0x6d0] sm:$0xf]
                %421 = vst [vmem:[%s201 + $0x1b4] sm:$0xf] %v420
                %v422 = vld [vmem:[%s200 + $0x6e0] sm:$0xf]
                %423 = vst [vmem:[%s201 + $0x1b8] sm:$0xf] %v422
                %v424 = vld [vmem:[%s200 + $0x6f0] sm:$0xf]
                %425 = vst [vmem:[%s201 + $0x1bc] sm:$0xf] %v424
                %v426 = vld [vmem:[%s200 + $0x700] sm:$0xf]
                %427 = vst [vmem:[%s201 + $0x1c0] sm:$0xf] %v426
                %v428 = vld [vmem:[%s200 + $0x710] sm:$0xf]
                %429 = vst [vmem:[%s201 + $0x1c4] sm:$0xf] %v428
                %v430 = vld [vmem:[%s200 + $0x720] sm:$0xf]
                %431 = vst [vmem:[%s201 + $0x1c8] sm:$0xf] %v430
                %v432 = vld [vmem:[%s200 + $0x730] sm:$0xf]
                %433 = vst [vmem:[%s201 + $0x1cc] sm:$0xf] %v432
                %v434 = vld [vmem:[%s200 + $0x740] sm:$0xf]
                %435 = vst [vmem:[%s201 + $0x1d0] sm:$0xf] %v434
                %v436 = vld [vmem:[%s200 + $0x750] sm:$0xf]
                %437 = vst [vmem:[%s201 + $0x1d4] sm:$0xf] %v436
                %v438 = vld [vmem:[%s200 + $0x760] sm:$0xf]
                %439 = vst [vmem:[%s201 + $0x1d8] sm:$0xf] %v438
                %v440 = vld [vmem:[%s200 + $0x770] sm:$0xf]
                %441 = vst [vmem:[%s201 + $0x1dc] sm:$0xf] %v440
                %v442 = vld [vmem:[%s200 + $0x780] sm:$0xf]
                %443 = vst [vmem:[%s201 + $0x1e0] sm:$0xf] %v442
                %v444 = vld [vmem:[%s200 + $0x790] sm:$0xf]
                %445 = vst [vmem:[%s201 + $0x1e4] sm:$0xf] %v444
                %v446 = vld [vmem:[%s200 + $0x7a0] sm:$0xf]
                %447 = vst [vmem:[%s201 + $0x1e8] sm:$0xf] %v446
                %v448 = vld [vmem:[%s200 + $0x7b0] sm:$0xf]
                %449 = vst [vmem:[%s201 + $0x1ec] sm:$0xf] %v448
                %v450 = vld [vmem:[%s200 + $0x7c0] sm:$0xf]
                %451 = vst [vmem:[%s201 + $0x1f0] sm:$0xf] %v450
                %v452 = vld [vmem:[%s200 + $0x7d0] sm:$0xf]
                %453 = vst [vmem:[%s201 + $0x1f4] sm:$0xf] %v452
                %v454 = vld [vmem:[%s200 + $0x7e0] sm:$0xf]
                %455 = vst [vmem:[%s201 + $0x1f8] sm:$0xf] %v454
                %v456 = vld [vmem:[%s200 + $0x7f0] sm:$0xf]
                %457 = vst [vmem:[%s201 + $0x1fc] sm:$0xf] %v456
                %v458 = vld [vmem:[%s200 + $0x800] sm:$0xf]
                %459 = vst [vmem:[%s201 + $0x200] sm:$0xf] %v458
                %v460 = vld [vmem:[%s200 + $0x810] sm:$0xf]
                %461 = vst [vmem:[%s201 + $0x204] sm:$0xf] %v460
                %v462 = vld [vmem:[%s200 + $0x820] sm:$0xf]
                %463 = vst [vmem:[%s201 + $0x208] sm:$0xf] %v462
                %v464 = vld [vmem:[%s200 + $0x830] sm:$0xf]
                %465 = vst [vmem:[%s201 + $0x20c] sm:$0xf] %v464
                %v466 = vld [vmem:[%s200 + $0x840] sm:$0xf]
                %467 = vst [vmem:[%s201 + $0x210] sm:$0xf] %v466
                %v468 = vld [vmem:[%s200 + $0x850] sm:$0xf]
                %469 = vst [vmem:[%s201 + $0x214] sm:$0xf] %v468
                %v470 = vld [vmem:[%s200 + $0x860] sm:$0xf]
                %471 = vst [vmem:[%s201 + $0x218] sm:$0xf] %v470
                %v472 = vld [vmem:[%s200 + $0x870] sm:$0xf]
                %473 = vst [vmem:[%s201 + $0x21c] sm:$0xf] %v472
                %v474 = vld [vmem:[%s200 + $0x880] sm:$0xf]
                %475 = vst [vmem:[%s201 + $0x220] sm:$0xf] %v474
                %v476 = vld [vmem:[%s200 + $0x890] sm:$0xf]
                %477 = vst [vmem:[%s201 + $0x224] sm:$0xf] %v476
                %v478 = vld [vmem:[%s200 + $0x8a0] sm:$0xf]
                %479 = vst [vmem:[%s201 + $0x228] sm:$0xf] %v478
                %v480 = vld [vmem:[%s200 + $0x8b0] sm:$0xf]
                %481 = vst [vmem:[%s201 + $0x22c] sm:$0xf] %v480
                %v482 = vld [vmem:[%s200 + $0x8c0] sm:$0xf]
                %483 = vst [vmem:[%s201 + $0x230] sm:$0xf] %v482
                %v484 = vld [vmem:[%s200 + $0x8d0] sm:$0xf]
                %485 = vst [vmem:[%s201 + $0x234] sm:$0xf] %v484
                %v486 = vld [vmem:[%s200 + $0x8e0] sm:$0xf]
                %487 = vst [vmem:[%s201 + $0x238] sm:$0xf] %v486
                %v488 = vld [vmem:[%s200 + $0x8f0] sm:$0xf]
                %489 = vst [vmem:[%s201 + $0x23c] sm:$0xf] %v488
                %v490 = vld [vmem:[%s200 + $0x900] sm:$0xf]
                %491 = vst [vmem:[%s201 + $0x240] sm:$0xf] %v490
                %v492 = vld [vmem:[%s200 + $0x910] sm:$0xf]
                %493 = vst [vmem:[%s201 + $0x244] sm:$0xf] %v492
                %v494 = vld [vmem:[%s200 + $0x920] sm:$0xf]
                %495 = vst [vmem:[%s201 + $0x248] sm:$0xf] %v494
                %v496 = vld [vmem:[%s200 + $0x930] sm:$0xf]
                %497 = vst [vmem:[%s201 + $0x24c] sm:$0xf] %v496
                %v498 = vld [vmem:[%s200 + $0x940] sm:$0xf]
                %499 = vst [vmem:[%s201 + $0x250] sm:$0xf] %v498
                %v500 = vld [vmem:[%s200 + $0x950] sm:$0xf]
                %501 = vst [vmem:[%s201 + $0x254] sm:$0xf] %v500
                %v502 = vld [vmem:[%s200 + $0x960] sm:$0xf]
                %503 = vst [vmem:[%s201 + $0x258] sm:$0xf] %v502
                %v504 = vld [vmem:[%s200 + $0x970] sm:$0xf]
                %505 = vst [vmem:[%s201 + $0x25c] sm:$0xf] %v504
                %v506 = vld [vmem:[%s200 + $0x980] sm:$0xf]
                %507 = vst [vmem:[%s201 + $0x260] sm:$0xf] %v506
                %v508 = vld [vmem:[%s200 + $0x990] sm:$0xf]
                %509 = vst [vmem:[%s201 + $0x264] sm:$0xf] %v508
                %v510 = vld [vmem:[%s200 + $0x9a0] sm:$0xf]
                %511 = vst [vmem:[%s201 + $0x268] sm:$0xf] %v510
                %v512 = vld [vmem:[%s200 + $0x9b0] sm:$0xf]
                %513 = vst [vmem:[%s201 + $0x26c] sm:$0xf] %v512
                %v514 = vld [vmem:[%s200 + $0x9c0] sm:$0xf]
                %515 = vst [vmem:[%s201 + $0x270] sm:$0xf] %v514
                %v516 = vld [vmem:[%s200 + $0x9d0] sm:$0xf]
                %517 = vst [vmem:[%s201 + $0x274] sm:$0xf] %v516
                %v518 = vld [vmem:[%s200 + $0x9e0] sm:$0xf]
                %519 = vst [vmem:[%s201 + $0x278] sm:$0xf] %v518
                %v520 = vld [vmem:[%s200 + $0x9f0] sm:$0xf]
                %521 = vst [vmem:[%s201 + $0x27c] sm:$0xf] %v520
                %v522 = vld [vmem:[%s200 + $0xa00] sm:$0xf]
                %523 = vst [vmem:[%s201 + $0x280] sm:$0xf] %v522
                %v524 = vld [vmem:[%s200 + $0xa10] sm:$0xf]
                %525 = vst [vmem:[%s201 + $0x284] sm:$0xf] %v524
                %v526 = vld [vmem:[%s200 + $0xa20] sm:$0xf]
                %527 = vst [vmem:[%s201 + $0x288] sm:$0xf] %v526
                %v528 = vld [vmem:[%s200 + $0xa30] sm:$0xf]
                %529 = vst [vmem:[%s201 + $0x28c] sm:$0xf] %v528
                %v530 = vld [vmem:[%s200 + $0xa40] sm:$0xf]
                %531 = vst [vmem:[%s201 + $0x290] sm:$0xf] %v530
                %v532 = vld [vmem:[%s200 + $0xa50] sm:$0xf]
                %533 = vst [vmem:[%s201 + $0x294] sm:$0xf] %v532
                %v534 = vld [vmem:[%s200 + $0xa60] sm:$0xf]
                %535 = vst [vmem:[%s201 + $0x298] sm:$0xf] %v534
                %v536 = vld [vmem:[%s200 + $0xa70] sm:$0xf]
                %537 = vst [vmem:[%s201 + $0x29c] sm:$0xf] %v536
                %v538 = vld [vmem:[%s200 + $0xa80] sm:$0xf]
                %539 = vst [vmem:[%s201 + $0x2a0] sm:$0xf] %v538
                %v540 = vld [vmem:[%s200 + $0xa90] sm:$0xf]
                %541 = vst [vmem:[%s201 + $0x2a4] sm:$0xf] %v540
                %v542 = vld [vmem:[%s200 + $0xaa0] sm:$0xf]
                %543 = vst [vmem:[%s201 + $0x2a8] sm:$0xf] %v542
                %v544 = vld [vmem:[%s200 + $0xab0] sm:$0xf]
                %545 = vst [vmem:[%s201 + $0x2ac] sm:$0xf] %v544
                %v546 = vld [vmem:[%s200 + $0xac0] sm:$0xf]
                %547 = vst [vmem:[%s201 + $0x2b0] sm:$0xf] %v546
                %v548 = vld [vmem:[%s200 + $0xad0] sm:$0xf]
                %549 = vst [vmem:[%s201 + $0x2b4] sm:$0xf] %v548
                %v550 = vld [vmem:[%s200 + $0xae0] sm:$0xf]
                %551 = vst [vmem:[%s201 + $0x2b8] sm:$0xf] %v550
                %v552 = vld [vmem:[%s200 + $0xaf0] sm:$0xf]
                %553 = vst [vmem:[%s201 + $0x2bc] sm:$0xf] %v552
                %v554 = vld [vmem:[%s200 + $0xb00] sm:$0xf]
                %555 = vst [vmem:[%s201 + $0x2c0] sm:$0xf] %v554
                %v556 = vld [vmem:[%s200 + $0xb10] sm:$0xf]
                %557 = vst [vmem:[%s201 + $0x2c4] sm:$0xf] %v556
                %v558 = vld [vmem:[%s200 + $0xb20] sm:$0xf]
                %559 = vst [vmem:[%s201 + $0x2c8] sm:$0xf] %v558
                %v560 = vld [vmem:[%s200 + $0xb30] sm:$0xf]
                %561 = vst [vmem:[%s201 + $0x2cc] sm:$0xf] %v560
                %v562 = vld [vmem:[%s200 + $0xb40] sm:$0xf]
                %563 = vst [vmem:[%s201 + $0x2d0] sm:$0xf] %v562
                %v564 = vld [vmem:[%s200 + $0xb50] sm:$0xf]
                %565 = vst [vmem:[%s201 + $0x2d4] sm:$0xf] %v564
                %v566 = vld [vmem:[%s200 + $0xb60] sm:$0xf]
                %567 = vst [vmem:[%s201 + $0x2d8] sm:$0xf] %v566
                %v568 = vld [vmem:[%s200 + $0xb70] sm:$0xf]
                %569 = vst [vmem:[%s201 + $0x2dc] sm:$0xf] %v568
                %v570 = vld [vmem:[%s200 + $0xb80] sm:$0xf]
                %571 = vst [vmem:[%s201 + $0x2e0] sm:$0xf] %v570
                %v572 = vld [vmem:[%s200 + $0xb90] sm:$0xf]
                %573 = vst [vmem:[%s201 + $0x2e4] sm:$0xf] %v572
                %v574 = vld [vmem:[%s200 + $0xba0] sm:$0xf]
                %575 = vst [vmem:[%s201 + $0x2e8] sm:$0xf] %v574
                %v576 = vld [vmem:[%s200 + $0xbb0] sm:$0xf]
                %577 = vst [vmem:[%s201 + $0x2ec] sm:$0xf] %v576
                %v578 = vld [vmem:[%s200 + $0xbc0] sm:$0xf]
                %579 = vst [vmem:[%s201 + $0x2f0] sm:$0xf] %v578
                %v580 = vld [vmem:[%s200 + $0xbd0] sm:$0xf]
                %581 = vst [vmem:[%s201 + $0x2f4] sm:$0xf] %v580
                %v582 = vld [vmem:[%s200 + $0xbe0] sm:$0xf]
                %583 = vst [vmem:[%s201 + $0x2f8] sm:$0xf] %v582
                %v584 = vld [vmem:[%s200 + $0xbf0] sm:$0xf]
                %585 = vst [vmem:[%s201 + $0x2fc] sm:$0xf] %v584
                %v586 = vld [vmem:[%s200 + $0xc00] sm:$0xf]
                %587 = vst [vmem:[%s201 + $0x300] sm:$0xf] %v586
                %v588 = vld [vmem:[%s200 + $0xc10] sm:$0xf]
                %589 = vst [vmem:[%s201 + $0x304] sm:$0xf] %v588
                %v590 = vld [vmem:[%s200 + $0xc20] sm:$0xf]
                %591 = vst [vmem:[%s201 + $0x308] sm:$0xf] %v590
                %v592 = vld [vmem:[%s200 + $0xc30] sm:$0xf]
                %593 = vst [vmem:[%s201 + $0x30c] sm:$0xf] %v592
                %v594 = vld [vmem:[%s200 + $0xc40] sm:$0xf]
                %595 = vst [vmem:[%s201 + $0x310] sm:$0xf] %v594
                %v596 = vld [vmem:[%s200 + $0xc50] sm:$0xf]
                %597 = vst [vmem:[%s201 + $0x314] sm:$0xf] %v596
                %v598 = vld [vmem:[%s200 + $0xc60] sm:$0xf]
                %599 = vst [vmem:[%s201 + $0x318] sm:$0xf] %v598
                %v600 = vld [vmem:[%s200 + $0xc70] sm:$0xf]
                %601 = vst [vmem:[%s201 + $0x31c] sm:$0xf] %v600
                %v602 = vld [vmem:[%s200 + $0xc80] sm:$0xf]
                %603 = vst [vmem:[%s201 + $0x320] sm:$0xf] %v602
                %v604 = vld [vmem:[%s200 + $0xc90] sm:$0xf]
                %605 = vst [vmem:[%s201 + $0x324] sm:$0xf] %v604
                %v606 = vld [vmem:[%s200 + $0xca0] sm:$0xf]
                %607 = vst [vmem:[%s201 + $0x328] sm:$0xf] %v606
                %v608 = vld [vmem:[%s200 + $0xcb0] sm:$0xf]
                %609 = vst [vmem:[%s201 + $0x32c] sm:$0xf] %v608
                %v610 = vld [vmem:[%s200 + $0xcc0] sm:$0xf]
                %611 = vst [vmem:[%s201 + $0x330] sm:$0xf] %v610
                %v612 = vld [vmem:[%s200 + $0xcd0] sm:$0xf]
                %613 = vst [vmem:[%s201 + $0x334] sm:$0xf] %v612
                %v614 = vld [vmem:[%s200 + $0xce0] sm:$0xf]
                %615 = vst [vmem:[%s201 + $0x338] sm:$0xf] %v614
                %v616 = vld [vmem:[%s200 + $0xcf0] sm:$0xf]
                %617 = vst [vmem:[%s201 + $0x33c] sm:$0xf] %v616
                %v618 = vld [vmem:[%s200 + $0xd00] sm:$0xf]
                %619 = vst [vmem:[%s201 + $0x340] sm:$0xf] %v618
                %v620 = vld [vmem:[%s200 + $0xd10] sm:$0xf]
                %621 = vst [vmem:[%s201 + $0x344] sm:$0xf] %v620
                %v622 = vld [vmem:[%s200 + $0xd20] sm:$0xf]
                %623 = vst [vmem:[%s201 + $0x348] sm:$0xf] %v622
                %v624 = vld [vmem:[%s200 + $0xd30] sm:$0xf]
                %625 = vst [vmem:[%s201 + $0x34c] sm:$0xf] %v624
                %v626 = vld [vmem:[%s200 + $0xd40] sm:$0xf]
                %627 = vst [vmem:[%s201 + $0x350] sm:$0xf] %v626
                %v628 = vld [vmem:[%s200 + $0xd50] sm:$0xf]
                %629 = vst [vmem:[%s201 + $0x354] sm:$0xf] %v628
                %v630 = vld [vmem:[%s200 + $0xd60] sm:$0xf]
                %631 = vst [vmem:[%s201 + $0x358] sm:$0xf] %v630
                %v632 = vld [vmem:[%s200 + $0xd70] sm:$0xf]
                %633 = vst [vmem:[%s201 + $0x35c] sm:$0xf] %v632
                %v634 = vld [vmem:[%s200 + $0xd80] sm:$0xf]
                %635 = vst [vmem:[%s201 + $0x360] sm:$0xf] %v634
                %v636 = vld [vmem:[%s200 + $0xd90] sm:$0xf]
                %637 = vst [vmem:[%s201 + $0x364] sm:$0xf] %v636
                %v638 = vld [vmem:[%s200 + $0xda0] sm:$0xf]
                %639 = vst [vmem:[%s201 + $0x368] sm:$0xf] %v638
                %v640 = vld [vmem:[%s200 + $0xdb0] sm:$0xf]
                %641 = vst [vmem:[%s201 + $0x36c] sm:$0xf] %v640
                %v642 = vld [vmem:[%s200 + $0xdc0] sm:$0xf]
                %643 = vst [vmem:[%s201 + $0x370] sm:$0xf] %v642
                %v644 = vld [vmem:[%s200 + $0xdd0] sm:$0xf]
                %645 = vst [vmem:[%s201 + $0x374] sm:$0xf] %v644
                %v646 = vld [vmem:[%s200 + $0xde0] sm:$0xf]
                %647 = vst [vmem:[%s201 + $0x378] sm:$0xf] %v646
                %v648 = vld [vmem:[%s200 + $0xdf0] sm:$0xf]
                %649 = vst [vmem:[%s201 + $0x37c] sm:$0xf] %v648
                %v650 = vld [vmem:[%s200 + $0xe00] sm:$0xf]
                %651 = vst [vmem:[%s201 + $0x380] sm:$0xf] %v650
                %v652 = vld [vmem:[%s200 + $0xe10] sm:$0xf]
                %653 = vst [vmem:[%s201 + $0x384] sm:$0xf] %v652
                %v654 = vld [vmem:[%s200 + $0xe20] sm:$0xf]
                %655 = vst [vmem:[%s201 + $0x388] sm:$0xf] %v654
                %v656 = vld [vmem:[%s200 + $0xe30] sm:$0xf]
                %657 = vst [vmem:[%s201 + $0x38c] sm:$0xf] %v656
                %v658 = vld [vmem:[%s200 + $0xe40] sm:$0xf]
                %659 = vst [vmem:[%s201 + $0x390] sm:$0xf] %v658
                %v660 = vld [vmem:[%s200 + $0xe50] sm:$0xf]
                %661 = vst [vmem:[%s201 + $0x394] sm:$0xf] %v660
                %v662 = vld [vmem:[%s200 + $0xe60] sm:$0xf]
                %663 = vst [vmem:[%s201 + $0x398] sm:$0xf] %v662
                %v664 = vld [vmem:[%s200 + $0xe70] sm:$0xf]
                %665 = vst [vmem:[%s201 + $0x39c] sm:$0xf] %v664
                %v666 = vld [vmem:[%s200 + $0xe80] sm:$0xf]
                %667 = vst [vmem:[%s201 + $0x3a0] sm:$0xf] %v666
                %v668 = vld [vmem:[%s200 + $0xe90] sm:$0xf]
                %669 = vst [vmem:[%s201 + $0x3a4] sm:$0xf] %v668
                %v670 = vld [vmem:[%s200 + $0xea0] sm:$0xf]
                %671 = vst [vmem:[%s201 + $0x3a8] sm:$0xf] %v670
                %v672 = vld [vmem:[%s200 + $0xeb0] sm:$0xf]
                %673 = vst [vmem:[%s201 + $0x3ac] sm:$0xf] %v672
                %v674 = vld [vmem:[%s200 + $0xec0] sm:$0xf]
                %675 = vst [vmem:[%s201 + $0x3b0] sm:$0xf] %v674
                %v676 = vld [vmem:[%s200 + $0xed0] sm:$0xf]
                %677 = vst [vmem:[%s201 + $0x3b4] sm:$0xf] %v676
                %v678 = vld [vmem:[%s200 + $0xee0] sm:$0xf]
                %679 = vst [vmem:[%s201 + $0x3b8] sm:$0xf] %v678
                %v680 = vld [vmem:[%s200 + $0xef0] sm:$0xf]
                %681 = vst [vmem:[%s201 + $0x3bc] sm:$0xf] %v680
                %v682 = vld [vmem:[%s200 + $0xf00] sm:$0xf]
                %683 = vst [vmem:[%s201 + $0x3c0] sm:$0xf] %v682
                %v684 = vld [vmem:[%s200 + $0xf10] sm:$0xf]
                %685 = vst [vmem:[%s201 + $0x3c4] sm:$0xf] %v684
                %v686 = vld [vmem:[%s200 + $0xf20] sm:$0xf]
                %687 = vst [vmem:[%s201 + $0x3c8] sm:$0xf] %v686
                %v688 = vld [vmem:[%s200 + $0xf30] sm:$0xf]
                %689 = vst [vmem:[%s201 + $0x3cc] sm:$0xf] %v688
                %v690 = vld [vmem:[%s200 + $0xf40] sm:$0xf]
                %691 = vst [vmem:[%s201 + $0x3d0] sm:$0xf] %v690
                %v692 = vld [vmem:[%s200 + $0xf50] sm:$0xf]
                %693 = vst [vmem:[%s201 + $0x3d4] sm:$0xf] %v692
                %v694 = vld [vmem:[%s200 + $0xf60] sm:$0xf]
                %695 = vst [vmem:[%s201 + $0x3d8] sm:$0xf] %v694
                %v696 = vld [vmem:[%s200 + $0xf70] sm:$0xf]
                %697 = vst [vmem:[%s201 + $0x3dc] sm:$0xf] %v696
                %v698 = vld [vmem:[%s200 + $0xf80] sm:$0xf]
                %699 = vst [vmem:[%s201 + $0x3e0] sm:$0xf] %v698
                %v700 = vld [vmem:[%s200 + $0xf90] sm:$0xf]
                %701 = vst [vmem:[%s201 + $0x3e4] sm:$0xf] %v700
                %v702 = vld [vmem:[%s200 + $0xfa0] sm:$0xf]
                %703 = vst [vmem:[%s201 + $0x3e8] sm:$0xf] %v702
                %v704 = vld [vmem:[%s200 + $0xfb0] sm:$0xf]
                %705 = vst [vmem:[%s201 + $0x3ec] sm:$0xf] %v704
                %v706 = vld [vmem:[%s200 + $0xfc0] sm:$0xf]
                %707 = vst [vmem:[%s201 + $0x3f0] sm:$0xf] %v706
                %v708 = vld [vmem:[%s200 + $0xfd0] sm:$0xf]
                %709 = vst [vmem:[%s201 + $0x3f4] sm:$0xf] %v708
                %v710 = vld [vmem:[%s200 + $0xfe0] sm:$0xf]
                %711 = vst [vmem:[%s201 + $0x3f8] sm:$0xf] %v710
                %v712 = vld [vmem:[%s200 + $0xff0] sm:$0xf]
                %713 = vst [vmem:[%s201 + $0x3fc] sm:$0xf] %v712
                %v714 = vld [vmem:[%s200 + $0x1000] sm:$0xf]
                %715 = vst [vmem:[%s201 + $0x400] sm:$0xf] %v714
                %v716 = vld [vmem:[%s200 + $0x1010] sm:$0xf]
                %717 = vst [vmem:[%s201 + $0x404] sm:$0xf] %v716
                %v718 = vld [vmem:[%s200 + $0x1020] sm:$0xf]
                %719 = vst [vmem:[%s201 + $0x408] sm:$0xf] %v718
                %v720 = vld [vmem:[%s200 + $0x1030] sm:$0xf]
                %721 = vst [vmem:[%s201 + $0x40c] sm:$0xf] %v720
                %v722 = vld [vmem:[%s200 + $0x1040] sm:$0xf]
                %723 = vst [vmem:[%s201 + $0x410] sm:$0xf] %v722
                %v724 = vld [vmem:[%s200 + $0x1050] sm:$0xf]
                %725 = vst [vmem:[%s201 + $0x414] sm:$0xf] %v724
                %v726 = vld [vmem:[%s200 + $0x1060] sm:$0xf]
                %727 = vst [vmem:[%s201 + $0x418] sm:$0xf] %v726
                %v728 = vld [vmem:[%s200 + $0x1070] sm:$0xf]
                %729 = vst [vmem:[%s201 + $0x41c] sm:$0xf] %v728
                %v730 = vld [vmem:[%s200 + $0x1080] sm:$0xf]
                %731 = vst [vmem:[%s201 + $0x420] sm:$0xf] %v730
                %v732 = vld [vmem:[%s200 + $0x1090] sm:$0xf]
                %733 = vst [vmem:[%s201 + $0x424] sm:$0xf] %v732
                %v734 = vld [vmem:[%s200 + $0x10a0] sm:$0xf]
                %735 = vst [vmem:[%s201 + $0x428] sm:$0xf] %v734
                %v736 = vld [vmem:[%s200 + $0x10b0] sm:$0xf]
                %737 = vst [vmem:[%s201 + $0x42c] sm:$0xf] %v736
                %v738 = vld [vmem:[%s200 + $0x10c0] sm:$0xf]
                %739 = vst [vmem:[%s201 + $0x430] sm:$0xf] %v738
                %v740 = vld [vmem:[%s200 + $0x10d0] sm:$0xf]
                %741 = vst [vmem:[%s201 + $0x434] sm:$0xf] %v740
                %v742 = vld [vmem:[%s200 + $0x10e0] sm:$0xf]
                %743 = vst [vmem:[%s201 + $0x438] sm:$0xf] %v742
                %v744 = vld [vmem:[%s200 + $0x10f0] sm:$0xf]
                %745 = vst [vmem:[%s201 + $0x43c] sm:$0xf] %v744
                %v746 = vld [vmem:[%s200 + $0x1100] sm:$0xf]
                %747 = vst [vmem:[%s201 + $0x440] sm:$0xf] %v746
                %v748 = vld [vmem:[%s200 + $0x1110] sm:$0xf]
                %749 = vst [vmem:[%s201 + $0x444] sm:$0xf] %v748
                %v750 = vld [vmem:[%s200 + $0x1120] sm:$0xf]
                %751 = vst [vmem:[%s201 + $0x448] sm:$0xf] %v750
                %v752 = vld [vmem:[%s200 + $0x1130] sm:$0xf]
                %753 = vst [vmem:[%s201 + $0x44c] sm:$0xf] %v752
                %v754 = vld [vmem:[%s200 + $0x1140] sm:$0xf]
                %755 = vst [vmem:[%s201 + $0x450] sm:$0xf] %v754
                %v756 = vld [vmem:[%s200 + $0x1150] sm:$0xf]
                %757 = vst [vmem:[%s201 + $0x454] sm:$0xf] %v756
                %v758 = vld [vmem:[%s200 + $0x1160] sm:$0xf]
                %759 = vst [vmem:[%s201 + $0x458] sm:$0xf] %v758
                %v760 = vld [vmem:[%s200 + $0x1170] sm:$0xf]
                %761 = vst [vmem:[%s201 + $0x45c] sm:$0xf] %v760
                %v762 = vld [vmem:[%s200 + $0x1180] sm:$0xf]
                %763 = vst [vmem:[%s201 + $0x460] sm:$0xf] %v762
                %v764 = vld [vmem:[%s200 + $0x1190] sm:$0xf]
                %765 = vst [vmem:[%s201 + $0x464] sm:$0xf] %v764
                %v766 = vld [vmem:[%s200 + $0x11a0] sm:$0xf]
                %767 = vst [vmem:[%s201 + $0x468] sm:$0xf] %v766
                %v768 = vld [vmem:[%s200 + $0x11b0] sm:$0xf]
                %769 = vst [vmem:[%s201 + $0x46c] sm:$0xf] %v768
                %v770 = vld [vmem:[%s200 + $0x11c0] sm:$0xf]
                %771 = vst [vmem:[%s201 + $0x470] sm:$0xf] %v770
                %v772 = vld [vmem:[%s200 + $0x11d0] sm:$0xf]
                %773 = vst [vmem:[%s201 + $0x474] sm:$0xf] %v772
                %v774 = vld [vmem:[%s200 + $0x11e0] sm:$0xf]
                %775 = vst [vmem:[%s201 + $0x478] sm:$0xf] %v774
                %v776 = vld [vmem:[%s200 + $0x11f0] sm:$0xf]
                %777 = vst [vmem:[%s201 + $0x47c] sm:$0xf] %v776
                %v778 = vld [vmem:[%s200 + $0x1200] sm:$0xf]
                %779 = vst [vmem:[%s201 + $0x480] sm:$0xf] %v778
                %v780 = vld [vmem:[%s200 + $0x1210] sm:$0xf]
                %781 = vst [vmem:[%s201 + $0x484] sm:$0xf] %v780
                %v782 = vld [vmem:[%s200 + $0x1220] sm:$0xf]
                %783 = vst [vmem:[%s201 + $0x488] sm:$0xf] %v782
                %v784 = vld [vmem:[%s200 + $0x1230] sm:$0xf]
                %785 = vst [vmem:[%s201 + $0x48c] sm:$0xf] %v784
                %v786 = vld [vmem:[%s200 + $0x1240] sm:$0xf]
                %787 = vst [vmem:[%s201 + $0x490] sm:$0xf] %v786
                %v788 = vld [vmem:[%s200 + $0x1250] sm:$0xf]
                %789 = vst [vmem:[%s201 + $0x494] sm:$0xf] %v788
                %v790 = vld [vmem:[%s200 + $0x1260] sm:$0xf]
                %791 = vst [vmem:[%s201 + $0x498] sm:$0xf] %v790
                %v792 = vld [vmem:[%s200 + $0x1270] sm:$0xf]
                %793 = vst [vmem:[%s201 + $0x49c] sm:$0xf] %v792
                %v794 = vld [vmem:[%s200 + $0x1280] sm:$0xf]
                %795 = vst [vmem:[%s201 + $0x4a0] sm:$0xf] %v794
                %v796 = vld [vmem:[%s200 + $0x1290] sm:$0xf]
                %797 = vst [vmem:[%s201 + $0x4a4] sm:$0xf] %v796
                %v798 = vld [vmem:[%s200 + $0x12a0] sm:$0xf]
                %799 = vst [vmem:[%s201 + $0x4a8] sm:$0xf] %v798
                %v800 = vld [vmem:[%s200 + $0x12b0] sm:$0xf]
                %801 = vst [vmem:[%s201 + $0x4ac] sm:$0xf] %v800
                %v802 = vld [vmem:[%s200 + $0x12c0] sm:$0xf]
                %803 = vst [vmem:[%s201 + $0x4b0] sm:$0xf] %v802
                %v804 = vld [vmem:[%s200 + $0x12d0] sm:$0xf]
                %805 = vst [vmem:[%s201 + $0x4b4] sm:$0xf] %v804
                %v806 = vld [vmem:[%s200 + $0x12e0] sm:$0xf]
                %807 = vst [vmem:[%s201 + $0x4b8] sm:$0xf] %v806
                %v808 = vld [vmem:[%s200 + $0x12f0] sm:$0xf]
                %809 = vst [vmem:[%s201 + $0x4bc] sm:$0xf] %v808
                %v810 = vld [vmem:[%s200 + $0x1300] sm:$0xf]
                %811 = vst [vmem:[%s201 + $0x4c0] sm:$0xf] %v810
                %v812 = vld [vmem:[%s200 + $0x1310] sm:$0xf]
                %813 = vst [vmem:[%s201 + $0x4c4] sm:$0xf] %v812
                %v814 = vld [vmem:[%s200 + $0x1320] sm:$0xf]
                %815 = vst [vmem:[%s201 + $0x4c8] sm:$0xf] %v814
                %v816 = vld [vmem:[%s200 + $0x1330] sm:$0xf]
                %817 = vst [vmem:[%s201 + $0x4cc] sm:$0xf] %v816
                %v818 = vld [vmem:[%s200 + $0x1340] sm:$0xf]
                %819 = vst [vmem:[%s201 + $0x4d0] sm:$0xf] %v818
                %v820 = vld [vmem:[%s200 + $0x1350] sm:$0xf]
                %821 = vst [vmem:[%s201 + $0x4d4] sm:$0xf] %v820
                %v822 = vld [vmem:[%s200 + $0x1360] sm:$0xf]
                %823 = vst [vmem:[%s201 + $0x4d8] sm:$0xf] %v822
                %v824 = vld [vmem:[%s200 + $0x1370] sm:$0xf]
                %825 = vst [vmem:[%s201 + $0x4dc] sm:$0xf] %v824
                %v826 = vld [vmem:[%s200 + $0x1380] sm:$0xf]
                %827 = vst [vmem:[%s201 + $0x4e0] sm:$0xf] %v826
                %v828 = vld [vmem:[%s200 + $0x1390] sm:$0xf]
                %829 = vst [vmem:[%s201 + $0x4e4] sm:$0xf] %v828
                %v830 = vld [vmem:[%s200 + $0x13a0] sm:$0xf]
                %831 = vst [vmem:[%s201 + $0x4e8] sm:$0xf] %v830
                %v832 = vld [vmem:[%s200 + $0x13b0] sm:$0xf]
                %833 = vst [vmem:[%s201 + $0x4ec] sm:$0xf] %v832
                %v834 = vld [vmem:[%s200 + $0x13c0] sm:$0xf]
                %835 = vst [vmem:[%s201 + $0x4f0] sm:$0xf] %v834
                %v836 = vld [vmem:[%s200 + $0x13d0] sm:$0xf]
                %837 = vst [vmem:[%s201 + $0x4f4] sm:$0xf] %v836
                %v838 = vld [vmem:[%s200 + $0x13e0] sm:$0xf]
                %839 = vst [vmem:[%s201 + $0x4f8] sm:$0xf] %v838
                %v840 = vld [vmem:[%s200 + $0x13f0] sm:$0xf]
                %841 = vst [vmem:[%s201 + $0x4fc] sm:$0xf] %v840
                %v842 = vld [vmem:[%s200 + $0x1400] sm:$0xf]
                %843 = vst [vmem:[%s201 + $0x500] sm:$0xf] %v842
                %v844 = vld [vmem:[%s200 + $0x1410] sm:$0xf]
                %845 = vst [vmem:[%s201 + $0x504] sm:$0xf] %v844
                %v846 = vld [vmem:[%s200 + $0x1420] sm:$0xf]
                %847 = vst [vmem:[%s201 + $0x508] sm:$0xf] %v846
                %v848 = vld [vmem:[%s200 + $0x1430] sm:$0xf]
                %849 = vst [vmem:[%s201 + $0x50c] sm:$0xf] %v848
                %v850 = vld [vmem:[%s200 + $0x1440] sm:$0xf]
                %851 = vst [vmem:[%s201 + $0x510] sm:$0xf] %v850
                %v852 = vld [vmem:[%s200 + $0x1450] sm:$0xf]
                %853 = vst [vmem:[%s201 + $0x514] sm:$0xf] %v852
                %v854 = vld [vmem:[%s200 + $0x1460] sm:$0xf]
                %855 = vst [vmem:[%s201 + $0x518] sm:$0xf] %v854
                %v856 = vld [vmem:[%s200 + $0x1470] sm:$0xf]
                %857 = vst [vmem:[%s201 + $0x51c] sm:$0xf] %v856
                %v858 = vld [vmem:[%s200 + $0x1480] sm:$0xf]
                %859 = vst [vmem:[%s201 + $0x520] sm:$0xf] %v858
                %v860 = vld [vmem:[%s200 + $0x1490] sm:$0xf]
                %861 = vst [vmem:[%s201 + $0x524] sm:$0xf] %v860
                %v862 = vld [vmem:[%s200 + $0x14a0] sm:$0xf]
                %863 = vst [vmem:[%s201 + $0x528] sm:$0xf] %v862
                %v864 = vld [vmem:[%s200 + $0x14b0] sm:$0xf]
                %865 = vst [vmem:[%s201 + $0x52c] sm:$0xf] %v864
                %v866 = vld [vmem:[%s200 + $0x14c0] sm:$0xf]
                %867 = vst [vmem:[%s201 + $0x530] sm:$0xf] %v866
                %v868 = vld [vmem:[%s200 + $0x14d0] sm:$0xf]
                %869 = vst [vmem:[%s201 + $0x534] sm:$0xf] %v868
                %v870 = vld [vmem:[%s200 + $0x14e0] sm:$0xf]
                %871 = vst [vmem:[%s201 + $0x538] sm:$0xf] %v870
                %v872 = vld [vmem:[%s200 + $0x14f0] sm:$0xf]
                %873 = vst [vmem:[%s201 + $0x53c] sm:$0xf] %v872
                %v874 = vld [vmem:[%s200 + $0x1500] sm:$0xf]
                %875 = vst [vmem:[%s201 + $0x540] sm:$0xf] %v874
                %v876 = vld [vmem:[%s200 + $0x1510] sm:$0xf]
                %877 = vst [vmem:[%s201 + $0x544] sm:$0xf] %v876
                %v878 = vld [vmem:[%s200 + $0x1520] sm:$0xf]
                %879 = vst [vmem:[%s201 + $0x548] sm:$0xf] %v878
                %v880 = vld [vmem:[%s200 + $0x1530] sm:$0xf]
                %881 = vst [vmem:[%s201 + $0x54c] sm:$0xf] %v880
                %v882 = vld [vmem:[%s200 + $0x1540] sm:$0xf]
                %883 = vst [vmem:[%s201 + $0x550] sm:$0xf] %v882
                %v884 = vld [vmem:[%s200 + $0x1550] sm:$0xf]
                %885 = vst [vmem:[%s201 + $0x554] sm:$0xf] %v884
                %v886 = vld [vmem:[%s200 + $0x1560] sm:$0xf]
                %887 = vst [vmem:[%s201 + $0x558] sm:$0xf] %v886
                %v888 = vld [vmem:[%s200 + $0x1570] sm:$0xf]
                %889 = vst [vmem:[%s201 + $0x55c] sm:$0xf] %v888
                %v890 = vld [vmem:[%s200 + $0x1580] sm:$0xf]
                %891 = vst [vmem:[%s201 + $0x560] sm:$0xf] %v890
                %v892 = vld [vmem:[%s200 + $0x1590] sm:$0xf]
                %893 = vst [vmem:[%s201 + $0x564] sm:$0xf] %v892
                %v894 = vld [vmem:[%s200 + $0x15a0] sm:$0xf]
                %895 = vst [vmem:[%s201 + $0x568] sm:$0xf] %v894
                %v896 = vld [vmem:[%s200 + $0x15b0] sm:$0xf]
                %897 = vst [vmem:[%s201 + $0x56c] sm:$0xf] %v896
                %v898 = vld [vmem:[%s200 + $0x15c0] sm:$0xf]
                %899 = vst [vmem:[%s201 + $0x570] sm:$0xf] %v898
                %v900 = vld [vmem:[%s200 + $0x15d0] sm:$0xf]
                %901 = vst [vmem:[%s201 + $0x574] sm:$0xf] %v900
                %v902 = vld [vmem:[%s200 + $0x15e0] sm:$0xf]
                %903 = vst [vmem:[%s201 + $0x578] sm:$0xf] %v902
                %v904 = vld [vmem:[%s200 + $0x15f0] sm:$0xf]
                %905 = vst [vmem:[%s201 + $0x57c] sm:$0xf] %v904
                %v906 = vld [vmem:[%s200 + $0x1600] sm:$0xf]
                %907 = vst [vmem:[%s201 + $0x580] sm:$0xf] %v906
                %v908 = vld [vmem:[%s200 + $0x1610] sm:$0xf]
                %909 = vst [vmem:[%s201 + $0x584] sm:$0xf] %v908
                %v910 = vld [vmem:[%s200 + $0x1620] sm:$0xf]
                %911 = vst [vmem:[%s201 + $0x588] sm:$0xf] %v910
                %v912 = vld [vmem:[%s200 + $0x1630] sm:$0xf]
                %913 = vst [vmem:[%s201 + $0x58c] sm:$0xf] %v912
                %v914 = vld [vmem:[%s200 + $0x1640] sm:$0xf]
                %915 = vst [vmem:[%s201 + $0x590] sm:$0xf] %v914
                %v916 = vld [vmem:[%s200 + $0x1650] sm:$0xf]
                %917 = vst [vmem:[%s201 + $0x594] sm:$0xf] %v916
                %v918 = vld [vmem:[%s200 + $0x1660] sm:$0xf]
                %919 = vst [vmem:[%s201 + $0x598] sm:$0xf] %v918
                %v920 = vld [vmem:[%s200 + $0x1670] sm:$0xf]
                %921 = vst [vmem:[%s201 + $0x59c] sm:$0xf] %v920
                %v922 = vld [vmem:[%s200 + $0x1680] sm:$0xf]
                %923 = vst [vmem:[%s201 + $0x5a0] sm:$0xf] %v922
                %v924 = vld [vmem:[%s200 + $0x1690] sm:$0xf]
                %925 = vst [vmem:[%s201 + $0x5a4] sm:$0xf] %v924
                %v926 = vld [vmem:[%s200 + $0x16a0] sm:$0xf]
                %927 = vst [vmem:[%s201 + $0x5a8] sm:$0xf] %v926
                %v928 = vld [vmem:[%s200 + $0x16b0] sm:$0xf]
                %929 = vst [vmem:[%s201 + $0x5ac] sm:$0xf] %v928
                %v930 = vld [vmem:[%s200 + $0x16c0] sm:$0xf]
                %931 = vst [vmem:[%s201 + $0x5b0] sm:$0xf] %v930
                %v932 = vld [vmem:[%s200 + $0x16d0] sm:$0xf]
                %933 = vst [vmem:[%s201 + $0x5b4] sm:$0xf] %v932
                %v934 = vld [vmem:[%s200 + $0x16e0] sm:$0xf]
                %935 = vst [vmem:[%s201 + $0x5b8] sm:$0xf] %v934
                %v936 = vld [vmem:[%s200 + $0x16f0] sm:$0xf]
                %937 = vst [vmem:[%s201 + $0x5bc] sm:$0xf] %v936
                %v938 = vld [vmem:[%s200 + $0x1700] sm:$0xf]
                %939 = vst [vmem:[%s201 + $0x5c0] sm:$0xf] %v938
                %v940 = vld [vmem:[%s200 + $0x1710] sm:$0xf]
                %941 = vst [vmem:[%s201 + $0x5c4] sm:$0xf] %v940
                %v942 = vld [vmem:[%s200 + $0x1720] sm:$0xf]
                %943 = vst [vmem:[%s201 + $0x5c8] sm:$0xf] %v942
                %v944 = vld [vmem:[%s200 + $0x1730] sm:$0xf]
                %945 = vst [vmem:[%s201 + $0x5cc] sm:$0xf] %v944
                %v946 = vld [vmem:[%s200 + $0x1740] sm:$0xf]
                %947 = vst [vmem:[%s201 + $0x5d0] sm:$0xf] %v946
                %v948 = vld [vmem:[%s200 + $0x1750] sm:$0xf]
                %949 = vst [vmem:[%s201 + $0x5d4] sm:$0xf] %v948
                %v950 = vld [vmem:[%s200 + $0x1760] sm:$0xf]
                %951 = vst [vmem:[%s201 + $0x5d8] sm:$0xf] %v950
                %v952 = vld [vmem:[%s200 + $0x1770] sm:$0xf]
                %953 = vst [vmem:[%s201 + $0x5dc] sm:$0xf] %v952
                %v954 = vld [vmem:[%s200 + $0x1780] sm:$0xf]
                %955 = vst [vmem:[%s201 + $0x5e0] sm:$0xf] %v954
                %v956 = vld [vmem:[%s200 + $0x1790] sm:$0xf]
                %957 = vst [vmem:[%s201 + $0x5e4] sm:$0xf] %v956
                %v958 = vld [vmem:[%s200 + $0x17a0] sm:$0xf]
                %959 = vst [vmem:[%s201 + $0x5e8] sm:$0xf] %v958
                %v960 = vld [vmem:[%s200 + $0x17b0] sm:$0xf]
                %961 = vst [vmem:[%s201 + $0x5ec] sm:$0xf] %v960
                %v962 = vld [vmem:[%s200 + $0x17c0] sm:$0xf]
                %963 = vst [vmem:[%s201 + $0x5f0] sm:$0xf] %v962
                %v964 = vld [vmem:[%s200 + $0x17d0] sm:$0xf]
                %965 = vst [vmem:[%s201 + $0x5f4] sm:$0xf] %v964
                %v966 = vld [vmem:[%s200 + $0x17e0] sm:$0xf]
                %967 = vst [vmem:[%s201 + $0x5f8] sm:$0xf] %v966
                %v968 = vld [vmem:[%s200 + $0x17f0] sm:$0xf]
                %969 = vst [vmem:[%s201 + $0x5fc] sm:$0xf] %v968
                %v970 = vld [vmem:[%s200 + $0x1800] sm:$0xf]
                %971 = vst [vmem:[%s201 + $0x600] sm:$0xf] %v970
                %v972 = vld [vmem:[%s200 + $0x1810] sm:$0xf]
                %973 = vst [vmem:[%s201 + $0x604] sm:$0xf] %v972
                %v974 = vld [vmem:[%s200 + $0x1820] sm:$0xf]
                %975 = vst [vmem:[%s201 + $0x608] sm:$0xf] %v974
                %v976 = vld [vmem:[%s200 + $0x1830] sm:$0xf]
                %977 = vst [vmem:[%s201 + $0x60c] sm:$0xf] %v976
                %v978 = vld [vmem:[%s200 + $0x1840] sm:$0xf]
                %979 = vst [vmem:[%s201 + $0x610] sm:$0xf] %v978
                %v980 = vld [vmem:[%s200 + $0x1850] sm:$0xf]
                %981 = vst [vmem:[%s201 + $0x614] sm:$0xf] %v980
                %v982 = vld [vmem:[%s200 + $0x1860] sm:$0xf]
                %983 = vst [vmem:[%s201 + $0x618] sm:$0xf] %v982
                %v984 = vld [vmem:[%s200 + $0x1870] sm:$0xf]
                %985 = vst [vmem:[%s201 + $0x61c] sm:$0xf] %v984
              $region45: #{dqn_forward.7} parent=39 // loop_footer
                %s199 = sadd.s32 1, %s195
              $region46: #{dqn_forward.7} parent=39 // loop_footer_branch
                %194 = sbr.rel target = $region42
              $region47: #{dqn_forward.7} parent=39 // loop_exit
                _
            $region40: #{dqn_forward.7} parent=31 // pred_fallthru
              _
          $region32: #{dqn_forward.7} parent=27 // pred_fallthru
            _
          %1789 = vnop
        $region28: #{dqn_forward.7} parent=23 // pred_fallthru
          _
        // Predicated region
        $region66: #{dqn_forward.7} parent=23 // pred_check
          %p1790 = pneg %p79
        $region67: #{dqn_forward.7} parent=23 // pred_check_branch
          %1792 = sbr.rel (%p1790) target = $region69
        $region68: #{dqn_forward.7} parent=23 // pred_region
          %p1793 = scmp.lt.s32.totalorder %s12, 3
          %s1794 = scalar_select %p1793, %s12, 3
          %s1795 = scalar_lea.vmem %s2, %s1794
        $region69: #{dqn_forward.7} parent=23 // pred_fallthru
          _
        // Predicated region
        $region70: #{dqn_forward.7} parent=23 // pred_check
          %p1796 = pneg %p105
        $region71: #{dqn_forward.7} parent=23 // pred_check_branch
          %1798 = sbr.rel (%p1796) target = $region73
        $region72: #{dqn_forward.7} parent=23 // pred_region
          %s1799 = smul.u32 16, %s12
          %p1800 = scmp.lt.s32.totalorder %s1799, 63
          %s1801 = scalar_select %p1800, %s1799, 63
          %s1802 = smul.addr %s1801, 4
          %s1803 = scalar_lea.vmem %s3, %s1802
          %s1804 = smul.u32 16, %s12
        $region73: #{dqn_forward.7} parent=23 // pred_fallthru
          _
      $region24: #{dqn_forward.7} parent=5 // pred_fallthru
        _
      %p1805 = scmp.le.s32.totalorder 1, %s12
      %p1806 = scmp.lt.s32.totalorder %s12, 5
      %p1807 = pnand %p1805, %p1806
      %p1808 = pneg %p1807
      // Predicated region
      $region74: #{dqn_forward.7} parent=5 // pred_check
        _
      $region75: #{dqn_forward.7} parent=5 // pred_check_branch
        %1810 = sbr.rel (%p1807) target = $region77
      $region76: #{dqn_forward.7} parent=5 // pred_region
        %s1811 = ssub.s32 %s12, 1
        %s1812 = sand.u32 %s46, 1
        %s1813 = sand.u32 %s46, 1
        %s1814 = smul.addr %s1813, 1568
        %s1815 = scalar_lea.vmem [#allocation3], %s1814
        // Predicated region
        $region78: #{dqn_forward.7} parent=76 // pred_check
          %p1816 = pneg %p59
        $region79: #{dqn_forward.7} parent=76 // pred_check_branch
          %1818 = sbr.rel (%p1816) target = $region81
        $region80: #{dqn_forward.7} parent=76 // pred_region
          _
        $region81: #{dqn_forward.7} parent=76 // pred_fallthru
          _
        %p1819 = pneg %p33
        %p1820 = pneg %p30
        %s1821 = sand.u32 %s46, 1
        %s1822 = sand.u32 %s46, 1
        %s1823 = smul.addr %s1822, 1568
        %s1824 = scalar_lea.vmem [#allocation3], %s1823
        %p1825 = pneg %p59
        %p1826 = pneg %p56
        %p1827 = scmp.lt.s32.totalorder %s17, 3
        %s1828 = scalar_select %p1827, %s17, 3
        %s1829 = scalar_lea.vmem %s2, %s1828
        %p1830 = pneg %p85
        %p1831 = pneg %p82
        %s1832 = smul.u32 16, %s17
        %p1833 = scmp.lt.s32.totalorder %s1832, 63
        %s1834 = scalar_select %p1833, %s1832, 63
        %s1835 = smul.addr %s1834, 4
        %s1836 = scalar_lea.vmem %s3, %s1835
        %p1837 = pneg %p111
        %p1838 = pneg %p108
        %p1839 = pneg %p132
        %p1840 = pneg %p129
        %p1841 = pneg %p153
        %p1842 = pneg %p150
        %p1843 = scmp.lt.s32.totalorder %s17, 3
        %s1844 = scalar_select %p1843, %s17, 3
        %s1845 = scalar_lea.vmem %s2, %s1844
        %s1846 = smul.u32 16, %s17
        %p1847 = scmp.lt.s32.totalorder %s1846, 63
        %s1848 = scalar_select %p1847, %s1846, 63
        %s1849 = smul.addr %s1848, 4
        %s1850 = scalar_lea.vmem %s3, %s1849
        %s1851 = smul.u32 16, %s17
        %p1853 = scmp.eq.s32.totalorder %s17, 0
        // Predicated region
        $region82: #{dqn_forward.7} parent=76 // pred_check
          %p1854 = pneg %p1853
        $region83: #{dqn_forward.7} parent=76 // pred_check_branch
          %1856 = sbr.rel (%p1854) target = $region85
        $region84: #{dqn_forward.7} parent=76 // pred_region
          %vm1857 = vcmask 25600
          %1858 = vst.msk [vmem:[#allocation2] sm:$0x3] %vm1857, 0.0
        $region85: #{dqn_forward.7} parent=76 // pred_fallthru
          _
        %v1859 = vld [vmem:[%s0] sm:$0xff]
        %v1860 = vld [vmem:[%s0 + $0x8] sm:$0xff]
        %v1861 = vld [vmem:[%s0 + $0x10] sm:$0xff]
        %v1862 = vld [vmem:[%s0 + $0x18] sm:$0x1]
        %v1863 = vld [vmem:[%s1815] sm:$0xf]
        %v1864 = vld [vmem:[%s1815 + $0x4] sm:$0xf]
        %v1865 = vld [vmem:[%s1815 + $0x8] sm:$0xf]
        %v1866 = vld [vmem:[%s1815 + $0xc] sm:$0xf]
        %v1867 = vld [vmem:[%s1815 + $0x10] sm:$0xf]
        %v1868 = vld [vmem:[%s1815 + $0x14] sm:$0xf]
        %v1869 = vld [vmem:[%s1815 + $0x18] sm:$0xf]
        %v1870 = vld [vmem:[%s1815 + $0x1c] sm:$0xf]
        %v1871 = vld [vmem:[%s1815 + $0x20] sm:$0xf]
        %v1872 = vld [vmem:[%s1815 + $0x24] sm:$0xf]
        %v1873 = vld [vmem:[%s1815 + $0x28] sm:$0xf]
        %v1874 = vld [vmem:[%s1815 + $0x2c] sm:$0xf]
        %v1875 = vld [vmem:[%s1815 + $0x30] sm:$0xf]
        %v1876 = vld [vmem:[%s1815 + $0x34] sm:$0xf]
        %v1877 = vld [vmem:[%s1815 + $0x38] sm:$0xf]
        %v1878 = vld [vmem:[%s1815 + $0x3c] sm:$0xf]
        %v1879 = vld [vmem:[%s1815 + $0x40] sm:$0xf]
        %v1880 = vld [vmem:[%s1815 + $0x44] sm:$0xf]
        %v1881 = vld [vmem:[%s1815 + $0x48] sm:$0xf]
        %v1882 = vld [vmem:[%s1815 + $0x4c] sm:$0xf]
        %v1883 = vld [vmem:[%s1815 + $0x50] sm:$0xf]
        %v1884 = vld [vmem:[%s1815 + $0x54] sm:$0xf]
        %v1885 = vld [vmem:[%s1815 + $0x58] sm:$0xf]
        %v1886 = vld [vmem:[%s1815 + $0x5c] sm:$0xf]
        %v1887 = vld [vmem:[%s1815 + $0x60] sm:$0xf]
        %v1888 = vld [vmem:[%s1815 + $0x64] sm:$0xf]
        %v1889 = vld [vmem:[%s1815 + $0x68] sm:$0xf]
        %v1890 = vld [vmem:[%s1815 + $0x6c] sm:$0xf]
        %v1891 = vld [vmem:[%s1815 + $0x70] sm:$0xf]
        %v1892 = vld [vmem:[%s1815 + $0x74] sm:$0xf]
        %v1893 = vld [vmem:[%s1815 + $0x78] sm:$0xf]
        %v1894 = vld [vmem:[%s1815 + $0x7c] sm:$0xf]
        %v1895 = vld [vmem:[%s1815 + $0x80] sm:$0xf]
        %v1896 = vld [vmem:[%s1815 + $0x84] sm:$0xf]
        %v1897 = vld [vmem:[%s1815 + $0x88] sm:$0xf]
        %v1898 = vld [vmem:[%s1815 + $0x8c] sm:$0xf]
        %v1899 = vld [vmem:[%s1815 + $0x90] sm:$0xf]
        %v1900 = vld [vmem:[%s1815 + $0x94] sm:$0xf]
        %v1901 = vld [vmem:[%s1815 + $0x98] sm:$0xf]
        %v1902 = vld [vmem:[%s1815 + $0x9c] sm:$0xf]
        %v1903 = vld [vmem:[%s1815 + $0xa0] sm:$0xf]
        %v1904 = vld [vmem:[%s1815 + $0xa4] sm:$0xf]
        %v1905 = vld [vmem:[%s1815 + $0xa8] sm:$0xf]
        %v1906 = vld [vmem:[%s1815 + $0xac] sm:$0xf]
        %v1907 = vld [vmem:[%s1815 + $0xb0] sm:$0xf]
        %v1908 = vld [vmem:[%s1815 + $0xb4] sm:$0xf]
        %v1909 = vld [vmem:[%s1815 + $0xb8] sm:$0xf]
        %v1910 = vld [vmem:[%s1815 + $0xbc] sm:$0xf]
        %v1911 = vld [vmem:[%s1815 + $0xc0] sm:$0xf]
        %v1912 = vld [vmem:[%s1815 + $0xc4] sm:$0xf]
        %v1913 = vld [vmem:[%s1815 + $0xc8] sm:$0xf]
        %v1914 = vld [vmem:[%s1815 + $0xcc] sm:$0xf]
        %v1915 = vld [vmem:[%s1815 + $0xd0] sm:$0xf]
        %v1916 = vld [vmem:[%s1815 + $0xd4] sm:$0xf]
        %v1917 = vld [vmem:[%s1815 + $0xd8] sm:$0xf]
        %v1918 = vld [vmem:[%s1815 + $0xdc] sm:$0xf]
        %v1919 = vld [vmem:[%s1815 + $0xe0] sm:$0xf]
        %v1920 = vld [vmem:[%s1815 + $0xe4] sm:$0xf]
        %v1921 = vld [vmem:[%s1815 + $0xe8] sm:$0xf]
        %v1922 = vld [vmem:[%s1815 + $0xec] sm:$0xf]
        %v1923 = vld [vmem:[%s1815 + $0xf0] sm:$0xf]
        %v1924 = vld [vmem:[%s1815 + $0xf4] sm:$0xf]
        %v1925 = vld [vmem:[%s1815 + $0xf8] sm:$0xf]
        %v1926 = vld [vmem:[%s1815 + $0xfc] sm:$0xf]
        %v1927 = vld [vmem:[%s1815 + $0x100] sm:$0xf]
        %v1928 = vld [vmem:[%s1815 + $0x104] sm:$0xf]
        %v1929 = vld [vmem:[%s1815 + $0x108] sm:$0xf]
        %v1930 = vld [vmem:[%s1815 + $0x10c] sm:$0xf]
        %v1931 = vld [vmem:[%s1815 + $0x110] sm:$0xf]
        %v1932 = vld [vmem:[%s1815 + $0x114] sm:$0xf]
        %v1933 = vld [vmem:[%s1815 + $0x118] sm:$0xf]
        %v1934 = vld [vmem:[%s1815 + $0x11c] sm:$0xf]
        %v1935 = vld [vmem:[%s1815 + $0x120] sm:$0xf]
        %v1936 = vld [vmem:[%s1815 + $0x124] sm:$0xf]
        %v1937 = vld [vmem:[%s1815 + $0x128] sm:$0xf]
        %v1938 = vld [vmem:[%s1815 + $0x12c] sm:$0xf]
        %v1939 = vld [vmem:[%s1815 + $0x130] sm:$0xf]
        %v1940 = vld [vmem:[%s1815 + $0x134] sm:$0xf]
        %v1941 = vld [vmem:[%s1815 + $0x138] sm:$0xf]
        %v1942 = vld [vmem:[%s1815 + $0x13c] sm:$0xf]
        %v1943 = vld [vmem:[%s1815 + $0x140] sm:$0xf]
        %v1944 = vld [vmem:[%s1815 + $0x144] sm:$0xf]
        %v1945 = vld [vmem:[%s1815 + $0x148] sm:$0xf]
        %v1946 = vld [vmem:[%s1815 + $0x14c] sm:$0xf]
        %v1947 = vld [vmem:[%s1815 + $0x150] sm:$0xf]
        %v1948 = vld [vmem:[%s1815 + $0x154] sm:$0xf]
        %v1949 = vld [vmem:[%s1815 + $0x158] sm:$0xf]
        %v1950 = vld [vmem:[%s1815 + $0x15c] sm:$0xf]
        %v1951 = vld [vmem:[%s1815 + $0x160] sm:$0xf]
        %v1952 = vld [vmem:[%s1815 + $0x164] sm:$0xf]
        %v1953 = vld [vmem:[%s1815 + $0x168] sm:$0xf]
        %v1954 = vld [vmem:[%s1815 + $0x16c] sm:$0xf]
        %v1955 = vld [vmem:[%s1815 + $0x170] sm:$0xf]
        %v1956 = vld [vmem:[%s1815 + $0x174] sm:$0xf]
        %v1957 = vld [vmem:[%s1815 + $0x178] sm:$0xf]
        %v1958 = vld [vmem:[%s1815 + $0x17c] sm:$0xf]
        %v1959 = vld [vmem:[%s1815 + $0x180] sm:$0xf]
        %v1960 = vld [vmem:[%s1815 + $0x184] sm:$0xf]
        %v1961 = vld [vmem:[%s1815 + $0x188] sm:$0xf]
        %v1962 = vld [vmem:[%s1815 + $0x18c] sm:$0xf]
        %v1963 = vld [vmem:[%s1815 + $0x190] sm:$0xf]
        %v1964 = vld [vmem:[%s1815 + $0x194] sm:$0xf]
        %v1965 = vld [vmem:[%s1815 + $0x198] sm:$0xf]
        %v1966 = vld [vmem:[%s1815 + $0x19c] sm:$0xf]
        %v1967 = vld [vmem:[%s1815 + $0x1a0] sm:$0xf]
        %v1968 = vld [vmem:[%s1815 + $0x1a4] sm:$0xf]
        %v1969 = vld [vmem:[%s1815 + $0x1a8] sm:$0xf]
        %v1970 = vld [vmem:[%s1815 + $0x1ac] sm:$0xf]
        %v1971 = vld [vmem:[%s1815 + $0x1b0] sm:$0xf]
        %v1972 = vld [vmem:[%s1815 + $0x1b4] sm:$0xf]
        %v1973 = vld [vmem:[%s1815 + $0x1b8] sm:$0xf]
        %v1974 = vld [vmem:[%s1815 + $0x1bc] sm:$0xf]
        %v1975 = vld [vmem:[%s1815 + $0x1c0] sm:$0xf]
        %v1976 = vld [vmem:[%s1815 + $0x1c4] sm:$0xf]
        %v1977 = vld [vmem:[%s1815 + $0x1c8] sm:$0xf]
        %v1978 = vld [vmem:[%s1815 + $0x1cc] sm:$0xf]
        %v1979 = vld [vmem:[%s1815 + $0x1d0] sm:$0xf]
        %v1980 = vld [vmem:[%s1815 + $0x1d4] sm:$0xf]
        %v1981 = vld [vmem:[%s1815 + $0x1d8] sm:$0xf]
        %v1982 = vld [vmem:[%s1815 + $0x1dc] sm:$0xf]
        %v1983 = vld [vmem:[%s1815 + $0x1e0] sm:$0xf]
        %v1984 = vld [vmem:[%s1815 + $0x1e4] sm:$0xf]
        %v1985 = vld [vmem:[%s1815 + $0x1e8] sm:$0xf]
        %v1986 = vld [vmem:[%s1815 + $0x1ec] sm:$0xf]
        %v1987 = vld [vmem:[%s1815 + $0x1f0] sm:$0xf]
        %v1988 = vld [vmem:[%s1815 + $0x1f4] sm:$0xf]
        %v1989 = vld [vmem:[%s1815 + $0x1f8] sm:$0xf]
        %v1990 = vld [vmem:[%s1815 + $0x1fc] sm:$0xf]
        %v1991 = vld [vmem:[%s1815 + $0x200] sm:$0xf]
        %v1992 = vld [vmem:[%s1815 + $0x204] sm:$0xf]
        %v1993 = vld [vmem:[%s1815 + $0x208] sm:$0xf]
        %v1994 = vld [vmem:[%s1815 + $0x20c] sm:$0xf]
        %v1995 = vld [vmem:[%s1815 + $0x210] sm:$0xf]
        %v1996 = vld [vmem:[%s1815 + $0x214] sm:$0xf]
        %v1997 = vld [vmem:[%s1815 + $0x218] sm:$0xf]
        %v1998 = vld [vmem:[%s1815 + $0x21c] sm:$0xf]
        %v1999 = vld [vmem:[%s1815 + $0x220] sm:$0xf]
        %v2000 = vld [vmem:[%s1815 + $0x224] sm:$0xf]
        %v2001 = vld [vmem:[%s1815 + $0x228] sm:$0xf]
        %v2002 = vld [vmem:[%s1815 + $0x22c] sm:$0xf]
        %v2003 = vld [vmem:[%s1815 + $0x230] sm:$0xf]
        %v2004 = vld [vmem:[%s1815 + $0x234] sm:$0xf]
        %v2005 = vld [vmem:[%s1815 + $0x238] sm:$0xf]
        %v2006 = vld [vmem:[%s1815 + $0x23c] sm:$0xf]
        %v2007 = vld [vmem:[%s1815 + $0x240] sm:$0xf]
        %v2008 = vld [vmem:[%s1815 + $0x244] sm:$0xf]
        %v2009 = vld [vmem:[%s1815 + $0x248] sm:$0xf]
        %v2010 = vld [vmem:[%s1815 + $0x24c] sm:$0xf]
        %v2011 = vld [vmem:[%s1815 + $0x250] sm:$0xf]
        %v2012 = vld [vmem:[%s1815 + $0x254] sm:$0xf]
        %v2013 = vld [vmem:[%s1815 + $0x258] sm:$0xf]
        %v2014 = vld [vmem:[%s1815 + $0x25c] sm:$0xf]
        %v2015 = vld [vmem:[%s1815 + $0x260] sm:$0xf]
        %v2016 = vld [vmem:[%s1815 + $0x264] sm:$0xf]
        %v2017 = vld [vmem:[%s1815 + $0x268] sm:$0xf]
        %v2018 = vld [vmem:[%s1815 + $0x26c] sm:$0xf]
        %v2019 = vld [vmem:[%s1815 + $0x270] sm:$0xf]
        %v2020 = vld [vmem:[%s1815 + $0x274] sm:$0xf]
        %v2021 = vld [vmem:[%s1815 + $0x278] sm:$0xf]
        %v2022 = vld [vmem:[%s1815 + $0x27c] sm:$0xf]
        %v2023 = vld [vmem:[%s1815 + $0x280] sm:$0xf]
        %v2024 = vld [vmem:[%s1815 + $0x284] sm:$0xf]
        %v2025 = vld [vmem:[%s1815 + $0x288] sm:$0xf]
        %v2026 = vld [vmem:[%s1815 + $0x28c] sm:$0xf]
        %v2027 = vld [vmem:[%s1815 + $0x290] sm:$0xf]
        %v2028 = vld [vmem:[%s1815 + $0x294] sm:$0xf]
        %v2029 = vld [vmem:[%s1815 + $0x298] sm:$0xf]
        %v2030 = vld [vmem:[%s1815 + $0x29c] sm:$0xf]
        %v2031 = vld [vmem:[%s1815 + $0x2a0] sm:$0xf]
        %v2032 = vld [vmem:[%s1815 + $0x2a4] sm:$0xf]
        %v2033 = vld [vmem:[%s1815 + $0x2a8] sm:$0xf]
        %v2034 = vld [vmem:[%s1815 + $0x2ac] sm:$0xf]
        %v2035 = vld [vmem:[%s1815 + $0x2b0] sm:$0xf]
        %v2036 = vld [vmem:[%s1815 + $0x2b4] sm:$0xf]
        %v2037 = vld [vmem:[%s1815 + $0x2b8] sm:$0xf]
        %v2038 = vld [vmem:[%s1815 + $0x2bc] sm:$0xf]
        %v2039 = vld [vmem:[%s1815 + $0x2c0] sm:$0xf]
        %v2040 = vld [vmem:[%s1815 + $0x2c4] sm:$0xf]
        %v2041 = vld [vmem:[%s1815 + $0x2c8] sm:$0xf]
        %v2042 = vld [vmem:[%s1815 + $0x2cc] sm:$0xf]
        %v2043 = vld [vmem:[%s1815 + $0x2d0] sm:$0xf]
        %v2044 = vld [vmem:[%s1815 + $0x2d4] sm:$0xf]
        %v2045 = vld [vmem:[%s1815 + $0x2d8] sm:$0xf]
        %v2046 = vld [vmem:[%s1815 + $0x2dc] sm:$0xf]
        %v2047 = vld [vmem:[%s1815 + $0x2e0] sm:$0xf]
        %v2048 = vld [vmem:[%s1815 + $0x2e4] sm:$0xf]
        %v2049 = vld [vmem:[%s1815 + $0x2e8] sm:$0xf]
        %v2050 = vld [vmem:[%s1815 + $0x2ec] sm:$0xf]
        %v2051 = vld [vmem:[%s1815 + $0x2f0] sm:$0xf]
        %v2052 = vld [vmem:[%s1815 + $0x2f4] sm:$0xf]
        %v2053 = vld [vmem:[%s1815 + $0x2f8] sm:$0xf]
        %v2054 = vld [vmem:[%s1815 + $0x2fc] sm:$0xf]
        %v2055 = vld [vmem:[%s1815 + $0x300] sm:$0xf]
        %v2056 = vld [vmem:[%s1815 + $0x304] sm:$0xf]
        %v2057 = vld [vmem:[%s1815 + $0x308] sm:$0xf]
        %v2058 = vld [vmem:[%s1815 + $0x30c] sm:$0xf]
        %v2059 = vld [vmem:[%s1815 + $0x310] sm:$0xf]
        %v2060 = vld [vmem:[%s1815 + $0x314] sm:$0xf]
        %v2061 = vld [vmem:[%s1815 + $0x318] sm:$0xf]
        %v2062 = vld [vmem:[%s1815 + $0x31c] sm:$0xf]
        %v2063 = vld [vmem:[%s1815 + $0x320] sm:$0xf]
        %v2064 = vld [vmem:[%s1815 + $0x324] sm:$0xf]
        %v2065 = vld [vmem:[%s1815 + $0x328] sm:$0xf]
        %v2066 = vld [vmem:[%s1815 + $0x32c] sm:$0xf]
        %v2067 = vld [vmem:[%s1815 + $0x330] sm:$0xf]
        %v2068 = vld [vmem:[%s1815 + $0x334] sm:$0xf]
        %v2069 = vld [vmem:[%s1815 + $0x338] sm:$0xf]
        %v2070 = vld [vmem:[%s1815 + $0x33c] sm:$0xf]
        %v2071 = vld [vmem:[%s1815 + $0x340] sm:$0xf]
        %v2072 = vld [vmem:[%s1815 + $0x344] sm:$0xf]
        %v2073 = vld [vmem:[%s1815 + $0x348] sm:$0xf]
        %v2074 = vld [vmem:[%s1815 + $0x34c] sm:$0xf]
        %v2075 = vld [vmem:[%s1815 + $0x350] sm:$0xf]
        %v2076 = vld [vmem:[%s1815 + $0x354] sm:$0xf]
        %v2077 = vld [vmem:[%s1815 + $0x358] sm:$0xf]
        %v2078 = vld [vmem:[%s1815 + $0x35c] sm:$0xf]
        %v2079 = vld [vmem:[%s1815 + $0x360] sm:$0xf]
        %v2080 = vld [vmem:[%s1815 + $0x364] sm:$0xf]
        %v2081 = vld [vmem:[%s1815 + $0x368] sm:$0xf]
        %v2082 = vld [vmem:[%s1815 + $0x36c] sm:$0xf]
        %v2083 = vld [vmem:[%s1815 + $0x370] sm:$0xf]
        %v2084 = vld [vmem:[%s1815 + $0x374] sm:$0xf]
        %v2085 = vld [vmem:[%s1815 + $0x378] sm:$0xf]
        %v2086 = vld [vmem:[%s1815 + $0x37c] sm:$0xf]
        %v2087 = vld [vmem:[%s1815 + $0x380] sm:$0xf]
        %v2088 = vld [vmem:[%s1815 + $0x384] sm:$0xf]
        %v2089 = vld [vmem:[%s1815 + $0x388] sm:$0xf]
        %v2090 = vld [vmem:[%s1815 + $0x38c] sm:$0xf]
        %v2091 = vld [vmem:[%s1815 + $0x390] sm:$0xf]
        %v2092 = vld [vmem:[%s1815 + $0x394] sm:$0xf]
        %v2093 = vld [vmem:[%s1815 + $0x398] sm:$0xf]
        %v2094 = vld [vmem:[%s1815 + $0x39c] sm:$0xf]
        %v2095 = vld [vmem:[%s1815 + $0x3a0] sm:$0xf]
        %v2096 = vld [vmem:[%s1815 + $0x3a4] sm:$0xf]
        %v2097 = vld [vmem:[%s1815 + $0x3a8] sm:$0xf]
        %v2098 = vld [vmem:[%s1815 + $0x3ac] sm:$0xf]
        %v2099 = vld [vmem:[%s1815 + $0x3b0] sm:$0xf]
        %v2100 = vld [vmem:[%s1815 + $0x3b4] sm:$0xf]
        %v2101 = vld [vmem:[%s1815 + $0x3b8] sm:$0xf]
        %v2102 = vld [vmem:[%s1815 + $0x3bc] sm:$0xf]
        %v2103 = vld [vmem:[%s1815 + $0x3c0] sm:$0xf]
        %v2104 = vld [vmem:[%s1815 + $0x3c4] sm:$0xf]
        %v2105 = vld [vmem:[%s1815 + $0x3c8] sm:$0xf]
        %v2106 = vld [vmem:[%s1815 + $0x3cc] sm:$0xf]
        %v2107 = vld [vmem:[%s1815 + $0x3d0] sm:$0xf]
        %v2108 = vld [vmem:[%s1815 + $0x3d4] sm:$0xf]
        %v2109 = vld [vmem:[%s1815 + $0x3d8] sm:$0xf]
        %v2110 = vld [vmem:[%s1815 + $0x3dc] sm:$0xf]
        %v2111 = vld [vmem:[%s1815 + $0x3e0] sm:$0xf]
        %v2112 = vld [vmem:[%s1815 + $0x3e4] sm:$0xf]
        %v2113 = vld [vmem:[%s1815 + $0x3e8] sm:$0xf]
        %v2114 = vld [vmem:[%s1815 + $0x3ec] sm:$0xf]
        %v2115 = vld [vmem:[%s1815 + $0x3f0] sm:$0xf]
        %v2116 = vld [vmem:[%s1815 + $0x3f4] sm:$0xf]
        %v2117 = vld [vmem:[%s1815 + $0x3f8] sm:$0xf]
        %v2118 = vld [vmem:[%s1815 + $0x3fc] sm:$0xf]
        %v2119 = vld [vmem:[%s1815 + $0x400] sm:$0xf]
        %v2120 = vld [vmem:[%s1815 + $0x404] sm:$0xf]
        %v2121 = vld [vmem:[%s1815 + $0x408] sm:$0xf]
        %v2122 = vld [vmem:[%s1815 + $0x40c] sm:$0xf]
        %v2123 = vld [vmem:[%s1815 + $0x410] sm:$0xf]
        %v2124 = vld [vmem:[%s1815 + $0x414] sm:$0xf]
        %v2125 = vld [vmem:[%s1815 + $0x418] sm:$0xf]
        %v2126 = vld [vmem:[%s1815 + $0x41c] sm:$0xf]
        %v2127 = vld [vmem:[%s1815 + $0x420] sm:$0xf]
        %v2128 = vld [vmem:[%s1815 + $0x424] sm:$0xf]
        %v2129 = vld [vmem:[%s1815 + $0x428] sm:$0xf]
        %v2130 = vld [vmem:[%s1815 + $0x42c] sm:$0xf]
        %v2131 = vld [vmem:[%s1815 + $0x430] sm:$0xf]
        %v2132 = vld [vmem:[%s1815 + $0x434] sm:$0xf]
        %v2133 = vld [vmem:[%s1815 + $0x438] sm:$0xf]
        %v2134 = vld [vmem:[%s1815 + $0x43c] sm:$0xf]
        %v2135 = vld [vmem:[%s1815 + $0x440] sm:$0xf]
        %v2136 = vld [vmem:[%s1815 + $0x444] sm:$0xf]
        %v2137 = vld [vmem:[%s1815 + $0x448] sm:$0xf]
        %v2138 = vld [vmem:[%s1815 + $0x44c] sm:$0xf]
        %v2139 = vld [vmem:[%s1815 + $0x450] sm:$0xf]
        %v2140 = vld [vmem:[%s1815 + $0x454] sm:$0xf]
        %v2141 = vld [vmem:[%s1815 + $0x458] sm:$0xf]
        %v2142 = vld [vmem:[%s1815 + $0x45c] sm:$0xf]
        %v2143 = vld [vmem:[%s1815 + $0x460] sm:$0xf]
        %v2144 = vld [vmem:[%s1815 + $0x464] sm:$0xf]
        %v2145 = vld [vmem:[%s1815 + $0x468] sm:$0xf]
        %v2146 = vld [vmem:[%s1815 + $0x46c] sm:$0xf]
        %v2147 = vld [vmem:[%s1815 + $0x470] sm:$0xf]
        %v2148 = vld [vmem:[%s1815 + $0x474] sm:$0xf]
        %v2149 = vld [vmem:[%s1815 + $0x478] sm:$0xf]
        %v2150 = vld [vmem:[%s1815 + $0x47c] sm:$0xf]
        %v2151 = vld [vmem:[%s1815 + $0x480] sm:$0xf]
        %v2152 = vld [vmem:[%s1815 + $0x484] sm:$0xf]
        %v2153 = vld [vmem:[%s1815 + $0x488] sm:$0xf]
        %v2154 = vld [vmem:[%s1815 + $0x48c] sm:$0xf]
        %v2155 = vld [vmem:[%s1815 + $0x490] sm:$0xf]
        %v2156 = vld [vmem:[%s1815 + $0x494] sm:$0xf]
        %v2157 = vld [vmem:[%s1815 + $0x498] sm:$0xf]
        %v2158 = vld [vmem:[%s1815 + $0x49c] sm:$0xf]
        %v2159 = vld [vmem:[%s1815 + $0x4a0] sm:$0xf]
        %v2160 = vld [vmem:[%s1815 + $0x4a4] sm:$0xf]
        %v2161 = vld [vmem:[%s1815 + $0x4a8] sm:$0xf]
        %v2162 = vld [vmem:[%s1815 + $0x4ac] sm:$0xf]
        %v2163 = vld [vmem:[%s1815 + $0x4b0] sm:$0xf]
        %v2164 = vld [vmem:[%s1815 + $0x4b4] sm:$0xf]
        %v2165 = vld [vmem:[%s1815 + $0x4b8] sm:$0xf]
        %v2166 = vld [vmem:[%s1815 + $0x4bc] sm:$0xf]
        %v2167 = vld [vmem:[%s1815 + $0x4c0] sm:$0xf]
        %v2168 = vld [vmem:[%s1815 + $0x4c4] sm:$0xf]
        %v2169 = vld [vmem:[%s1815 + $0x4c8] sm:$0xf]
        %v2170 = vld [vmem:[%s1815 + $0x4cc] sm:$0xf]
        %v2171 = vld [vmem:[%s1815 + $0x4d0] sm:$0xf]
        %v2172 = vld [vmem:[%s1815 + $0x4d4] sm:$0xf]
        %v2173 = vld [vmem:[%s1815 + $0x4d8] sm:$0xf]
        %v2174 = vld [vmem:[%s1815 + $0x4dc] sm:$0xf]
        %v2175 = vld [vmem:[%s1815 + $0x4e0] sm:$0xf]
        %v2176 = vld [vmem:[%s1815 + $0x4e4] sm:$0xf]
        %v2177 = vld [vmem:[%s1815 + $0x4e8] sm:$0xf]
        %v2178 = vld [vmem:[%s1815 + $0x4ec] sm:$0xf]
        %v2179 = vld [vmem:[%s1815 + $0x4f0] sm:$0xf]
        %v2180 = vld [vmem:[%s1815 + $0x4f4] sm:$0xf]
        %v2181 = vld [vmem:[%s1815 + $0x4f8] sm:$0xf]
        %v2182 = vld [vmem:[%s1815 + $0x4fc] sm:$0xf]
        %v2183 = vld [vmem:[%s1815 + $0x500] sm:$0xf]
        %v2184 = vld [vmem:[%s1815 + $0x504] sm:$0xf]
        %v2185 = vld [vmem:[%s1815 + $0x508] sm:$0xf]
        %v2186 = vld [vmem:[%s1815 + $0x50c] sm:$0xf]
        %v2187 = vld [vmem:[%s1815 + $0x510] sm:$0xf]
        %v2188 = vld [vmem:[%s1815 + $0x514] sm:$0xf]
        %v2189 = vld [vmem:[%s1815 + $0x518] sm:$0xf]
        %v2190 = vld [vmem:[%s1815 + $0x51c] sm:$0xf]
        %v2191 = vld [vmem:[%s1815 + $0x520] sm:$0xf]
        %v2192 = vld [vmem:[%s1815 + $0x524] sm:$0xf]
        %v2193 = vld [vmem:[%s1815 + $0x528] sm:$0xf]
        %v2194 = vld [vmem:[%s1815 + $0x52c] sm:$0xf]
        %v2195 = vld [vmem:[%s1815 + $0x530] sm:$0xf]
        %v2196 = vld [vmem:[%s1815 + $0x534] sm:$0xf]
        %v2197 = vld [vmem:[%s1815 + $0x538] sm:$0xf]
        %v2198 = vld [vmem:[%s1815 + $0x53c] sm:$0xf]
        %v2199 = vld [vmem:[%s1815 + $0x540] sm:$0xf]
        %v2200 = vld [vmem:[%s1815 + $0x544] sm:$0xf]
        %v2201 = vld [vmem:[%s1815 + $0x548] sm:$0xf]
        %v2202 = vld [vmem:[%s1815 + $0x54c] sm:$0xf]
        %v2203 = vld [vmem:[%s1815 + $0x550] sm:$0xf]
        %v2204 = vld [vmem:[%s1815 + $0x554] sm:$0xf]
        %v2205 = vld [vmem:[%s1815 + $0x558] sm:$0xf]
        %v2206 = vld [vmem:[%s1815 + $0x55c] sm:$0xf]
        %v2207 = vld [vmem:[%s1815 + $0x560] sm:$0xf]
        %v2208 = vld [vmem:[%s1815 + $0x564] sm:$0xf]
        %v2209 = vld [vmem:[%s1815 + $0x568] sm:$0xf]
        %v2210 = vld [vmem:[%s1815 + $0x56c] sm:$0xf]
        %v2211 = vld [vmem:[%s1815 + $0x570] sm:$0xf]
        %v2212 = vld [vmem:[%s1815 + $0x574] sm:$0xf]
        %v2213 = vld [vmem:[%s1815 + $0x578] sm:$0xf]
        %v2214 = vld [vmem:[%s1815 + $0x57c] sm:$0xf]
        %v2215 = vld [vmem:[%s1815 + $0x580] sm:$0xf]
        %v2216 = vld [vmem:[%s1815 + $0x584] sm:$0xf]
        %v2217 = vld [vmem:[%s1815 + $0x588] sm:$0xf]
        %v2218 = vld [vmem:[%s1815 + $0x58c] sm:$0xf]
        %v2219 = vld [vmem:[%s1815 + $0x590] sm:$0xf]
        %v2220 = vld [vmem:[%s1815 + $0x594] sm:$0xf]
        %v2221 = vld [vmem:[%s1815 + $0x598] sm:$0xf]
        %v2222 = vld [vmem:[%s1815 + $0x59c] sm:$0xf]
        %v2223 = vld [vmem:[%s1815 + $0x5a0] sm:$0xf]
        %v2224 = vld [vmem:[%s1815 + $0x5a4] sm:$0xf]
        %v2225 = vld [vmem:[%s1815 + $0x5a8] sm:$0xf]
        %v2226 = vld [vmem:[%s1815 + $0x5ac] sm:$0xf]
        %v2227 = vld [vmem:[%s1815 + $0x5b0] sm:$0xf]
        %v2228 = vld [vmem:[%s1815 + $0x5b4] sm:$0xf]
        %v2229 = vld [vmem:[%s1815 + $0x5b8] sm:$0xf]
        %v2230 = vld [vmem:[%s1815 + $0x5bc] sm:$0xf]
        %v2231 = vld [vmem:[%s1815 + $0x5c0] sm:$0xf]
        %v2232 = vld [vmem:[%s1815 + $0x5c4] sm:$0xf]
        %v2233 = vld [vmem:[%s1815 + $0x5c8] sm:$0xf]
        %v2234 = vld [vmem:[%s1815 + $0x5cc] sm:$0xf]
        %v2235 = vld [vmem:[%s1815 + $0x5d0] sm:$0xf]
        %v2236 = vld [vmem:[%s1815 + $0x5d4] sm:$0xf]
        %v2237 = vld [vmem:[%s1815 + $0x5d8] sm:$0xf]
        %v2238 = vld [vmem:[%s1815 + $0x5dc] sm:$0xf]
        %v2239 = vld [vmem:[%s1815 + $0x5e0] sm:$0xf]
        %v2240 = vld [vmem:[%s1815 + $0x5e4] sm:$0xf]
        %v2241 = vld [vmem:[%s1815 + $0x5e8] sm:$0xf]
        %v2242 = vld [vmem:[%s1815 + $0x5ec] sm:$0xf]
        %v2243 = vld [vmem:[%s1815 + $0x5f0] sm:$0xf]
        %v2244 = vld [vmem:[%s1815 + $0x5f4] sm:$0xf]
        %v2245 = vld [vmem:[%s1815 + $0x5f8] sm:$0xf]
        %v2246 = vld [vmem:[%s1815 + $0x5fc] sm:$0xf]
        %v2247 = vld [vmem:[%s1815 + $0x600] sm:$0xf]
        %v2248 = vld [vmem:[%s1815 + $0x604] sm:$0xf]
        %v2249 = vld [vmem:[%s1815 + $0x608] sm:$0xf]
        %v2250 = vld [vmem:[%s1815 + $0x60c] sm:$0xf]
        %v2251 = vld [vmem:[%s1815 + $0x610] sm:$0xf]
        %v2252 = vld [vmem:[%s1815 + $0x614] sm:$0xf]
        %v2253 = vld [vmem:[%s1815 + $0x618] sm:$0xf]
        %v2254 = vld [vmem:[%s1815 + $0x61c] sm:$0xf]
        %v2255 = vld [vmem:[%s1845] sm:$0x1]
        %v2257 = vlaneseq
        %v2258 = vshrl.u32 %v2257, 7
        %v2259 = vsub.s32 0, %v2258
        %v2260 = vrot.slane %v2255, %v2259
        %v2266 = vcombine.high %v1859, %v1859
        %v2268 = vunpack.c.l.s4 1966171168
        %v2269 = vunpack.c.0.s8 %v2268
        %v2270 = vlaneseq
        %v2271 = vshrl.u32 %v2270, 7
        %v2272 = vsub.s32 %v2269, %v2271
        %v2273 = vrot.slane %v1859, %v2272
        %v2275 = vunpack.c.l.s4 1966171168
        %v2276 = vunpack.c.0.s8 %v2275
        %v2277 = vlaneseq
        %v2278 = vshrl.u32 %v2277, 7
        %v2279 = vsub.s32 %v2276, %v2278
        %v2280 = vrot.slane %v2266, %v2279
        %v2281 = vcombine.high %v2273, %v2273
        %v2282 = vcombine.high %v2280, %v2280
        %v2284 = vunpack.c.l.s4 1966171168
        %v2285 = vunpack.c.0.s8 %v2284
        %v2286 = vlaneseq
        %v2287 = vshrl.u32 %v2286, 7
        %v2288 = vsub.s32 %v2285, %v2287
        %v2289 = vrot.slane %v2273, %v2288
        %v2291 = vunpack.c.l.s4 1966171168
        %v2292 = vunpack.c.0.s8 %v2291
        %v2293 = vlaneseq
        %v2294 = vshrl.u32 %v2293, 7
        %v2295 = vsub.s32 %v2292, %v2294
        %v2296 = vrot.slane %v2280, %v2295
        %v2298 = vunpack.c.l.s4 1966171168
        %v2299 = vunpack.c.0.s8 %v2298
        %v2300 = vlaneseq
        %v2301 = vshrl.u32 %v2300, 7
        %v2302 = vsub.s32 %v2299, %v2301
        %v2303 = vrot.slane %v2281, %v2302
        %v2305 = vunpack.c.l.s4 1966171168
        %v2306 = vunpack.c.0.s8 %v2305
        %v2307 = vlaneseq
        %v2308 = vshrl.u32 %v2307, 7
        %v2309 = vsub.s32 %v2306, %v2308
        %v2310 = vrot.slane %v2282, %v2309
        %v2311 = vcombine.high %v2289, %v2289
        %v2312 = vcombine.high %v2296, %v2296
        %v2313 = vcombine.high %v2303, %v2303
        %v2314 = vcombine.high %v2310, %v2310
        %v2315 = vcombine.high %v1860, %v1860
        %v2317 = vunpack.c.l.s4 1966171168
        %v2318 = vunpack.c.0.s8 %v2317
        %v2319 = vlaneseq
        %v2320 = vshrl.u32 %v2319, 7
        %v2321 = vsub.s32 %v2318, %v2320
        %v2322 = vrot.slane %v1860, %v2321
        %v2324 = vunpack.c.l.s4 1966171168
        %v2325 = vunpack.c.0.s8 %v2324
        %v2326 = vlaneseq
        %v2327 = vshrl.u32 %v2326, 7
        %v2328 = vsub.s32 %v2325, %v2327
        %v2329 = vrot.slane %v2315, %v2328
        %v2330 = vcombine.high %v2322, %v2322
        %v2331 = vcombine.high %v2329, %v2329
        %v2333 = vunpack.c.l.s4 1966171168
        %v2334 = vunpack.c.0.s8 %v2333
        %v2335 = vlaneseq
        %v2336 = vshrl.u32 %v2335, 7
        %v2337 = vsub.s32 %v2334, %v2336
        %v2338 = vrot.slane %v2322, %v2337
        %v2340 = vunpack.c.l.s4 1966171168
        %v2341 = vunpack.c.0.s8 %v2340
        %v2342 = vlaneseq
        %v2343 = vshrl.u32 %v2342, 7
        %v2344 = vsub.s32 %v2341, %v2343
        %v2345 = vrot.slane %v2329, %v2344
        %v2347 = vunpack.c.l.s4 1966171168
        %v2348 = vunpack.c.0.s8 %v2347
        %v2349 = vlaneseq
        %v2350 = vshrl.u32 %v2349, 7
        %v2351 = vsub.s32 %v2348, %v2350
        %v2352 = vrot.slane %v2330, %v2351
        %v2354 = vunpack.c.l.s4 1966171168
        %v2355 = vunpack.c.0.s8 %v2354
        %v2356 = vlaneseq
        %v2357 = vshrl.u32 %v2356, 7
        %v2358 = vsub.s32 %v2355, %v2357
        %v2359 = vrot.slane %v2331, %v2358
        %v2360 = vcombine.high %v2338, %v2338
        %v2361 = vcombine.high %v2345, %v2345
        %v2362 = vcombine.high %v2352, %v2352
        %v2363 = vcombine.high %v2359, %v2359
        %v2364 = vcombine.high %v1861, %v1861
        %v2366 = vunpack.c.l.s4 1966171168
        %v2367 = vunpack.c.0.s8 %v2366
        %v2368 = vlaneseq
        %v2369 = vshrl.u32 %v2368, 7
        %v2370 = vsub.s32 %v2367, %v2369
        %v2371 = vrot.slane %v1861, %v2370
        %v2373 = vunpack.c.l.s4 1966171168
        %v2374 = vunpack.c.0.s8 %v2373
        %v2375 = vlaneseq
        %v2376 = vshrl.u32 %v2375, 7
        %v2377 = vsub.s32 %v2374, %v2376
        %v2378 = vrot.slane %v2364, %v2377
        %v2379 = vcombine.high %v2371, %v2371
        %v2380 = vcombine.high %v2378, %v2378
        %v2382 = vunpack.c.l.s4 1966171168
        %v2383 = vunpack.c.0.s8 %v2382
        %v2384 = vlaneseq
        %v2385 = vshrl.u32 %v2384, 7
        %v2386 = vsub.s32 %v2383, %v2385
        %v2387 = vrot.slane %v2371, %v2386
        %v2389 = vunpack.c.l.s4 1966171168
        %v2390 = vunpack.c.0.s8 %v2389
        %v2391 = vlaneseq
        %v2392 = vshrl.u32 %v2391, 7
        %v2393 = vsub.s32 %v2390, %v2392
        %v2394 = vrot.slane %v2378, %v2393
        %v2396 = vunpack.c.l.s4 1966171168
        %v2397 = vunpack.c.0.s8 %v2396
        %v2398 = vlaneseq
        %v2399 = vshrl.u32 %v2398, 7
        %v2400 = vsub.s32 %v2397, %v2399
        %v2401 = vrot.slane %v2379, %v2400
        %v2403 = vunpack.c.l.s4 1966171168
        %v2404 = vunpack.c.0.s8 %v2403
        %v2405 = vlaneseq
        %v2406 = vshrl.u32 %v2405, 7
        %v2407 = vsub.s32 %v2404, %v2406
        %v2408 = vrot.slane %v2380, %v2407
        %v2409 = vcombine.high %v2387, %v2387
        %v2410 = vcombine.high %v2394, %v2394
        %v2411 = vcombine.high %v2401, %v2401
        %v2412 = vcombine.high %v2408, %v2408
        %v2414 = vunpack.c.l.s4 1966171168
        %v2415 = vunpack.c.0.s8 %v2414
        %v2416 = vlaneseq
        %v2417 = vshrl.u32 %v2416, 7
        %v2418 = vsub.s32 %v2415, %v2417
        %v2419 = vrot.slane %v1862, %v2418
        %v2421 = vunpack.c.l.s4 1966171168
        %v2422 = vunpack.c.0.s8 %v2421
        %v2423 = vlaneseq
        %v2424 = vshrl.u32 %v2423, 7
        %v2425 = vsub.s32 %v2422, %v2424
        %v2426 = vrot.slane %v2419, %v2425
        %v2843 = vunpack.c.l.b16 %v1863
        %v2844 = vunpack.c.l.b16 %v1864
        %v2845 = vunpack.c.l.b16 %v1865
        %v2846 = vunpack.c.l.b16 %v1866
        %v2847 = vunpack.c.l.b16 %v1867
        %v2848 = vunpack.c.l.b16 %v1868
        %v2849 = vunpack.c.l.b16 %v1869
        %v2850 = vunpack.c.l.b16 %v1870
        %v2851 = vunpack.c.l.b16 %v1871
        %v2852 = vunpack.c.l.b16 %v1872
        %v2853 = vunpack.c.l.b16 %v1873
        %v2854 = vunpack.c.l.b16 %v1874
        %v2855 = vunpack.c.l.b16 %v1875
        %v2856 = vunpack.c.l.b16 %v1876
        %v2857 = vunpack.c.l.b16 %v1877
        %v2858 = vunpack.c.l.b16 %v1878
        %v2859 = vunpack.c.l.b16 %v1879
        %v2860 = vunpack.c.l.b16 %v1880
        %v2861 = vunpack.c.l.b16 %v1881
        %v2862 = vunpack.c.l.b16 %v1882
        %v2863 = vunpack.c.l.b16 %v1883
        %v2864 = vunpack.c.l.b16 %v1884
        %v2865 = vunpack.c.l.b16 %v1885
        %v2866 = vunpack.c.l.b16 %v1886
        %v2867 = vunpack.c.l.b16 %v1887
        %v2868 = vunpack.c.l.b16 %v1888
        %v2869 = vunpack.c.l.b16 %v1889
        %v2870 = vunpack.c.l.b16 %v1890
        %v2871 = vunpack.c.l.b16 %v1891
        %v2872 = vunpack.c.l.b16 %v1892
        %v2873 = vunpack.c.l.b16 %v1893
        %v2874 = vunpack.c.l.b16 %v1894
        %v2875 = vunpack.c.l.b16 %v1895
        %v2876 = vunpack.c.l.b16 %v1896
        %v2877 = vunpack.c.l.b16 %v1897
        %v2878 = vunpack.c.l.b16 %v1898
        %v2879 = vunpack.c.l.b16 %v1899
        %v2880 = vunpack.c.l.b16 %v1900
        %v2881 = vunpack.c.l.b16 %v1901
        %v2882 = vunpack.c.l.b16 %v1902
        %v2883 = vunpack.c.l.b16 %v1903
        %v2884 = vunpack.c.l.b16 %v1904
        %v2885 = vunpack.c.l.b16 %v1905
        %v2886 = vunpack.c.l.b16 %v1906
        %v2887 = vunpack.c.l.b16 %v1907
        %v2888 = vunpack.c.l.b16 %v1908
        %v2889 = vunpack.c.l.b16 %v1909
        %v2890 = vunpack.c.l.b16 %v1910
        %v2891 = vunpack.c.l.b16 %v1911
        %v2892 = vunpack.c.l.b16 %v1912
        %v2893 = vunpack.c.l.b16 %v1913
        %v2894 = vunpack.c.l.b16 %v1914
        %v2895 = vunpack.c.l.b16 %v1915
        %v2896 = vunpack.c.l.b16 %v1916
        %v2897 = vunpack.c.l.b16 %v1917
        %v2898 = vunpack.c.l.b16 %v1918
        %v2899 = vunpack.c.l.b16 %v1919
        %v2900 = vunpack.c.l.b16 %v1920
        %v2901 = vunpack.c.l.b16 %v1921
        %v2902 = vunpack.c.l.b16 %v1922
        %v2903 = vunpack.c.l.b16 %v1923
        %v2904 = vunpack.c.l.b16 %v1924
        %v2905 = vunpack.c.l.b16 %v1925
        %v2906 = vunpack.c.l.b16 %v1926
        %v2907 = vunpack.c.l.b16 %v1927
        %v2908 = vunpack.c.l.b16 %v1928
        %v2909 = vunpack.c.l.b16 %v1929
        %v2910 = vunpack.c.l.b16 %v1930
        %v2911 = vunpack.c.l.b16 %v1931
        %v2912 = vunpack.c.l.b16 %v1932
        %v2913 = vunpack.c.l.b16 %v1933
        %v2914 = vunpack.c.l.b16 %v1934
        %v2915 = vunpack.c.l.b16 %v1935
        %v2916 = vunpack.c.l.b16 %v1936
        %v2917 = vunpack.c.l.b16 %v1937
        %v2918 = vunpack.c.l.b16 %v1938
        %v2919 = vunpack.c.l.b16 %v1939
        %v2920 = vunpack.c.l.b16 %v1940
        %v2921 = vunpack.c.l.b16 %v1941
        %v2922 = vunpack.c.l.b16 %v1942
        %v2923 = vunpack.c.l.b16 %v1943
        %v2924 = vunpack.c.l.b16 %v1944
        %v2925 = vunpack.c.l.b16 %v1945
        %v2926 = vunpack.c.l.b16 %v1946
        %v2927 = vunpack.c.l.b16 %v1947
        %v2928 = vunpack.c.l.b16 %v1948
        %v2929 = vunpack.c.l.b16 %v1949
        %v2930 = vunpack.c.l.b16 %v1950
        %v2931 = vunpack.c.l.b16 %v1951
        %v2932 = vunpack.c.l.b16 %v1952
        %v2933 = vunpack.c.l.b16 %v1953
        %v2934 = vunpack.c.l.b16 %v1954
        %v2935 = vunpack.c.l.b16 %v1955
        %v2936 = vunpack.c.l.b16 %v1956
        %v2937 = vunpack.c.l.b16 %v1957
        %v2938 = vunpack.c.l.b16 %v1958
        %v2939 = vunpack.c.l.b16 %v1959
        %v2940 = vunpack.c.l.b16 %v1960
        %v2941 = vunpack.c.l.b16 %v1961
        %v2942 = vunpack.c.l.b16 %v1962
        %v2943 = vunpack.c.l.b16 %v1963
        %v2944 = vunpack.c.l.b16 %v1964
        %v2945 = vunpack.c.l.b16 %v1965
        %v2946 = vunpack.c.l.b16 %v1966
        %v2947 = vunpack.c.l.b16 %v1967
        %v2948 = vunpack.c.l.b16 %v1968
        %v2949 = vunpack.c.l.b16 %v1969
        %v2950 = vunpack.c.l.b16 %v1970
        %v2951 = vunpack.c.l.b16 %v1971
        %v2952 = vunpack.c.l.b16 %v1972
        %v2953 = vunpack.c.l.b16 %v1973
        %v2954 = vunpack.c.l.b16 %v1974
        %v2955 = vunpack.c.l.b16 %v1975
        %v2956 = vunpack.c.l.b16 %v1976
        %v2957 = vunpack.c.l.b16 %v1977
        %v2958 = vunpack.c.l.b16 %v1978
        %v2959 = vunpack.c.l.b16 %v1979
        %v2960 = vunpack.c.l.b16 %v1980
        %v2961 = vunpack.c.l.b16 %v1981
        %v2962 = vunpack.c.l.b16 %v1982
        %v2963 = vunpack.c.l.b16 %v1983
        %v2964 = vunpack.c.l.b16 %v1984
        %v2965 = vunpack.c.l.b16 %v1985
        %v2966 = vunpack.c.l.b16 %v1986
        %v2967 = vunpack.c.l.b16 %v1987
        %v2968 = vunpack.c.l.b16 %v1988
        %v2969 = vunpack.c.l.b16 %v1989
        %v2970 = vunpack.c.l.b16 %v1990
        %v2971 = vunpack.c.l.b16 %v1991
        %v2972 = vunpack.c.l.b16 %v1992
        %v2973 = vunpack.c.l.b16 %v1993
        %v2974 = vunpack.c.l.b16 %v1994
        %v2975 = vunpack.c.l.b16 %v1995
        %v2976 = vunpack.c.l.b16 %v1996
        %v2977 = vunpack.c.l.b16 %v1997
        %v2978 = vunpack.c.l.b16 %v1998
        %v2979 = vunpack.c.l.b16 %v1999
        %v2980 = vunpack.c.l.b16 %v2000
        %v2981 = vunpack.c.l.b16 %v2001
        %v2982 = vunpack.c.l.b16 %v2002
        %v2983 = vunpack.c.l.b16 %v2003
        %v2984 = vunpack.c.l.b16 %v2004
        %v2985 = vunpack.c.l.b16 %v2005
        %v2986 = vunpack.c.l.b16 %v2006
        %v2987 = vunpack.c.l.b16 %v2007
        %v2988 = vunpack.c.l.b16 %v2008
        %v2989 = vunpack.c.l.b16 %v2009
        %v2990 = vunpack.c.l.b16 %v2010
        %v2991 = vunpack.c.l.b16 %v2011
        %v2992 = vunpack.c.l.b16 %v2012
        %v2993 = vunpack.c.l.b16 %v2013
        %v2994 = vunpack.c.l.b16 %v2014
        %v2995 = vunpack.c.l.b16 %v2015
        %v2996 = vunpack.c.l.b16 %v2016
        %v2997 = vunpack.c.l.b16 %v2017
        %v2998 = vunpack.c.l.b16 %v2018
        %v2999 = vunpack.c.l.b16 %v2019
        %v3000 = vunpack.c.l.b16 %v2020
        %v3001 = vunpack.c.l.b16 %v2021
        %v3002 = vunpack.c.l.b16 %v2022
        %v3003 = vunpack.c.l.b16 %v2023
        %v3004 = vunpack.c.l.b16 %v2024
        %v3005 = vunpack.c.l.b16 %v2025
        %v3006 = vunpack.c.l.b16 %v2026
        %v3007 = vunpack.c.l.b16 %v2027
        %v3008 = vunpack.c.l.b16 %v2028
        %v3009 = vunpack.c.l.b16 %v2029
        %v3010 = vunpack.c.l.b16 %v2030
        %v3011 = vunpack.c.l.b16 %v2031
        %v3012 = vunpack.c.l.b16 %v2032
        %v3013 = vunpack.c.l.b16 %v2033
        %v3014 = vunpack.c.l.b16 %v2034
        %v3015 = vunpack.c.l.b16 %v2035
        %v3016 = vunpack.c.l.b16 %v2036
        %v3017 = vunpack.c.l.b16 %v2037
        %v3018 = vunpack.c.l.b16 %v2038
        %v3019 = vunpack.c.l.b16 %v2039
        %v3020 = vunpack.c.l.b16 %v2040
        %v3021 = vunpack.c.l.b16 %v2041
        %v3022 = vunpack.c.l.b16 %v2042
        %v3023 = vunpack.c.l.b16 %v2043
        %v3024 = vunpack.c.l.b16 %v2044
        %v3025 = vunpack.c.l.b16 %v2045
        %v3026 = vunpack.c.l.b16 %v2046
        %v3027 = vunpack.c.l.b16 %v2047
        %v3028 = vunpack.c.l.b16 %v2048
        %v3029 = vunpack.c.l.b16 %v2049
        %v3030 = vunpack.c.l.b16 %v2050
        %v3031 = vunpack.c.l.b16 %v2051
        %v3032 = vunpack.c.l.b16 %v2052
        %v3033 = vunpack.c.l.b16 %v2053
        %v3034 = vunpack.c.l.b16 %v2054
        %v3035 = vunpack.c.l.b16 %v2055
        %v3036 = vunpack.c.l.b16 %v2056
        %v3037 = vunpack.c.l.b16 %v2057
        %v3038 = vunpack.c.l.b16 %v2058
        %v3039 = vunpack.c.l.b16 %v2059
        %v3040 = vunpack.c.l.b16 %v2060
        %v3041 = vunpack.c.l.b16 %v2061
        %v3042 = vunpack.c.l.b16 %v2062
        %v3043 = vunpack.c.l.b16 %v2063
        %v3044 = vunpack.c.l.b16 %v2064
        %v3045 = vunpack.c.l.b16 %v2065
        %v3046 = vunpack.c.l.b16 %v2066
        %v3047 = vunpack.c.l.b16 %v2067
        %v3048 = vunpack.c.l.b16 %v2068
        %v3049 = vunpack.c.l.b16 %v2069
        %v3050 = vunpack.c.l.b16 %v2070
        %v3051 = vunpack.c.l.b16 %v2071
        %v3052 = vunpack.c.l.b16 %v2072
        %v3053 = vunpack.c.l.b16 %v2073
        %v3054 = vunpack.c.l.b16 %v2074
        %v3055 = vunpack.c.l.b16 %v2075
        %v3056 = vunpack.c.l.b16 %v2076
        %v3057 = vunpack.c.l.b16 %v2077
        %v3058 = vunpack.c.l.b16 %v2078
        %v3059 = vunpack.c.l.b16 %v2079
        %v3060 = vunpack.c.l.b16 %v2080
        %v3061 = vunpack.c.l.b16 %v2081
        %v3062 = vunpack.c.l.b16 %v2082
        %v3063 = vunpack.c.l.b16 %v2083
        %v3064 = vunpack.c.l.b16 %v2084
        %v3065 = vunpack.c.l.b16 %v2085
        %v3066 = vunpack.c.l.b16 %v2086
        %v3067 = vunpack.c.l.b16 %v2087
        %v3068 = vunpack.c.l.b16 %v2088
        %v3069 = vunpack.c.l.b16 %v2089
        %v3070 = vunpack.c.l.b16 %v2090
        %v3071 = vunpack.c.l.b16 %v2091
        %v3072 = vunpack.c.l.b16 %v2092
        %v3073 = vunpack.c.l.b16 %v2093
        %v3074 = vunpack.c.l.b16 %v2094
        %v3075 = vunpack.c.l.b16 %v2095
        %v3076 = vunpack.c.l.b16 %v2096
        %v3077 = vunpack.c.l.b16 %v2097
        %v3078 = vunpack.c.l.b16 %v2098
        %v3079 = vunpack.c.l.b16 %v2099
        %v3080 = vunpack.c.l.b16 %v2100
        %v3081 = vunpack.c.l.b16 %v2101
        %v3082 = vunpack.c.l.b16 %v2102
        %v3083 = vunpack.c.l.b16 %v2103
        %v3084 = vunpack.c.l.b16 %v2104
        %v3085 = vunpack.c.l.b16 %v2105
        %v3086 = vunpack.c.l.b16 %v2106
        %v3087 = vunpack.c.l.b16 %v2107
        %v3088 = vunpack.c.l.b16 %v2108
        %v3089 = vunpack.c.l.b16 %v2109
        %v3090 = vunpack.c.l.b16 %v2110
        %v3091 = vunpack.c.l.b16 %v2111
        %v3092 = vunpack.c.l.b16 %v2112
        %v3093 = vunpack.c.l.b16 %v2113
        %v3094 = vunpack.c.l.b16 %v2114
        %v3095 = vunpack.c.l.b16 %v2115
        %v3096 = vunpack.c.l.b16 %v2116
        %v3097 = vunpack.c.l.b16 %v2117
        %v3098 = vunpack.c.l.b16 %v2118
        %v3099 = vunpack.c.l.b16 %v2119
        %v3100 = vunpack.c.l.b16 %v2120
        %v3101 = vunpack.c.l.b16 %v2121
        %v3102 = vunpack.c.l.b16 %v2122
        %v3103 = vunpack.c.l.b16 %v2123
        %v3104 = vunpack.c.l.b16 %v2124
        %v3105 = vunpack.c.l.b16 %v2125
        %v3106 = vunpack.c.l.b16 %v2126
        %v3107 = vunpack.c.l.b16 %v2127
        %v3108 = vunpack.c.l.b16 %v2128
        %v3109 = vunpack.c.l.b16 %v2129
        %v3110 = vunpack.c.l.b16 %v2130
        %v3111 = vunpack.c.l.b16 %v2131
        %v3112 = vunpack.c.l.b16 %v2132
        %v3113 = vunpack.c.l.b16 %v2133
        %v3114 = vunpack.c.l.b16 %v2134
        %v3115 = vunpack.c.l.b16 %v2135
        %v3116 = vunpack.c.l.b16 %v2136
        %v3117 = vunpack.c.l.b16 %v2137
        %v3118 = vunpack.c.l.b16 %v2138
        %v3119 = vunpack.c.l.b16 %v2139
        %v3120 = vunpack.c.l.b16 %v2140
        %v3121 = vunpack.c.l.b16 %v2141
        %v3122 = vunpack.c.l.b16 %v2142
        %v3123 = vunpack.c.l.b16 %v2143
        %v3124 = vunpack.c.l.b16 %v2144
        %v3125 = vunpack.c.l.b16 %v2145
        %v3126 = vunpack.c.l.b16 %v2146
        %v3127 = vunpack.c.l.b16 %v2147
        %v3128 = vunpack.c.l.b16 %v2148
        %v3129 = vunpack.c.l.b16 %v2149
        %v3130 = vunpack.c.l.b16 %v2150
        %v3131 = vunpack.c.l.b16 %v2151
        %v3132 = vunpack.c.l.b16 %v2152
        %v3133 = vunpack.c.l.b16 %v2153
        %v3134 = vunpack.c.l.b16 %v2154
        %v3135 = vunpack.c.l.b16 %v2155
        %v3136 = vunpack.c.l.b16 %v2156
        %v3137 = vunpack.c.l.b16 %v2157
        %v3138 = vunpack.c.l.b16 %v2158
        %v3139 = vunpack.c.l.b16 %v2159
        %v3140 = vunpack.c.l.b16 %v2160
        %v3141 = vunpack.c.l.b16 %v2161
        %v3142 = vunpack.c.l.b16 %v2162
        %v3143 = vunpack.c.l.b16 %v2163
        %v3144 = vunpack.c.l.b16 %v2164
        %v3145 = vunpack.c.l.b16 %v2165
        %v3146 = vunpack.c.l.b16 %v2166
        %v3147 = vunpack.c.l.b16 %v2167
        %v3148 = vunpack.c.l.b16 %v2168
        %v3149 = vunpack.c.l.b16 %v2169
        %v3150 = vunpack.c.l.b16 %v2170
        %v3151 = vunpack.c.l.b16 %v2171
        %v3152 = vunpack.c.l.b16 %v2172
        %v3153 = vunpack.c.l.b16 %v2173
        %v3154 = vunpack.c.l.b16 %v2174
        %v3155 = vunpack.c.l.b16 %v2175
        %v3156 = vunpack.c.l.b16 %v2176
        %v3157 = vunpack.c.l.b16 %v2177
        %v3158 = vunpack.c.l.b16 %v2178
        %v3159 = vunpack.c.l.b16 %v2179
        %v3160 = vunpack.c.l.b16 %v2180
        %v3161 = vunpack.c.l.b16 %v2181
        %v3162 = vunpack.c.l.b16 %v2182
        %v3163 = vunpack.c.l.b16 %v2183
        %v3164 = vunpack.c.l.b16 %v2184
        %v3165 = vunpack.c.l.b16 %v2185
        %v3166 = vunpack.c.l.b16 %v2186
        %v3167 = vunpack.c.l.b16 %v2187
        %v3168 = vunpack.c.l.b16 %v2188
        %v3169 = vunpack.c.l.b16 %v2189
        %v3170 = vunpack.c.l.b16 %v2190
        %v3171 = vunpack.c.l.b16 %v2191
        %v3172 = vunpack.c.l.b16 %v2192
        %v3173 = vunpack.c.l.b16 %v2193
        %v3174 = vunpack.c.l.b16 %v2194
        %v3175 = vunpack.c.l.b16 %v2195
        %v3176 = vunpack.c.l.b16 %v2196
        %v3177 = vunpack.c.l.b16 %v2197
        %v3178 = vunpack.c.l.b16 %v2198
        %v3179 = vunpack.c.l.b16 %v2199
        %v3180 = vunpack.c.l.b16 %v2200
        %v3181 = vunpack.c.l.b16 %v2201
        %v3182 = vunpack.c.l.b16 %v2202
        %v3183 = vunpack.c.l.b16 %v2203
        %v3184 = vunpack.c.l.b16 %v2204
        %v3185 = vunpack.c.l.b16 %v2205
        %v3186 = vunpack.c.l.b16 %v2206
        %v3187 = vunpack.c.l.b16 %v2207
        %v3188 = vunpack.c.l.b16 %v2208
        %v3189 = vunpack.c.l.b16 %v2209
        %v3190 = vunpack.c.l.b16 %v2210
        %v3191 = vunpack.c.l.b16 %v2211
        %v3192 = vunpack.c.l.b16 %v2212
        %v3193 = vunpack.c.l.b16 %v2213
        %v3194 = vunpack.c.l.b16 %v2214
        %v3195 = vunpack.c.l.b16 %v2215
        %v3196 = vunpack.c.l.b16 %v2216
        %v3197 = vunpack.c.l.b16 %v2217
        %v3198 = vunpack.c.l.b16 %v2218
        %v3199 = vunpack.c.l.b16 %v2219
        %v3200 = vunpack.c.l.b16 %v2220
        %v3201 = vunpack.c.l.b16 %v2221
        %v3202 = vunpack.c.l.b16 %v2222
        %v3203 = vunpack.c.l.b16 %v2223
        %v3204 = vunpack.c.l.b16 %v2224
        %v3205 = vunpack.c.l.b16 %v2225
        %v3206 = vunpack.c.l.b16 %v2226
        %v3207 = vunpack.c.l.b16 %v2227
        %v3208 = vunpack.c.l.b16 %v2228
        %v3209 = vunpack.c.l.b16 %v2229
        %v3210 = vunpack.c.l.b16 %v2230
        %v3211 = vunpack.c.l.b16 %v2231
        %v3212 = vunpack.c.l.b16 %v2232
        %v3213 = vunpack.c.l.b16 %v2233
        %v3214 = vunpack.c.l.b16 %v2234
        %v3215 = vunpack.c.l.b16 %v2235
        %v3216 = vunpack.c.l.b16 %v2236
        %v3217 = vunpack.c.l.b16 %v2237
        %v3218 = vunpack.c.l.b16 %v2238
        %v3219 = vunpack.c.l.b16 %v2239
        %v3220 = vunpack.c.l.b16 %v2240
        %v3221 = vunpack.c.l.b16 %v2241
        %v3222 = vunpack.c.l.b16 %v2242
        %v3223 = vunpack.c.l.b16 %v2243
        %v3224 = vunpack.c.l.b16 %v2244
        %v3225 = vunpack.c.l.b16 %v2245
        %v3226 = vunpack.c.l.b16 %v2246
        %v3227 = vunpack.c.l.b16 %v2247
        %v3228 = vunpack.c.l.b16 %v2248
        %v3229 = vunpack.c.l.b16 %v2249
        %v3230 = vunpack.c.l.b16 %v2250
        %v3231 = vunpack.c.l.b16 %v2251
        %v3232 = vunpack.c.l.b16 %v2252
        %v3233 = vunpack.c.l.b16 %v2253
        %v3234 = vunpack.c.l.b16 %v2254
        %v3235 = vpack.c.b16 %v2844, %v2843
        %v3236 = vpack.c.b16 %v2846, %v2845
        %v3237 = vpack.c.b16 %v2848, %v2847
        %v3238 = vpack.c.b16 %v2850, %v2849
        %v3239 = vpack.c.b16 %v2852, %v2851
        %v3240 = vpack.c.b16 %v2854, %v2853
        %v3241 = vpack.c.b16 %v2856, %v2855
        %v3242 = vpack.c.b16 %v2858, %v2857
        %v3243 = vpack.c.b16 %v2860, %v2859
        %v3244 = vpack.c.b16 %v2862, %v2861
        %v3245 = vpack.c.b16 %v2864, %v2863
        %v3246 = vpack.c.b16 %v2866, %v2865
        %v3247 = vpack.c.b16 %v2868, %v2867
        %v3248 = vpack.c.b16 %v2870, %v2869
        %v3249 = vpack.c.b16 %v2872, %v2871
        %v3250 = vpack.c.b16 %v2874, %v2873
        %v3251 = vpack.c.b16 %v2876, %v2875
        %v3252 = vpack.c.b16 %v2878, %v2877
        %v3253 = vpack.c.b16 %v2880, %v2879
        %v3254 = vpack.c.b16 %v2882, %v2881
        %v3255 = vpack.c.b16 %v2884, %v2883
        %v3256 = vpack.c.b16 %v2886, %v2885
        %v3257 = vpack.c.b16 %v2888, %v2887
        %v3258 = vpack.c.b16 %v2890, %v2889
        %v3259 = vpack.c.b16 %v2892, %v2891
        %v3260 = vpack.c.b16 %v2894, %v2893
        %v3261 = vpack.c.b16 %v2896, %v2895
        %v3262 = vpack.c.b16 %v2898, %v2897
        %v3263 = vpack.c.b16 %v2900, %v2899
        %v3264 = vpack.c.b16 %v2902, %v2901
        %v3265 = vpack.c.b16 %v2904, %v2903
        %v3266 = vpack.c.b16 %v2906, %v2905
        %v3267 = vpack.c.b16 %v2908, %v2907
        %v3268 = vpack.c.b16 %v2910, %v2909
        %v3269 = vpack.c.b16 %v2912, %v2911
        %v3270 = vpack.c.b16 %v2914, %v2913
        %v3271 = vpack.c.b16 %v2916, %v2915
        %v3272 = vpack.c.b16 %v2918, %v2917
        %v3273 = vpack.c.b16 %v2920, %v2919
        %v3274 = vpack.c.b16 %v2922, %v2921
        %v3275 = vpack.c.b16 %v2924, %v2923
        %v3276 = vpack.c.b16 %v2926, %v2925
        %v3277 = vpack.c.b16 %v2928, %v2927
        %v3278 = vpack.c.b16 %v2930, %v2929
        %v3279 = vpack.c.b16 %v2932, %v2931
        %v3280 = vpack.c.b16 %v2934, %v2933
        %v3281 = vpack.c.b16 %v2936, %v2935
        %v3282 = vpack.c.b16 %v2938, %v2937
        %v3283 = vpack.c.b16 %v2940, %v2939
        %v3284 = vpack.c.b16 %v2942, %v2941
        %v3285 = vpack.c.b16 %v2944, %v2943
        %v3286 = vpack.c.b16 %v2946, %v2945
        %v3287 = vpack.c.b16 %v2948, %v2947
        %v3288 = vpack.c.b16 %v2950, %v2949
        %v3289 = vpack.c.b16 %v2952, %v2951
        %v3290 = vpack.c.b16 %v2954, %v2953
        %v3291 = vpack.c.b16 %v2956, %v2955
        %v3292 = vpack.c.b16 %v2958, %v2957
        %v3293 = vpack.c.b16 %v2960, %v2959
        %v3294 = vpack.c.b16 %v2962, %v2961
        %v3295 = vpack.c.b16 %v2964, %v2963
        %v3296 = vpack.c.b16 %v2966, %v2965
        %v3297 = vpack.c.b16 %v2968, %v2967
        %v3298 = vpack.c.b16 %v2970, %v2969
        %v3299 = vpack.c.b16 %v2972, %v2971
        %v3300 = vpack.c.b16 %v2974, %v2973
        %v3301 = vpack.c.b16 %v2976, %v2975
        %v3302 = vpack.c.b16 %v2978, %v2977
        %v3303 = vpack.c.b16 %v2980, %v2979
        %v3304 = vpack.c.b16 %v2982, %v2981
        %v3305 = vpack.c.b16 %v2984, %v2983
        %v3306 = vpack.c.b16 %v2986, %v2985
        %v3307 = vpack.c.b16 %v2988, %v2987
        %v3308 = vpack.c.b16 %v2990, %v2989
        %v3309 = vpack.c.b16 %v2992, %v2991
        %v3310 = vpack.c.b16 %v2994, %v2993
        %v3311 = vpack.c.b16 %v2996, %v2995
        %v3312 = vpack.c.b16 %v2998, %v2997
        %v3313 = vpack.c.b16 %v3000, %v2999
        %v3314 = vpack.c.b16 %v3002, %v3001
        %v3315 = vpack.c.b16 %v3004, %v3003
        %v3316 = vpack.c.b16 %v3006, %v3005
        %v3317 = vpack.c.b16 %v3008, %v3007
        %v3318 = vpack.c.b16 %v3010, %v3009
        %v3319 = vpack.c.b16 %v3012, %v3011
        %v3320 = vpack.c.b16 %v3014, %v3013
        %v3321 = vpack.c.b16 %v3016, %v3015
        %v3322 = vpack.c.b16 %v3018, %v3017
        %v3323 = vpack.c.b16 %v3020, %v3019
        %v3324 = vpack.c.b16 %v3022, %v3021
        %v3325 = vpack.c.b16 %v3024, %v3023
        %v3326 = vpack.c.b16 %v3026, %v3025
        %v3327 = vpack.c.b16 %v3028, %v3027
        %v3328 = vpack.c.b16 %v3030, %v3029
        %v3329 = vpack.c.b16 %v3032, %v3031
        %v3330 = vpack.c.b16 %v3034, %v3033
        %v3331 = vpack.c.b16 %v3036, %v3035
        %v3332 = vpack.c.b16 %v3038, %v3037
        %v3333 = vpack.c.b16 %v3040, %v3039
        %v3334 = vpack.c.b16 %v3042, %v3041
        %v3335 = vpack.c.b16 %v3044, %v3043
        %v3336 = vpack.c.b16 %v3046, %v3045
        %v3337 = vpack.c.b16 %v3048, %v3047
        %v3338 = vpack.c.b16 %v3050, %v3049
        %v3339 = vpack.c.b16 %v3052, %v3051
        %v3340 = vpack.c.b16 %v3054, %v3053
        %v3341 = vpack.c.b16 %v3056, %v3055
        %v3342 = vpack.c.b16 %v3058, %v3057
        %v3343 = vpack.c.b16 %v3060, %v3059
        %v3344 = vpack.c.b16 %v3062, %v3061
        %v3345 = vpack.c.b16 %v3064, %v3063
        %v3346 = vpack.c.b16 %v3066, %v3065
        %v3347 = vpack.c.b16 %v3068, %v3067
        %v3348 = vpack.c.b16 %v3070, %v3069
        %v3349 = vpack.c.b16 %v3072, %v3071
        %v3350 = vpack.c.b16 %v3074, %v3073
        %v3351 = vpack.c.b16 %v3076, %v3075
        %v3352 = vpack.c.b16 %v3078, %v3077
        %v3353 = vpack.c.b16 %v3080, %v3079
        %v3354 = vpack.c.b16 %v3082, %v3081
        %v3355 = vpack.c.b16 %v3084, %v3083
        %v3356 = vpack.c.b16 %v3086, %v3085
        %v3357 = vpack.c.b16 %v3088, %v3087
        %v3358 = vpack.c.b16 %v3090, %v3089
        %v3359 = vpack.c.b16 %v3092, %v3091
        %v3360 = vpack.c.b16 %v3094, %v3093
        %v3361 = vpack.c.b16 %v3096, %v3095
        %v3362 = vpack.c.b16 %v3098, %v3097
        %v3363 = vpack.c.b16 %v3100, %v3099
        %v3364 = vpack.c.b16 %v3102, %v3101
        %v3365 = vpack.c.b16 %v3104, %v3103
        %v3366 = vpack.c.b16 %v3106, %v3105
        %v3367 = vpack.c.b16 %v3108, %v3107
        %v3368 = vpack.c.b16 %v3110, %v3109
        %v3369 = vpack.c.b16 %v3112, %v3111
        %v3370 = vpack.c.b16 %v3114, %v3113
        %v3371 = vpack.c.b16 %v3116, %v3115
        %v3372 = vpack.c.b16 %v3118, %v3117
        %v3373 = vpack.c.b16 %v3120, %v3119
        %v3374 = vpack.c.b16 %v3122, %v3121
        %v3375 = vpack.c.b16 %v3124, %v3123
        %v3376 = vpack.c.b16 %v3126, %v3125
        %v3377 = vpack.c.b16 %v3128, %v3127
        %v3378 = vpack.c.b16 %v3130, %v3129
        %v3379 = vpack.c.b16 %v3132, %v3131
        %v3380 = vpack.c.b16 %v3134, %v3133
        %v3381 = vpack.c.b16 %v3136, %v3135
        %v3382 = vpack.c.b16 %v3138, %v3137
        %v3383 = vpack.c.b16 %v3140, %v3139
        %v3384 = vpack.c.b16 %v3142, %v3141
        %v3385 = vpack.c.b16 %v3144, %v3143
        %v3386 = vpack.c.b16 %v3146, %v3145
        %v3387 = vpack.c.b16 %v3148, %v3147
        %v3388 = vpack.c.b16 %v3150, %v3149
        %v3389 = vpack.c.b16 %v3152, %v3151
        %v3390 = vpack.c.b16 %v3154, %v3153
        %v3391 = vpack.c.b16 %v3156, %v3155
        %v3392 = vpack.c.b16 %v3158, %v3157
        %v3393 = vpack.c.b16 %v3160, %v3159
        %v3394 = vpack.c.b16 %v3162, %v3161
        %v3395 = vpack.c.b16 %v3164, %v3163
        %v3396 = vpack.c.b16 %v3166, %v3165
        %v3397 = vpack.c.b16 %v3168, %v3167
        %v3398 = vpack.c.b16 %v3170, %v3169
        %v3399 = vpack.c.b16 %v3172, %v3171
        %v3400 = vpack.c.b16 %v3174, %v3173
        %v3401 = vpack.c.b16 %v3176, %v3175
        %v3402 = vpack.c.b16 %v3178, %v3177
        %v3403 = vpack.c.b16 %v3180, %v3179
        %v3404 = vpack.c.b16 %v3182, %v3181
        %v3405 = vpack.c.b16 %v3184, %v3183
        %v3406 = vpack.c.b16 %v3186, %v3185
        %v3407 = vpack.c.b16 %v3188, %v3187
        %v3408 = vpack.c.b16 %v3190, %v3189
        %v3409 = vpack.c.b16 %v3192, %v3191
        %v3410 = vpack.c.b16 %v3194, %v3193
        %v3411 = vpack.c.b16 %v3196, %v3195
        %v3412 = vpack.c.b16 %v3198, %v3197
        %v3413 = vpack.c.b16 %v3200, %v3199
        %v3414 = vpack.c.b16 %v3202, %v3201
        %v3415 = vpack.c.b16 %v3204, %v3203
        %v3416 = vpack.c.b16 %v3206, %v3205
        %v3417 = vpack.c.b16 %v3208, %v3207
        %v3418 = vpack.c.b16 %v3210, %v3209
        %v3419 = vpack.c.b16 %v3212, %v3211
        %v3420 = vpack.c.b16 %v3214, %v3213
        %v3421 = vpack.c.b16 %v3216, %v3215
        %v3422 = vpack.c.b16 %v3218, %v3217
        %v3423 = vpack.c.b16 %v3220, %v3219
        %v3424 = vpack.c.b16 %v3222, %v3221
        %v3425 = vpack.c.b16 %v3224, %v3223
        %v3426 = vpack.c.b16 %v3226, %v3225
        %v3427 = vpack.c.b16 %v3228, %v3227
        %v3428 = vpack.c.b16 %v3230, %v3229
        %v3429 = vpack.c.b16 %v3232, %v3231
        %v3430 = vpack.c.b16 %v3234, %v3233
        %vm3627 = vcmask 523264
        %v3629 = vsel %vm3627, %v2426, 0
        %3631 = vmatprep.subr.bf16.mxu0 0
        %3632 = vmatpush1.bf16.msra.mxu0 %v3235
        %3633 = vmatprep.subr.bf16.mxu0 0
        %3634 = vmatpush1.bf16.msra.mxu0 %v3236
        %3635 = vmatprep.subr.bf16.mxu0 0
        %3636 = vmatpush1.bf16.msra.mxu0 %v3237
        %3637 = vmatprep.subr.bf16.mxu0 0
        %3638 = vmatpush1.bf16.msra.mxu0 %v3238
        %3639 = vmatprep.subr.bf16.mxu0 0
        %3640 = vmatpush1.bf16.msra.mxu0 %v3239
        %3641 = vmatprep.subr.bf16.mxu0 0
        %3642 = vmatpush1.bf16.msra.mxu0 %v3240
        %3643 = vmatprep.subr.bf16.mxu0 0
        %3644 = vmatpush1.bf16.msra.mxu0 %v3241
        %3645 = vmatprep.subr.bf16.mxu0 0
        %3646 = vmatpush1.bf16.msra.mxu0 %v3242
        %3647 = vmatprep.subr.bf16.mxu0 0
        %3648 = vmatpush1.bf16.msra.mxu0 %v3243
        %3649 = vmatprep.subr.bf16.mxu0 0
        %3650 = vmatpush1.bf16.msra.mxu0 %v3244
        %3651 = vmatprep.subr.bf16.mxu0 0
        %3652 = vmatpush1.bf16.msra.mxu0 %v3245
        %3653 = vmatprep.subr.bf16.mxu0 0
        %3654 = vmatpush1.bf16.msra.mxu0 %v3246
        %3655 = vmatprep.subr.bf16.mxu0 0
        %3656 = vmatpush1.bf16.msra.mxu0 %v3247
        %3657 = vmatprep.subr.bf16.mxu0 0
        %3658 = vmatpush1.bf16.msra.mxu0 %v3248
        %3659 = vmatprep.subr.bf16.mxu0 0
        %3660 = vmatpush1.bf16.msra.mxu0 %v3249
        %3661 = vmatprep.subr.bf16.mxu0 0
        %3662 = vmatpush1.bf16.msra.mxu0 %v3250
        %3663 = vmatprep.mubr.bf16.mxu0 %v2303
        %3664 = vmatmul.mubr.bf16.gmra.mrb[0].mxu0 %v2289
        %v3665 = vpop.f32.mrb[0].mxu0
        %v3666 = vadd.f32 %v2260, %v3665
        %v3667 = vpop.f32.mrb[0].mxu0
        %v3668 = vpop.f32.mrb[0].mxu0
        %v3669 = vpop.f32.mrb[0].mxu0
        %3670 = vdwg.mxu0
        %3671 = vmatprep.subr.bf16.mxu0 0
        %3672 = vmatpush1.bf16.msra.mxu0 %v3251
        %3673 = vmatprep.subr.bf16.mxu0 0
        %3674 = vmatpush1.bf16.msra.mxu0 %v3252
        %3675 = vmatprep.subr.bf16.mxu0 0
        %3676 = vmatpush1.bf16.msra.mxu0 %v3253
        %3677 = vmatprep.subr.bf16.mxu0 0
        %3678 = vmatpush1.bf16.msra.mxu0 %v3254
        %3679 = vmatprep.subr.bf16.mxu0 0
        %3680 = vmatpush1.bf16.msra.mxu0 %v3255
        %3681 = vmatprep.subr.bf16.mxu0 0
        %3682 = vmatpush1.bf16.msra.mxu0 %v3256
        %3683 = vmatprep.subr.bf16.mxu0 0
        %3684 = vmatpush1.bf16.msra.mxu0 %v3257
        %3685 = vmatprep.subr.bf16.mxu0 0
        %3686 = vmatpush1.bf16.msra.mxu0 %v3258
        %3687 = vmatprep.subr.bf16.mxu0 0
        %3688 = vmatpush1.bf16.msra.mxu0 %v3259
        %3689 = vmatprep.subr.bf16.mxu0 0
        %3690 = vmatpush1.bf16.msra.mxu0 %v3260
        %3691 = vmatprep.subr.bf16.mxu0 0
        %3692 = vmatpush1.bf16.msra.mxu0 %v3261
        %3693 = vmatprep.subr.bf16.mxu0 0
        %3694 = vmatpush1.bf16.msra.mxu0 %v3262
        %3695 = vmatprep.subr.bf16.mxu0 0
        %3696 = vmatpush1.bf16.msra.mxu0 %v3263
        %3697 = vmatprep.subr.bf16.mxu0 0
        %3698 = vmatpush1.bf16.msra.mxu0 %v3264
        %3699 = vmatprep.subr.bf16.mxu0 0
        %3700 = vmatpush1.bf16.msra.mxu0 %v3265
        %3701 = vmatprep.subr.bf16.mxu0 0
        %3702 = vmatpush1.bf16.msra.mxu0 %v3266
        %3703 = vmatprep.mubr.bf16.mxu0 %v2313
        %3704 = vmatmul.mubr.bf16.gmra.mrb[0].mxu0 %v2311
        %v3705 = vpop.f32.mrb[0].mxu0
        %v3706 = vadd.f32 %v3666, %v3705
        %v3707 = vpop.f32.mrb[0].mxu0
        %v3708 = vpop.f32.mrb[0].mxu0
        %v3709 = vpop.f32.mrb[0].mxu0
        %3710 = vdwg.mxu0
        %3711 = vmatprep.subr.bf16.mxu0 0
        %3712 = vmatpush1.bf16.msra.mxu0 %v3267
        %3713 = vmatprep.subr.bf16.mxu0 0
        %3714 = vmatpush1.bf16.msra.mxu0 %v3268
        %3715 = vmatprep.subr.bf16.mxu0 0
        %3716 = vmatpush1.bf16.msra.mxu0 %v3269
        %3717 = vmatprep.subr.bf16.mxu0 0
        %3718 = vmatpush1.bf16.msra.mxu0 %v3270
        %3719 = vmatprep.subr.bf16.mxu0 0
        %3720 = vmatpush1.bf16.msra.mxu0 %v3271
        %3721 = vmatprep.subr.bf16.mxu0 0
        %3722 = vmatpush1.bf16.msra.mxu0 %v3272
        %3723 = vmatprep.subr.bf16.mxu0 0
        %3724 = vmatpush1.bf16.msra.mxu0 %v3273
        %3725 = vmatprep.subr.bf16.mxu0 0
        %3726 = vmatpush1.bf16.msra.mxu0 %v3274
        %3727 = vmatprep.subr.bf16.mxu0 0
        %3728 = vmatpush1.bf16.msra.mxu0 %v3275
        %3729 = vmatprep.subr.bf16.mxu0 0
        %3730 = vmatpush1.bf16.msra.mxu0 %v3276
        %3731 = vmatprep.subr.bf16.mxu0 0
        %3732 = vmatpush1.bf16.msra.mxu0 %v3277
        %3733 = vmatprep.subr.bf16.mxu0 0
        %3734 = vmatpush1.bf16.msra.mxu0 %v3278
        %3735 = vmatprep.subr.bf16.mxu0 0
        %3736 = vmatpush1.bf16.msra.mxu0 %v3279
        %3737 = vmatprep.subr.bf16.mxu0 0
        %3738 = vmatpush1.bf16.msra.mxu0 %v3280
        %3739 = vmatprep.subr.bf16.mxu0 0
        %3740 = vmatpush1.bf16.msra.mxu0 %v3281
        %3741 = vmatprep.subr.bf16.mxu0 0
        %3742 = vmatpush1.bf16.msra.mxu0 %v3282
        %3743 = vmatprep.mubr.bf16.mxu0 %v2310
        %3744 = vmatmul.mubr.bf16.gmra.mrb[0].mxu0 %v2296
        %v3745 = vpop.f32.mrb[0].mxu0
        %v3746 = vadd.f32 %v3706, %v3745
        %v3747 = vpop.f32.mrb[0].mxu0
        %v3748 = vpop.f32.mrb[0].mxu0
        %v3749 = vpop.f32.mrb[0].mxu0
        %3750 = vdwg.mxu0
        %3751 = vmatprep.subr.bf16.mxu0 0
        %3752 = vmatpush1.bf16.msra.mxu0 %v3283
        %3753 = vmatprep.subr.bf16.mxu0 0
        %3754 = vmatpush1.bf16.msra.mxu0 %v3284
        %3755 = vmatprep.subr.bf16.mxu0 0
        %3756 = vmatpush1.bf16.msra.mxu0 %v3285
        %3757 = vmatprep.subr.bf16.mxu0 0
        %3758 = vmatpush1.bf16.msra.mxu0 %v3286
        %3759 = vmatprep.subr.bf16.mxu0 0
        %3760 = vmatpush1.bf16.msra.mxu0 %v3287
        %3761 = vmatprep.subr.bf16.mxu0 0
        %3762 = vmatpush1.bf16.msra.mxu0 %v3288
        %3763 = vmatprep.subr.bf16.mxu0 0
        %3764 = vmatpush1.bf16.msra.mxu0 %v3289
        %3765 = vmatprep.subr.bf16.mxu0 0
        %3766 = vmatpush1.bf16.msra.mxu0 %v3290
        %3767 = vmatprep.subr.bf16.mxu0 0
        %3768 = vmatpush1.bf16.msra.mxu0 %v3291
        %3769 = vmatprep.subr.bf16.mxu0 0
        %3770 = vmatpush1.bf16.msra.mxu0 %v3292
        %3771 = vmatprep.subr.bf16.mxu0 0
        %3772 = vmatpush1.bf16.msra.mxu0 %v3293
        %3773 = vmatprep.subr.bf16.mxu0 0
        %3774 = vmatpush1.bf16.msra.mxu0 %v3294
        %3775 = vmatprep.subr.bf16.mxu0 0
        %3776 = vmatpush1.bf16.msra.mxu0 %v3295
        %3777 = vmatprep.subr.bf16.mxu0 0
        %3778 = vmatpush1.bf16.msra.mxu0 %v3296
        %3779 = vmatprep.subr.bf16.mxu0 0
        %3780 = vmatpush1.bf16.msra.mxu0 %v3297
        %3781 = vmatprep.subr.bf16.mxu0 0
        %3782 = vmatpush1.bf16.msra.mxu0 %v3298
        %3783 = vmatprep.mubr.bf16.mxu0 %v2314
        %3784 = vmatmul.mubr.bf16.gmra.mrb[0].mxu0 %v2312
        %v3785 = vpop.f32.mrb[0].mxu0
        %v3786 = vadd.f32 %v3746, %v3785
        %v3787 = vpop.f32.mrb[0].mxu0
        %v3788 = vpop.f32.mrb[0].mxu0
        %v3789 = vpop.f32.mrb[0].mxu0
        %3790 = vdwg.mxu0
        %3791 = vmatprep.subr.bf16.mxu0 0
        %3792 = vmatpush1.bf16.msra.mxu0 %v3299
        %3793 = vmatprep.subr.bf16.mxu0 0
        %3794 = vmatpush1.bf16.msra.mxu0 %v3300
        %3795 = vmatprep.subr.bf16.mxu0 0
        %3796 = vmatpush1.bf16.msra.mxu0 %v3301
        %3797 = vmatprep.subr.bf16.mxu0 0
        %3798 = vmatpush1.bf16.msra.mxu0 %v3302
        %3799 = vmatprep.subr.bf16.mxu0 0
        %3800 = vmatpush1.bf16.msra.mxu0 %v3303
        %3801 = vmatprep.subr.bf16.mxu0 0
        %3802 = vmatpush1.bf16.msra.mxu0 %v3304
        %3803 = vmatprep.subr.bf16.mxu0 0
        %3804 = vmatpush1.bf16.msra.mxu0 %v3305
        %3805 = vmatprep.subr.bf16.mxu0 0
        %3806 = vmatpush1.bf16.msra.mxu0 %v3306
        %3807 = vmatprep.subr.bf16.mxu0 0
        %3808 = vmatpush1.bf16.msra.mxu0 %v3307
        %3809 = vmatprep.subr.bf16.mxu0 0
        %3810 = vmatpush1.bf16.msra.mxu0 %v3308
        %3811 = vmatprep.subr.bf16.mxu0 0
        %3812 = vmatpush1.bf16.msra.mxu0 %v3309
        %3813 = vmatprep.subr.bf16.mxu0 0
        %3814 = vmatpush1.bf16.msra.mxu0 %v3310
        %3815 = vmatprep.subr.bf16.mxu0 0
        %3816 = vmatpush1.bf16.msra.mxu0 %v3311
        %3817 = vmatprep.subr.bf16.mxu0 0
        %3818 = vmatpush1.bf16.msra.mxu0 %v3312
        %3819 = vmatprep.subr.bf16.mxu0 0
        %3820 = vmatpush1.bf16.msra.mxu0 %v3313
        %3821 = vmatprep.subr.bf16.mxu0 0
        %3822 = vmatpush1.bf16.msra.mxu0 %v3314
        %3823 = vmatprep.mubr.bf16.mxu0 %v2352
        %3824 = vmatmul.mubr.bf16.gmra.mrb[0].mxu0 %v2338
        %v3825 = vpop.f32.mrb[0].mxu0
        %v3826 = vadd.f32 %v3786, %v3825
        %v3827 = vpop.f32.mrb[0].mxu0
        %v3828 = vpop.f32.mrb[0].mxu0
        %v3829 = vpop.f32.mrb[0].mxu0
        %3830 = vdwg.mxu0
        %3831 = vmatprep.subr.bf16.mxu0 0
        %3832 = vmatpush1.bf16.msra.mxu0 %v3315
        %3833 = vmatprep.subr.bf16.mxu0 0
        %3834 = vmatpush1.bf16.msra.mxu0 %v3316
        %3835 = vmatprep.subr.bf16.mxu0 0
        %3836 = vmatpush1.bf16.msra.mxu0 %v3317
        %3837 = vmatprep.subr.bf16.mxu0 0
        %3838 = vmatpush1.bf16.msra.mxu0 %v3318
        %3839 = vmatprep.subr.bf16.mxu0 0
        %3840 = vmatpush1.bf16.msra.mxu0 %v3319
        %3841 = vmatprep.subr.bf16.mxu0 0
        %3842 = vmatpush1.bf16.msra.mxu0 %v3320
        %3843 = vmatprep.subr.bf16.mxu0 0
        %3844 = vmatpush1.bf16.msra.mxu0 %v3321
        %3845 = vmatprep.subr.bf16.mxu0 0
        %3846 = vmatpush1.bf16.msra.mxu0 %v3322
        %3847 = vmatprep.subr.bf16.mxu0 0
        %3848 = vmatpush1.bf16.msra.mxu0 %v3323
        %3849 = vmatprep.subr.bf16.mxu0 0
        %3850 = vmatpush1.bf16.msra.mxu0 %v3324
        %3851 = vmatprep.subr.bf16.mxu0 0
        %3852 = vmatpush1.bf16.msra.mxu0 %v3325
        %3853 = vmatprep.subr.bf16.mxu0 0
        %3854 = vmatpush1.bf16.msra.mxu0 %v3326
        %3855 = vmatprep.subr.bf16.mxu0 0
        %3856 = vmatpush1.bf16.msra.mxu0 %v3327
        %3857 = vmatprep.subr.bf16.mxu0 0
        %3858 = vmatpush1.bf16.msra.mxu0 %v3328
        %3859 = vmatprep.subr.bf16.mxu0 0
        %3860 = vmatpush1.bf16.msra.mxu0 %v3329
        %3861 = vmatprep.subr.bf16.mxu0 0
        %3862 = vmatpush1.bf16.msra.mxu0 %v3330
        %3863 = vmatprep.mubr.bf16.mxu0 %v2362
        %3864 = vmatmul.mubr.bf16.gmra.mrb[0].mxu0 %v2360
        %v3865 = vpop.f32.mrb[0].mxu0
        %v3866 = vadd.f32 %v3826, %v3865
        %v3867 = vpop.f32.mrb[0].mxu0
        %v3868 = vpop.f32.mrb[0].mxu0
        %v3869 = vpop.f32.mrb[0].mxu0
        %3870 = vdwg.mxu0
        %3871 = vmatprep.subr.bf16.mxu0 0
        %3872 = vmatpush1.bf16.msra.mxu0 %v3331
        %3873 = vmatprep.subr.bf16.mxu0 0
        %3874 = vmatpush1.bf16.msra.mxu0 %v3332
        %3875 = vmatprep.subr.bf16.mxu0 0
        %3876 = vmatpush1.bf16.msra.mxu0 %v3333
        %3877 = vmatprep.subr.bf16.mxu0 0
        %3878 = vmatpush1.bf16.msra.mxu0 %v3334
        %3879 = vmatprep.subr.bf16.mxu0 0
        %3880 = vmatpush1.bf16.msra.mxu0 %v3335
        %3881 = vmatprep.subr.bf16.mxu0 0
        %3882 = vmatpush1.bf16.msra.mxu0 %v3336
        %3883 = vmatprep.subr.bf16.mxu0 0
        %3884 = vmatpush1.bf16.msra.mxu0 %v3337
        %3885 = vmatprep.subr.bf16.mxu0 0
        %3886 = vmatpush1.bf16.msra.mxu0 %v3338
        %3887 = vmatprep.subr.bf16.mxu0 0
        %3888 = vmatpush1.bf16.msra.mxu0 %v3339
        %3889 = vmatprep.subr.bf16.mxu0 0
        %3890 = vmatpush1.bf16.msra.mxu0 %v3340
        %3891 = vmatprep.subr.bf16.mxu0 0
        %3892 = vmatpush1.bf16.msra.mxu0 %v3341
        %3893 = vmatprep.subr.bf16.mxu0 0
        %3894 = vmatpush1.bf16.msra.mxu0 %v3342
        %3895 = vmatprep.subr.bf16.mxu0 0
        %3896 = vmatpush1.bf16.msra.mxu0 %v3343
        %3897 = vmatprep.subr.bf16.mxu0 0
        %3898 = vmatpush1.bf16.msra.mxu0 %v3344
        %3899 = vmatprep.subr.bf16.mxu0 0
        %3900 = vmatpush1.bf16.msra.mxu0 %v3345
        %3901 = vmatprep.subr.bf16.mxu0 0
        %3902 = vmatpush1.bf16.msra.mxu0 %v3346
        %3903 = vmatprep.mubr.bf16.mxu0 %v2359
        %3904 = vmatmul.mubr.bf16.gmra.mrb[0].mxu0 %v2345
        %v3905 = vpop.f32.mrb[0].mxu0
        %v3906 = vadd.f32 %v3866, %v3905
        %v3907 = vpop.f32.mrb[0].mxu0
        %v3908 = vpop.f32.mrb[0].mxu0
        %v3909 = vpop.f32.mrb[0].mxu0
        %3910 = vdwg.mxu0
        %3911 = vmatprep.subr.bf16.mxu0 0
        %3912 = vmatpush1.bf16.msra.mxu0 %v3347
        %3913 = vmatprep.subr.bf16.mxu0 0
        %3914 = vmatpush1.bf16.msra.mxu0 %v3348
        %3915 = vmatprep.subr.bf16.mxu0 0
        %3916 = vmatpush1.bf16.msra.mxu0 %v3349
        %3917 = vmatprep.subr.bf16.mxu0 0
        %3918 = vmatpush1.bf16.msra.mxu0 %v3350
        %3919 = vmatprep.subr.bf16.mxu0 0
        %3920 = vmatpush1.bf16.msra.mxu0 %v3351
        %3921 = vmatprep.subr.bf16.mxu0 0
        %3922 = vmatpush1.bf16.msra.mxu0 %v3352
        %3923 = vmatprep.subr.bf16.mxu0 0
        %3924 = vmatpush1.bf16.msra.mxu0 %v3353
        %3925 = vmatprep.subr.bf16.mxu0 0
        %3926 = vmatpush1.bf16.msra.mxu0 %v3354
        %3927 = vmatprep.subr.bf16.mxu0 0
        %3928 = vmatpush1.bf16.msra.mxu0 %v3355
        %3929 = vmatprep.subr.bf16.mxu0 0
        %3930 = vmatpush1.bf16.msra.mxu0 %v3356
        %3931 = vmatprep.subr.bf16.mxu0 0
        %3932 = vmatpush1.bf16.msra.mxu0 %v3357
        %3933 = vmatprep.subr.bf16.mxu0 0
        %3934 = vmatpush1.bf16.msra.mxu0 %v3358
        %3935 = vmatprep.subr.bf16.mxu0 0
        %3936 = vmatpush1.bf16.msra.mxu0 %v3359
        %3937 = vmatprep.subr.bf16.mxu0 0
        %3938 = vmatpush1.bf16.msra.mxu0 %v3360
        %3939 = vmatprep.subr.bf16.mxu0 0
        %3940 = vmatpush1.bf16.msra.mxu0 %v3361
        %3941 = vmatprep.subr.bf16.mxu0 0
        %3942 = vmatpush1.bf16.msra.mxu0 %v3362
        %3943 = vmatprep.mubr.bf16.mxu0 %v2363
        %3944 = vmatmul.mubr.bf16.gmra.mrb[0].mxu0 %v2361
        %v3945 = vpop.f32.mrb[0].mxu0
        %v3946 = vadd.f32 %v3906, %v3945
        %v3947 = vpop.f32.mrb[0].mxu0
        %v3948 = vpop.f32.mrb[0].mxu0
        %v3949 = vpop.f32.mrb[0].mxu0
        %3950 = vdwg.mxu0
        %3951 = vmatprep.subr.bf16.mxu0 0
        %3952 = vmatpush1.bf16.msra.mxu0 %v3363
        %3953 = vmatprep.subr.bf16.mxu0 0
        %3954 = vmatpush1.bf16.msra.mxu0 %v3364
        %3955 = vmatprep.subr.bf16.mxu0 0
        %3956 = vmatpush1.bf16.msra.mxu0 %v3365
        %3957 = vmatprep.subr.bf16.mxu0 0
        %3958 = vmatpush1.bf16.msra.mxu0 %v3366
        %3959 = vmatprep.subr.bf16.mxu0 0
        %3960 = vmatpush1.bf16.msra.mxu0 %v3367
        %3961 = vmatprep.subr.bf16.mxu0 0
        %3962 = vmatpush1.bf16.msra.mxu0 %v3368
        %3963 = vmatprep.subr.bf16.mxu0 0
        %3964 = vmatpush1.bf16.msra.mxu0 %v3369
        %3965 = vmatprep.subr.bf16.mxu0 0
        %3966 = vmatpush1.bf16.msra.mxu0 %v3370
        %3967 = vmatprep.subr.bf16.mxu0 0
        %3968 = vmatpush1.bf16.msra.mxu0 %v3371
        %3969 = vmatprep.subr.bf16.mxu0 0
        %3970 = vmatpush1.bf16.msra.mxu0 %v3372
        %3971 = vmatprep.subr.bf16.mxu0 0
        %3972 = vmatpush1.bf16.msra.mxu0 %v3373
        %3973 = vmatprep.subr.bf16.mxu0 0
        %3974 = vmatpush1.bf16.msra.mxu0 %v3374
        %3975 = vmatprep.subr.bf16.mxu0 0
        %3976 = vmatpush1.bf16.msra.mxu0 %v3375
        %3977 = vmatprep.subr.bf16.mxu0 0
        %3978 = vmatpush1.bf16.msra.mxu0 %v3376
        %3979 = vmatprep.subr.bf16.mxu0 0
        %3980 = vmatpush1.bf16.msra.mxu0 %v3377
        %3981 = vmatprep.subr.bf16.mxu0 0
        %3982 = vmatpush1.bf16.msra.mxu0 %v3378
        %3983 = vmatprep.mubr.bf16.mxu0 %v2401
        %3984 = vmatmul.mubr.bf16.gmra.mrb[0].mxu0 %v2387
        %v3985 = vpop.f32.mrb[0].mxu0
        %v3986 = vadd.f32 %v3946, %v3985
        %v3987 = vpop.f32.mrb[0].mxu0
        %v3988 = vpop.f32.mrb[0].mxu0
        %v3989 = vpop.f32.mrb[0].mxu0
        %3990 = vdwg.mxu0
        %3991 = vmatprep.subr.bf16.mxu0 0
        %3992 = vmatpush1.bf16.msra.mxu0 %v3379
        %3993 = vmatprep.subr.bf16.mxu0 0
        %3994 = vmatpush1.bf16.msra.mxu0 %v3380
        %3995 = vmatprep.subr.bf16.mxu0 0
        %3996 = vmatpush1.bf16.msra.mxu0 %v3381
        %3997 = vmatprep.subr.bf16.mxu0 0
        %3998 = vmatpush1.bf16.msra.mxu0 %v3382
        %3999 = vmatprep.subr.bf16.mxu0 0
        %4000 = vmatpush1.bf16.msra.mxu0 %v3383
        %4001 = vmatprep.subr.bf16.mxu0 0
        %4002 = vmatpush1.bf16.msra.mxu0 %v3384
        %4003 = vmatprep.subr.bf16.mxu0 0
        %4004 = vmatpush1.bf16.msra.mxu0 %v3385
        %4005 = vmatprep.subr.bf16.mxu0 0
        %4006 = vmatpush1.bf16.msra.mxu0 %v3386
        %4007 = vmatprep.subr.bf16.mxu0 0
        %4008 = vmatpush1.bf16.msra.mxu0 %v3387
        %4009 = vmatprep.subr.bf16.mxu0 0
        %4010 = vmatpush1.bf16.msra.mxu0 %v3388
        %4011 = vmatprep.subr.bf16.mxu0 0
        %4012 = vmatpush1.bf16.msra.mxu0 %v3389
        %4013 = vmatprep.subr.bf16.mxu0 0
        %4014 = vmatpush1.bf16.msra.mxu0 %v3390
        %4015 = vmatprep.subr.bf16.mxu0 0
        %4016 = vmatpush1.bf16.msra.mxu0 %v3391
        %4017 = vmatprep.subr.bf16.mxu0 0
        %4018 = vmatpush1.bf16.msra.mxu0 %v3392
        %4019 = vmatprep.subr.bf16.mxu0 0
        %4020 = vmatpush1.bf16.msra.mxu0 %v3393
        %4021 = vmatprep.subr.bf16.mxu0 0
        %4022 = vmatpush1.bf16.msra.mxu0 %v3394
        %4023 = vmatprep.mubr.bf16.mxu0 %v2411
        %4024 = vmatmul.mubr.bf16.gmra.mrb[0].mxu0 %v2409
        %v4025 = vpop.f32.mrb[0].mxu0
        %v4026 = vadd.f32 %v3986, %v4025
        %v4027 = vpop.f32.mrb[0].mxu0
        %v4028 = vpop.f32.mrb[0].mxu0
        %v4029 = vpop.f32.mrb[0].mxu0
        %4030 = vdwg.mxu0
        %4031 = vmatprep.subr.bf16.mxu0 0
        %4032 = vmatpush1.bf16.msra.mxu0 %v3395
        %4033 = vmatprep.subr.bf16.mxu0 0
        %4034 = vmatpush1.bf16.msra.mxu0 %v3396
        %4035 = vmatprep.subr.bf16.mxu0 0
        %4036 = vmatpush1.bf16.msra.mxu0 %v3397
        %4037 = vmatprep.subr.bf16.mxu0 0
        %4038 = vmatpush1.bf16.msra.mxu0 %v3398
        %4039 = vmatprep.subr.bf16.mxu0 0
        %4040 = vmatpush1.bf16.msra.mxu0 %v3399
        %4041 = vmatprep.subr.bf16.mxu0 0
        %4042 = vmatpush1.bf16.msra.mxu0 %v3400
        %4043 = vmatprep.subr.bf16.mxu0 0
        %4044 = vmatpush1.bf16.msra.mxu0 %v3401
        %4045 = vmatprep.subr.bf16.mxu0 0
        %4046 = vmatpush1.bf16.msra.mxu0 %v3402
        %4047 = vmatprep.subr.bf16.mxu0 0
        %4048 = vmatpush1.bf16.msra.mxu0 %v3403
        %4049 = vmatprep.subr.bf16.mxu0 0
        %4050 = vmatpush1.bf16.msra.mxu0 %v3404
        %4051 = vmatprep.subr.bf16.mxu0 0
        %4052 = vmatpush1.bf16.msra.mxu0 %v3405
        %4053 = vmatprep.subr.bf16.mxu0 0
        %4054 = vmatpush1.bf16.msra.mxu0 %v3406
        %4055 = vmatprep.subr.bf16.mxu0 0
        %4056 = vmatpush1.bf16.msra.mxu0 %v3407
        %4057 = vmatprep.subr.bf16.mxu0 0
        %4058 = vmatpush1.bf16.msra.mxu0 %v3408
        %4059 = vmatprep.subr.bf16.mxu0 0
        %4060 = vmatpush1.bf16.msra.mxu0 %v3409
        %4061 = vmatprep.subr.bf16.mxu0 0
        %4062 = vmatpush1.bf16.msra.mxu0 %v3410
        %4063 = vmatprep.mubr.bf16.mxu0 %v2408
        %4064 = vmatmul.mubr.bf16.gmra.mrb[0].mxu0 %v2394
        %v4065 = vpop.f32.mrb[0].mxu0
        %v4066 = vadd.f32 %v4026, %v4065
        %v4067 = vpop.f32.mrb[0].mxu0
        %v4068 = vpop.f32.mrb[0].mxu0
        %v4069 = vpop.f32.mrb[0].mxu0
        %4070 = vdwg.mxu0
        %4071 = vmatprep.subr.bf16.mxu0 0
        %4072 = vmatpush1.bf16.msra.mxu0 %v3411
        %4073 = vmatprep.subr.bf16.mxu0 0
        %4074 = vmatpush1.bf16.msra.mxu0 %v3412
        %4075 = vmatprep.subr.bf16.mxu0 0
        %4076 = vmatpush1.bf16.msra.mxu0 %v3413
        %4077 = vmatprep.subr.bf16.mxu0 0
        %4078 = vmatpush1.bf16.msra.mxu0 %v3414
        %4079 = vmatprep.subr.bf16.mxu0 0
        %4080 = vmatpush1.bf16.msra.mxu0 %v3415
        %4081 = vmatprep.subr.bf16.mxu0 0
        %4082 = vmatpush1.bf16.msra.mxu0 %v3416
        %4083 = vmatprep.subr.bf16.mxu0 0
        %4084 = vmatpush1.bf16.msra.mxu0 %v3417
        %4085 = vmatprep.subr.bf16.mxu0 0
        %4086 = vmatpush1.bf16.msra.mxu0 %v3418
        %4087 = vmatprep.subr.bf16.mxu0 0
        %4088 = vmatpush1.bf16.msra.mxu0 %v3419
        %4089 = vmatprep.subr.bf16.mxu0 0
        %4090 = vmatpush1.bf16.msra.mxu0 %v3420
        %4091 = vmatprep.subr.bf16.mxu0 0
        %4092 = vmatpush1.bf16.msra.mxu0 %v3421
        %4093 = vmatprep.subr.bf16.mxu0 0
        %4094 = vmatpush1.bf16.msra.mxu0 %v3422
        %4095 = vmatprep.subr.bf16.mxu0 0
        %4096 = vmatpush1.bf16.msra.mxu0 %v3423
        %4097 = vmatprep.subr.bf16.mxu0 0
        %4098 = vmatpush1.bf16.msra.mxu0 %v3424
        %4099 = vmatprep.subr.bf16.mxu0 0
        %4100 = vmatpush1.bf16.msra.mxu0 %v3425
        %4101 = vmatprep.subr.bf16.mxu0 0
        %4102 = vmatpush1.bf16.msra.mxu0 %v3426
        %4103 = vmatprep.mubr.bf16.mxu0 %v2412
        %4104 = vmatmul.mubr.bf16.gmra.mrb[0].mxu0 %v2410
        %v4105 = vpop.f32.mrb[0].mxu0
        %v4106 = vadd.f32 %v4066, %v4105
        %v4107 = vpop.f32.mrb[0].mxu0
        %v4108 = vpop.f32.mrb[0].mxu0
        %v4109 = vpop.f32.mrb[0].mxu0
        %4110 = vdwg.mxu0
        %4111 = vmatprep.subr.bf16.mxu0 0
        %4112 = vmatpush1.bf16.msra.mxu0 %v3427
        %4113 = vmatprep.subr.bf16.mxu0 0
        %4114 = vmatpush1.bf16.msra.mxu0 %v3428
        %4115 = vmatprep.subr.bf16.mxu0 0
        %4116 = vmatpush1.bf16.msra.mxu0 %v3429
        %4117 = vmatprep.subr.bf16.mxu0 0
        %4118 = vmatpush1.bf16.msra.mxu0 %v3430
        %4119 = vmatprep.subr.bf16.mxu0 0
        %4120 = vmatpush1.bf16.msra.mxu0 0
        %4121 = vmatprep.subr.bf16.mxu0 0
        %4122 = vmatpush1.bf16.msra.mxu0 0
        %4123 = vmatprep.subr.bf16.mxu0 0
        %4124 = vmatpush1.bf16.msra.mxu0 0
        %4125 = vmatprep.subr.bf16.mxu0 0
        %4126 = vmatpush1.bf16.msra.mxu0 0
        %4127 = vmatprep.subr.bf16.mxu0 0
        %4128 = vmatpush1.bf16.msra.mxu0 0
        %4129 = vmatprep.subr.bf16.mxu0 0
        %4130 = vmatpush1.bf16.msra.mxu0 0
        %4131 = vmatprep.subr.bf16.mxu0 0
        %4132 = vmatpush1.bf16.msra.mxu0 0
        %4133 = vmatprep.subr.bf16.mxu0 0
        %4134 = vmatpush1.bf16.msra.mxu0 0
        %4135 = vmatprep.subr.bf16.mxu0 0
        %4136 = vmatpush1.bf16.msra.mxu0 0
        %4137 = vmatprep.subr.bf16.mxu0 0
        %4138 = vmatpush1.bf16.msra.mxu0 0
        %4139 = vmatprep.subr.bf16.mxu0 0
        %4140 = vmatpush1.bf16.msra.mxu0 0
        %4141 = vmatprep.subr.bf16.mxu0 0
        %4142 = vmatpush1.bf16.msra.mxu0 0
        %4143 = vmatprep.mubr.bf16.mxu0 0
        %4144 = vmatmul.mubr.bf16.gmra.mrb[0].mxu0 %v3629
        %v4145 = vpop.f32.mrb[0].mxu0
        %v4146 = vadd.f32 %v4106, %v4145
        %v4147 = vpop.f32.mrb[0].mxu0
        %v4148 = vpop.f32.mrb[0].mxu0
        %v4149 = vpop.f32.mrb[0].mxu0
        %4150 = vdwg.mxu0
        %v4151 = vmax.f32 %v4146, 0.0
        %v4152 = vpack.c.bf16 %v4151, %v4151
        %v4153 = vld [vmem:[#allocation2] sm:$0x3]
        %v4154 = vld [vmem:[%s1850] sm:$0xf]
        %v4155 = vld [vmem:[%s1850 + $0x4] sm:$0xf]
        %v4156 = vld [vmem:[%s1850 + $0x8] sm:$0xf]
        %v4157 = vld [vmem:[%s1850 + $0xc] sm:$0xf]
        %v4158 = vld [vmem:[%s1850 + $0x10] sm:$0xf]
        %v4159 = vld [vmem:[%s1850 + $0x14] sm:$0xf]
        %v4160 = vld [vmem:[%s1850 + $0x18] sm:$0xf]
        %v4161 = vld [vmem:[%s1850 + $0x1c] sm:$0xf]
        %v4162 = vld [vmem:[%s1850 + $0x20] sm:$0xf]
        %v4163 = vld [vmem:[%s1850 + $0x24] sm:$0xf]
        %v4164 = vld [vmem:[%s1850 + $0x28] sm:$0xf]
        %v4165 = vld [vmem:[%s1850 + $0x2c] sm:$0xf]
        %v4166 = vld [vmem:[%s1850 + $0x30] sm:$0xf]
        %v4167 = vld [vmem:[%s1850 + $0x34] sm:$0xf]
        %v4168 = vld [vmem:[%s1850 + $0x38] sm:$0xf]
        %v4169 = vld [vmem:[%s1850 + $0x3c] sm:$0xf]
        %v4186 = vunpack.c.l.b16 %v4154
        %v4187 = vunpack.c.l.b16 %v4155
        %v4188 = vunpack.c.l.b16 %v4156
        %v4189 = vunpack.c.l.b16 %v4157
        %v4190 = vunpack.c.l.b16 %v4158
        %v4191 = vunpack.c.l.b16 %v4159
        %v4192 = vunpack.c.l.b16 %v4160
        %v4193 = vunpack.c.l.b16 %v4161
        %v4194 = vunpack.c.l.b16 %v4162
        %v4195 = vunpack.c.l.b16 %v4163
        %v4196 = vunpack.c.l.b16 %v4164
        %v4197 = vunpack.c.l.b16 %v4165
        %v4198 = vunpack.c.l.b16 %v4166
        %v4199 = vunpack.c.l.b16 %v4167
        %v4200 = vunpack.c.l.b16 %v4168
        %v4201 = vunpack.c.l.b16 %v4169
        %v4202 = vpack.c.b16 %v4187, %v4186
        %v4203 = vpack.c.b16 %v4189, %v4188
        %v4204 = vpack.c.b16 %v4191, %v4190
        %v4205 = vpack.c.b16 %v4193, %v4192
        %v4206 = vpack.c.b16 %v4195, %v4194
        %v4207 = vpack.c.b16 %v4197, %v4196
        %v4208 = vpack.c.b16 %v4199, %v4198
        %v4209 = vpack.c.b16 %v4201, %v4200
        %4218 = vmatprep.subr.bf16.mxu0 0
        %4219 = vmatpush1.bf16.msra.mxu0 %v4202
        %4220 = vmatprep.subr.bf16.mxu0 0
        %4221 = vmatpush1.bf16.msra.mxu0 %v4203
        %4222 = vmatprep.subr.bf16.mxu0 0
        %4223 = vmatpush1.bf16.msra.mxu0 %v4204
        %4224 = vmatprep.subr.bf16.mxu0 0
        %4225 = vmatpush1.bf16.msra.mxu0 %v4205
        %4226 = vmatprep.subr.bf16.mxu0 0
        %4227 = vmatpush1.bf16.msra.mxu0 %v4206
        %4228 = vmatprep.subr.bf16.mxu0 0
        %4229 = vmatpush1.bf16.msra.mxu0 %v4207
        %4230 = vmatprep.subr.bf16.mxu0 0
        %4231 = vmatpush1.bf16.msra.mxu0 %v4208
        %4232 = vmatprep.subr.bf16.mxu0 0
        %4233 = vmatpush1.bf16.msra.mxu0 %v4209
        %4234 = vmatprep.subr.bf16.mxu0 0
        %4235 = vmatpush1.bf16.msra.mxu0 0
        %4236 = vmatprep.subr.bf16.mxu0 0
        %4237 = vmatpush1.bf16.msra.mxu0 0
        %4238 = vmatprep.subr.bf16.mxu0 0
        %4239 = vmatpush1.bf16.msra.mxu0 0
        %4240 = vmatprep.subr.bf16.mxu0 0
        %4241 = vmatpush1.bf16.msra.mxu0 0
        %4242 = vmatprep.subr.bf16.mxu0 0
        %4243 = vmatpush1.bf16.msra.mxu0 0
        %4244 = vmatprep.subr.bf16.mxu0 0
        %4245 = vmatpush1.bf16.msra.mxu0 0
        %4246 = vmatprep.subr.bf16.mxu0 0
        %4247 = vmatpush1.bf16.msra.mxu0 0
        %4248 = vmatprep.subr.bf16.mxu0 0
        %4249 = vmatpush1.bf16.msra.mxu0 0
        %4250 = vmatprep.mubr.bf16.mxu0 0
        %4251 = vmatmul.mubr.bf16.gmra.mrb[0].mxu0 %v4152
        %v4252 = vpop.f32.mrb[0].mxu0
        %v4253 = vadd.f32 0.0, %v4252
        %v4254 = vpop.f32.mrb[0].mxu0
        %v4255 = vpop.f32.mrb[0].mxu0
        %v4256 = vpop.f32.mrb[0].mxu0
        %4257 = vdwg.mxu0
        %v4258 = vadd.f32 %v4153, %v4253
        %vm4259 = vcmask 25600
        %4260 = vst.msk [vmem:[#allocation2] sm:$0x3] %vm4259, %v4258
        %p4261 = scmp.eq.s32.totalorder %s17, 3
        // Predicated region
        $region86: #{dqn_forward.7} parent=76 // pred_check
          %p4262 = pneg %p4261
        $region87: #{dqn_forward.7} parent=76 // pred_check_branch
          %4264 = sbr.rel (%p4262) target = $region89
        $region88: #{dqn_forward.7} parent=76 // pred_region
          %v4265 = vld [vmem:[#allocation2] sm:$0x3]
          %v4266 = vld [vmem:[%s4] sm:$0x1]
          %v4268 = vlaneseq
          %v4269 = vshrl.u32 %v4268, 7
          %v4270 = vsub.s32 0, %v4269
          %v4271 = vrot.slane %v4266, %v4270
          %v4273 = vadd.f32 %v4265, %v4271
          %4274 = vst.msk [vmem:[#allocation4] sm:$0x3] %vm4259, %v4273
        $region89: #{dqn_forward.7} parent=76 // pred_fallthru
          _
        // Predicated region
        $region90: #{dqn_forward.7} parent=76 // pred_check
          %p4275 = pneg %p150
        $region91: #{dqn_forward.7} parent=76 // pred_check_branch
          %4277 = sbr.rel (%p4275) target = $region93
        $region92: #{dqn_forward.7} parent=76 // pred_region
          %s4279 = ssub.s32 32, 32
          %4280 = vsyncadd [#allocation5], %s4279
          %s4282 = sshll.u32 [#allocation4], 4
          %s4283 = int_to_ptr.vmem [resolvable:$true] %s4282
          %4285 = dma.vmem_to_hbm [thread:$0]  %s4283, 32, %s5, [#allocation5]
        $region93: #{dqn_forward.7} parent=76 // pred_fallthru
          _
        // Predicated region
        $region94: #{dqn_forward.7} parent=76 // pred_check
          %p4286 = pneg %p150
        $region95: #{dqn_forward.7} parent=76 // pred_check_branch
          %4288 = sbr.rel (%p4286) target = $region97
        $region96: #{dqn_forward.7} parent=76 // pred_region
          %4289 = dma.done [#allocation5], 32
        $region97: #{dqn_forward.7} parent=76 // pred_fallthru
          _
      $region77: #{dqn_forward.7} parent=5 // pred_fallthru
        _
      %p4290 = scmp.le.s32.totalorder 2, %s12
      // Predicated region
      $region98: #{dqn_forward.7} parent=5 // pred_check
        %p4291 = pneg %p4290
      $region99: #{dqn_forward.7} parent=5 // pred_check_branch
        %4293 = sbr.rel (%p4291) target = $region101
      $region100: #{dqn_forward.7} parent=5 // pred_region
        %s4294 = ssub.s32 %s12, 2
      $region101: #{dqn_forward.7} parent=5 // pred_fallthru
        _
    $region6: #{dqn_forward.7} parent=1 // loop_footer
      %s16 = sadd.s32 1, %s12
    $region7: #{dqn_forward.7} parent=1 // loop_footer_branch
      %11 = sbr.rel target = $region3
    $region8: #{dqn_forward.7} parent=1 // loop_exit
      _
    %4295 = vsyncpa [#allocation5], 1
    %s4296 = scalar_lea.sflag [#allocation5], 1
    %4297 = vsyncpa %s4296, 1

</llo_original>
